<compile_context>
chip_gen: v6e
topology: v6e:2x2x1
jax: 0.10.0
libtpu: 0.0.40
codegen_flags: <defaults>
</compile_context>

<pallas_src>
import functools
import math

import jax
import jax.numpy as jnp
import numpy as np
from jax.experimental import pallas as pl
from jax.experimental.pallas import tpu as pltpu


# ----------------------------- kernel ---------------------------------------


def _layernorm(x, gamma, beta, eps=1e-5):
    # LayerNorm over the last dim in fp32 (matches the fp16-safe LayerNorm
    # subclass, which upcasts to float32).
    xf = x.astype(jnp.float32)
    mu = jnp.mean(xf, axis=-1, keepdims=True)
    var = jnp.mean((xf - mu) ** 2, axis=-1, keepdims=True)
    y = (xf - mu) * jax.lax.rsqrt(var + eps)
    return y * gamma + beta


def residual_attention_block_kernel(
    x_ref,
    ln1_g_ref, ln1_b_ref,
    w_in_ref, b_in_ref,
    w_out_ref, b_out_ref,
    ln2_g_ref, ln2_b_ref,
    w_fc_ref, b_fc_ref,
    w_proj_ref, b_proj_ref,
    o_ref,
    *,
    n_head: int,
    seq_len: int,      # real (unpadded) sequence length
    mlp_chunks: int,
):
    TB, Lp, E = x_ref.shape
    hd = E // n_head
    F = w_fc_ref.shape[1]              # 4 * E
    cdtype = w_in_ref.dtype            # MXU operand dtype (bf16)

    x = x_ref[...].astype(jnp.float32)           # (TB, Lp, E)
    x2 = x.reshape(TB * Lp, E)                   # residual stream, f32

    # ---------------- ln_1 -> fused QKV projection --------------------------
    h = _layernorm(x2, ln1_g_ref[...], ln1_b_ref[...])          # (tok, E) f32
    # single (tok, E) x (E, 3E) MXU matmul; query columns pre-scaled by
    # 1/sqrt(hd) on the host. Cast to bf16 immediately so the f32 qkv dies.
    qkv = (jnp.dot(h.astype(cdtype), w_in_ref[...],
                   preferred_element_type=jnp.float32)
           + b_in_ref[...]).astype(cdtype)                      # (tok, 3E) bf16

    # additive key-padding bias (only needed when L was padded)
    if seq_len < Lp:
        key_idx = jax.lax.broadcasted_iota(jnp.int32, (1, 1, Lp), 2)
        key_bias = jnp.where(key_idx < seq_len,
                             jnp.float32(0.0), jnp.float32(-1e30))
    else:
        key_bias = None

    # ---------------- multi-head self-attention ------------------------------
    # Head merge is folded into the output projection: attn = sum_h ctx_h @
    # w_out[h*hd:(h+1)*hd, :]  -> no concatenate / head-merge copy needed.
    attn_out = jnp.zeros((TB * Lp, E), jnp.float32) + b_out_ref[...]
    for hi in range(n_head):
        c0 = hi * hd
        qh = qkv[:, 0 * E + c0: 0 * E + c0 + hd].reshape(TB, Lp, hd)
        kh = qkv[:, 1 * E + c0: 1 * E + c0 + hd].reshape(TB, Lp, hd)
        vh = qkv[:, 2 * E + c0: 2 * E + c0 + hd].reshape(TB, Lp, hd)

        s = jnp.einsum("bqd,bkd->bqk", qh, kh,
                       preferred_element_type=jnp.float32)      # (TB, Lp, Lp)
        if key_bias is not None:
            s = s + key_bias
        s = s - jnp.max(s, axis=-1, keepdims=True)
        p = jnp.exp(s)
        p = p * pl.reciprocal(jnp.sum(p, axis=-1, keepdims=True), approx=True)

        ctx = jnp.einsum("bqk,bkd->bqd", p.astype(cdtype), vh,
                         preferred_element_type=jnp.float32)    # (TB, Lp, hd)
        attn_out = attn_out + jnp.dot(
            ctx.reshape(TB * Lp, hd).astype(cdtype),
            w_out_ref[c0:c0 + hd, :],
            preferred_element_type=jnp.float32)

    x2 = x2 + attn_out

    # ---------------- ln_2 -> MLP (c_fc -> QuickGELU -> c_proj) -------------
    h2 = _layernorm(x2, ln2_g_ref[...], ln2_b_ref[...]).astype(cdtype)
    ck = F // mlp_chunks
    mlp_out = jnp.zeros((TB * Lp, E), jnp.float32) + b_proj_ref[...]
    for ci in range(mlp_chunks):
        f0 = ci * ck
        fc = (jnp.dot(h2, w_fc_ref[:, f0:f0 + ck],
                      preferred_element_type=jnp.float32)
              + b_fc_ref[:, f0:f0 + ck])                        # (tok, ck) f32
        fc = fc * jax.nn.sigmoid(1.702 * fc)                    # QuickGELU
        mlp_out = mlp_out + jnp.dot(fc.astype(cdtype),
                                    w_proj_ref[f0:f0 + ck, :],
                                    preferred_element_type=jnp.float32)
    x2 = x2 + mlp_out

    o_ref[...] = x2.reshape(TB, Lp, E).astype(o_ref.dtype)


# ----------------------------- wrapper ---------------------------------------


def residual_attention_block(x, params, n_head, *, block_batch=None,
                             compute_dtype=jnp.bfloat16):
    """x: (L, N, E) float32 (seq-first, like nn.MultiheadAttention default)."""
    L, N, E = x.shape
    hd = E // n_head
    scale = 1.0 / math.sqrt(hd)

    # ---- pad seq to a multiple of 128 (lane-dense scores, aligned MXU M) ---
    Lp = ((L + 127) // 128) * 128
    xb = jnp.transpose(x, (1, 0, 2))                  # (N, L, E)
    if Lp != L:
        xb = jnp.pad(xb, ((0, 0), (0, Lp - L), (0, 0)))

    # ---- host-side weight prep: fold q-scale, pre-transpose, cast to bf16 --
    w_in = jnp.asarray(params["w_in"], jnp.float32).at[:E].multiply(scale)
    b_in = jnp.asarray(params["b_in"], jnp.float32).at[:E].multiply(scale)

    def mat(m):   # (out, in) torch layout -> (in, out), MXU-ready dtype
        return jnp.asarray(m, jnp.float32).T.astype(compute_dtype)

    def row(v):   # 1-D param -> (1, dim) f32 row so it stays >= 2-D in VMEM
        return jnp.asarray(v, jnp.float32).reshape(1, -1)

    weight_inputs = [
        row(params["ln1_g"]), row(params["ln1_b"]),
        mat(w_in), row(b_in),
        mat(params["w_out"]), row(params["b_out"]),
        row(params["ln2_g"]), row(params["ln2_b"]),
        mat(params["w_fc"]), row(params["b_fc"]),
        mat(params["w_proj"]), row(params["b_proj"]),
    ]
    w_bytes = sum(int(np.prod(w.shape)) * w.dtype.itemsize
                  for w in weight_inputs)             # 1x (Buffered(1) weights)

    # ---- MLP hidden-dim chunking keeps the f32 fc slice bounded (v7x) ------
    mlp_chunks = 4 if E > 512 else 1
    ck = (4 * E) // mlp_chunks

    # ---- generation-aware VMEM budget ---------------------------------------
    try:
        vmem_cap = int(pltpu.get_tpu_info().vmem_capacity_bytes)
        vmem_limit = int(0.85 * vmem_cap)             # ~54 MiB v7x, ~109 MiB v6e
    except Exception:
        vmem_limit = 32 << 20                         # conservative fallback
    vmem_limit = max(vmem_limit, 16 << 20)

    xdt = x.dtype.itemsize

    def est_bytes(tb):
        tok = tb * Lp
        io = 2 * 2 * tok * E * xdt                    # double-buffered in + out
        act = (tok * E * 4 * 6                        # f32 residual/LN/attn/h2/mlp
               + tok * 3 * E * 2                      # bf16 qkv
               + tok * ck * 4 * 2                     # fc chunk + gelu temp (f32)
               + tb * Lp * Lp * 4 * 2                 # per-head scores + probs
               + tok * max(hd, 128) * 4)              # per-head ctx
        return w_bytes + io + act + (4 << 20)

    # ---- batch tile: biggest divisor of N that fits VMEM, grid >= 2 if we can
    if block_batch is None:
        divs = [d for d in range(1, N + 1) if N % d == 0]
        fitting = [d for d in divs
                   if est_bytes(d) <= vmem_limit and d * Lp <= 4096]
        if not fitting:
            fitting = [1]
        multi = [d for d in fitting if N // d >= 2]   # keep both v7x TCs busy
        tb = max(multi if multi else fitting)
    else:
        tb = block_batch
    assert N % tb == 0

    kernel = functools.partial(residual_attention_block_kernel,
                               n_head=n_head, seq_len=L, mlp_chunks=mlp_chunks)

    def _run(buffered_weights):
        extra = {"pipeline_mode": pl.Buffered(1)} if buffered_weights else {}
        in_specs = [pl.BlockSpec((tb, Lp, E), lambda n: (n, 0, 0))]
        in_specs += [pl.BlockSpec(w.shape, lambda n: (0, 0), **extra)
                     for w in weight_inputs]
        return pl.pallas_call(
            kernel,
            out_shape=jax.ShapeDtypeStruct((N, Lp, E), x.dtype),
            grid_spec=pltpu.PrefetchScalarGridSpec(
                num_scalar_prefetch=0,
                grid=(N // tb,),
                in_specs=in_specs,
                out_specs=pl.BlockSpec((tb, Lp, E), lambda n: (n, 0, 0)),
            ),
            compiler_params=pltpu.CompilerParams(
                dimension_semantics=("parallel",),
                vmem_limit_bytes=int(vmem_limit)),
        )(xb, *weight_inputs)

    try:
        out = _run(True)      # single-buffered weights (constant index_map)
    except Exception:
        out = _run(False)     # fall back to default double buffering

    out = out[:, :L, :]                               # drop seq padding
    return jnp.transpose(out, (1, 0, 2))              # back to (L, N, E)


# ----------------------------- pure-JAX reference ----------------------------


def residual_attention_block_ref(x, params, n_head):
    L, N, E = x.shape
    hd = E // n_head
    scale = 1.0 / float(np.sqrt(hd))

    def ln(v, g, b, eps=1e-5):
        mu = jnp.mean(v, axis=-1, keepdims=True)
        var = jnp.mean((v - mu) ** 2, axis=-1, keepdims=True)
        return (v - mu) * jax.lax.rsqrt(var + eps) * g + b

    h = ln(x, params["ln1_g"], params["ln1_b"])
    qkv = jnp.einsum("lne,fe->lnf", h, params["w_in"]) + params["b_in"]
    q, k, v = jnp.split(qkv, 3, axis=-1)
    q = q.reshape(L, N, n_head, hd) * scale
    k = k.reshape(L, N, n_head, hd)
    v = v.reshape(L, N, n_head, hd)
    scores = jnp.einsum("qnhd,knhd->nhqk", q, k)
    p = jax.nn.softmax(scores, axis=-1)
    ctx = jnp.einsum("nhqk,knhd->qnhd", p, v).reshape(L, N, E)
    attn = jnp.einsum("lne,fe->lnf", ctx, params["w_out"]) + params["b_out"]
    x = x + attn

    h2 = ln(x, params["ln2_g"], params["ln2_b"])
    fc = jnp.einsum("lne,fe->lnf", h2, params["w_fc"]) + params["b_fc"]
    fc = fc * jax.nn.sigmoid(1.702 * fc)
    mlp = jnp.einsum("lnf,ef->lne", fc, params["w_proj"]) + params["b_proj"]
    return x + mlp


# ----------------------------- main ------------------------------------------


def make_params(key, d_model):
    E = d_model
    ks = jax.random.split(key, 8)
    return {
        "ln1_g": jnp.ones((E,), jnp.float32),
        "ln1_b": jnp.zeros((E,), jnp.float32),
        "w_in": 0.02 * jax.random.normal(ks[0], (3 * E, E), jnp.float32),
        "b_in": 0.01 * jax.random.normal(ks[1], (3 * E,), jnp.float32),
        "w_out": 0.02 * jax.random.normal(ks[2], (E, E), jnp.float32),
        "b_out": 0.01 * jax.random.normal(ks[3], (E,), jnp.float32),
        "ln2_g": jnp.ones((E,), jnp.float32),
        "ln2_b": jnp.zeros((E,), jnp.float32),
        "w_fc": 0.02 * jax.random.normal(ks[4], (4 * E, E), jnp.float32),
        "b_fc": 0.01 * jax.random.normal(ks[5], (4 * E,), jnp.float32),
        "w_proj": 0.02 * jax.random.normal(ks[6], (E, 4 * E), jnp.float32),
        "b_proj": 0.01 * jax.random.normal(ks[7], (E,), jnp.float32),
    }


if __name__ == "__main__":
    L, N, d_model, n_head = 8, 2, 32, 4   # seq=8, batch=2, hidden=32, 4 heads

    key = jax.random.PRNGKey(0)
    k_x, k_p = jax.random.split(key)
    x = jax.random.normal(k_x, (L, N, d_model), jnp.float32)
    params = make_params(k_p, d_model)

    out = jax.block_until_ready(residual_attention_block(x, params, n_head))
    ref = jax.block_until_ready(residual_attention_block_ref(x, params, n_head))
    np.testing.assert_allclose(np.asarray(out), np.asarray(ref),
                               rtol=2e-2, atol=2e-2)

    print("KERNEL_OK")
</pallas_src>

<mosaic_0001>
module attributes {stable_mosaic.version = 11 : i64} {
  func.func @residual_attention_block_kernel(%arg0: i32, %arg1: memref<1x128x32xf32, #tpu.memory_space<vmem>>, %arg2: memref<1x32xf32, #tpu.memory_space<vmem>>, %arg3: memref<1x32xf32, #tpu.memory_space<vmem>>, %arg4: memref<32x96xbf16, #tpu.memory_space<vmem>>, %arg5: memref<1x96xf32, #tpu.memory_space<vmem>>, %arg6: memref<32x32xbf16, #tpu.memory_space<vmem>>, %arg7: memref<1x32xf32, #tpu.memory_space<vmem>>, %arg8: memref<1x32xf32, #tpu.memory_space<vmem>>, %arg9: memref<1x32xf32, #tpu.memory_space<vmem>>, %arg10: memref<32x128xbf16, #tpu.memory_space<vmem>>, %arg11: memref<1x128xf32, #tpu.memory_space<vmem>>, %arg12: memref<128x32xbf16, #tpu.memory_space<vmem>>, %arg13: memref<1x32xf32, #tpu.memory_space<vmem>>, %arg14: memref<1x128x32xf32, #tpu.memory_space<vmem>>) attributes {dimension_semantics = [#tpu.dimension_semantics<parallel>], iteration_bounds = array<i64: 2>, scalar_prefetch = 0 : i64, scratch_operands = 0 : i64, tpu.core_type = #tpu.core_type<tc>, window_params = [{transform_indices = @transform_0, window_bounds = array<i64: 1, 128, 32>}, {pipeline_mode = #tpu.pipeline_mode<synchronous>, transform_indices = @transform_1, window_bounds = array<i64: 1, 32>}, {pipeline_mode = #tpu.pipeline_mode<synchronous>, transform_indices = @transform_2, window_bounds = array<i64: 1, 32>}, {pipeline_mode = #tpu.pipeline_mode<synchronous>, transform_indices = @transform_3, window_bounds = array<i64: 32, 96>}, {pipeline_mode = #tpu.pipeline_mode<synchronous>, transform_indices = @transform_4, window_bounds = array<i64: 1, 96>}, {pipeline_mode = #tpu.pipeline_mode<synchronous>, transform_indices = @transform_5, window_bounds = array<i64: 32, 32>}, {pipeline_mode = #tpu.pipeline_mode<synchronous>, transform_indices = @transform_6, window_bounds = array<i64: 1, 32>}, {pipeline_mode = #tpu.pipeline_mode<synchronous>, transform_indices = @transform_7, window_bounds = array<i64: 1, 32>}, {pipeline_mode = #tpu.pipeline_mode<synchronous>, transform_indices = @transform_8, window_bounds = array<i64: 1, 32>}, {pipeline_mode = #tpu.pipeline_mode<synchronous>, transform_indices = @transform_9, window_bounds = array<i64: 32, 128>}, {pipeline_mode = #tpu.pipeline_mode<synchronous>, transform_indices = @transform_10, window_bounds = array<i64: 1, 128>}, {pipeline_mode = #tpu.pipeline_mode<synchronous>, transform_indices = @transform_11, window_bounds = array<i64: 128, 32>}, {pipeline_mode = #tpu.pipeline_mode<synchronous>, transform_indices = @transform_12, window_bounds = array<i64: 1, 32>}, {transform_indices = @transform_13, window_bounds = array<i64: 1, 128, 32>}]} {
    %c0 = arith.constant 0 : index
    %c0_0 = arith.constant 0 : index
    %c0_1 = arith.constant 0 : index
    %0 = vector.load %arg1[%c0, %c0_0, %c0_1] : memref<1x128x32xf32, #tpu.memory_space<vmem>>, vector<1x128x32xf32>
    %1 = vector.shape_cast %0 : vector<1x128x32xf32> to vector<128x32xf32>
    %c0_2 = arith.constant 0 : index
    %c0_3 = arith.constant 0 : index
    %2 = vector.load %arg2[%c0_2, %c0_3] : memref<1x32xf32, #tpu.memory_space<vmem>>, vector<1x32xf32>
    %c0_4 = arith.constant 0 : index
    %c0_5 = arith.constant 0 : index
    %3 = vector.load %arg3[%c0_4, %c0_5] : memref<1x32xf32, #tpu.memory_space<vmem>>, vector<1x32xf32>
    %cst = arith.constant dense<0.000000e+00> : vector<128xf32>
    %4 = vector.multi_reduction <add>, %1, %cst [1] : vector<128x32xf32> to vector<128xf32>
    %5 = vector.shape_cast %4 : vector<128xf32> to vector<128x1xf32>
    %cst_6 = arith.constant 3.200000e+01 : f32
    %6 = vector.broadcast %cst_6 : f32 to vector<128x1xf32>
    %7 = arith.divf %5, %6 : vector<128x1xf32>
    %8 = vector.broadcast %7 : vector<128x1xf32> to vector<128x32xf32>
    %9 = arith.subf %1, %8 : vector<128x32xf32>
    %10 = arith.mulf %9, %9 : vector<128x32xf32>
    %cst_7 = arith.constant dense<0.000000e+00> : vector<128xf32>
    %11 = vector.multi_reduction <add>, %10, %cst_7 [1] : vector<128x32xf32> to vector<128xf32>
    %12 = vector.shape_cast %11 : vector<128xf32> to vector<128x1xf32>
    %cst_8 = arith.constant 3.200000e+01 : f32
    %13 = vector.broadcast %cst_8 : f32 to vector<128x1xf32>
    %14 = arith.divf %12, %13 : vector<128x1xf32>
    %15 = vector.broadcast %7 : vector<128x1xf32> to vector<128x32xf32>
    %16 = arith.subf %1, %15 : vector<128x32xf32>
    %cst_9 = arith.constant 9.99999974E-6 : f32
    %17 = vector.broadcast %cst_9 : f32 to vector<128x1xf32>
    %18 = arith.addf %14, %17 : vector<128x1xf32>
    %19 = math.rsqrt %18 : vector<128x1xf32>
    %20 = vector.broadcast %19 : vector<128x1xf32> to vector<128x32xf32>
    %21 = arith.mulf %16, %20 : vector<128x32xf32>
    %22 = vector.broadcast %2 : vector<1x32xf32> to vector<128x32xf32>
    %23 = arith.mulf %21, %22 : vector<128x32xf32>
    %24 = vector.broadcast %3 : vector<1x32xf32> to vector<128x32xf32>
    %25 = arith.addf %23, %24 : vector<128x32xf32>
    %26 = arith.truncf %25 : vector<128x32xf32> to vector<128x32xbf16>
    %c0_10 = arith.constant 0 : index
    %c0_11 = arith.constant 0 : index
    %27 = vector.load %arg4[%c0_10, %c0_11] : memref<32x96xbf16, #tpu.memory_space<vmem>>, vector<32x96xbf16>
    %cst_12 = arith.constant dense<0.000000e+00> : vector<128x96xf32>
    %28 = tpu.matmul %26, %27, %cst_12 {dimension_numbers = #tpu.dot_dimension_numbers<[1], [0], [0], [1], [0, 0, 1, 1], [], []>} : vector<128x32xbf16>, vector<32x96xbf16>, vector<128x96xf32> -> vector<128x96xf32>
    %c0_13 = arith.constant 0 : index
    %c0_14 = arith.constant 0 : index
    %29 = vector.load %arg5[%c0_13, %c0_14] : memref<1x96xf32, #tpu.memory_space<vmem>>, vector<1x96xf32>
    %30 = vector.broadcast %29 : vector<1x96xf32> to vector<128x96xf32>
    %31 = arith.addf %28, %30 : vector<128x96xf32>
    %32 = arith.truncf %31 : vector<128x96xf32> to vector<128x96xbf16>
    %33 = tpu.iota {dimensions = array<i32: 2>} : vector<1x1x128xi32>
    %c8_i32 = arith.constant 8 : i32
    %34 = vector.broadcast %c8_i32 : i32 to vector<1x1x128xi32>
    %35 = arith.cmpi slt, %33, %34 : vector<1x1x128xi32>
    %cst_15 = arith.constant 0.000000e+00 : f32
    %cst_16 = arith.constant -1.000000e+30 : f32
    %36 = vector.broadcast %cst_15 : f32 to vector<1x1x128xf32>
    %37 = vector.broadcast %cst_16 : f32 to vector<1x1x128xf32>
    %38 = arith.select %35, %36, %37 : vector<1x1x128xi1>, vector<1x1x128xf32>
    %cst_17 = arith.constant 0.000000e+00 : f32
    %39 = vector.broadcast %cst_17 : f32 to vector<128x32xf32>
    %c0_18 = arith.constant 0 : index
    %c0_19 = arith.constant 0 : index
    %40 = vector.load %arg7[%c0_18, %c0_19] : memref<1x32xf32, #tpu.memory_space<vmem>>, vector<1x32xf32>
    %41 = vector.broadcast %40 : vector<1x32xf32> to vector<128x32xf32>
    %42 = arith.addf %39, %41 : vector<128x32xf32>
    %43 = vector.extract_strided_slice %32 {offsets = [0, 0], sizes = [128, 8], strides = [1, 1]} : vector<128x96xbf16> to vector<128x8xbf16>
    %44 = vector.shape_cast %43 : vector<128x8xbf16> to vector<1x128x8xbf16>
    %45 = vector.extract_strided_slice %32 {offsets = [0, 32], sizes = [128, 8], strides = [1, 1]} : vector<128x96xbf16> to vector<128x8xbf16>
    %46 = vector.shape_cast %45 : vector<128x8xbf16> to vector<1x128x8xbf16>
    %47 = vector.extract_strided_slice %32 {offsets = [0, 64], sizes = [128, 8], strides = [1, 1]} : vector<128x96xbf16> to vector<128x8xbf16>
    %48 = vector.shape_cast %47 : vector<128x8xbf16> to vector<1x128x8xbf16>
    "tpu.trace_start"() <{level = 10 : i32, message = "bqd,bkd->bqk"}> : () -> ()
    %cst_20 = arith.constant dense<0.000000e+00> : vector<1x128x128xf32>
    %49 = tpu.matmul %44, %46, %cst_20 {dimension_numbers = #tpu.dot_dimension_numbers<[2], [2], [1], [1], [0, 0, 0, 1, 1, 1], [0], [0]>} : vector<1x128x8xbf16>, vector<1x128x8xbf16>, vector<1x128x128xf32> -> vector<1x128x128xf32>
    "tpu.trace_stop"() : () -> ()
    %50 = vector.broadcast %38 : vector<1x1x128xf32> to vector<1x128x128xf32>
    %51 = arith.addf %49, %50 : vector<1x128x128xf32>
    %cst_21 = arith.constant dense<0xFF800000> : vector<1x128xf32>
    %52 = vector.multi_reduction <maximumf>, %51, %cst_21 [2] : vector<1x128x128xf32> to vector<1x128xf32>
    %53 = vector.shape_cast %52 : vector<1x128xf32> to vector<1x128x1xf32>
    %54 = vector.broadcast %53 : vector<1x128x1xf32> to vector<1x128x128xf32>
    %55 = arith.subf %51, %54 : vector<1x128x128xf32>
    %56 = math.exp %55 : vector<1x128x128xf32>
    %cst_22 = arith.constant dense<0.000000e+00> : vector<1x128xf32>
    %57 = vector.multi_reduction <add>, %56, %cst_22 [2] : vector<1x128x128xf32> to vector<1x128xf32>
    %58 = vector.shape_cast %57 : vector<1x128xf32> to vector<1x128x1xf32>
    %59 = tpu.reciprocal %58 {approx = true} : vector<1x128x1xf32> -> vector<1x128x1xf32>
    %60 = vector.broadcast %59 : vector<1x128x1xf32> to vector<1x128x128xf32>
    %61 = arith.mulf %56, %60 : vector<1x128x128xf32>
    %62 = arith.truncf %61 : vector<1x128x128xf32> to vector<1x128x128xbf16>
    "tpu.trace_start"() <{level = 10 : i32, message = "bqk,bkd->bqd"}> : () -> ()
    %cst_23 = arith.constant dense<0.000000e+00> : vector<1x128x8xf32>
    %63 = tpu.matmul %62, %48, %cst_23 {dimension_numbers = #tpu.dot_dimension_numbers<[2], [1], [1], [2], [0, 0, 0, 1, 1, 2], [0], [0]>} : vector<1x128x128xbf16>, vector<1x128x8xbf16>, vector<1x128x8xf32> -> vector<1x128x8xf32>
    "tpu.trace_stop"() : () -> ()
    %64 = vector.shape_cast %63 : vector<1x128x8xf32> to vector<128x8xf32>
    %65 = arith.truncf %64 : vector<128x8xf32> to vector<128x8xbf16>
    %c0_24 = arith.constant 0 : index
    %c0_25 = arith.constant 0 : index
    %66 = vector.load %arg6[%c0_24, %c0_25] : memref<32x32xbf16, #tpu.memory_space<vmem>>, vector<8x32xbf16>
    %cst_26 = arith.constant dense<0.000000e+00> : vector<128x32xf32>
    %67 = tpu.matmul %65, %66, %cst_26 {dimension_numbers = #tpu.dot_dimension_numbers<[1], [0], [0], [1], [0, 0, 1, 1], [], []>} : vector<128x8xbf16>, vector<8x32xbf16>, vector<128x32xf32> -> vector<128x32xf32>
    %68 = arith.addf %42, %67 : vector<128x32xf32>
    %69 = vector.extract_strided_slice %32 {offsets = [0, 8], sizes = [128, 8], strides = [1, 1]} : vector<128x96xbf16> to vector<128x8xbf16>
    %70 = vector.shape_cast %69 : vector<128x8xbf16> to vector<1x128x8xbf16>
    %71 = vector.extract_strided_slice %32 {offsets = [0, 40], sizes = [128, 8], strides = [1, 1]} : vector<128x96xbf16> to vector<128x8xbf16>
    %72 = vector.shape_cast %71 : vector<128x8xbf16> to vector<1x128x8xbf16>
    %73 = vector.extract_strided_slice %32 {offsets = [0, 72], sizes = [128, 8], strides = [1, 1]} : vector<128x96xbf16> to vector<128x8xbf16>
    %74 = vector.shape_cast %73 : vector<128x8xbf16> to vector<1x128x8xbf16>
    "tpu.trace_start"() <{level = 10 : i32, message = "bqd,bkd->bqk"}> : () -> ()
    %cst_27 = arith.constant dense<0.000000e+00> : vector<1x128x128xf32>
    %75 = tpu.matmul %70, %72, %cst_27 {dimension_numbers = #tpu.dot_dimension_numbers<[2], [2], [1], [1], [0, 0, 0, 1, 1, 1], [0], [0]>} : vector<1x128x8xbf16>, vector<1x128x8xbf16>, vector<1x128x128xf32> -> vector<1x128x128xf32>
    "tpu.trace_stop"() : () -> ()
    %76 = vector.broadcast %38 : vector<1x1x128xf32> to vector<1x128x128xf32>
    %77 = arith.addf %75, %76 : vector<1x128x128xf32>
    %cst_28 = arith.constant dense<0xFF800000> : vector<1x128xf32>
    %78 = vector.multi_reduction <maximumf>, %77, %cst_28 [2] : vector<1x128x128xf32> to vector<1x128xf32>
    %79 = vector.shape_cast %78 : vector<1x128xf32> to vector<1x128x1xf32>
    %80 = vector.broadcast %79 : vector<1x128x1xf32> to vector<1x128x128xf32>
    %81 = arith.subf %77, %80 : vector<1x128x128xf32>
    %82 = math.exp %81 : vector<1x128x128xf32>
    %cst_29 = arith.constant dense<0.000000e+00> : vector<1x128xf32>
    %83 = vector.multi_reduction <add>, %82, %cst_29 [2] : vector<1x128x128xf32> to vector<1x128xf32>
    %84 = vector.shape_cast %83 : vector<1x128xf32> to vector<1x128x1xf32>
    %85 = tpu.reciprocal %84 {approx = true} : vector<1x128x1xf32> -> vector<1x128x1xf32>
    %86 = vector.broadcast %85 : vector<1x128x1xf32> to vector<1x128x128xf32>
    %87 = arith.mulf %82, %86 : vector<1x128x128xf32>
    %88 = arith.truncf %87 : vector<1x128x128xf32> to vector<1x128x128xbf16>
    "tpu.trace_start"() <{level = 10 : i32, message = "bqk,bkd->bqd"}> : () -> ()
    %cst_30 = arith.constant dense<0.000000e+00> : vector<1x128x8xf32>
    %89 = tpu.matmul %88, %74, %cst_30 {dimension_numbers = #tpu.dot_dimension_numbers<[2], [1], [1], [2], [0, 0, 0, 1, 1, 2], [0], [0]>} : vector<1x128x128xbf16>, vector<1x128x8xbf16>, vector<1x128x8xf32> -> vector<1x128x8xf32>
    "tpu.trace_stop"() : () -> ()
    %90 = vector.shape_cast %89 : vector<1x128x8xf32> to vector<128x8xf32>
    %91 = arith.truncf %90 : vector<128x8xf32> to vector<128x8xbf16>
    %c8 = arith.constant 8 : index
    %c0_31 = arith.constant 0 : index
    %92 = vector.load %arg6[%c8, %c0_31] : memref<32x32xbf16, #tpu.memory_space<vmem>>, vector<8x32xbf16>
    %cst_32 = arith.constant dense<0.000000e+00> : vector<128x32xf32>
    %93 = tpu.matmul %91, %92, %cst_32 {dimension_numbers = #tpu.dot_dimension_numbers<[1], [0], [0], [1], [0, 0, 1, 1], [], []>} : vector<128x8xbf16>, vector<8x32xbf16>, vector<128x32xf32> -> vector<128x32xf32>
    %94 = arith.addf %68, %93 : vector<128x32xf32>
    %95 = vector.extract_strided_slice %32 {offsets = [0, 16], sizes = [128, 8], strides = [1, 1]} : vector<128x96xbf16> to vector<128x8xbf16>
    %96 = vector.shape_cast %95 : vector<128x8xbf16> to vector<1x128x8xbf16>
    %97 = vector.extract_strided_slice %32 {offsets = [0, 48], sizes = [128, 8], strides = [1, 1]} : vector<128x96xbf16> to vector<128x8xbf16>
    %98 = vector.shape_cast %97 : vector<128x8xbf16> to vector<1x128x8xbf16>
    %99 = vector.extract_strided_slice %32 {offsets = [0, 80], sizes = [128, 8], strides = [1, 1]} : vector<128x96xbf16> to vector<128x8xbf16>
    %100 = vector.shape_cast %99 : vector<128x8xbf16> to vector<1x128x8xbf16>
    "tpu.trace_start"() <{level = 10 : i32, message = "bqd,bkd->bqk"}> : () -> ()
    %cst_33 = arith.constant dense<0.000000e+00> : vector<1x128x128xf32>
    %101 = tpu.matmul %96, %98, %cst_33 {dimension_numbers = #tpu.dot_dimension_numbers<[2], [2], [1], [1], [0, 0, 0, 1, 1, 1], [0], [0]>} : vector<1x128x8xbf16>, vector<1x128x8xbf16>, vector<1x128x128xf32> -> vector<1x128x128xf32>
    "tpu.trace_stop"() : () -> ()
    %102 = vector.broadcast %38 : vector<1x1x128xf32> to vector<1x128x128xf32>
    %103 = arith.addf %101, %102 : vector<1x128x128xf32>
    %cst_34 = arith.constant dense<0xFF800000> : vector<1x128xf32>
    %104 = vector.multi_reduction <maximumf>, %103, %cst_34 [2] : vector<1x128x128xf32> to vector<1x128xf32>
    %105 = vector.shape_cast %104 : vector<1x128xf32> to vector<1x128x1xf32>
    %106 = vector.broadcast %105 : vector<1x128x1xf32> to vector<1x128x128xf32>
    %107 = arith.subf %103, %106 : vector<1x128x128xf32>
    %108 = math.exp %107 : vector<1x128x128xf32>
    %cst_35 = arith.constant dense<0.000000e+00> : vector<1x128xf32>
    %109 = vector.multi_reduction <add>, %108, %cst_35 [2] : vector<1x128x128xf32> to vector<1x128xf32>
    %110 = vector.shape_cast %109 : vector<1x128xf32> to vector<1x128x1xf32>
    %111 = tpu.reciprocal %110 {approx = true} : vector<1x128x1xf32> -> vector<1x128x1xf32>
    %112 = vector.broadcast %111 : vector<1x128x1xf32> to vector<1x128x128xf32>
    %113 = arith.mulf %108, %112 : vector<1x128x128xf32>
    %114 = arith.truncf %113 : vector<1x128x128xf32> to vector<1x128x128xbf16>
    "tpu.trace_start"() <{level = 10 : i32, message = "bqk,bkd->bqd"}> : () -> ()
    %cst_36 = arith.constant dense<0.000000e+00> : vector<1x128x8xf32>
    %115 = tpu.matmul %114, %100, %cst_36 {dimension_numbers = #tpu.dot_dimension_numbers<[2], [1], [1], [2], [0, 0, 0, 1, 1, 2], [0], [0]>} : vector<1x128x128xbf16>, vector<1x128x8xbf16>, vector<1x128x8xf32> -> vector<1x128x8xf32>
    "tpu.trace_stop"() : () -> ()
    %116 = vector.shape_cast %115 : vector<1x128x8xf32> to vector<128x8xf32>
    %117 = arith.truncf %116 : vector<128x8xf32> to vector<128x8xbf16>
    %c16 = arith.constant 16 : index
    %c0_37 = arith.constant 0 : index
    %118 = vector.load %arg6[%c16, %c0_37] : memref<32x32xbf16, #tpu.memory_space<vmem>>, vector<8x32xbf16>
    %cst_38 = arith.constant dense<0.000000e+00> : vector<128x32xf32>
    %119 = tpu.matmul %117, %118, %cst_38 {dimension_numbers = #tpu.dot_dimension_numbers<[1], [0], [0], [1], [0, 0, 1, 1], [], []>} : vector<128x8xbf16>, vector<8x32xbf16>, vector<128x32xf32> -> vector<128x32xf32>
    %120 = arith.addf %94, %119 : vector<128x32xf32>
    %121 = vector.extract_strided_slice %32 {offsets = [0, 24], sizes = [128, 8], strides = [1, 1]} : vector<128x96xbf16> to vector<128x8xbf16>
    %122 = vector.shape_cast %121 : vector<128x8xbf16> to vector<1x128x8xbf16>
    %123 = vector.extract_strided_slice %32 {offsets = [0, 56], sizes = [128, 8], strides = [1, 1]} : vector<128x96xbf16> to vector<128x8xbf16>
    %124 = vector.shape_cast %123 : vector<128x8xbf16> to vector<1x128x8xbf16>
    %125 = vector.extract_strided_slice %32 {offsets = [0, 88], sizes = [128, 8], strides = [1, 1]} : vector<128x96xbf16> to vector<128x8xbf16>
    %126 = vector.shape_cast %125 : vector<128x8xbf16> to vector<1x128x8xbf16>
    "tpu.trace_start"() <{level = 10 : i32, message = "bqd,bkd->bqk"}> : () -> ()
    %cst_39 = arith.constant dense<0.000000e+00> : vector<1x128x128xf32>
    %127 = tpu.matmul %122, %124, %cst_39 {dimension_numbers = #tpu.dot_dimension_numbers<[2], [2], [1], [1], [0, 0, 0, 1, 1, 1], [0], [0]>} : vector<1x128x8xbf16>, vector<1x128x8xbf16>, vector<1x128x128xf32> -> vector<1x128x128xf32>
    "tpu.trace_stop"() : () -> ()
    %128 = vector.broadcast %38 : vector<1x1x128xf32> to vector<1x128x128xf32>
    %129 = arith.addf %127, %128 : vector<1x128x128xf32>
    %cst_40 = arith.constant dense<0xFF800000> : vector<1x128xf32>
    %130 = vector.multi_reduction <maximumf>, %129, %cst_40 [2] : vector<1x128x128xf32> to vector<1x128xf32>
    %131 = vector.shape_cast %130 : vector<1x128xf32> to vector<1x128x1xf32>
    %132 = vector.broadcast %131 : vector<1x128x1xf32> to vector<1x128x128xf32>
    %133 = arith.subf %129, %132 : vector<1x128x128xf32>
    %134 = math.exp %133 : vector<1x128x128xf32>
    %cst_41 = arith.constant dense<0.000000e+00> : vector<1x128xf32>
    %135 = vector.multi_reduction <add>, %134, %cst_41 [2] : vector<1x128x128xf32> to vector<1x128xf32>
    %136 = vector.shape_cast %135 : vector<1x128xf32> to vector<1x128x1xf32>
    %137 = tpu.reciprocal %136 {approx = true} : vector<1x128x1xf32> -> vector<1x128x1xf32>
    %138 = vector.broadcast %137 : vector<1x128x1xf32> to vector<1x128x128xf32>
    %139 = arith.mulf %134, %138 : vector<1x128x128xf32>
    %140 = arith.truncf %139 : vector<1x128x128xf32> to vector<1x128x128xbf16>
    "tpu.trace_start"() <{level = 10 : i32, message = "bqk,bkd->bqd"}> : () -> ()
    %cst_42 = arith.constant dense<0.000000e+00> : vector<1x128x8xf32>
    %141 = tpu.matmul %140, %126, %cst_42 {dimension_numbers = #tpu.dot_dimension_numbers<[2], [1], [1], [2], [0, 0, 0, 1, 1, 2], [0], [0]>} : vector<1x128x128xbf16>, vector<1x128x8xbf16>, vector<1x128x8xf32> -> vector<1x128x8xf32>
    "tpu.trace_stop"() : () -> ()
    %142 = vector.shape_cast %141 : vector<1x128x8xf32> to vector<128x8xf32>
    %143 = arith.truncf %142 : vector<128x8xf32> to vector<128x8xbf16>
    %c24 = arith.constant 24 : index
    %c0_43 = arith.constant 0 : index
    %144 = vector.load %arg6[%c24, %c0_43] : memref<32x32xbf16, #tpu.memory_space<vmem>>, vector<8x32xbf16>
    %cst_44 = arith.constant dense<0.000000e+00> : vector<128x32xf32>
    %145 = tpu.matmul %143, %144, %cst_44 {dimension_numbers = #tpu.dot_dimension_numbers<[1], [0], [0], [1], [0, 0, 1, 1], [], []>} : vector<128x8xbf16>, vector<8x32xbf16>, vector<128x32xf32> -> vector<128x32xf32>
    %146 = arith.addf %120, %145 : vector<128x32xf32>
    %147 = arith.addf %1, %146 : vector<128x32xf32>
    %c0_45 = arith.constant 0 : index
    %c0_46 = arith.constant 0 : index
    %148 = vector.load %arg8[%c0_45, %c0_46] : memref<1x32xf32, #tpu.memory_space<vmem>>, vector<1x32xf32>
    %c0_47 = arith.constant 0 : index
    %c0_48 = arith.constant 0 : index
    %149 = vector.load %arg9[%c0_47, %c0_48] : memref<1x32xf32, #tpu.memory_space<vmem>>, vector<1x32xf32>
    %cst_49 = arith.constant dense<0.000000e+00> : vector<128xf32>
    %150 = vector.multi_reduction <add>, %147, %cst_49 [1] : vector<128x32xf32> to vector<128xf32>
    %151 = vector.shape_cast %150 : vector<128xf32> to vector<128x1xf32>
    %cst_50 = arith.constant 3.200000e+01 : f32
    %152 = vector.broadcast %cst_50 : f32 to vector<128x1xf32>
    %153 = arith.divf %151, %152 : vector<128x1xf32>
    %154 = vector.broadcast %153 : vector<128x1xf32> to vector<128x32xf32>
    %155 = arith.subf %147, %154 : vector<128x32xf32>
    %156 = arith.mulf %155, %155 : vector<128x32xf32>
    %cst_51 = arith.constant dense<0.000000e+00> : vector<128xf32>
    %157 = vector.multi_reduction <add>, %156, %cst_51 [1] : vector<128x32xf32> to vector<128xf32>
    %158 = vector.shape_cast %157 : vector<128xf32> to vector<128x1xf32>
    %cst_52 = arith.constant 3.200000e+01 : f32
    %159 = vector.broadcast %cst_52 : f32 to vector<128x1xf32>
    %160 = arith.divf %158, %159 : vector<128x1xf32>
    %161 = vector.broadcast %153 : vector<128x1xf32> to vector<128x32xf32>
    %162 = arith.subf %147, %161 : vector<128x32xf32>
    %cst_53 = arith.constant 9.99999974E-6 : f32
    %163 = vector.broadcast %cst_53 : f32 to vector<128x1xf32>
    %164 = arith.addf %160, %163 : vector<128x1xf32>
    %165 = math.rsqrt %164 : vector<128x1xf32>
    %166 = vector.broadcast %165 : vector<128x1xf32> to vector<128x32xf32>
    %167 = arith.mulf %162, %166 : vector<128x32xf32>
    %168 = vector.broadcast %148 : vector<1x32xf32> to vector<128x32xf32>
    %169 = arith.mulf %167, %168 : vector<128x32xf32>
    %170 = vector.broadcast %149 : vector<1x32xf32> to vector<128x32xf32>
    %171 = arith.addf %169, %170 : vector<128x32xf32>
    %172 = arith.truncf %171 : vector<128x32xf32> to vector<128x32xbf16>
    %cst_54 = arith.constant 0.000000e+00 : f32
    %173 = vector.broadcast %cst_54 : f32 to vector<128x32xf32>
    %c0_55 = arith.constant 0 : index
    %c0_56 = arith.constant 0 : index
    %174 = vector.load %arg13[%c0_55, %c0_56] : memref<1x32xf32, #tpu.memory_space<vmem>>, vector<1x32xf32>
    %175 = vector.broadcast %174 : vector<1x32xf32> to vector<128x32xf32>
    %176 = arith.addf %173, %175 : vector<128x32xf32>
    %c0_57 = arith.constant 0 : index
    %c0_58 = arith.constant 0 : index
    %177 = vector.load %arg10[%c0_57, %c0_58] : memref<32x128xbf16, #tpu.memory_space<vmem>>, vector<32x128xbf16>
    %cst_59 = arith.constant dense<0.000000e+00> : vector<128x128xf32>
    %178 = tpu.matmul %172, %177, %cst_59 {dimension_numbers = #tpu.dot_dimension_numbers<[1], [0], [0], [1], [0, 0, 1, 1], [], []>} : vector<128x32xbf16>, vector<32x128xbf16>, vector<128x128xf32> -> vector<128x128xf32>
    %c0_60 = arith.constant 0 : index
    %c0_61 = arith.constant 0 : index
    %179 = vector.load %arg11[%c0_60, %c0_61] : memref<1x128xf32, #tpu.memory_space<vmem>>, vector<1x128xf32>
    %180 = vector.broadcast %179 : vector<1x128xf32> to vector<128x128xf32>
    %181 = arith.addf %178, %180 : vector<128x128xf32>
    %cst_62 = arith.constant 1.702000e+00 : f32
    %182 = vector.broadcast %cst_62 : f32 to vector<128x128xf32>
    %183 = arith.mulf %182, %181 : vector<128x128xf32>
    %184 = arith.negf %183 : vector<128x128xf32>
    %185 = math.exp %184 : vector<128x128xf32>
    %cst_63 = arith.constant 1.000000e+00 : f32
    %186 = vector.broadcast %cst_63 : f32 to vector<128x128xf32>
    %187 = arith.addf %186, %185 : vector<128x128xf32>
    %188 = arith.divf %186, %187 : vector<128x128xf32>
    %189 = arith.mulf %181, %188 : vector<128x128xf32>
    %190 = arith.truncf %189 : vector<128x128xf32> to vector<128x128xbf16>
    %c0_64 = arith.constant 0 : index
    %c0_65 = arith.constant 0 : index
    %191 = vector.load %arg12[%c0_64, %c0_65] : memref<128x32xbf16, #tpu.memory_space<vmem>>, vector<128x32xbf16>
    %cst_66 = arith.constant dense<0.000000e+00> : vector<128x32xf32>
    %192 = tpu.matmul %190, %191, %cst_66 {dimension_numbers = #tpu.dot_dimension_numbers<[1], [0], [0], [1], [0, 0, 1, 1], [], []>} : vector<128x128xbf16>, vector<128x32xbf16>, vector<128x32xf32> -> vector<128x32xf32>
    %193 = arith.addf %176, %192 : vector<128x32xf32>
    %194 = arith.addf %147, %193 : vector<128x32xf32>
    %195 = vector.shape_cast %194 : vector<128x32xf32> to vector<1x128x32xf32>
    %c0_67 = arith.constant 0 : index
    %c0_68 = arith.constant 0 : index
    %c0_69 = arith.constant 0 : index
    %196 = vector.load %arg14[%c0_67, %c0_68, %c0_69] : memref<1x128x32xf32, #tpu.memory_space<vmem>>, vector<1x128x32xf32>
    tpu.vector_store %arg14[%c0_67, %c0_68, %c0_69], %195 {strides = array<i32>} : memref<1x128x32xf32, #tpu.memory_space<vmem>>, vector<1x128x32xf32>,
    return
  }
  func.func @transform_0(%arg0: i32) -> (i32, i32, i32) {
    %c0_i32 = arith.constant 0 : i32
    %c0_i32_0 = arith.constant 0 : i32
    %c0_i32_1 = arith.constant 0 : i32
    return %arg0, %c0_i32, %c0_i32_0 : i32, i32, i32
  }
  func.func @transform_1(%arg0: i32) -> (i32, i32) {
    %c0_i32 = arith.constant 0 : i32
    %c0_i32_0 = arith.constant 0 : i32
    %c0_i32_1 = arith.constant 0 : i32
    return %c0_i32, %c0_i32_0 : i32, i32
  }
  func.func @transform_2(%arg0: i32) -> (i32, i32) {
    %c0_i32 = arith.constant 0 : i32
    %c0_i32_0 = arith.constant 0 : i32
    %c0_i32_1 = arith.constant 0 : i32
    return %c0_i32, %c0_i32_0 : i32, i32
  }
  func.func @transform_3(%arg0: i32) -> (i32, i32) {
    %c0_i32 = arith.constant 0 : i32
    %c0_i32_0 = arith.constant 0 : i32
    %c0_i32_1 = arith.constant 0 : i32
    return %c0_i32, %c0_i32_0 : i32, i32
  }
  func.func @transform_4(%arg0: i32) -> (i32, i32) {
    %c0_i32 = arith.constant 0 : i32
    %c0_i32_0 = arith.constant 0 : i32
    %c0_i32_1 = arith.constant 0 : i32
    return %c0_i32, %c0_i32_0 : i32, i32
  }
  func.func @transform_5(%arg0: i32) -> (i32, i32) {
    %c0_i32 = arith.constant 0 : i32
    %c0_i32_0 = arith.constant 0 : i32
    %c0_i32_1 = arith.constant 0 : i32
    return %c0_i32, %c0_i32_0 : i32, i32
  }
  func.func @transform_6(%arg0: i32) -> (i32, i32) {
    %c0_i32 = arith.constant 0 : i32
    %c0_i32_0 = arith.constant 0 : i32
    %c0_i32_1 = arith.constant 0 : i32
    return %c0_i32, %c0_i32_0 : i32, i32
  }
  func.func @transform_7(%arg0: i32) -> (i32, i32) {
    %c0_i32 = arith.constant 0 : i32
    %c0_i32_0 = arith.constant 0 : i32
    %c0_i32_1 = arith.constant 0 : i32
    return %c0_i32, %c0_i32_0 : i32, i32
  }
  func.func @transform_8(%arg0: i32) -> (i32, i32) {
    %c0_i32 = arith.constant 0 : i32
    %c0_i32_0 = arith.constant 0 : i32
    %c0_i32_1 = arith.constant 0 : i32
    return %c0_i32, %c0_i32_0 : i32, i32
  }
  func.func @transform_9(%arg0: i32) -> (i32, i32) {
    %c0_i32 = arith.constant 0 : i32
    %c0_i32_0 = arith.constant 0 : i32
    %c0_i32_1 = arith.constant 0 : i32
    return %c0_i32, %c0_i32_0 : i32, i32
  }
  func.func @transform_10(%arg0: i32) -> (i32, i32) {
    %c0_i32 = arith.constant 0 : i32
    %c0_i32_0 = arith.constant 0 : i32
    %c0_i32_1 = arith.constant 0 : i32
    return %c0_i32, %c0_i32_0 : i32, i32
  }
  func.func @transform_11(%arg0: i32) -> (i32, i32) {
    %c0_i32 = arith.constant 0 : i32
    %c0_i32_0 = arith.constant 0 : i32
    %c0_i32_1 = arith.constant 0 : i32
    return %c0_i32, %c0_i32_0 : i32, i32
  }
  func.func @transform_12(%arg0: i32) -> (i32, i32) {
    %c0_i32 = arith.constant 0 : i32
    %c0_i32_0 = arith.constant 0 : i32
    %c0_i32_1 = arith.constant 0 : i32
    return %c0_i32, %c0_i32_0 : i32, i32
  }
  func.func @transform_13(%arg0: i32) -> (i32, i32, i32) {
    %c0_i32 = arith.constant 0 : i32
    %c0_i32_0 = arith.constant 0 : i32
    %c0_i32_1 = arith.constant 0 : i32
    return %arg0, %c0_i32, %c0_i32_0 : i32, i32, i32
  }
}

module attributes {stable_mosaic.version = 11 : i64} {
  func.func @residual_attention_block_kernel(%arg0: i32, %arg1: memref<1x128x32xf32, #tpu.memory_space<vmem>>, %arg2: memref<1x32xf32, #tpu.memory_space<vmem>>, %arg3: memref<1x32xf32, #tpu.memory_space<vmem>>, %arg4: memref<32x96xbf16, #tpu.memory_space<vmem>>, %arg5: memref<1x96xf32, #tpu.memory_space<vmem>>, %arg6: memref<32x32xbf16, #tpu.memory_space<vmem>>, %arg7: memref<1x32xf32, #tpu.memory_space<vmem>>, %arg8: memref<1x32xf32, #tpu.memory_space<vmem>>, %arg9: memref<1x32xf32, #tpu.memory_space<vmem>>, %arg10: memref<32x128xbf16, #tpu.memory_space<vmem>>, %arg11: memref<1x128xf32, #tpu.memory_space<vmem>>, %arg12: memref<128x32xbf16, #tpu.memory_space<vmem>>, %arg13: memref<1x32xf32, #tpu.memory_space<vmem>>, %arg14: memref<1x128x32xf32, #tpu.memory_space<vmem>>) attributes {dimension_semantics = [#tpu.dimension_semantics<parallel>], iteration_bounds = array<i64: 2>, scalar_prefetch = 0 : i64, scratch_operands = 0 : i64, tpu.core_type = #tpu.core_type<tc>, window_params = [{transform_indices = @transform_0, window_bounds = array<i64: 1, 128, 32>}, {pipeline_mode = #tpu.pipeline_mode<synchronous>, transform_indices = @transform_1, window_bounds = array<i64: 1, 32>}, {pipeline_mode = #tpu.pipeline_mode<synchronous>, transform_indices = @transform_2, window_bounds = array<i64: 1, 32>}, {pipeline_mode = #tpu.pipeline_mode<synchronous>, transform_indices = @transform_3, window_bounds = array<i64: 32, 96>}, {pipeline_mode = #tpu.pipeline_mode<synchronous>, transform_indices = @transform_4, window_bounds = array<i64: 1, 96>}, {pipeline_mode = #tpu.pipeline_mode<synchronous>, transform_indices = @transform_5, window_bounds = array<i64: 32, 32>}, {pipeline_mode = #tpu.pipeline_mode<synchronous>, transform_indices = @transform_6, window_bounds = array<i64: 1, 32>}, {pipeline_mode = #tpu.pipeline_mode<synchronous>, transform_indices = @transform_7, window_bounds = array<i64: 1, 32>}, {pipeline_mode = #tpu.pipeline_mode<synchronous>, transform_indices = @transform_8, window_bounds = array<i64: 1, 32>}, {pipeline_mode = #tpu.pipeline_mode<synchronous>, transform_indices = @transform_9, window_bounds = array<i64: 32, 128>}, {pipeline_mode = #tpu.pipeline_mode<synchronous>, transform_indices = @transform_10, window_bounds = array<i64: 1, 128>}, {pipeline_mode = #tpu.pipeline_mode<synchronous>, transform_indices = @transform_11, window_bounds = array<i64: 128, 32>}, {pipeline_mode = #tpu.pipeline_mode<synchronous>, transform_indices = @transform_12, window_bounds = array<i64: 1, 32>}, {transform_indices = @transform_13, window_bounds = array<i64: 1, 128, 32>}]} {
    %c0 = arith.constant 0 : index
    %c0_0 = arith.constant 0 : index
    %c0_1 = arith.constant 0 : index
    %0 = vector.load %arg1[%c0, %c0_0, %c0_1] : memref<1x128x32xf32, #tpu.memory_space<vmem>>, vector<1x128x32xf32>
    %1 = vector.shape_cast %0 : vector<1x128x32xf32> to vector<128x32xf32>
    %c0_2 = arith.constant 0 : index
    %c0_3 = arith.constant 0 : index
    %2 = vector.load %arg2[%c0_2, %c0_3] : memref<1x32xf32, #tpu.memory_space<vmem>>, vector<1x32xf32>
    %c0_4 = arith.constant 0 : index
    %c0_5 = arith.constant 0 : index
    %3 = vector.load %arg3[%c0_4, %c0_5] : memref<1x32xf32, #tpu.memory_space<vmem>>, vector<1x32xf32>
    %cst = arith.constant dense<0.000000e+00> : vector<128xf32>
    %4 = vector.multi_reduction <add>, %1, %cst [1] : vector<128x32xf32> to vector<128xf32>
    %5 = vector.shape_cast %4 : vector<128xf32> to vector<128x1xf32>
    %cst_6 = arith.constant 3.200000e+01 : f32
    %6 = vector.broadcast %cst_6 : f32 to vector<128x1xf32>
    %7 = arith.divf %5, %6 : vector<128x1xf32>
    %8 = vector.broadcast %7 : vector<128x1xf32> to vector<128x32xf32>
    %9 = arith.subf %1, %8 : vector<128x32xf32>
    %10 = arith.mulf %9, %9 : vector<128x32xf32>
    %cst_7 = arith.constant dense<0.000000e+00> : vector<128xf32>
    %11 = vector.multi_reduction <add>, %10, %cst_7 [1] : vector<128x32xf32> to vector<128xf32>
    %12 = vector.shape_cast %11 : vector<128xf32> to vector<128x1xf32>
    %cst_8 = arith.constant 3.200000e+01 : f32
    %13 = vector.broadcast %cst_8 : f32 to vector<128x1xf32>
    %14 = arith.divf %12, %13 : vector<128x1xf32>
    %15 = vector.broadcast %7 : vector<128x1xf32> to vector<128x32xf32>
    %16 = arith.subf %1, %15 : vector<128x32xf32>
    %cst_9 = arith.constant 9.99999974E-6 : f32
    %17 = vector.broadcast %cst_9 : f32 to vector<128x1xf32>
    %18 = arith.addf %14, %17 : vector<128x1xf32>
    %19 = math.rsqrt %18 : vector<128x1xf32>
    %20 = vector.broadcast %19 : vector<128x1xf32> to vector<128x32xf32>
    %21 = arith.mulf %16, %20 : vector<128x32xf32>
    %22 = vector.broadcast %2 : vector<1x32xf32> to vector<128x32xf32>
    %23 = arith.mulf %21, %22 : vector<128x32xf32>
    %24 = vector.broadcast %3 : vector<1x32xf32> to vector<128x32xf32>
    %25 = arith.addf %23, %24 : vector<128x32xf32>
    %26 = arith.truncf %25 : vector<128x32xf32> to vector<128x32xbf16>
    %c0_10 = arith.constant 0 : index
    %c0_11 = arith.constant 0 : index
    %27 = vector.load %arg4[%c0_10, %c0_11] : memref<32x96xbf16, #tpu.memory_space<vmem>>, vector<32x96xbf16>
    %cst_12 = arith.constant dense<0.000000e+00> : vector<128x96xf32>
    %28 = tpu.matmul %26, %27, %cst_12 {dimension_numbers = #tpu.dot_dimension_numbers<[1], [0], [0], [1], [0, 0, 1, 1], [], []>} : vector<128x32xbf16>, vector<32x96xbf16>, vector<128x96xf32> -> vector<128x96xf32>
    %c0_13 = arith.constant 0 : index
    %c0_14 = arith.constant 0 : index
    %29 = vector.load %arg5[%c0_13, %c0_14] : memref<1x96xf32, #tpu.memory_space<vmem>>, vector<1x96xf32>
    %30 = vector.broadcast %29 : vector<1x96xf32> to vector<128x96xf32>
    %31 = arith.addf %28, %30 : vector<128x96xf32>
    %32 = arith.truncf %31 : vector<128x96xf32> to vector<128x96xbf16>
    %33 = tpu.iota {dimensions = array<i32: 2>} : vector<1x1x128xi32>
    %c8_i32 = arith.constant 8 : i32
    %34 = vector.broadcast %c8_i32 : i32 to vector<1x1x128xi32>
    %35 = arith.cmpi slt, %33, %34 : vector<1x1x128xi32>
    %cst_15 = arith.constant 0.000000e+00 : f32
    %cst_16 = arith.constant -1.000000e+30 : f32
    %36 = vector.broadcast %cst_15 : f32 to vector<1x1x128xf32>
    %37 = vector.broadcast %cst_16 : f32 to vector<1x1x128xf32>
    %38 = arith.select %35, %36, %37 : vector<1x1x128xi1>, vector<1x1x128xf32>
    %cst_17 = arith.constant 0.000000e+00 : f32
    %39 = vector.broadcast %cst_17 : f32 to vector<128x32xf32>
    %c0_18 = arith.constant 0 : index
    %c0_19 = arith.constant 0 : index
    %40 = vector.load %arg7[%c0_18, %c0_19] : memref<1x32xf32, #tpu.memory_space<vmem>>, vector<1x32xf32>
    %41 = vector.broadcast %40 : vector<1x32xf32> to vector<128x32xf32>
    %42 = arith.addf %39, %41 : vector<128x32xf32>
    %43 = vector.extract_strided_slice %32 {offsets = [0, 0], sizes = [128, 8], strides = [1, 1]} : vector<128x96xbf16> to vector<128x8xbf16>
    %44 = vector.shape_cast %43 : vector<128x8xbf16> to vector<1x128x8xbf16>
    %45 = vector.extract_strided_slice %32 {offsets = [0, 32], sizes = [128, 8], strides = [1, 1]} : vector<128x96xbf16> to vector<128x8xbf16>
    %46 = vector.shape_cast %45 : vector<128x8xbf16> to vector<1x128x8xbf16>
    %47 = vector.extract_strided_slice %32 {offsets = [0, 64], sizes = [128, 8], strides = [1, 1]} : vector<128x96xbf16> to vector<128x8xbf16>
    %48 = vector.shape_cast %47 : vector<128x8xbf16> to vector<1x128x8xbf16>
    "tpu.trace_start"() <{level = 10 : i32, message = "bqd,bkd->bqk"}> : () -> ()
    %cst_20 = arith.constant dense<0.000000e+00> : vector<1x128x128xf32>
    %49 = tpu.matmul %44, %46, %cst_20 {dimension_numbers = #tpu.dot_dimension_numbers<[2], [2], [1], [1], [0, 0, 0, 1, 1, 1], [0], [0]>} : vector<1x128x8xbf16>, vector<1x128x8xbf16>, vector<1x128x128xf32> -> vector<1x128x128xf32>
    "tpu.trace_stop"() : () -> ()
    %50 = vector.broadcast %38 : vector<1x1x128xf32> to vector<1x128x128xf32>
    %51 = arith.addf %49, %50 : vector<1x128x128xf32>
    %cst_21 = arith.constant dense<0xFF800000> : vector<1x128xf32>
    %52 = vector.multi_reduction <maximumf>, %51, %cst_21 [2] : vector<1x128x128xf32> to vector<1x128xf32>
    %53 = vector.shape_cast %52 : vector<1x128xf32> to vector<1x128x1xf32>
    %54 = vector.broadcast %53 : vector<1x128x1xf32> to vector<1x128x128xf32>
    %55 = arith.subf %51, %54 : vector<1x128x128xf32>
    %56 = math.exp %55 : vector<1x128x128xf32>
    %cst_22 = arith.constant dense<0.000000e+00> : vector<1x128xf32>
    %57 = vector.multi_reduction <add>, %56, %cst_22 [2] : vector<1x128x128xf32> to vector<1x128xf32>
    %58 = vector.shape_cast %57 : vector<1x128xf32> to vector<1x128x1xf32>
    %59 = tpu.reciprocal %58 {approx = true} : vector<1x128x1xf32> -> vector<1x128x1xf32>
    %60 = vector.broadcast %59 : vector<1x128x1xf32> to vector<1x128x128xf32>
    %61 = arith.mulf %56, %60 : vector<1x128x128xf32>
    %62 = arith.truncf %61 : vector<1x128x128xf32> to vector<1x128x128xbf16>
    "tpu.trace_start"() <{level = 10 : i32, message = "bqk,bkd->bqd"}> : () -> ()
    %cst_23 = arith.constant dense<0.000000e+00> : vector<1x128x8xf32>
    %63 = tpu.matmul %62, %48, %cst_23 {dimension_numbers = #tpu.dot_dimension_numbers<[2], [1], [1], [2], [0, 0, 0, 1, 1, 2], [0], [0]>} : vector<1x128x128xbf16>, vector<1x128x8xbf16>, vector<1x128x8xf32> -> vector<1x128x8xf32>
    "tpu.trace_stop"() : () -> ()
    %64 = vector.shape_cast %63 : vector<1x128x8xf32> to vector<128x8xf32>
    %65 = arith.truncf %64 : vector<128x8xf32> to vector<128x8xbf16>
    %c0_24 = arith.constant 0 : index
    %c0_25 = arith.constant 0 : index
    %66 = vector.load %arg6[%c0_24, %c0_25] : memref<32x32xbf16, #tpu.memory_space<vmem>>, vector<8x32xbf16>
    %cst_26 = arith.constant dense<0.000000e+00> : vector<128x32xf32>
    %67 = tpu.matmul %65, %66, %cst_26 {dimension_numbers = #tpu.dot_dimension_numbers<[1], [0], [0], [1], [0, 0, 1, 1], [], []>} : vector<128x8xbf16>, vector<8x32xbf16>, vector<128x32xf32> -> vector<128x32xf32>
    %68 = arith.addf %42, %67 : vector<128x32xf32>
    %69 = vector.extract_strided_slice %32 {offsets = [0, 8], sizes = [128, 8], strides = [1, 1]} : vector<128x96xbf16> to vector<128x8xbf16>
    %70 = vector.shape_cast %69 : vector<128x8xbf16> to vector<1x128x8xbf16>
    %71 = vector.extract_strided_slice %32 {offsets = [0, 40], sizes = [128, 8], strides = [1, 1]} : vector<128x96xbf16> to vector<128x8xbf16>
    %72 = vector.shape_cast %71 : vector<128x8xbf16> to vector<1x128x8xbf16>
    %73 = vector.extract_strided_slice %32 {offsets = [0, 72], sizes = [128, 8], strides = [1, 1]} : vector<128x96xbf16> to vector<128x8xbf16>
    %74 = vector.shape_cast %73 : vector<128x8xbf16> to vector<1x128x8xbf16>
    "tpu.trace_start"() <{level = 10 : i32, message = "bqd,bkd->bqk"}> : () -> ()
    %cst_27 = arith.constant dense<0.000000e+00> : vector<1x128x128xf32>
    %75 = tpu.matmul %70, %72, %cst_27 {dimension_numbers = #tpu.dot_dimension_numbers<[2], [2], [1], [1], [0, 0, 0, 1, 1, 1], [0], [0]>} : vector<1x128x8xbf16>, vector<1x128x8xbf16>, vector<1x128x128xf32> -> vector<1x128x128xf32>
    "tpu.trace_stop"() : () -> ()
    %76 = vector.broadcast %38 : vector<1x1x128xf32> to vector<1x128x128xf32>
    %77 = arith.addf %75, %76 : vector<1x128x128xf32>
    %cst_28 = arith.constant dense<0xFF800000> : vector<1x128xf32>
    %78 = vector.multi_reduction <maximumf>, %77, %cst_28 [2] : vector<1x128x128xf32> to vector<1x128xf32>
    %79 = vector.shape_cast %78 : vector<1x128xf32> to vector<1x128x1xf32>
    %80 = vector.broadcast %79 : vector<1x128x1xf32> to vector<1x128x128xf32>
    %81 = arith.subf %77, %80 : vector<1x128x128xf32>
    %82 = math.exp %81 : vector<1x128x128xf32>
    %cst_29 = arith.constant dense<0.000000e+00> : vector<1x128xf32>
    %83 = vector.multi_reduction <add>, %82, %cst_29 [2] : vector<1x128x128xf32> to vector<1x128xf32>
    %84 = vector.shape_cast %83 : vector<1x128xf32> to vector<1x128x1xf32>
    %85 = tpu.reciprocal %84 {approx = true} : vector<1x128x1xf32> -> vector<1x128x1xf32>
    %86 = vector.broadcast %85 : vector<1x128x1xf32> to vector<1x128x128xf32>
    %87 = arith.mulf %82, %86 : vector<1x128x128xf32>
    %88 = arith.truncf %87 : vector<1x128x128xf32> to vector<1x128x128xbf16>
    "tpu.trace_start"() <{level = 10 : i32, message = "bqk,bkd->bqd"}> : () -> ()
    %cst_30 = arith.constant dense<0.000000e+00> : vector<1x128x8xf32>
    %89 = tpu.matmul %88, %74, %cst_30 {dimension_numbers = #tpu.dot_dimension_numbers<[2], [1], [1], [2], [0, 0, 0, 1, 1, 2], [0], [0]>} : vector<1x128x128xbf16>, vector<1x128x8xbf16>, vector<1x128x8xf32> -> vector<1x128x8xf32>
    "tpu.trace_stop"() : () -> ()
    %90 = vector.shape_cast %89 : vector<1x128x8xf32> to vector<128x8xf32>
    %91 = arith.truncf %90 : vector<128x8xf32> to vector<128x8xbf16>
    %c8 = arith.constant 8 : index
    %c0_31 = arith.constant 0 : index
    %92 = vector.load %arg6[%c8, %c0_31] : memref<32x32xbf16, #tpu.memory_space<vmem>>, vector<8x32xbf16>
    %cst_32 = arith.constant dense<0.000000e+00> : vector<128x32xf32>
    %93 = tpu.matmul %91, %92, %cst_32 {dimension_numbers = #tpu.dot_dimension_numbers<[1], [0], [0], [1], [0, 0, 1, 1], [], []>} : vector<128x8xbf16>, vector<8x32xbf16>, vector<128x32xf32> -> vector<128x32xf32>
    %94 = arith.addf %68, %93 : vector<128x32xf32>
    %95 = vector.extract_strided_slice %32 {offsets = [0, 16], sizes = [128, 8], strides = [1, 1]} : vector<128x96xbf16> to vector<128x8xbf16>
    %96 = vector.shape_cast %95 : vector<128x8xbf16> to vector<1x128x8xbf16>
    %97 = vector.extract_strided_slice %32 {offsets = [0, 48], sizes = [128, 8], strides = [1, 1]} : vector<128x96xbf16> to vector<128x8xbf16>
    %98 = vector.shape_cast %97 : vector<128x8xbf16> to vector<1x128x8xbf16>
    %99 = vector.extract_strided_slice %32 {offsets = [0, 80], sizes = [128, 8], strides = [1, 1]} : vector<128x96xbf16> to vector<128x8xbf16>
    %100 = vector.shape_cast %99 : vector<128x8xbf16> to vector<1x128x8xbf16>
    "tpu.trace_start"() <{level = 10 : i32, message = "bqd,bkd->bqk"}> : () -> ()
    %cst_33 = arith.constant dense<0.000000e+00> : vector<1x128x128xf32>
    %101 = tpu.matmul %96, %98, %cst_33 {dimension_numbers = #tpu.dot_dimension_numbers<[2], [2], [1], [1], [0, 0, 0, 1, 1, 1], [0], [0]>} : vector<1x128x8xbf16>, vector<1x128x8xbf16>, vector<1x128x128xf32> -> vector<1x128x128xf32>
    "tpu.trace_stop"() : () -> ()
    %102 = vector.broadcast %38 : vector<1x1x128xf32> to vector<1x128x128xf32>
    %103 = arith.addf %101, %102 : vector<1x128x128xf32>
    %cst_34 = arith.constant dense<0xFF800000> : vector<1x128xf32>
    %104 = vector.multi_reduction <maximumf>, %103, %cst_34 [2] : vector<1x128x128xf32> to vector<1x128xf32>
    %105 = vector.shape_cast %104 : vector<1x128xf32> to vector<1x128x1xf32>
    %106 = vector.broadcast %105 : vector<1x128x1xf32> to vector<1x128x128xf32>
    %107 = arith.subf %103, %106 : vector<1x128x128xf32>
    %108 = math.exp %107 : vector<1x128x128xf32>
    %cst_35 = arith.constant dense<0.000000e+00> : vector<1x128xf32>
    %109 = vector.multi_reduction <add>, %108, %cst_35 [2] : vector<1x128x128xf32> to vector<1x128xf32>
    %110 = vector.shape_cast %109 : vector<1x128xf32> to vector<1x128x1xf32>
    %111 = tpu.reciprocal %110 {approx = true} : vector<1x128x1xf32> -> vector<1x128x1xf32>
    %112 = vector.broadcast %111 : vector<1x128x1xf32> to vector<1x128x128xf32>
    %113 = arith.mulf %108, %112 : vector<1x128x128xf32>
    %114 = arith.truncf %113 : vector<1x128x128xf32> to vector<1x128x128xbf16>
    "tpu.trace_start"() <{level = 10 : i32, message = "bqk,bkd->bqd"}> : () -> ()
    %cst_36 = arith.constant dense<0.000000e+00> : vector<1x128x8xf32>
    %115 = tpu.matmul %114, %100, %cst_36 {dimension_numbers = #tpu.dot_dimension_numbers<[2], [1], [1], [2], [0, 0, 0, 1, 1, 2], [0], [0]>} : vector<1x128x128xbf16>, vector<1x128x8xbf16>, vector<1x128x8xf32> -> vector<1x128x8xf32>
    "tpu.trace_stop"() : () -> ()
    %116 = vector.shape_cast %115 : vector<1x128x8xf32> to vector<128x8xf32>
    %117 = arith.truncf %116 : vector<128x8xf32> to vector<128x8xbf16>
    %c16 = arith.constant 16 : index
    %c0_37 = arith.constant 0 : index
    %118 = vector.load %arg6[%c16, %c0_37] : memref<32x32xbf16, #tpu.memory_space<vmem>>, vector<8x32xbf16>
    %cst_38 = arith.constant dense<0.000000e+00> : vector<128x32xf32>
    %119 = tpu.matmul %117, %118, %cst_38 {dimension_numbers = #tpu.dot_dimension_numbers<[1], [0], [0], [1], [0, 0, 1, 1], [], []>} : vector<128x8xbf16>, vector<8x32xbf16>, vector<128x32xf32> -> vector<128x32xf32>
    %120 = arith.addf %94, %119 : vector<128x32xf32>
    %121 = vector.extract_strided_slice %32 {offsets = [0, 24], sizes = [128, 8], strides = [1, 1]} : vector<128x96xbf16> to vector<128x8xbf16>
    %122 = vector.shape_cast %121 : vector<128x8xbf16> to vector<1x128x8xbf16>
    %123 = vector.extract_strided_slice %32 {offsets = [0, 56], sizes = [128, 8], strides = [1, 1]} : vector<128x96xbf16> to vector<128x8xbf16>
    %124 = vector.shape_cast %123 : vector<128x8xbf16> to vector<1x128x8xbf16>
    %125 = vector.extract_strided_slice %32 {offsets = [0, 88], sizes = [128, 8], strides = [1, 1]} : vector<128x96xbf16> to vector<128x8xbf16>
    %126 = vector.shape_cast %125 : vector<128x8xbf16> to vector<1x128x8xbf16>
    "tpu.trace_start"() <{level = 10 : i32, message = "bqd,bkd->bqk"}> : () -> ()
    %cst_39 = arith.constant dense<0.000000e+00> : vector<1x128x128xf32>
    %127 = tpu.matmul %122, %124, %cst_39 {dimension_numbers = #tpu.dot_dimension_numbers<[2], [2], [1], [1], [0, 0, 0, 1, 1, 1], [0], [0]>} : vector<1x128x8xbf16>, vector<1x128x8xbf16>, vector<1x128x128xf32> -> vector<1x128x128xf32>
    "tpu.trace_stop"() : () -> ()
    %128 = vector.broadcast %38 : vector<1x1x128xf32> to vector<1x128x128xf32>
    %129 = arith.addf %127, %128 : vector<1x128x128xf32>
    %cst_40 = arith.constant dense<0xFF800000> : vector<1x128xf32>
    %130 = vector.multi_reduction <maximumf>, %129, %cst_40 [2] : vector<1x128x128xf32> to vector<1x128xf32>
    %131 = vector.shape_cast %130 : vector<1x128xf32> to vector<1x128x1xf32>
    %132 = vector.broadcast %131 : vector<1x128x1xf32> to vector<1x128x128xf32>
    %133 = arith.subf %129, %132 : vector<1x128x128xf32>
    %134 = math.exp %133 : vector<1x128x128xf32>
    %cst_41 = arith.constant dense<0.000000e+00> : vector<1x128xf32>
    %135 = vector.multi_reduction <add>, %134, %cst_41 [2] : vector<1x128x128xf32> to vector<1x128xf32>
    %136 = vector.shape_cast %135 : vector<1x128xf32> to vector<1x128x1xf32>
    %137 = tpu.reciprocal %136 {approx = true} : vector<1x128x1xf32> -> vector<1x128x1xf32>
    %138 = vector.broadcast %137 : vector<1x128x1xf32> to vector<1x128x128xf32>
    %139 = arith.mulf %134, %138 : vector<1x128x128xf32>
    %140 = arith.truncf %139 : vector<1x128x128xf32> to vector<1x128x128xbf16>
    "tpu.trace_start"() <{level = 10 : i32, message = "bqk,bkd->bqd"}> : () -> ()
    %cst_42 = arith.constant dense<0.000000e+00> : vector<1x128x8xf32>
    %141 = tpu.matmul %140, %126, %cst_42 {dimension_numbers = #tpu.dot_dimension_numbers<[2], [1], [1], [2], [0, 0, 0, 1, 1, 2], [0], [0]>} : vector<1x128x128xbf16>, vector<1x128x8xbf16>, vector<1x128x8xf32> -> vector<1x128x8xf32>
    "tpu.trace_stop"() : () -> ()
    %142 = vector.shape_cast %141 : vector<1x128x8xf32> to vector<128x8xf32>
    %143 = arith.truncf %142 : vector<128x8xf32> to vector<128x8xbf16>
    %c24 = arith.constant 24 : index
    %c0_43 = arith.constant 0 : index
    %144 = vector.load %arg6[%c24, %c0_43] : memref<32x32xbf16, #tpu.memory_space<vmem>>, vector<8x32xbf16>
    %cst_44 = arith.constant dense<0.000000e+00> : vector<128x32xf32>
    %145 = tpu.matmul %143, %144, %cst_44 {dimension_numbers = #tpu.dot_dimension_numbers<[1], [0], [0], [1], [0, 0, 1, 1], [], []>} : vector<128x8xbf16>, vector<8x32xbf16>, vector<128x32xf32> -> vector<128x32xf32>
    %146 = arith.addf %120, %145 : vector<128x32xf32>
    %147 = arith.addf %1, %146 : vector<128x32xf32>
    %c0_45 = arith.constant 0 : index
    %c0_46 = arith.constant 0 : index
    %148 = vector.load %arg8[%c0_45, %c0_46] : memref<1x32xf32, #tpu.memory_space<vmem>>, vector<1x32xf32>
    %c0_47 = arith.constant 0 : index
    %c0_48 = arith.constant 0 : index
    %149 = vector.load %arg9[%c0_47, %c0_48] : memref<1x32xf32, #tpu.memory_space<vmem>>, vector<1x32xf32>
    %cst_49 = arith.constant dense<0.000000e+00> : vector<128xf32>
    %150 = vector.multi_reduction <add>, %147, %cst_49 [1] : vector<128x32xf32> to vector<128xf32>
    %151 = vector.shape_cast %150 : vector<128xf32> to vector<128x1xf32>
    %cst_50 = arith.constant 3.200000e+01 : f32
    %152 = vector.broadcast %cst_50 : f32 to vector<128x1xf32>
    %153 = arith.divf %151, %152 : vector<128x1xf32>
    %154 = vector.broadcast %153 : vector<128x1xf32> to vector<128x32xf32>
    %155 = arith.subf %147, %154 : vector<128x32xf32>
    %156 = arith.mulf %155, %155 : vector<128x32xf32>
    %cst_51 = arith.constant dense<0.000000e+00> : vector<128xf32>
    %157 = vector.multi_reduction <add>, %156, %cst_51 [1] : vector<128x32xf32> to vector<128xf32>
    %158 = vector.shape_cast %157 : vector<128xf32> to vector<128x1xf32>
    %cst_52 = arith.constant 3.200000e+01 : f32
    %159 = vector.broadcast %cst_52 : f32 to vector<128x1xf32>
    %160 = arith.divf %158, %159 : vector<128x1xf32>
    %161 = vector.broadcast %153 : vector<128x1xf32> to vector<128x32xf32>
    %162 = arith.subf %147, %161 : vector<128x32xf32>
    %cst_53 = arith.constant 9.99999974E-6 : f32
    %163 = vector.broadcast %cst_53 : f32 to vector<128x1xf32>
    %164 = arith.addf %160, %163 : vector<128x1xf32>
    %165 = math.rsqrt %164 : vector<128x1xf32>
    %166 = vector.broadcast %165 : vector<128x1xf32> to vector<128x32xf32>
    %167 = arith.mulf %162, %166 : vector<128x32xf32>
    %168 = vector.broadcast %148 : vector<1x32xf32> to vector<128x32xf32>
    %169 = arith.mulf %167, %168 : vector<128x32xf32>
    %170 = vector.broadcast %149 : vector<1x32xf32> to vector<128x32xf32>
    %171 = arith.addf %169, %170 : vector<128x32xf32>
    %172 = arith.truncf %171 : vector<128x32xf32> to vector<128x32xbf16>
    %cst_54 = arith.constant 0.000000e+00 : f32
    %173 = vector.broadcast %cst_54 : f32 to vector<128x32xf32>
    %c0_55 = arith.constant 0 : index
    %c0_56 = arith.constant 0 : index
    %174 = vector.load %arg13[%c0_55, %c0_56] : memref<1x32xf32, #tpu.memory_space<vmem>>, vector<1x32xf32>
    %175 = vector.broadcast %174 : vector<1x32xf32> to vector<128x32xf32>
    %176 = arith.addf %173, %175 : vector<128x32xf32>
    %c0_57 = arith.constant 0 : index
    %c0_58 = arith.constant 0 : index
    %177 = vector.load %arg10[%c0_57, %c0_58] : memref<32x128xbf16, #tpu.memory_space<vmem>>, vector<32x128xbf16>
    %cst_59 = arith.constant dense<0.000000e+00> : vector<128x128xf32>
    %178 = tpu.matmul %172, %177, %cst_59 {dimension_numbers = #tpu.dot_dimension_numbers<[1], [0], [0], [1], [0, 0, 1, 1], [], []>} : vector<128x32xbf16>, vector<32x128xbf16>, vector<128x128xf32> -> vector<128x128xf32>
    %c0_60 = arith.constant 0 : index
    %c0_61 = arith.constant 0 : index
    %179 = vector.load %arg11[%c0_60, %c0_61] : memref<1x128xf32, #tpu.memory_space<vmem>>, vector<1x128xf32>
    %180 = vector.broadcast %179 : vector<1x128xf32> to vector<128x128xf32>
    %181 = arith.addf %178, %180 : vector<128x128xf32>
    %cst_62 = arith.constant 1.702000e+00 : f32
    %182 = vector.broadcast %cst_62 : f32 to vector<128x128xf32>
    %183 = arith.mulf %182, %181 : vector<128x128xf32>
    %184 = arith.negf %183 : vector<128x128xf32>
    %185 = math.exp %184 : vector<128x128xf32>
    %cst_63 = arith.constant 1.000000e+00 : f32
    %186 = vector.broadcast %cst_63 : f32 to vector<128x128xf32>
    %187 = arith.addf %186, %185 : vector<128x128xf32>
    %188 = arith.divf %186, %187 : vector<128x128xf32>
    %189 = arith.mulf %181, %188 : vector<128x128xf32>
    %190 = arith.truncf %189 : vector<128x128xf32> to vector<128x128xbf16>
    %c0_64 = arith.constant 0 : index
    %c0_65 = arith.constant 0 : index
    %191 = vector.load %arg12[%c0_64, %c0_65] : memref<128x32xbf16, #tpu.memory_space<vmem>>, vector<128x32xbf16>
    %cst_66 = arith.constant dense<0.000000e+00> : vector<128x32xf32>
    %192 = tpu.matmul %190, %191, %cst_66 {dimension_numbers = #tpu.dot_dimension_numbers<[1], [0], [0], [1], [0, 0, 1, 1], [], []>} : vector<128x128xbf16>, vector<128x32xbf16>, vector<128x32xf32> -> vector<128x32xf32>
    %193 = arith.addf %176, %192 : vector<128x32xf32>
    %194 = arith.addf %147, %193 : vector<128x32xf32>
    %195 = vector.shape_cast %194 : vector<128x32xf32> to vector<1x128x32xf32>
    %c0_67 = arith.constant 0 : index
    %c0_68 = arith.constant 0 : index
    %c0_69 = arith.constant 0 : index
    %196 = vector.load %arg14[%c0_67, %c0_68, %c0_69] : memref<1x128x32xf32, #tpu.memory_space<vmem>>, vector<1x128x32xf32>
    tpu.vector_store %arg14[%c0_67, %c0_68, %c0_69], %195 {strides = array<i32>} : memref<1x128x32xf32, #tpu.memory_space<vmem>>, vector<1x128x32xf32>,
    return
  }
  func.func @transform_0(%arg0: i32) -> (i32, i32, i32) {
    %c0_i32 = arith.constant 0 : i32
    %c0_i32_0 = arith.constant 0 : i32
    %c0_i32_1 = arith.constant 0 : i32
    return %arg0, %c0_i32, %c0_i32_0 : i32, i32, i32
  }
  func.func @transform_1(%arg0: i32) -> (i32, i32) {
    %c0_i32 = arith.constant 0 : i32
    %c0_i32_0 = arith.constant 0 : i32
    %c0_i32_1 = arith.constant 0 : i32
    return %c0_i32, %c0_i32_0 : i32, i32
  }
  func.func @transform_2(%arg0: i32) -> (i32, i32) {
    %c0_i32 = arith.constant 0 : i32
    %c0_i32_0 = arith.constant 0 : i32
    %c0_i32_1 = arith.constant 0 : i32
    return %c0_i32, %c0_i32_0 : i32, i32
  }
  func.func @transform_3(%arg0: i32) -> (i32, i32) {
    %c0_i32 = arith.constant 0 : i32
    %c0_i32_0 = arith.constant 0 : i32
    %c0_i32_1 = arith.constant 0 : i32
    return %c0_i32, %c0_i32_0 : i32, i32
  }
  func.func @transform_4(%arg0: i32) -> (i32, i32) {
    %c0_i32 = arith.constant 0 : i32
    %c0_i32_0 = arith.constant 0 : i32
    %c0_i32_1 = arith.constant 0 : i32
    return %c0_i32, %c0_i32_0 : i32, i32
  }
  func.func @transform_5(%arg0: i32) -> (i32, i32) {
    %c0_i32 = arith.constant 0 : i32
    %c0_i32_0 = arith.constant 0 : i32
    %c0_i32_1 = arith.constant 0 : i32
    return %c0_i32, %c0_i32_0 : i32, i32
  }
  func.func @transform_6(%arg0: i32) -> (i32, i32) {
    %c0_i32 = arith.constant 0 : i32
    %c0_i32_0 = arith.constant 0 : i32
    %c0_i32_1 = arith.constant 0 : i32
    return %c0_i32, %c0_i32_0 : i32, i32
  }
  func.func @transform_7(%arg0: i32) -> (i32, i32) {
    %c0_i32 = arith.constant 0 : i32
    %c0_i32_0 = arith.constant 0 : i32
    %c0_i32_1 = arith.constant 0 : i32
    return %c0_i32, %c0_i32_0 : i32, i32
  }
  func.func @transform_8(%arg0: i32) -> (i32, i32) {
    %c0_i32 = arith.constant 0 : i32
    %c0_i32_0 = arith.constant 0 : i32
    %c0_i32_1 = arith.constant 0 : i32
    return %c0_i32, %c0_i32_0 : i32, i32
  }
  func.func @transform_9(%arg0: i32) -> (i32, i32) {
    %c0_i32 = arith.constant 0 : i32
    %c0_i32_0 = arith.constant 0 : i32
    %c0_i32_1 = arith.constant 0 : i32
    return %c0_i32, %c0_i32_0 : i32, i32
  }
  func.func @transform_10(%arg0: i32) -> (i32, i32) {
    %c0_i32 = arith.constant 0 : i32
    %c0_i32_0 = arith.constant 0 : i32
    %c0_i32_1 = arith.constant 0 : i32
    return %c0_i32, %c0_i32_0 : i32, i32
  }
  func.func @transform_11(%arg0: i32) -> (i32, i32) {
    %c0_i32 = arith.constant 0 : i32
    %c0_i32_0 = arith.constant 0 : i32
    %c0_i32_1 = arith.constant 0 : i32
    return %c0_i32, %c0_i32_0 : i32, i32
  }
  func.func @transform_12(%arg0: i32) -> (i32, i32) {
    %c0_i32 = arith.constant 0 : i32
    %c0_i32_0 = arith.constant 0 : i32
    %c0_i32_1 = arith.constant 0 : i32
    return %c0_i32, %c0_i32_0 : i32, i32
  }
  func.func @transform_13(%arg0: i32) -> (i32, i32, i32) {
    %c0_i32 = arith.constant 0 : i32
    %c0_i32_0 = arith.constant 0 : i32
    %c0_i32_1 = arith.constant 0 : i32
    return %arg0, %c0_i32, %c0_i32_0 : i32, i32, i32
  }
}

</mosaic_0001>

<llo_original>
// kernel: tpu_custom_call.1
$region0: #{tpu_custom_call.1}
  #allocation0 [shape = 'u32[]', space=smem, size = 0x4, offset = 0x4, fixed_abs, tag = 'smem constant byte address 0x4 - core index']
  #allocation1 [shape = 'u32[144,128]{1,0:T(1,128)}', space=vmem, size = 0x12000, scoped, tag = 'internal scratch']
  %s0 = inlined_call_operand.vmem [shape: f32[2,128,32], index: 0, kind: input, shape index: {}]
  %s1 = inlined_call_operand.vmem [shape: f32[1,32], index: 1, kind: input, shape index: {}]
  %s2 = inlined_call_operand.vmem [shape: f32[1,32], index: 2, kind: input, shape index: {}]
  %s3 = inlined_call_operand.vmem [shape: bf16[32,96], index: 3, kind: input, shape index: {}]
  %s4 = inlined_call_operand.vmem [shape: f32[1,96], index: 4, kind: input, shape index: {}]
  %s5 = inlined_call_operand.vmem [shape: bf16[32,32], index: 5, kind: input, shape index: {}]
  %s6 = inlined_call_operand.vmem [shape: f32[1,32], index: 6, kind: input, shape index: {}]
  %s7 = inlined_call_operand.vmem [shape: f32[1,32], index: 7, kind: input, shape index: {}]
  %s8 = inlined_call_operand.vmem [shape: f32[1,32], index: 8, kind: input, shape index: {}]
  %s9 = inlined_call_operand.vmem [shape: bf16[32,128], index: 9, kind: input, shape index: {}]
  %s10 = inlined_call_operand.vmem [shape: f32[1,128], index: 10, kind: input, shape index: {}]
  %s11 = inlined_call_operand.vmem [shape: bf16[128,32], index: 11, kind: input, shape index: {}]
  %s12 = inlined_call_operand.vmem [shape: f32[1,32], index: 12, kind: input, shape index: {}]
  %s13 = inlined_call_operand.vmem [shape: f32[2,128,32], index: 13, kind: output, shape index: {}]
  %s14 = sld [smem:[#allocation0]]
  $region85: #{tpu_custom_call.1} parent=0
    _
  %s16 = ssub.s32 1, %s14
  %s17 = scalar_select 0, %s16, %s14
  loop: start=0, step=1, limit=4
  $region2: #{tpu_custom_call.1} parent=0 // loop_pre_header
    _
  $region3: #{tpu_custom_call.1} parent=0 // loop_header
    %s19 = sphi 0, %s23
    %p20 = scmp.ge.s32.totalorder %s19, 4
    %s29 = sphi 0, %s31
    %s32 = sphi 0, %s29
    %s33 = sphi 0, %s32
    %s49 = sphi 0, %s33
    %s53 = sphi 0, %s53
    %s55 = sphi 0, %s53
    %s56 = sphi 0, %s55
    %s70 = sphi 0, %s56
    %s74 = sphi 0, %s74
    %s76 = sphi 0, %s74
    %s77 = sphi 0, %s76
    %s91 = sphi 0, %s77
    %s95 = sphi 0, %s95
    %s97 = sphi 0, %s95
    %s98 = sphi 0, %s97
    %s112 = sphi 0, %s98
    %s116 = sphi 0, %s116
    %s118 = sphi 0, %s116
    %s119 = sphi 0, %s118
    %s133 = sphi 0, %s119
    %s137 = sphi 0, %s137
    %s139 = sphi 0, %s137
    %s140 = sphi 0, %s139
    %s154 = sphi 0, %s140
    %s158 = sphi 0, %s158
    %s160 = sphi 0, %s158
    %s161 = sphi 0, %s160
    %s175 = sphi 0, %s161
    %s179 = sphi 0, %s179
    %s181 = sphi 0, %s179
    %s182 = sphi 0, %s181
    %s196 = sphi 0, %s182
    %s200 = sphi 0, %s200
    %s202 = sphi 0, %s200
    %s203 = sphi 0, %s202
    %s217 = sphi 0, %s203
    %s221 = sphi 0, %s221
    %s223 = sphi 0, %s221
    %s224 = sphi 0, %s223
    %s238 = sphi 0, %s224
    %s242 = sphi 0, %s242
    %s244 = sphi 0, %s242
    %s245 = sphi 0, %s244
    %s259 = sphi 0, %s245
    %s263 = sphi 0, %s263
    %s265 = sphi 0, %s263
    %s266 = sphi 0, %s265
    %s280 = sphi 0, %s266
    %s284 = sphi 0, %s284
    %s286 = sphi 0, %s284
    %s287 = sphi 0, %s286
    %s301 = sphi 0, %s287
    %s307 = sphi 0, %s309
    %s310 = sphi 0, %s307
    %s311 = sphi 0, %s310
    %s327 = sphi 0, %s311
  $region4: #{tpu_custom_call.1} parent=0 // loop_header_branch
    %22 = sbr.rel (%p20) target = $region8
  $region5: #{tpu_custom_call.1} parent=0 // loop_body
    %s24 = ssub.s32 %s19, 1
    %s25 = ssub.s32 %s19, 2
    %s26 = sadd.s32 %s19, 1
    %s27 = ssub.s32 %s19, %s26
    %p28 = scmp.eq.s32.totalorder %s27, 0
    %s30 = sadd.s32 %s29, 1
    %s31 = scalar_select %p28, %s29, %s30
    %p34 = pneg %p28
    %p35 = scmp.eq.s32.totalorder %s19, 1
    %p36 = por %p34, %p35
    %p37 = scmp.ne.s32.totalorder %s29, %s32
    %p38 = scmp.eq.s32.totalorder %s19, 0
    %p39 = por %p37, %p38
    %p40 = scmp.ne.s32.totalorder %s29, %s32
    %p41 = scmp.eq.s32.totalorder %s24, 1
    %p42 = por %p40, %p41
    %p43 = scmp.ne.s32.totalorder %s32, %s33
    %p44 = scmp.eq.s32.totalorder %s24, 0
    %p45 = por %p43, %p44
    %p46 = scmp.ne.s32.totalorder %s32, %s33
    %p47 = scmp.eq.s32.totalorder %s25, 1
    %p48 = por %p46, %p47
    %p50 = scmp.ne.s32.totalorder %s33, %s49
    %p51 = scmp.eq.s32.totalorder %s25, 0
    %p52 = por %p50, %p51
    %s54 = sadd.s32 %s53, 1
    %p57 = scmp.eq.s32.totalorder %s19, 1
    %p58 = scmp.ne.s32.totalorder %s53, %s55
    %p59 = scmp.eq.s32.totalorder %s19, 0
    %p60 = por %p58, %p59
    %p61 = scmp.ne.s32.totalorder %s53, %s55
    %p62 = scmp.eq.s32.totalorder %s24, 1
    %p63 = por %p61, %p62
    %p64 = scmp.ne.s32.totalorder %s55, %s56
    %p65 = scmp.eq.s32.totalorder %s24, 0
    %p66 = por %p64, %p65
    %p67 = scmp.ne.s32.totalorder %s55, %s56
    %p68 = scmp.eq.s32.totalorder %s25, 1
    %p69 = por %p67, %p68
    %p71 = scmp.ne.s32.totalorder %s56, %s70
    %p72 = scmp.eq.s32.totalorder %s25, 0
    %p73 = por %p71, %p72
    %s75 = sadd.s32 %s74, 1
    %p78 = scmp.eq.s32.totalorder %s19, 1
    %p79 = scmp.ne.s32.totalorder %s74, %s76
    %p80 = scmp.eq.s32.totalorder %s19, 0
    %p81 = por %p79, %p80
    %p82 = scmp.ne.s32.totalorder %s74, %s76
    %p83 = scmp.eq.s32.totalorder %s24, 1
    %p84 = por %p82, %p83
    %p85 = scmp.ne.s32.totalorder %s76, %s77
    %p86 = scmp.eq.s32.totalorder %s24, 0
    %p87 = por %p85, %p86
    %p88 = scmp.ne.s32.totalorder %s76, %s77
    %p89 = scmp.eq.s32.totalorder %s25, 1
    %p90 = por %p88, %p89
    %p92 = scmp.ne.s32.totalorder %s77, %s91
    %p93 = scmp.eq.s32.totalorder %s25, 0
    %p94 = por %p92, %p93
    %s96 = sadd.s32 %s95, 1
    %p99 = scmp.eq.s32.totalorder %s19, 1
    %p100 = scmp.ne.s32.totalorder %s95, %s97
    %p101 = scmp.eq.s32.totalorder %s19, 0
    %p102 = por %p100, %p101
    %p103 = scmp.ne.s32.totalorder %s95, %s97
    %p104 = scmp.eq.s32.totalorder %s24, 1
    %p105 = por %p103, %p104
    %p106 = scmp.ne.s32.totalorder %s97, %s98
    %p107 = scmp.eq.s32.totalorder %s24, 0
    %p108 = por %p106, %p107
    %p109 = scmp.ne.s32.totalorder %s97, %s98
    %p110 = scmp.eq.s32.totalorder %s25, 1
    %p111 = por %p109, %p110
    %p113 = scmp.ne.s32.totalorder %s98, %s112
    %p114 = scmp.eq.s32.totalorder %s25, 0
    %p115 = por %p113, %p114
    %s117 = sadd.s32 %s116, 1
    %p120 = scmp.eq.s32.totalorder %s19, 1
    %p121 = scmp.ne.s32.totalorder %s116, %s118
    %p122 = scmp.eq.s32.totalorder %s19, 0
    %p123 = por %p121, %p122
    %p124 = scmp.ne.s32.totalorder %s116, %s118
    %p125 = scmp.eq.s32.totalorder %s24, 1
    %p126 = por %p124, %p125
    %p127 = scmp.ne.s32.totalorder %s118, %s119
    %p128 = scmp.eq.s32.totalorder %s24, 0
    %p129 = por %p127, %p128
    %p130 = scmp.ne.s32.totalorder %s118, %s119
    %p131 = scmp.eq.s32.totalorder %s25, 1
    %p132 = por %p130, %p131
    %p134 = scmp.ne.s32.totalorder %s119, %s133
    %p135 = scmp.eq.s32.totalorder %s25, 0
    %p136 = por %p134, %p135
    %s138 = sadd.s32 %s137, 1
    %p141 = scmp.eq.s32.totalorder %s19, 1
    %p142 = scmp.ne.s32.totalorder %s137, %s139
    %p143 = scmp.eq.s32.totalorder %s19, 0
    %p144 = por %p142, %p143
    %p145 = scmp.ne.s32.totalorder %s137, %s139
    %p146 = scmp.eq.s32.totalorder %s24, 1
    %p147 = por %p145, %p146
    %p148 = scmp.ne.s32.totalorder %s139, %s140
    %p149 = scmp.eq.s32.totalorder %s24, 0
    %p150 = por %p148, %p149
    %p151 = scmp.ne.s32.totalorder %s139, %s140
    %p152 = scmp.eq.s32.totalorder %s25, 1
    %p153 = por %p151, %p152
    %p155 = scmp.ne.s32.totalorder %s140, %s154
    %p156 = scmp.eq.s32.totalorder %s25, 0
    %p157 = por %p155, %p156
    %s159 = sadd.s32 %s158, 1
    %p162 = scmp.eq.s32.totalorder %s19, 1
    %p163 = scmp.ne.s32.totalorder %s158, %s160
    %p164 = scmp.eq.s32.totalorder %s19, 0
    %p165 = por %p163, %p164
    %p166 = scmp.ne.s32.totalorder %s158, %s160
    %p167 = scmp.eq.s32.totalorder %s24, 1
    %p168 = por %p166, %p167
    %p169 = scmp.ne.s32.totalorder %s160, %s161
    %p170 = scmp.eq.s32.totalorder %s24, 0
    %p171 = por %p169, %p170
    %p172 = scmp.ne.s32.totalorder %s160, %s161
    %p173 = scmp.eq.s32.totalorder %s25, 1
    %p174 = por %p172, %p173
    %p176 = scmp.ne.s32.totalorder %s161, %s175
    %p177 = scmp.eq.s32.totalorder %s25, 0
    %p178 = por %p176, %p177
    %s180 = sadd.s32 %s179, 1
    %p183 = scmp.eq.s32.totalorder %s19, 1
    %p184 = scmp.ne.s32.totalorder %s179, %s181
    %p185 = scmp.eq.s32.totalorder %s19, 0
    %p186 = por %p184, %p185
    %p187 = scmp.ne.s32.totalorder %s179, %s181
    %p188 = scmp.eq.s32.totalorder %s24, 1
    %p189 = por %p187, %p188
    %p190 = scmp.ne.s32.totalorder %s181, %s182
    %p191 = scmp.eq.s32.totalorder %s24, 0
    %p192 = por %p190, %p191
    %p193 = scmp.ne.s32.totalorder %s181, %s182
    %p194 = scmp.eq.s32.totalorder %s25, 1
    %p195 = por %p193, %p194
    %p197 = scmp.ne.s32.totalorder %s182, %s196
    %p198 = scmp.eq.s32.totalorder %s25, 0
    %p199 = por %p197, %p198
    %s201 = sadd.s32 %s200, 1
    %p204 = scmp.eq.s32.totalorder %s19, 1
    %p205 = scmp.ne.s32.totalorder %s200, %s202
    %p206 = scmp.eq.s32.totalorder %s19, 0
    %p207 = por %p205, %p206
    %p208 = scmp.ne.s32.totalorder %s200, %s202
    %p209 = scmp.eq.s32.totalorder %s24, 1
    %p210 = por %p208, %p209
    %p211 = scmp.ne.s32.totalorder %s202, %s203
    %p212 = scmp.eq.s32.totalorder %s24, 0
    %p213 = por %p211, %p212
    %p214 = scmp.ne.s32.totalorder %s202, %s203
    %p215 = scmp.eq.s32.totalorder %s25, 1
    %p216 = por %p214, %p215
    %p218 = scmp.ne.s32.totalorder %s203, %s217
    %p219 = scmp.eq.s32.totalorder %s25, 0
    %p220 = por %p218, %p219
    %s222 = sadd.s32 %s221, 1
    %p225 = scmp.eq.s32.totalorder %s19, 1
    %p226 = scmp.ne.s32.totalorder %s221, %s223
    %p227 = scmp.eq.s32.totalorder %s19, 0
    %p228 = por %p226, %p227
    %p229 = scmp.ne.s32.totalorder %s221, %s223
    %p230 = scmp.eq.s32.totalorder %s24, 1
    %p231 = por %p229, %p230
    %p232 = scmp.ne.s32.totalorder %s223, %s224
    %p233 = scmp.eq.s32.totalorder %s24, 0
    %p234 = por %p232, %p233
    %p235 = scmp.ne.s32.totalorder %s223, %s224
    %p236 = scmp.eq.s32.totalorder %s25, 1
    %p237 = por %p235, %p236
    %p239 = scmp.ne.s32.totalorder %s224, %s238
    %p240 = scmp.eq.s32.totalorder %s25, 0
    %p241 = por %p239, %p240
    %s243 = sadd.s32 %s242, 1
    %p246 = scmp.eq.s32.totalorder %s19, 1
    %p247 = scmp.ne.s32.totalorder %s242, %s244
    %p248 = scmp.eq.s32.totalorder %s19, 0
    %p249 = por %p247, %p248
    %p250 = scmp.ne.s32.totalorder %s242, %s244
    %p251 = scmp.eq.s32.totalorder %s24, 1
    %p252 = por %p250, %p251
    %p253 = scmp.ne.s32.totalorder %s244, %s245
    %p254 = scmp.eq.s32.totalorder %s24, 0
    %p255 = por %p253, %p254
    %p256 = scmp.ne.s32.totalorder %s244, %s245
    %p257 = scmp.eq.s32.totalorder %s25, 1
    %p258 = por %p256, %p257
    %p260 = scmp.ne.s32.totalorder %s245, %s259
    %p261 = scmp.eq.s32.totalorder %s25, 0
    %p262 = por %p260, %p261
    %s264 = sadd.s32 %s263, 1
    %p267 = scmp.eq.s32.totalorder %s19, 1
    %p268 = scmp.ne.s32.totalorder %s263, %s265
    %p269 = scmp.eq.s32.totalorder %s19, 0
    %p270 = por %p268, %p269
    %p271 = scmp.ne.s32.totalorder %s263, %s265
    %p272 = scmp.eq.s32.totalorder %s24, 1
    %p273 = por %p271, %p272
    %p274 = scmp.ne.s32.totalorder %s265, %s266
    %p275 = scmp.eq.s32.totalorder %s24, 0
    %p276 = por %p274, %p275
    %p277 = scmp.ne.s32.totalorder %s265, %s266
    %p278 = scmp.eq.s32.totalorder %s25, 1
    %p279 = por %p277, %p278
    %p281 = scmp.ne.s32.totalorder %s266, %s280
    %p282 = scmp.eq.s32.totalorder %s25, 0
    %p283 = por %p281, %p282
    %s285 = sadd.s32 %s284, 1
    %p288 = scmp.eq.s32.totalorder %s19, 1
    %p289 = scmp.ne.s32.totalorder %s284, %s286
    %p290 = scmp.eq.s32.totalorder %s19, 0
    %p291 = por %p289, %p290
    %p292 = scmp.ne.s32.totalorder %s284, %s286
    %p293 = scmp.eq.s32.totalorder %s24, 1
    %p294 = por %p292, %p293
    %p295 = scmp.ne.s32.totalorder %s286, %s287
    %p296 = scmp.eq.s32.totalorder %s24, 0
    %p297 = por %p295, %p296
    %p298 = scmp.ne.s32.totalorder %s286, %s287
    %p299 = scmp.eq.s32.totalorder %s25, 1
    %p300 = por %p298, %p299
    %p302 = scmp.ne.s32.totalorder %s287, %s301
    %p303 = scmp.eq.s32.totalorder %s25, 0
    %p304 = por %p302, %p303
    %s305 = ssub.s32 %s19, %s26
    %p306 = scmp.eq.s32.totalorder %s305, 0
    %s308 = sadd.s32 %s307, 1
    %s309 = scalar_select %p306, %s307, %s308
    %p312 = pneg %p306
    %p313 = scmp.eq.s32.totalorder %s19, 1
    %p314 = por %p312, %p313
    %p315 = scmp.ne.s32.totalorder %s307, %s310
    %p316 = scmp.eq.s32.totalorder %s19, 0
    %p317 = por %p315, %p316
    %p318 = scmp.ne.s32.totalorder %s307, %s310
    %p319 = scmp.eq.s32.totalorder %s24, 1
    %p320 = por %p318, %p319
    %p321 = scmp.ne.s32.totalorder %s310, %s311
    %p322 = scmp.eq.s32.totalorder %s24, 0
    %p323 = por %p321, %p322
    %p324 = scmp.ne.s32.totalorder %s310, %s311
    %p325 = scmp.eq.s32.totalorder %s25, 1
    %p326 = por %p324, %p325
    %p328 = scmp.ne.s32.totalorder %s311, %s327
    %p329 = scmp.eq.s32.totalorder %s25, 0
    %p330 = por %p328, %p329
    %p331 = scmp.le.s32.totalorder 1, %s19
    %p332 = scmp.lt.s32.totalorder %s19, 3
    %p333 = pnand %p331, %p332
    %p334 = pneg %p333
    // Predicated region
    $region9: #{tpu_custom_call.1} parent=5 // pred_check
      _
    $region10: #{tpu_custom_call.1} parent=5 // pred_check_branch
      %336 = sbr.rel (%p333) target = $region12
    $region11: #{tpu_custom_call.1} parent=5 // pred_region
      %s337 = ssub.s32 %s19, 1
      // Predicated region
      $region13: #{tpu_custom_call.1} parent=11 // pred_check
        %p338 = pneg %p66
      $region14: #{tpu_custom_call.1} parent=11 // pred_check_branch
        %340 = sbr.rel (%p338) target = $region16
      $region15: #{tpu_custom_call.1} parent=11 // pred_region
        _
      $region16: #{tpu_custom_call.1} parent=11 // pred_fallthru
        _
      // Predicated region
      $region17: #{tpu_custom_call.1} parent=11 // pred_check
        %p341 = pneg %p87
      $region18: #{tpu_custom_call.1} parent=11 // pred_check_branch
        %343 = sbr.rel (%p341) target = $region20
      $region19: #{tpu_custom_call.1} parent=11 // pred_region
        _
      $region20: #{tpu_custom_call.1} parent=11 // pred_fallthru
        _
      // Predicated region
      $region21: #{tpu_custom_call.1} parent=11 // pred_check
        %p344 = pneg %p108
      $region22: #{tpu_custom_call.1} parent=11 // pred_check_branch
        %346 = sbr.rel (%p344) target = $region24
      $region23: #{tpu_custom_call.1} parent=11 // pred_region
        _
      $region24: #{tpu_custom_call.1} parent=11 // pred_fallthru
        _
      // Predicated region
      $region25: #{tpu_custom_call.1} parent=11 // pred_check
        %p347 = pneg %p129
      $region26: #{tpu_custom_call.1} parent=11 // pred_check_branch
        %349 = sbr.rel (%p347) target = $region28
      $region27: #{tpu_custom_call.1} parent=11 // pred_region
        _
      $region28: #{tpu_custom_call.1} parent=11 // pred_fallthru
        _
      // Predicated region
      $region29: #{tpu_custom_call.1} parent=11 // pred_check
        %p350 = pneg %p150
      $region30: #{tpu_custom_call.1} parent=11 // pred_check_branch
        %352 = sbr.rel (%p350) target = $region32
      $region31: #{tpu_custom_call.1} parent=11 // pred_region
        _
      $region32: #{tpu_custom_call.1} parent=11 // pred_fallthru
        _
      // Predicated region
      $region33: #{tpu_custom_call.1} parent=11 // pred_check
        %p353 = pneg %p171
      $region34: #{tpu_custom_call.1} parent=11 // pred_check_branch
        %355 = sbr.rel (%p353) target = $region36
      $region35: #{tpu_custom_call.1} parent=11 // pred_region
        _
      $region36: #{tpu_custom_call.1} parent=11 // pred_fallthru
        _
      // Predicated region
      $region37: #{tpu_custom_call.1} parent=11 // pred_check
        %p356 = pneg %p192
      $region38: #{tpu_custom_call.1} parent=11 // pred_check_branch
        %358 = sbr.rel (%p356) target = $region40
      $region39: #{tpu_custom_call.1} parent=11 // pred_region
        _
      $region40: #{tpu_custom_call.1} parent=11 // pred_fallthru
        _
      // Predicated region
      $region41: #{tpu_custom_call.1} parent=11 // pred_check
        %p359 = pneg %p213
      $region42: #{tpu_custom_call.1} parent=11 // pred_check_branch
        %361 = sbr.rel (%p359) target = $region44
      $region43: #{tpu_custom_call.1} parent=11 // pred_region
        _
      $region44: #{tpu_custom_call.1} parent=11 // pred_fallthru
        _
      // Predicated region
      $region45: #{tpu_custom_call.1} parent=11 // pred_check
        %p362 = pneg %p234
      $region46: #{tpu_custom_call.1} parent=11 // pred_check_branch
        %364 = sbr.rel (%p362) target = $region48
      $region47: #{tpu_custom_call.1} parent=11 // pred_region
        _
      $region48: #{tpu_custom_call.1} parent=11 // pred_fallthru
        _
      // Predicated region
      $region49: #{tpu_custom_call.1} parent=11 // pred_check
        %p365 = pneg %p255
      $region50: #{tpu_custom_call.1} parent=11 // pred_check_branch
        %367 = sbr.rel (%p365) target = $region52
      $region51: #{tpu_custom_call.1} parent=11 // pred_region
        _
      $region52: #{tpu_custom_call.1} parent=11 // pred_fallthru
        _
      // Predicated region
      $region53: #{tpu_custom_call.1} parent=11 // pred_check
        %p368 = pneg %p276
      $region54: #{tpu_custom_call.1} parent=11 // pred_check_branch
        %370 = sbr.rel (%p368) target = $region56
      $region55: #{tpu_custom_call.1} parent=11 // pred_region
        _
      $region56: #{tpu_custom_call.1} parent=11 // pred_fallthru
        _
      // Predicated region
      $region57: #{tpu_custom_call.1} parent=11 // pred_check
        %p371 = pneg %p297
      $region58: #{tpu_custom_call.1} parent=11 // pred_check_branch
        %373 = sbr.rel (%p371) target = $region60
      $region59: #{tpu_custom_call.1} parent=11 // pred_region
        _
      $region60: #{tpu_custom_call.1} parent=11 // pred_fallthru
        _
    $region12: #{tpu_custom_call.1} parent=5 // pred_fallthru
      _
    %p374 = scmp.lt.s32.totalorder %s19, 2
    // Predicated region
    $region61: #{tpu_custom_call.1} parent=5 // pred_check
      %p375 = pneg %p374
    $region62: #{tpu_custom_call.1} parent=5 // pred_check_branch
      %377 = sbr.rel (%p375) target = $region64
    $region63: #{tpu_custom_call.1} parent=5 // pred_region
      // Predicated region
      $region65: #{tpu_custom_call.1} parent=63 // pred_check
        %p378 = pneg %p39
      $region66: #{tpu_custom_call.1} parent=63 // pred_check_branch
        %380 = sbr.rel (%p378) target = $region68
      $region67: #{tpu_custom_call.1} parent=63 // pred_region
        %p381 = scmp.lt.s32.totalorder %s19, 1
        %s382 = scalar_select %p381, %s19, 1
        %s383 = smul.addr %s382, 16
        %s384 = smul.addr %s383, 8
        %s385 = scalar_lea.vmem %s0, %s384
      $region68: #{tpu_custom_call.1} parent=63 // pred_fallthru
        _
    $region64: #{tpu_custom_call.1} parent=5 // pred_fallthru
      _
    %p386 = scmp.le.s32.totalorder 1, %s19
    %p387 = scmp.lt.s32.totalorder %s19, 3
    %p388 = pnand %p386, %p387
    %p389 = pneg %p388
    // Predicated region
    $region69: #{tpu_custom_call.1} parent=5 // pred_check
      _
    $region70: #{tpu_custom_call.1} parent=5 // pred_check_branch
      %391 = sbr.rel (%p388) target = $region72
    $region71: #{tpu_custom_call.1} parent=5 // pred_region
      %s392 = ssub.s32 %s19, 1
      %p393 = scmp.lt.s32.totalorder %s24, 1
      %s394 = scalar_select %p393, %s24, 1
      %s395 = smul.addr %s394, 16
      %s396 = smul.addr %s395, 8
      %s397 = scalar_lea.vmem %s0, %s396
      %p398 = pneg %p45
      %p399 = pneg %p42
      %p400 = pneg %p66
      %p401 = pneg %p63
      %p402 = pneg %p87
      %p403 = pneg %p84
      %p404 = pneg %p108
      %p405 = pneg %p105
      %p406 = pneg %p129
      %p407 = pneg %p126
      %p408 = pneg %p150
      %p409 = pneg %p147
      %p410 = pneg %p171
      %p411 = pneg %p168
      %p412 = pneg %p192
      %p413 = pneg %p189
      %p414 = pneg %p213
      %p415 = pneg %p210
      %p416 = pneg %p234
      %p417 = pneg %p231
      %p418 = pneg %p255
      %p419 = pneg %p252
      %p420 = pneg %p276
      %p421 = pneg %p273
      %p422 = pneg %p297
      %p423 = pneg %p294
      %p424 = pneg %p323
      %p425 = pneg %p320
      %p426 = scmp.lt.s32.totalorder %s24, 1
      %s427 = scalar_select %p426, %s24, 1
      %s428 = smul.addr %s427, 16
      %s429 = smul.addr %s428, 8
      %s430 = scalar_lea.vmem %s13, %s429
      %p431 = scmp.lt.s32.totalorder %s24, 1
      %s432 = scalar_select %p431, %s24, 1
      %s433 = smul.addr %s432, 16
      %s434 = smul.addr %s433, 8
      %s435 = scalar_lea.vmem %s0, %s434
      %p436 = scmp.lt.s32.totalorder %s24, 1
      %s437 = scalar_select %p436, %s24, 1
      %s438 = smul.addr %s437, 16
      %s439 = smul.addr %s438, 8
      %s440 = scalar_lea.vmem %s13, %s439
      %v442 = vld [vmem:[%s435] sm:$0xff]
      %v443 = vld [vmem:[%s435 + $0x8] sm:$0xff]
      %v444 = vld [vmem:[%s435 + $0x10] sm:$0xff]
      %v445 = vld [vmem:[%s435 + $0x18] sm:$0xff]
      %v446 = vld [vmem:[%s435 + $0x20] sm:$0xff]
      %v447 = vld [vmem:[%s435 + $0x28] sm:$0xff]
      %v448 = vld [vmem:[%s435 + $0x30] sm:$0xff]
      %v449 = vld [vmem:[%s435 + $0x38] sm:$0xff]
      %v450 = vld [vmem:[%s435 + $0x40] sm:$0xff]
      %v451 = vld [vmem:[%s435 + $0x48] sm:$0xff]
      %v452 = vld [vmem:[%s435 + $0x50] sm:$0xff]
      %v453 = vld [vmem:[%s435 + $0x58] sm:$0xff]
      %v454 = vld [vmem:[%s435 + $0x60] sm:$0xff]
      %v455 = vld [vmem:[%s435 + $0x68] sm:$0xff]
      %v456 = vld [vmem:[%s435 + $0x70] sm:$0xff]
      %v457 = vld [vmem:[%s435 + $0x78] sm:$0xff]
      %v458 = vld [vmem:[%s1] sm:$0x1]
      %v459 = vld [vmem:[%s2] sm:$0x1]
      %vm460 = vcmask 261120
      %v461 = vsel %vm460, %v442, 0.0
      %462 = vadd.xlane.f32.xlu0 %v461
      %v463 = vpop.xlane.xlu0 %462
      %v464 = vsel %vm460, %v443, 0.0
      %465 = vadd.xlane.f32.xlu0 %v464
      %v466 = vpop.xlane.xlu0 %465
      %v467 = vsel %vm460, %v444, 0.0
      %468 = vadd.xlane.f32.xlu0 %v467
      %v469 = vpop.xlane.xlu0 %468
      %v470 = vsel %vm460, %v445, 0.0
      %471 = vadd.xlane.f32.xlu0 %v470
      %v472 = vpop.xlane.xlu0 %471
      %v473 = vsel %vm460, %v446, 0.0
      %474 = vadd.xlane.f32.xlu0 %v473
      %v475 = vpop.xlane.xlu0 %474
      %v476 = vsel %vm460, %v447, 0.0
      %477 = vadd.xlane.f32.xlu0 %v476
      %v478 = vpop.xlane.xlu0 %477
      %v479 = vsel %vm460, %v448, 0.0
      %480 = vadd.xlane.f32.xlu0 %v479
      %v481 = vpop.xlane.xlu0 %480
      %v482 = vsel %vm460, %v449, 0.0
      %483 = vadd.xlane.f32.xlu0 %v482
      %v484 = vpop.xlane.xlu0 %483
      %v485 = vsel %vm460, %v450, 0.0
      %486 = vadd.xlane.f32.xlu0 %v485
      %v487 = vpop.xlane.xlu0 %486
      %v488 = vsel %vm460, %v451, 0.0
      %489 = vadd.xlane.f32.xlu0 %v488
      %v490 = vpop.xlane.xlu0 %489
      %v491 = vsel %vm460, %v452, 0.0
      %492 = vadd.xlane.f32.xlu0 %v491
      %v493 = vpop.xlane.xlu0 %492
      %v494 = vsel %vm460, %v453, 0.0
      %495 = vadd.xlane.f32.xlu0 %v494
      %v496 = vpop.xlane.xlu0 %495
      %v497 = vsel %vm460, %v454, 0.0
      %498 = vadd.xlane.f32.xlu0 %v497
      %v499 = vpop.xlane.xlu0 %498
      %v500 = vsel %vm460, %v455, 0.0
      %501 = vadd.xlane.f32.xlu0 %v500
      %v502 = vpop.xlane.xlu0 %501
      %v503 = vsel %vm460, %v456, 0.0
      %504 = vadd.xlane.f32.xlu0 %v503
      %v505 = vpop.xlane.xlu0 %504
      %v506 = vsel %vm460, %v457, 0.0
      %507 = vadd.xlane.f32.xlu0 %v506
      %v508 = vpop.xlane.xlu0 %507
      %v509 = vrcp.pop 32.0
      %v510 = vmul.f32 %v463, %v509
      %v511 = vmul.f32 %v466, %v509
      %v512 = vmul.f32 %v469, %v509
      %v513 = vmul.f32 %v472, %v509
      %v514 = vmul.f32 %v475, %v509
      %v515 = vmul.f32 %v478, %v509
      %v516 = vmul.f32 %v481, %v509
      %v517 = vmul.f32 %v484, %v509
      %v518 = vmul.f32 %v487, %v509
      %v519 = vmul.f32 %v490, %v509
      %v520 = vmul.f32 %v493, %v509
      %v521 = vmul.f32 %v496, %v509
      %v522 = vmul.f32 %v499, %v509
      %v523 = vmul.f32 %v502, %v509
      %v524 = vmul.f32 %v505, %v509
      %v525 = vmul.f32 %v508, %v509
      %v526 = vsub.f32 %v442, %v510
      %v527 = vsub.f32 %v443, %v511
      %v528 = vsub.f32 %v444, %v512
      %v529 = vsub.f32 %v445, %v513
      %v530 = vsub.f32 %v446, %v514
      %v531 = vsub.f32 %v447, %v515
      %v532 = vsub.f32 %v448, %v516
      %v533 = vsub.f32 %v449, %v517
      %v534 = vsub.f32 %v450, %v518
      %v535 = vsub.f32 %v451, %v519
      %v536 = vsub.f32 %v452, %v520
      %v537 = vsub.f32 %v453, %v521
      %v538 = vsub.f32 %v454, %v522
      %v539 = vsub.f32 %v455, %v523
      %v540 = vsub.f32 %v456, %v524
      %v541 = vsub.f32 %v457, %v525
      %v542 = vmul.f32 %v526, %v526
      %v543 = vmul.f32 %v527, %v527
      %v544 = vmul.f32 %v528, %v528
      %v545 = vmul.f32 %v529, %v529
      %v546 = vmul.f32 %v530, %v530
      %v547 = vmul.f32 %v531, %v531
      %v548 = vmul.f32 %v532, %v532
      %v549 = vmul.f32 %v533, %v533
      %v550 = vmul.f32 %v534, %v534
      %v551 = vmul.f32 %v535, %v535
      %v552 = vmul.f32 %v536, %v536
      %v553 = vmul.f32 %v537, %v537
      %v554 = vmul.f32 %v538, %v538
      %v555 = vmul.f32 %v539, %v539
      %v556 = vmul.f32 %v540, %v540
      %v557 = vmul.f32 %v541, %v541
      %v558 = vsel %vm460, %v542, 0.0
      %559 = vadd.xlane.f32.xlu0 %v558
      %v560 = vpop.xlane.xlu0 %559
      %v561 = vsel %vm460, %v543, 0.0
      %562 = vadd.xlane.f32.xlu0 %v561
      %v563 = vpop.xlane.xlu0 %562
      %v564 = vsel %vm460, %v544, 0.0
      %565 = vadd.xlane.f32.xlu0 %v564
      %v566 = vpop.xlane.xlu0 %565
      %v567 = vsel %vm460, %v545, 0.0
      %568 = vadd.xlane.f32.xlu0 %v567
      %v569 = vpop.xlane.xlu0 %568
      %v570 = vsel %vm460, %v546, 0.0
      %571 = vadd.xlane.f32.xlu0 %v570
      %v572 = vpop.xlane.xlu0 %571
      %v573 = vsel %vm460, %v547, 0.0
      %574 = vadd.xlane.f32.xlu0 %v573
      %v575 = vpop.xlane.xlu0 %574
      %v576 = vsel %vm460, %v548, 0.0
      %577 = vadd.xlane.f32.xlu0 %v576
      %v578 = vpop.xlane.xlu0 %577
      %v579 = vsel %vm460, %v549, 0.0
      %580 = vadd.xlane.f32.xlu0 %v579
      %v581 = vpop.xlane.xlu0 %580
      %v582 = vsel %vm460, %v550, 0.0
      %583 = vadd.xlane.f32.xlu0 %v582
      %v584 = vpop.xlane.xlu0 %583
      %v585 = vsel %vm460, %v551, 0.0
      %586 = vadd.xlane.f32.xlu0 %v585
      %v587 = vpop.xlane.xlu0 %586
      %v588 = vsel %vm460, %v552, 0.0
      %589 = vadd.xlane.f32.xlu0 %v588
      %v590 = vpop.xlane.xlu0 %589
      %v591 = vsel %vm460, %v553, 0.0
      %592 = vadd.xlane.f32.xlu0 %v591
      %v593 = vpop.xlane.xlu0 %592
      %v594 = vsel %vm460, %v554, 0.0
      %595 = vadd.xlane.f32.xlu0 %v594
      %v596 = vpop.xlane.xlu0 %595
      %v597 = vsel %vm460, %v555, 0.0
      %598 = vadd.xlane.f32.xlu0 %v597
      %v599 = vpop.xlane.xlu0 %598
      %v600 = vsel %vm460, %v556, 0.0
      %601 = vadd.xlane.f32.xlu0 %v600
      %v602 = vpop.xlane.xlu0 %601
      %v603 = vsel %vm460, %v557, 0.0
      %604 = vadd.xlane.f32.xlu0 %v603
      %v605 = vpop.xlane.xlu0 %604
      %v606 = vmul.f32 %v560, %v509
      %v607 = vmul.f32 %v563, %v509
      %v608 = vmul.f32 %v566, %v509
      %v609 = vmul.f32 %v569, %v509
      %v610 = vmul.f32 %v572, %v509
      %v611 = vmul.f32 %v575, %v509
      %v612 = vmul.f32 %v578, %v509
      %v613 = vmul.f32 %v581, %v509
      %v614 = vmul.f32 %v584, %v509
      %v615 = vmul.f32 %v587, %v509
      %v616 = vmul.f32 %v590, %v509
      %v617 = vmul.f32 %v593, %v509
      %v618 = vmul.f32 %v596, %v509
      %v619 = vmul.f32 %v599, %v509
      %v620 = vmul.f32 %v602, %v509
      %v621 = vmul.f32 %v605, %v509
      %v622 = vadd.f32 %v606, 1e-05
      %v623 = vadd.f32 %v607, 1e-05
      %v624 = vadd.f32 %v608, 1e-05
      %v625 = vadd.f32 %v609, 1e-05
      %v626 = vadd.f32 %v610, 1e-05
      %v627 = vadd.f32 %v611, 1e-05
      %v628 = vadd.f32 %v612, 1e-05
      %v629 = vadd.f32 %v613, 1e-05
      %v630 = vadd.f32 %v614, 1e-05
      %v631 = vadd.f32 %v615, 1e-05
      %v632 = vadd.f32 %v616, 1e-05
      %v633 = vadd.f32 %v617, 1e-05
      %v634 = vadd.f32 %v618, 1e-05
      %v635 = vadd.f32 %v619, 1e-05
      %v636 = vadd.f32 %v620, 1e-05
      %v637 = vadd.f32 %v621, 1e-05
      %v638 = vrsqrt.pop %v622
      %v639 = vrsqrt.pop %v623
      %v640 = vrsqrt.pop %v624
      %v641 = vrsqrt.pop %v625
      %v642 = vrsqrt.pop %v626
      %v643 = vrsqrt.pop %v627
      %v644 = vrsqrt.pop %v628
      %v645 = vrsqrt.pop %v629
      %v646 = vrsqrt.pop %v630
      %v647 = vrsqrt.pop %v631
      %v648 = vrsqrt.pop %v632
      %v649 = vrsqrt.pop %v633
      %v650 = vrsqrt.pop %v634
      %v651 = vrsqrt.pop %v635
      %v652 = vrsqrt.pop %v636
      %v653 = vrsqrt.pop %v637
      %v654 = vmul.f32 %v526, %v638
      %v655 = vmul.f32 %v527, %v639
      %v656 = vmul.f32 %v528, %v640
      %v657 = vmul.f32 %v529, %v641
      %v658 = vmul.f32 %v530, %v642
      %v659 = vmul.f32 %v531, %v643
      %v660 = vmul.f32 %v532, %v644
      %v661 = vmul.f32 %v533, %v645
      %v662 = vmul.f32 %v534, %v646
      %v663 = vmul.f32 %v535, %v647
      %v664 = vmul.f32 %v536, %v648
      %v665 = vmul.f32 %v537, %v649
      %v666 = vmul.f32 %v538, %v650
      %v667 = vmul.f32 %v539, %v651
      %v668 = vmul.f32 %v540, %v652
      %v669 = vmul.f32 %v541, %v653
      %v671 = vlaneseq
      %v672 = vshrl.u32 %v671, 7
      %v673 = vsub.s32 0, %v672
      %v674 = vrot.slane %v458, %v673
      %v676 = vmul.f32 %v654, %v674
      %v677 = vmul.f32 %v655, %v674
      %v678 = vmul.f32 %v656, %v674
      %v679 = vmul.f32 %v657, %v674
      %v680 = vmul.f32 %v658, %v674
      %v681 = vmul.f32 %v659, %v674
      %v682 = vmul.f32 %v660, %v674
      %v683 = vmul.f32 %v661, %v674
      %v684 = vmul.f32 %v662, %v674
      %v685 = vmul.f32 %v663, %v674
      %v686 = vmul.f32 %v664, %v674
      %v687 = vmul.f32 %v665, %v674
      %v688 = vmul.f32 %v666, %v674
      %v689 = vmul.f32 %v667, %v674
      %v690 = vmul.f32 %v668, %v674
      %v691 = vmul.f32 %v669, %v674
      %v693 = vlaneseq
      %v694 = vshrl.u32 %v693, 7
      %v695 = vsub.s32 0, %v694
      %v696 = vrot.slane %v459, %v695
      %v698 = vadd.f32 %v676, %v696
      %v699 = vadd.f32 %v677, %v696
      %v700 = vadd.f32 %v678, %v696
      %v701 = vadd.f32 %v679, %v696
      %v702 = vadd.f32 %v680, %v696
      %v703 = vadd.f32 %v681, %v696
      %v704 = vadd.f32 %v682, %v696
      %v705 = vadd.f32 %v683, %v696
      %v706 = vadd.f32 %v684, %v696
      %v707 = vadd.f32 %v685, %v696
      %v708 = vadd.f32 %v686, %v696
      %v709 = vadd.f32 %v687, %v696
      %v710 = vadd.f32 %v688, %v696
      %v711 = vadd.f32 %v689, %v696
      %v712 = vadd.f32 %v690, %v696
      %v713 = vadd.f32 %v691, %v696
      %v714 = vpack.c.bf16 %v699, %v698
      %v715 = vpack.c.bf16 %v701, %v700
      %v716 = vpack.c.bf16 %v703, %v702
      %v717 = vpack.c.bf16 %v705, %v704
      %v718 = vpack.c.bf16 %v707, %v706
      %v719 = vpack.c.bf16 %v709, %v708
      %v720 = vpack.c.bf16 %v711, %v710
      %v721 = vpack.c.bf16 %v713, %v712
      %v722 = vld [vmem:[%s3] sm:$0xf]
      %v723 = vld [vmem:[%s3 + $0x4] sm:$0xf]
      %v724 = vld [vmem:[%s3 + $0x8] sm:$0xf]
      %v725 = vld [vmem:[%s3 + $0xc] sm:$0xf]
      %v726 = vld [vmem:[%s4] sm:$0x1]
      %v728 = vlaneseq
      %v729 = vshrl.u32 %v728, 7
      %v730 = vsub.s32 0, %v729
      %v731 = vrot.slane %v726, %v730
      %v737 = vunpack.c.l.b16 %v722
      %v738 = vunpack.c.l.b16 %v723
      %v739 = vunpack.c.l.b16 %v724
      %v740 = vunpack.c.l.b16 %v725
      %v741 = vpack.c.b16 %v738, %v737
      %v742 = vpack.c.b16 %v740, %v739
      %v746 = vsel %vm460, %v714, 0
      %v749 = vsel %vm460, %v715, 0
      %v752 = vsel %vm460, %v716, 0
      %v755 = vsel %vm460, %v717, 0
      %v758 = vsel %vm460, %v718, 0
      %v761 = vsel %vm460, %v719, 0
      %v764 = vsel %vm460, %v720, 0
      %v767 = vsel %vm460, %v721, 0
      %769 = vmatprep.subr.bf16.mxu0 0
      %770 = vmatpush1.bf16.msra.mxu0 0
      %771 = vmatprep.subr.bf16.mxu0 0
      %772 = vmatpush1.bf16.msra.mxu0 0
      %773 = vmatprep.subr.bf16.mxu0 0
      %774 = vmatpush1.bf16.msra.mxu0 0
      %775 = vmatprep.subr.bf16.mxu0 0
      %776 = vmatpush1.bf16.msra.mxu0 0
      %777 = vmatprep.subr.bf16.mxu0 0
      %778 = vmatpush1.bf16.msra.mxu0 0
      %779 = vmatprep.subr.bf16.mxu0 0
      %780 = vmatpush1.bf16.msra.mxu0 0
      %781 = vmatprep.subr.bf16.mxu0 0
      %782 = vmatpush1.bf16.msra.mxu0 %v742
      %783 = vmatprep.subr.bf16.mxu0 0
      %784 = vmatpush1.bf16.msra.mxu0 %v741
      %785 = vmatprep.subr.bf16.mxu0 0
      %786 = vmatpush2.bf16.msra.mxu0 0
      %787 = vmatprep.subr.bf16.mxu0 0
      %788 = vmatpush2.bf16.msra.mxu0 0
      %789 = vmatprep.subr.bf16.mxu0 0
      %790 = vmatpush2.bf16.msra.mxu0 0
      %791 = vmatprep.subr.bf16.mxu0 0
      %792 = vmatpush2.bf16.msra.mxu0 0
      %793 = vmatprep.subr.bf16.mxu0 0
      %794 = vmatpush2.bf16.msra.mxu0 0
      %795 = vmatprep.subr.bf16.mxu0 0
      %796 = vmatpush2.bf16.msra.mxu0 0
      %797 = vmatprep.subr.bf16.mxu0 0
      %798 = vmatpush2.bf16.msra.mxu0 0
      %799 = vmatprep.subr.bf16.mxu0 0
      %800 = vmatpush2.bf16.msra.mxu0 0
      %801 = vmatprep.mubr.bf16.mxu0 0
      %802 = vmatmul.mubr.bf16.gmra.mxu0 %v746
      %v803 = vpop.f32.mrf.mxu0
      %v804 = vadd.f32 %v731, %v803
      %v805 = vpop.f32.mrf.mxu0
      %v806 = vpop.f32.mrf.mxu0
      %v807 = vadd.f32 %v731, %v806
      %v808 = vpop.f32.mrf.mxu0
      %809 = vmatprep.mubr.bf16.mxu0 0
      %810 = vmatmul.mubr.bf16.gmra.mxu0 %v749
      %v811 = vpop.f32.mrf.mxu0
      %v812 = vadd.f32 %v731, %v811
      %v813 = vpop.f32.mrf.mxu0
      %v814 = vpop.f32.mrf.mxu0
      %v815 = vadd.f32 %v731, %v814
      %v816 = vpop.f32.mrf.mxu0
      %817 = vmatprep.mubr.bf16.mxu0 0
      %818 = vmatmul.mubr.bf16.gmra.mxu0 %v752
      %v819 = vpop.f32.mrf.mxu0
      %v820 = vadd.f32 %v731, %v819
      %v821 = vpop.f32.mrf.mxu0
      %v822 = vpop.f32.mrf.mxu0
      %v823 = vadd.f32 %v731, %v822
      %v824 = vpop.f32.mrf.mxu0
      %825 = vmatprep.mubr.bf16.mxu0 0
      %826 = vmatmul.mubr.bf16.gmra.mxu0 %v755
      %v827 = vpop.f32.mrf.mxu0
      %v828 = vadd.f32 %v731, %v827
      %v829 = vpop.f32.mrf.mxu0
      %v830 = vpop.f32.mrf.mxu0
      %v831 = vadd.f32 %v731, %v830
      %v832 = vpop.f32.mrf.mxu0
      %833 = vmatprep.mubr.bf16.mxu0 0
      %834 = vmatmul.mubr.bf16.gmra.mxu0 %v758
      %v835 = vpop.f32.mrf.mxu0
      %v836 = vadd.f32 %v731, %v835
      %v837 = vpop.f32.mrf.mxu0
      %v838 = vpop.f32.mrf.mxu0
      %v839 = vadd.f32 %v731, %v838
      %v840 = vpop.f32.mrf.mxu0
      %841 = vmatprep.mubr.bf16.mxu0 0
      %842 = vmatmul.mubr.bf16.gmra.mxu0 %v761
      %v843 = vpop.f32.mrf.mxu0
      %v844 = vadd.f32 %v731, %v843
      %v845 = vpop.f32.mrf.mxu0
      %v846 = vpop.f32.mrf.mxu0
      %v847 = vadd.f32 %v731, %v846
      %v848 = vpop.f32.mrf.mxu0
      %849 = vmatprep.mubr.bf16.mxu0 0
      %850 = vmatmul.mubr.bf16.gmra.mxu0 %v764
      %v851 = vpop.f32.mrf.mxu0
      %v852 = vadd.f32 %v731, %v851
      %v853 = vpop.f32.mrf.mxu0
      %v854 = vpop.f32.mrf.mxu0
      %v855 = vadd.f32 %v731, %v854
      %v856 = vpop.f32.mrf.mxu0
      %857 = vmatprep.mubr.bf16.mxu0 0
      %858 = vmatmul.mubr.bf16.gmra.mxu0 %v767
      %v859 = vpop.f32.mrf.mxu0
      %v860 = vadd.f32 %v731, %v859
      %v861 = vpop.f32.mrf.mxu0
      %v862 = vpop.f32.mrf.mxu0
      %v863 = vadd.f32 %v731, %v862
      %v864 = vpop.f32.mrf.mxu0
      %865 = vdwg.mxu0
      %v866 = vpack.c.bf16 %v807, %v804
      %v867 = vpack.c.bf16 %v815, %v812
      %v868 = vpack.c.bf16 %v823, %v820
      %v869 = vpack.c.bf16 %v831, %v828
      %v870 = vpack.c.bf16 %v839, %v836
      %v871 = vpack.c.bf16 %v847, %v844
      %v872 = vpack.c.bf16 %v855, %v852
      %v873 = vpack.c.bf16 %v863, %v860
      %v874 = vlaneseq
      %v875 = vand.u32 %v874, 127
      %vm876 = vcmp.lt.s32.totalorder %v875, 8
      %v877 = vsel %vm876, 0.0, -1e+30
      %v878 = vld [vmem:[%s6] sm:$0x1]
      %v880 = vlaneseq
      %v881 = vshrl.u32 %v880, 7
      %v882 = vsub.s32 0, %v881
      %v883 = vrot.slane %v878, %v882
      %v885 = vadd.f32 %v883, 0.0
      %894 = vrot.lane.b32.xlu0 %v866, 96
      %v895 = vpop.permute.xlu0 %894
      %896 = vrot.lane.b32.xlu0 %v867, 96
      %v897 = vpop.permute.xlu0 %896
      %898 = vrot.lane.b32.xlu0 %v868, 96
      %v899 = vpop.permute.xlu0 %898
      %900 = vrot.lane.b32.xlu0 %v869, 96
      %v901 = vpop.permute.xlu0 %900
      %902 = vrot.lane.b32.xlu0 %v870, 96
      %v903 = vpop.permute.xlu0 %902
      %904 = vrot.lane.b32.xlu0 %v871, 96
      %v905 = vpop.permute.xlu0 %904
      %906 = vrot.lane.b32.xlu0 %v872, 96
      %v907 = vpop.permute.xlu0 %906
      %908 = vrot.lane.b32.xlu0 %v873, 96
      %v909 = vpop.permute.xlu0 %908
      %vm910 = vcmask 64512
      %v912 = vsel %vm910, %v866, 0
      %v915 = vsel %vm910, %v867, 0
      %v918 = vsel %vm910, %v868, 0
      %v921 = vsel %vm910, %v869, 0
      %v924 = vsel %vm910, %v870, 0
      %v927 = vsel %vm910, %v871, 0
      %v930 = vsel %vm910, %v872, 0
      %v933 = vsel %vm910, %v873, 0
      %v936 = vsel %vm910, %v895, 0
      %v939 = vsel %vm910, %v897, 0
      %v942 = vsel %vm910, %v899, 0
      %v945 = vsel %vm910, %v901, 0
      %v948 = vsel %vm910, %v903, 0
      %v951 = vsel %vm910, %v905, 0
      %v954 = vsel %vm910, %v907, 0
      %v957 = vsel %vm910, %v909, 0
      %959 = vmatprep.subr.bf16.mxu0 0
      %960 = vmatpush1.bf16.xpose.msra.mxu0 %v957
      %961 = vmatprep.subr.bf16.mxu0 0
      %962 = vmatpush1.bf16.xpose.msra.mxu0 %v954
      %963 = vmatprep.subr.bf16.mxu0 0
      %964 = vmatpush1.bf16.xpose.msra.mxu0 %v951
      %965 = vmatprep.subr.bf16.mxu0 0
      %966 = vmatpush1.bf16.xpose.msra.mxu0 %v948
      %967 = vmatprep.subr.bf16.mxu0 0
      %968 = vmatpush1.bf16.xpose.msra.mxu0 %v945
      %969 = vmatprep.subr.bf16.mxu0 0
      %970 = vmatpush1.bf16.xpose.msra.mxu0 %v942
      %971 = vmatprep.subr.bf16.mxu0 0
      %972 = vmatpush1.bf16.xpose.msra.mxu0 %v939
      %973 = vmatprep.subr.bf16.mxu0 0
      %974 = vmatpush1.bf16.xpose.msra.mxu0 %v936
      %975 = vmatprep.subr.bf16.mxu0 0
      %976 = vmatpush2.bf16.xpose.msra.mxu0 0
      %977 = vmatprep.subr.bf16.mxu0 0
      %978 = vmatpush2.bf16.xpose.msra.mxu0 0
      %979 = vmatprep.subr.bf16.mxu0 0
      %980 = vmatpush2.bf16.xpose.msra.mxu0 0
      %981 = vmatprep.subr.bf16.mxu0 0
      %982 = vmatpush2.bf16.xpose.msra.mxu0 0
      %983 = vmatprep.subr.bf16.mxu0 0
      %984 = vmatpush2.bf16.xpose.msra.mxu0 0
      %985 = vmatprep.subr.bf16.mxu0 0
      %986 = vmatpush2.bf16.xpose.msra.mxu0 0
      %987 = vmatprep.subr.bf16.mxu0 0
      %988 = vmatpush2.bf16.xpose.msra.mxu0 0
      %989 = vmatprep.subr.bf16.mxu0 0
      %990 = vmatpush2.bf16.xpose.msra.mxu0 0
      %991 = vmatprep.mubr.bf16.mxu0 0
      %992 = vmatmul.mubr.bf16.gmra.mxu0 %v912
      %v993 = vpop.f32.mrf.mxu0
      %v994 = vadd.f32 %v877, %v993
      %v995 = vpop.f32.mrf.mxu0
      %v996 = vpop.f32.mrf.mxu0
      %v997 = vadd.f32 %v877, %v996
      %v998 = vpop.f32.mrf.mxu0
      %999 = vmatprep.mubr.bf16.mxu0 0
      %1000 = vmatmul.mubr.bf16.gmra.mxu0 %v915
      %v1001 = vpop.f32.mrf.mxu0
      %v1002 = vadd.f32 %v877, %v1001
      %v1003 = vpop.f32.mrf.mxu0
      %v1004 = vpop.f32.mrf.mxu0
      %v1005 = vadd.f32 %v877, %v1004
      %v1006 = vpop.f32.mrf.mxu0
      %1007 = vmatprep.mubr.bf16.mxu0 0
      %1008 = vmatmul.mubr.bf16.gmra.mxu0 %v918
      %v1009 = vpop.f32.mrf.mxu0
      %v1010 = vadd.f32 %v877, %v1009
      %v1011 = vpop.f32.mrf.mxu0
      %v1012 = vpop.f32.mrf.mxu0
      %v1013 = vadd.f32 %v877, %v1012
      %v1014 = vpop.f32.mrf.mxu0
      %1015 = vmatprep.mubr.bf16.mxu0 0
      %1016 = vmatmul.mubr.bf16.gmra.mxu0 %v921
      %v1017 = vpop.f32.mrf.mxu0
      %v1018 = vadd.f32 %v877, %v1017
      %v1019 = vpop.f32.mrf.mxu0
      %v1020 = vpop.f32.mrf.mxu0
      %v1021 = vadd.f32 %v877, %v1020
      %v1022 = vpop.f32.mrf.mxu0
      %1023 = vmatprep.mubr.bf16.mxu0 0
      %1024 = vmatmul.mubr.bf16.gmra.mxu0 %v924
      %v1025 = vpop.f32.mrf.mxu0
      %v1026 = vadd.f32 %v877, %v1025
      %v1027 = vpop.f32.mrf.mxu0
      %v1028 = vpop.f32.mrf.mxu0
      %v1029 = vadd.f32 %v877, %v1028
      %v1030 = vpop.f32.mrf.mxu0
      %1031 = vmatprep.mubr.bf16.mxu0 0
      %1032 = vmatmul.mubr.bf16.gmra.mxu0 %v927
      %v1033 = vpop.f32.mrf.mxu0
      %v1034 = vadd.f32 %v877, %v1033
      %v1035 = vpop.f32.mrf.mxu0
      %v1036 = vpop.f32.mrf.mxu0
      %v1037 = vadd.f32 %v877, %v1036
      %v1038 = vpop.f32.mrf.mxu0
      %1039 = vmatprep.mubr.bf16.mxu0 0
      %1040 = vmatmul.mubr.bf16.gmra.mxu0 %v930
      %v1041 = vpop.f32.mrf.mxu0
      %v1042 = vadd.f32 %v877, %v1041
      %v1043 = vpop.f32.mrf.mxu0
      %v1044 = vpop.f32.mrf.mxu0
      %v1045 = vadd.f32 %v877, %v1044
      %v1046 = vpop.f32.mrf.mxu0
      %1047 = vmatprep.mubr.bf16.mxu0 0
      %1048 = vmatmul.mubr.bf16.gmra.mxu0 %v933
      %v1049 = vpop.f32.mrf.mxu0
      %v1050 = vadd.f32 %v877, %v1049
      %v1051 = vpop.f32.mrf.mxu0
      %v1052 = vpop.f32.mrf.mxu0
      %v1053 = vadd.f32 %v877, %v1052
      %v1054 = vpop.f32.mrf.mxu0
      %1055 = vdwg.mxu0
      %1056 = vmax.xlane.f32.xlu0 %v994
      %v1057 = vpop.xlane.xlu0 %1056
      %1058 = vmax.xlane.f32.xlu0 %v997
      %v1059 = vpop.xlane.xlu0 %1058
      %1060 = vmax.xlane.f32.xlu0 %v1002
      %v1061 = vpop.xlane.xlu0 %1060
      %1062 = vmax.xlane.f32.xlu0 %v1005
      %v1063 = vpop.xlane.xlu0 %1062
      %1064 = vmax.xlane.f32.xlu0 %v1010
      %v1065 = vpop.xlane.xlu0 %1064
      %1066 = vmax.xlane.f32.xlu0 %v1013
      %v1067 = vpop.xlane.xlu0 %1066
      %1068 = vmax.xlane.f32.xlu0 %v1018
      %v1069 = vpop.xlane.xlu0 %1068
      %1070 = vmax.xlane.f32.xlu0 %v1021
      %v1071 = vpop.xlane.xlu0 %1070
      %1072 = vmax.xlane.f32.xlu0 %v1026
      %v1073 = vpop.xlane.xlu0 %1072
      %1074 = vmax.xlane.f32.xlu0 %v1029
      %v1075 = vpop.xlane.xlu0 %1074
      %1076 = vmax.xlane.f32.xlu0 %v1034
      %v1077 = vpop.xlane.xlu0 %1076
      %1078 = vmax.xlane.f32.xlu0 %v1037
      %v1079 = vpop.xlane.xlu0 %1078
      %1080 = vmax.xlane.f32.xlu0 %v1042
      %v1081 = vpop.xlane.xlu0 %1080
      %1082 = vmax.xlane.f32.xlu0 %v1045
      %v1083 = vpop.xlane.xlu0 %1082
      %1084 = vmax.xlane.f32.xlu0 %v1050
      %v1085 = vpop.xlane.xlu0 %1084
      %1086 = vmax.xlane.f32.xlu0 %v1053
      %v1087 = vpop.xlane.xlu0 %1086
      %v1088 = vsub.f32 %v994, %v1057
      %v1089 = vsub.f32 %v997, %v1059
      %v1090 = vsub.f32 %v1002, %v1061
      %v1091 = vsub.f32 %v1005, %v1063
      %v1092 = vsub.f32 %v1010, %v1065
      %v1093 = vsub.f32 %v1013, %v1067
      %v1094 = vsub.f32 %v1018, %v1069
      %v1095 = vsub.f32 %v1021, %v1071
      %v1096 = vsub.f32 %v1026, %v1073
      %v1097 = vsub.f32 %v1029, %v1075
      %v1098 = vsub.f32 %v1034, %v1077
      %v1099 = vsub.f32 %v1037, %v1079
      %v1100 = vsub.f32 %v1042, %v1081
      %v1101 = vsub.f32 %v1045, %v1083
      %v1102 = vsub.f32 %v1050, %v1085
      %v1103 = vsub.f32 %v1053, %v1087
      %v1104 = vmul.f32 %v1088, 1.442695
      %v1105 = vpow.pop %v1104
      %v1106 = vmul.f32 %v1089, 1.442695
      %v1107 = vpow.pop %v1106
      %v1108 = vmul.f32 %v1090, 1.442695
      %v1109 = vpow.pop %v1108
      %v1110 = vmul.f32 %v1091, 1.442695
      %v1111 = vpow.pop %v1110
      %v1112 = vmul.f32 %v1092, 1.442695
      %v1113 = vpow.pop %v1112
      %v1114 = vmul.f32 %v1093, 1.442695
      %v1115 = vpow.pop %v1114
      %v1116 = vmul.f32 %v1094, 1.442695
      %v1117 = vpow.pop %v1116
      %v1118 = vmul.f32 %v1095, 1.442695
      %v1119 = vpow.pop %v1118
      %v1120 = vmul.f32 %v1096, 1.442695
      %v1121 = vpow.pop %v1120
      %v1122 = vmul.f32 %v1097, 1.442695
      %v1123 = vpow.pop %v1122
      %v1124 = vmul.f32 %v1098, 1.442695
      %v1125 = vpow.pop %v1124
      %v1126 = vmul.f32 %v1099, 1.442695
      %v1127 = vpow.pop %v1126
      %v1128 = vmul.f32 %v1100, 1.442695
      %v1129 = vpow.pop %v1128
      %v1130 = vmul.f32 %v1101, 1.442695
      %v1131 = vpow.pop %v1130
      %v1132 = vmul.f32 %v1102, 1.442695
      %v1133 = vpow.pop %v1132
      %v1134 = vmul.f32 %v1103, 1.442695
      %v1135 = vpow.pop %v1134
      %1136 = vadd.xlane.f32.xlu0 %v1105
      %v1137 = vpop.xlane.xlu0 %1136
      %1138 = vadd.xlane.f32.xlu0 %v1107
      %v1139 = vpop.xlane.xlu0 %1138
      %1140 = vadd.xlane.f32.xlu0 %v1109
      %v1141 = vpop.xlane.xlu0 %1140
      %1142 = vadd.xlane.f32.xlu0 %v1111
      %v1143 = vpop.xlane.xlu0 %1142
      %1144 = vadd.xlane.f32.xlu0 %v1113
      %v1145 = vpop.xlane.xlu0 %1144
      %1146 = vadd.xlane.f32.xlu0 %v1115
      %v1147 = vpop.xlane.xlu0 %1146
      %1148 = vadd.xlane.f32.xlu0 %v1117
      %v1149 = vpop.xlane.xlu0 %1148
      %1150 = vadd.xlane.f32.xlu0 %v1119
      %v1151 = vpop.xlane.xlu0 %1150
      %1152 = vadd.xlane.f32.xlu0 %v1121
      %v1153 = vpop.xlane.xlu0 %1152
      %1154 = vadd.xlane.f32.xlu0 %v1123
      %v1155 = vpop.xlane.xlu0 %1154
      %1156 = vadd.xlane.f32.xlu0 %v1125
      %v1157 = vpop.xlane.xlu0 %1156
      %1158 = vadd.xlane.f32.xlu0 %v1127
      %v1159 = vpop.xlane.xlu0 %1158
      %1160 = vadd.xlane.f32.xlu0 %v1129
      %v1161 = vpop.xlane.xlu0 %1160
      %1162 = vadd.xlane.f32.xlu0 %v1131
      %v1163 = vpop.xlane.xlu0 %1162
      %1164 = vadd.xlane.f32.xlu0 %v1133
      %v1165 = vpop.xlane.xlu0 %1164
      %1166 = vadd.xlane.f32.xlu0 %v1135
      %v1167 = vpop.xlane.xlu0 %1166
      %v1168 = vrcp.pop %v1137
      %v1169 = vrcp.pop %v1139
      %v1170 = vrcp.pop %v1141
      %v1171 = vrcp.pop %v1143
      %v1172 = vrcp.pop %v1145
      %v1173 = vrcp.pop %v1147
      %v1174 = vrcp.pop %v1149
      %v1175 = vrcp.pop %v1151
      %v1176 = vrcp.pop %v1153
      %v1177 = vrcp.pop %v1155
      %v1178 = vrcp.pop %v1157
      %v1179 = vrcp.pop %v1159
      %v1180 = vrcp.pop %v1161
      %v1181 = vrcp.pop %v1163
      %v1182 = vrcp.pop %v1165
      %v1183 = vrcp.pop %v1167
      %v1184 = vmul.f32 %v1105, %v1168
      %v1185 = vmul.f32 %v1107, %v1169
      %v1186 = vmul.f32 %v1109, %v1170
      %v1187 = vmul.f32 %v1111, %v1171
      %v1188 = vmul.f32 %v1113, %v1172
      %v1189 = vmul.f32 %v1115, %v1173
      %v1190 = vmul.f32 %v1117, %v1174
      %v1191 = vmul.f32 %v1119, %v1175
      %v1192 = vmul.f32 %v1121, %v1176
      %v1193 = vmul.f32 %v1123, %v1177
      %v1194 = vmul.f32 %v1125, %v1178
      %v1195 = vmul.f32 %v1127, %v1179
      %v1196 = vmul.f32 %v1129, %v1180
      %v1197 = vmul.f32 %v1131, %v1181
      %v1198 = vmul.f32 %v1133, %v1182
      %v1199 = vmul.f32 %v1135, %v1183
      %v1200 = vpack.c.bf16 %v1185, %v1184
      %v1201 = vpack.c.bf16 %v1187, %v1186
      %v1202 = vpack.c.bf16 %v1189, %v1188
      %v1203 = vpack.c.bf16 %v1191, %v1190
      %v1204 = vpack.c.bf16 %v1193, %v1192
      %v1205 = vpack.c.bf16 %v1195, %v1194
      %v1206 = vpack.c.bf16 %v1197, %v1196
      %v1207 = vpack.c.bf16 %v1199, %v1198
      %1208 = vrot.lane.b32.xlu0 %v866, 64
      %v1209 = vpop.permute.xlu0 %1208
      %1210 = vrot.lane.b32.xlu0 %v867, 64
      %v1211 = vpop.permute.xlu0 %1210
      %1212 = vrot.lane.b32.xlu0 %v868, 64
      %v1213 = vpop.permute.xlu0 %1212
      %1214 = vrot.lane.b32.xlu0 %v869, 64
      %v1215 = vpop.permute.xlu0 %1214
      %1216 = vrot.lane.b32.xlu0 %v870, 64
      %v1217 = vpop.permute.xlu0 %1216
      %1218 = vrot.lane.b32.xlu0 %v871, 64
      %v1219 = vpop.permute.xlu0 %1218
      %1220 = vrot.lane.b32.xlu0 %v872, 64
      %v1221 = vpop.permute.xlu0 %1220
      %1222 = vrot.lane.b32.xlu0 %v873, 64
      %v1223 = vpop.permute.xlu0 %1222
      %1232 = vmatprep.subr.bf16.mxu0 0
      %1233 = vmatpush1.bf16.msra.mxu0 %v1223
      %1234 = vmatprep.subr.bf16.mxu0 0
      %1235 = vmatpush1.bf16.msra.mxu0 %v1221
      %1236 = vmatprep.subr.bf16.mxu0 0
      %1237 = vmatpush1.bf16.msra.mxu0 %v1219
      %1238 = vmatprep.subr.bf16.mxu0 0
      %1239 = vmatpush1.bf16.msra.mxu0 %v1217
      %1240 = vmatprep.subr.bf16.mxu0 0
      %1241 = vmatpush1.bf16.msra.mxu0 %v1215
      %1242 = vmatprep.subr.bf16.mxu0 0
      %1243 = vmatpush1.bf16.msra.mxu0 %v1213
      %1244 = vmatprep.subr.bf16.mxu0 0
      %1245 = vmatpush1.bf16.msra.mxu0 %v1211
      %1246 = vmatprep.subr.bf16.mxu0 0
      %1247 = vmatpush1.bf16.msra.mxu0 %v1209
      %1248 = vmatprep.subr.bf16.mxu0 0
      %1249 = vmatpush2.bf16.msra.mxu0 0
      %1250 = vmatprep.subr.bf16.mxu0 0
      %1251 = vmatpush2.bf16.msra.mxu0 0
      %1252 = vmatprep.subr.bf16.mxu0 0
      %1253 = vmatpush2.bf16.msra.mxu0 0
      %1254 = vmatprep.subr.bf16.mxu0 0
      %1255 = vmatpush2.bf16.msra.mxu0 0
      %1256 = vmatprep.subr.bf16.mxu0 0
      %1257 = vmatpush2.bf16.msra.mxu0 0
      %1258 = vmatprep.subr.bf16.mxu0 0
      %1259 = vmatpush2.bf16.msra.mxu0 0
      %1260 = vmatprep.subr.bf16.mxu0 0
      %1261 = vmatpush2.bf16.msra.mxu0 0
      %1262 = vmatprep.subr.bf16.mxu0 0
      %1263 = vmatpush2.bf16.msra.mxu0 0
      %1264 = vmatprep.mubr.bf16.mxu0 0
      %1265 = vmatmul.mubr.bf16.gmra.mxu0 %v1200
      %v1266 = vpop.f32.mrf.mxu0
      %v1267 = vadd.f32 0.0, %v1266
      %v1268 = vpop.f32.mrf.mxu0
      %v1269 = vpop.f32.mrf.mxu0
      %v1270 = vadd.f32 0.0, %v1269
      %v1271 = vpop.f32.mrf.mxu0
      %1272 = vmatprep.mubr.bf16.mxu0 0
      %1273 = vmatmul.mubr.bf16.gmra.mxu0 %v1201
      %v1274 = vpop.f32.mrf.mxu0
      %v1275 = vadd.f32 0.0, %v1274
      %v1276 = vpop.f32.mrf.mxu0
      %v1277 = vpop.f32.mrf.mxu0
      %v1278 = vadd.f32 0.0, %v1277
      %v1279 = vpop.f32.mrf.mxu0
      %1280 = vmatprep.mubr.bf16.mxu0 0
      %1281 = vmatmul.mubr.bf16.gmra.mxu0 %v1202
      %v1282 = vpop.f32.mrf.mxu0
      %v1283 = vadd.f32 0.0, %v1282
      %v1284 = vpop.f32.mrf.mxu0
      %v1285 = vpop.f32.mrf.mxu0
      %v1286 = vadd.f32 0.0, %v1285
      %v1287 = vpop.f32.mrf.mxu0
      %1288 = vmatprep.mubr.bf16.mxu0 0
      %1289 = vmatmul.mubr.bf16.gmra.mxu0 %v1203
      %v1290 = vpop.f32.mrf.mxu0
      %v1291 = vadd.f32 0.0, %v1290
      %v1292 = vpop.f32.mrf.mxu0
      %v1293 = vpop.f32.mrf.mxu0
      %v1294 = vadd.f32 0.0, %v1293
      %v1295 = vpop.f32.mrf.mxu0
      %1296 = vmatprep.mubr.bf16.mxu0 0
      %1297 = vmatmul.mubr.bf16.gmra.mxu0 %v1204
      %v1298 = vpop.f32.mrf.mxu0
      %v1299 = vadd.f32 0.0, %v1298
      %v1300 = vpop.f32.mrf.mxu0
      %v1301 = vpop.f32.mrf.mxu0
      %v1302 = vadd.f32 0.0, %v1301
      %v1303 = vpop.f32.mrf.mxu0
      %1304 = vmatprep.mubr.bf16.mxu0 0
      %1305 = vmatmul.mubr.bf16.gmra.mxu0 %v1205
      %v1306 = vpop.f32.mrf.mxu0
      %v1307 = vadd.f32 0.0, %v1306
      %v1308 = vpop.f32.mrf.mxu0
      %v1309 = vpop.f32.mrf.mxu0
      %v1310 = vadd.f32 0.0, %v1309
      %v1311 = vpop.f32.mrf.mxu0
      %1312 = vmatprep.mubr.bf16.mxu0 0
      %1313 = vmatmul.mubr.bf16.gmra.mxu0 %v1206
      %v1314 = vpop.f32.mrf.mxu0
      %v1315 = vadd.f32 0.0, %v1314
      %v1316 = vpop.f32.mrf.mxu0
      %v1317 = vpop.f32.mrf.mxu0
      %v1318 = vadd.f32 0.0, %v1317
      %v1319 = vpop.f32.mrf.mxu0
      %1320 = vmatprep.mubr.bf16.mxu0 0
      %1321 = vmatmul.mubr.bf16.gmra.mxu0 %v1207
      %v1322 = vpop.f32.mrf.mxu0
      %v1323 = vadd.f32 0.0, %v1322
      %v1324 = vpop.f32.mrf.mxu0
      %v1325 = vpop.f32.mrf.mxu0
      %v1326 = vadd.f32 0.0, %v1325
      %v1327 = vpop.f32.mrf.mxu0
      %1328 = vdwg.mxu0
      %v1329 = vpack.c.bf16 %v1270, %v1267
      %v1330 = vpack.c.bf16 %v1278, %v1275
      %v1331 = vpack.c.bf16 %v1286, %v1283
      %v1332 = vpack.c.bf16 %v1294, %v1291
      %v1333 = vpack.c.bf16 %v1302, %v1299
      %v1334 = vpack.c.bf16 %v1310, %v1307
      %v1335 = vpack.c.bf16 %v1318, %v1315
      %v1336 = vpack.c.bf16 %v1326, %v1323
      %v1337 = vld [vmem:[%s5] sm:$0xf]
      %v1339 = vsel %vm910, %v1329, 0
      %v1342 = vsel %vm910, %v1330, 0
      %v1345 = vsel %vm910, %v1331, 0
      %v1348 = vsel %vm910, %v1332, 0
      %v1351 = vsel %vm910, %v1333, 0
      %v1354 = vsel %vm910, %v1334, 0
      %v1357 = vsel %vm910, %v1335, 0
      %v1360 = vsel %vm910, %v1336, 0
      %vm1362 = vcmask 1043456
      %v1364 = vsel %vm1362, %v1337, 0
      %1366 = vmatprep.subr.bf16.mxu0 0
      %1367 = vmatpush1.bf16.msra.mxu0 0
      %1368 = vmatprep.subr.bf16.mxu0 0
      %1369 = vmatpush1.bf16.msra.mxu0 0
      %1370 = vmatprep.subr.bf16.mxu0 0
      %1371 = vmatpush1.bf16.msra.mxu0 0
      %1372 = vmatprep.subr.bf16.mxu0 0
      %1373 = vmatpush1.bf16.msra.mxu0 0
      %1374 = vmatprep.subr.bf16.mxu0 0
      %1375 = vmatpush1.bf16.msra.mxu0 0
      %1376 = vmatprep.subr.bf16.mxu0 0
      %1377 = vmatpush1.bf16.msra.mxu0 0
      %1378 = vmatprep.subr.bf16.mxu0 0
      %1379 = vmatpush1.bf16.msra.mxu0 0
      %1380 = vmatprep.subr.bf16.mxu0 0
      %1381 = vmatpush1.bf16.msra.mxu0 %v1364
      %1382 = vmatprep.subr.bf16.mxu0 0
      %1383 = vmatpush2.bf16.msra.mxu0 0
      %1384 = vmatprep.subr.bf16.mxu0 0
      %1385 = vmatpush2.bf16.msra.mxu0 0
      %1386 = vmatprep.subr.bf16.mxu0 0
      %1387 = vmatpush2.bf16.msra.mxu0 0
      %1388 = vmatprep.subr.bf16.mxu0 0
      %1389 = vmatpush2.bf16.msra.mxu0 0
      %1390 = vmatprep.subr.bf16.mxu0 0
      %1391 = vmatpush2.bf16.msra.mxu0 0
      %1392 = vmatprep.subr.bf16.mxu0 0
      %1393 = vmatpush2.bf16.msra.mxu0 0
      %1394 = vmatprep.subr.bf16.mxu0 0
      %1395 = vmatpush2.bf16.msra.mxu0 0
      %1396 = vmatprep.subr.bf16.mxu0 0
      %1397 = vmatpush2.bf16.msra.mxu0 0
      %1398 = vmatprep.mubr.bf16.mxu0 0
      %1399 = vmatmul.mubr.bf16.gmra.mxu0 %v1339
      %v1400 = vpop.f32.mrf.mxu0
      %v1401 = vadd.f32 0.0, %v1400
      %v1402 = vpop.f32.mrf.mxu0
      %v1403 = vpop.f32.mrf.mxu0
      %v1404 = vadd.f32 0.0, %v1403
      %v1405 = vpop.f32.mrf.mxu0
      %1406 = vmatprep.mubr.bf16.mxu0 0
      %1407 = vmatmul.mubr.bf16.gmra.mxu0 %v1342
      %v1408 = vpop.f32.mrf.mxu0
      %v1409 = vadd.f32 0.0, %v1408
      %v1410 = vpop.f32.mrf.mxu0
      %v1411 = vpop.f32.mrf.mxu0
      %v1412 = vadd.f32 0.0, %v1411
      %v1413 = vpop.f32.mrf.mxu0
      %1414 = vmatprep.mubr.bf16.mxu0 0
      %1415 = vmatmul.mubr.bf16.gmra.mxu0 %v1345
      %v1416 = vpop.f32.mrf.mxu0
      %v1417 = vadd.f32 0.0, %v1416
      %v1418 = vpop.f32.mrf.mxu0
      %v1419 = vpop.f32.mrf.mxu0
      %v1420 = vadd.f32 0.0, %v1419
      %v1421 = vpop.f32.mrf.mxu0
      %1422 = vmatprep.mubr.bf16.mxu0 0
      %1423 = vmatmul.mubr.bf16.gmra.mxu0 %v1348
      %v1424 = vpop.f32.mrf.mxu0
      %v1425 = vadd.f32 0.0, %v1424
      %v1426 = vpop.f32.mrf.mxu0
      %v1427 = vpop.f32.mrf.mxu0
      %v1428 = vadd.f32 0.0, %v1427
      %v1429 = vpop.f32.mrf.mxu0
      %1430 = vmatprep.mubr.bf16.mxu0 0
      %1431 = vmatmul.mubr.bf16.gmra.mxu0 %v1351
      %v1432 = vpop.f32.mrf.mxu0
      %v1433 = vadd.f32 0.0, %v1432
      %v1434 = vpop.f32.mrf.mxu0
      %v1435 = vpop.f32.mrf.mxu0
      %v1436 = vadd.f32 0.0, %v1435
      %v1437 = vpop.f32.mrf.mxu0
      %1438 = vmatprep.mubr.bf16.mxu0 0
      %1439 = vmatmul.mubr.bf16.gmra.mxu0 %v1354
      %v1440 = vpop.f32.mrf.mxu0
      %v1441 = vadd.f32 0.0, %v1440
      %v1442 = vpop.f32.mrf.mxu0
      %v1443 = vpop.f32.mrf.mxu0
      %v1444 = vadd.f32 0.0, %v1443
      %v1445 = vpop.f32.mrf.mxu0
      %1446 = vmatprep.mubr.bf16.mxu0 0
      %1447 = vmatmul.mubr.bf16.gmra.mxu0 %v1357
      %v1448 = vpop.f32.mrf.mxu0
      %v1449 = vadd.f32 0.0, %v1448
      %v1450 = vpop.f32.mrf.mxu0
      %v1451 = vpop.f32.mrf.mxu0
      %v1452 = vadd.f32 0.0, %v1451
      %v1453 = vpop.f32.mrf.mxu0
      %1454 = vmatprep.mubr.bf16.mxu0 0
      %1455 = vmatmul.mubr.bf16.gmra.mxu0 %v1360
      %v1456 = vpop.f32.mrf.mxu0
      %v1457 = vadd.f32 0.0, %v1456
      %v1458 = vpop.f32.mrf.mxu0
      %v1459 = vpop.f32.mrf.mxu0
      %v1460 = vadd.f32 0.0, %v1459
      %v1461 = vpop.f32.mrf.mxu0
      %1462 = vdwg.mxu0
      %v1463 = vadd.f32 %v885, %v1401
      %v1464 = vadd.f32 %v885, %v1404
      %v1465 = vadd.f32 %v885, %v1409
      %v1466 = vadd.f32 %v885, %v1412
      %v1467 = vadd.f32 %v885, %v1417
      %v1468 = vadd.f32 %v885, %v1420
      %v1469 = vadd.f32 %v885, %v1425
      %v1470 = vadd.f32 %v885, %v1428
      %v1471 = vadd.f32 %v885, %v1433
      %v1472 = vadd.f32 %v885, %v1436
      %v1473 = vadd.f32 %v885, %v1441
      %v1474 = vadd.f32 %v885, %v1444
      %v1475 = vadd.f32 %v885, %v1449
      %v1476 = vadd.f32 %v885, %v1452
      %v1477 = vadd.f32 %v885, %v1457
      %v1478 = vadd.f32 %v885, %v1460
      %1479 = vrot.lane.b32.xlu0 %v866, 120
      %v1480 = vpop.permute.xlu0 %1479
      %1481 = vrot.lane.b32.xlu0 %v867, 120
      %v1482 = vpop.permute.xlu0 %1481
      %1483 = vrot.lane.b32.xlu0 %v868, 120
      %v1484 = vpop.permute.xlu0 %1483
      %1485 = vrot.lane.b32.xlu0 %v869, 120
      %v1486 = vpop.permute.xlu0 %1485
      %1487 = vrot.lane.b32.xlu0 %v870, 120
      %v1488 = vpop.permute.xlu0 %1487
      %1489 = vrot.lane.b32.xlu0 %v871, 120
      %v1490 = vpop.permute.xlu0 %1489
      %1491 = vrot.lane.b32.xlu0 %v872, 120
      %v1492 = vpop.permute.xlu0 %1491
      %1493 = vrot.lane.b32.xlu0 %v873, 120
      %v1494 = vpop.permute.xlu0 %1493
      %1495 = vrot.lane.b32.xlu0 %v866, 88
      %v1496 = vpop.permute.xlu0 %1495
      %1497 = vrot.lane.b32.xlu0 %v867, 88
      %v1498 = vpop.permute.xlu0 %1497
      %1499 = vrot.lane.b32.xlu0 %v868, 88
      %v1500 = vpop.permute.xlu0 %1499
      %1501 = vrot.lane.b32.xlu0 %v869, 88
      %v1502 = vpop.permute.xlu0 %1501
      %1503 = vrot.lane.b32.xlu0 %v870, 88
      %v1504 = vpop.permute.xlu0 %1503
      %1505 = vrot.lane.b32.xlu0 %v871, 88
      %v1506 = vpop.permute.xlu0 %1505
      %1507 = vrot.lane.b32.xlu0 %v872, 88
      %v1508 = vpop.permute.xlu0 %1507
      %1509 = vrot.lane.b32.xlu0 %v873, 88
      %v1510 = vpop.permute.xlu0 %1509
      %v1512 = vsel %vm910, %v1480, 0
      %v1515 = vsel %vm910, %v1482, 0
      %v1518 = vsel %vm910, %v1484, 0
      %v1521 = vsel %vm910, %v1486, 0
      %v1524 = vsel %vm910, %v1488, 0
      %v1527 = vsel %vm910, %v1490, 0
      %v1530 = vsel %vm910, %v1492, 0
      %v1533 = vsel %vm910, %v1494, 0
      %v1536 = vsel %vm910, %v1496, 0
      %v1539 = vsel %vm910, %v1498, 0
      %v1542 = vsel %vm910, %v1500, 0
      %v1545 = vsel %vm910, %v1502, 0
      %v1548 = vsel %vm910, %v1504, 0
      %v1551 = vsel %vm910, %v1506, 0
      %v1554 = vsel %vm910, %v1508, 0
      %v1557 = vsel %vm910, %v1510, 0
      %1559 = vmatprep.subr.bf16.mxu0 0
      %1560 = vmatpush1.bf16.xpose.msra.mxu0 %v1557
      %1561 = vmatprep.subr.bf16.mxu0 0
      %1562 = vmatpush1.bf16.xpose.msra.mxu0 %v1554
      %1563 = vmatprep.subr.bf16.mxu0 0
      %1564 = vmatpush1.bf16.xpose.msra.mxu0 %v1551
      %1565 = vmatprep.subr.bf16.mxu0 0
      %1566 = vmatpush1.bf16.xpose.msra.mxu0 %v1548
      %1567 = vmatprep.subr.bf16.mxu0 0
      %1568 = vmatpush1.bf16.xpose.msra.mxu0 %v1545
      %1569 = vmatprep.subr.bf16.mxu0 0
      %1570 = vmatpush1.bf16.xpose.msra.mxu0 %v1542
      %1571 = vmatprep.subr.bf16.mxu0 0
      %1572 = vmatpush1.bf16.xpose.msra.mxu0 %v1539
      %1573 = vmatprep.subr.bf16.mxu0 0
      %1574 = vmatpush1.bf16.xpose.msra.mxu0 %v1536
      %1575 = vmatprep.subr.bf16.mxu0 0
      %1576 = vmatpush2.bf16.xpose.msra.mxu0 0
      %1577 = vmatprep.subr.bf16.mxu0 0
      %1578 = vmatpush2.bf16.xpose.msra.mxu0 0
      %1579 = vmatprep.subr.bf16.mxu0 0
      %1580 = vmatpush2.bf16.xpose.msra.mxu0 0
      %1581 = vmatprep.subr.bf16.mxu0 0
      %1582 = vmatpush2.bf16.xpose.msra.mxu0 0
      %1583 = vmatprep.subr.bf16.mxu0 0
      %1584 = vmatpush2.bf16.xpose.msra.mxu0 0
      %1585 = vmatprep.subr.bf16.mxu0 0
      %1586 = vmatpush2.bf16.xpose.msra.mxu0 0
      %1587 = vmatprep.subr.bf16.mxu0 0
      %1588 = vmatpush2.bf16.xpose.msra.mxu0 0
      %1589 = vmatprep.subr.bf16.mxu0 0
      %1590 = vmatpush2.bf16.xpose.msra.mxu0 0
      %1591 = vmatprep.mubr.bf16.mxu0 0
      %1592 = vmatmul.mubr.bf16.gmra.mxu0 %v1512
      %v1593 = vpop.f32.mrf.mxu0
      %v1594 = vadd.f32 %v877, %v1593
      %v1595 = vpop.f32.mrf.mxu0
      %v1596 = vpop.f32.mrf.mxu0
      %v1597 = vadd.f32 %v877, %v1596
      %v1598 = vpop.f32.mrf.mxu0
      %1599 = vmatprep.mubr.bf16.mxu0 0
      %1600 = vmatmul.mubr.bf16.gmra.mxu0 %v1515
      %v1601 = vpop.f32.mrf.mxu0
      %v1602 = vadd.f32 %v877, %v1601
      %v1603 = vpop.f32.mrf.mxu0
      %v1604 = vpop.f32.mrf.mxu0
      %v1605 = vadd.f32 %v877, %v1604
      %v1606 = vpop.f32.mrf.mxu0
      %1607 = vmatprep.mubr.bf16.mxu0 0
      %1608 = vmatmul.mubr.bf16.gmra.mxu0 %v1518
      %v1609 = vpop.f32.mrf.mxu0
      %v1610 = vadd.f32 %v877, %v1609
      %v1611 = vpop.f32.mrf.mxu0
      %v1612 = vpop.f32.mrf.mxu0
      %v1613 = vadd.f32 %v877, %v1612
      %v1614 = vpop.f32.mrf.mxu0
      %1615 = vmatprep.mubr.bf16.mxu0 0
      %1616 = vmatmul.mubr.bf16.gmra.mxu0 %v1521
      %v1617 = vpop.f32.mrf.mxu0
      %v1618 = vadd.f32 %v877, %v1617
      %v1619 = vpop.f32.mrf.mxu0
      %v1620 = vpop.f32.mrf.mxu0
      %v1621 = vadd.f32 %v877, %v1620
      %v1622 = vpop.f32.mrf.mxu0
      %1623 = vmatprep.mubr.bf16.mxu0 0
      %1624 = vmatmul.mubr.bf16.gmra.mxu0 %v1524
      %v1625 = vpop.f32.mrf.mxu0
      %v1626 = vadd.f32 %v877, %v1625
      %v1627 = vpop.f32.mrf.mxu0
      %v1628 = vpop.f32.mrf.mxu0
      %v1629 = vadd.f32 %v877, %v1628
      %v1630 = vpop.f32.mrf.mxu0
      %1631 = vmatprep.mubr.bf16.mxu0 0
      %1632 = vmatmul.mubr.bf16.gmra.mxu0 %v1527
      %v1633 = vpop.f32.mrf.mxu0
      %v1634 = vadd.f32 %v877, %v1633
      %v1635 = vpop.f32.mrf.mxu0
      %v1636 = vpop.f32.mrf.mxu0
      %v1637 = vadd.f32 %v877, %v1636
      %v1638 = vpop.f32.mrf.mxu0
      %1639 = vmatprep.mubr.bf16.mxu0 0
      %1640 = vmatmul.mubr.bf16.gmra.mxu0 %v1530
      %v1641 = vpop.f32.mrf.mxu0
      %v1642 = vadd.f32 %v877, %v1641
      %v1643 = vpop.f32.mrf.mxu0
      %v1644 = vpop.f32.mrf.mxu0
      %v1645 = vadd.f32 %v877, %v1644
      %v1646 = vpop.f32.mrf.mxu0
      %1647 = vmatprep.mubr.bf16.mxu0 0
      %1648 = vmatmul.mubr.bf16.gmra.mxu0 %v1533
      %v1649 = vpop.f32.mrf.mxu0
      %v1650 = vadd.f32 %v877, %v1649
      %v1651 = vpop.f32.mrf.mxu0
      %v1652 = vpop.f32.mrf.mxu0
      %v1653 = vadd.f32 %v877, %v1652
      %v1654 = vpop.f32.mrf.mxu0
      %1655 = vdwg.mxu0
      %1656 = vmax.xlane.f32.xlu0 %v1594
      %v1657 = vpop.xlane.xlu0 %1656
      %1658 = vmax.xlane.f32.xlu0 %v1597
      %v1659 = vpop.xlane.xlu0 %1658
      %1660 = vmax.xlane.f32.xlu0 %v1602
      %v1661 = vpop.xlane.xlu0 %1660
      %1662 = vmax.xlane.f32.xlu0 %v1605
      %v1663 = vpop.xlane.xlu0 %1662
      %1664 = vmax.xlane.f32.xlu0 %v1610
      %v1665 = vpop.xlane.xlu0 %1664
      %1666 = vmax.xlane.f32.xlu0 %v1613
      %v1667 = vpop.xlane.xlu0 %1666
      %1668 = vmax.xlane.f32.xlu0 %v1618
      %v1669 = vpop.xlane.xlu0 %1668
      %1670 = vmax.xlane.f32.xlu0 %v1621
      %v1671 = vpop.xlane.xlu0 %1670
      %1672 = vmax.xlane.f32.xlu0 %v1626
      %v1673 = vpop.xlane.xlu0 %1672
      %1674 = vmax.xlane.f32.xlu0 %v1629
      %v1675 = vpop.xlane.xlu0 %1674
      %1676 = vmax.xlane.f32.xlu0 %v1634
      %v1677 = vpop.xlane.xlu0 %1676
      %1678 = vmax.xlane.f32.xlu0 %v1637
      %v1679 = vpop.xlane.xlu0 %1678
      %1680 = vmax.xlane.f32.xlu0 %v1642
      %v1681 = vpop.xlane.xlu0 %1680
      %1682 = vmax.xlane.f32.xlu0 %v1645
      %v1683 = vpop.xlane.xlu0 %1682
      %1684 = vmax.xlane.f32.xlu0 %v1650
      %v1685 = vpop.xlane.xlu0 %1684
      %1686 = vmax.xlane.f32.xlu0 %v1653
      %v1687 = vpop.xlane.xlu0 %1686
      %v1688 = vsub.f32 %v1594, %v1657
      %v1689 = vsub.f32 %v1597, %v1659
      %v1690 = vsub.f32 %v1602, %v1661
      %v1691 = vsub.f32 %v1605, %v1663
      %v1692 = vsub.f32 %v1610, %v1665
      %v1693 = vsub.f32 %v1613, %v1667
      %v1694 = vsub.f32 %v1618, %v1669
      %v1695 = vsub.f32 %v1621, %v1671
      %v1696 = vsub.f32 %v1626, %v1673
      %v1697 = vsub.f32 %v1629, %v1675
      %v1698 = vsub.f32 %v1634, %v1677
      %v1699 = vsub.f32 %v1637, %v1679
      %v1700 = vsub.f32 %v1642, %v1681
      %v1701 = vsub.f32 %v1645, %v1683
      %v1702 = vsub.f32 %v1650, %v1685
      %v1703 = vsub.f32 %v1653, %v1687
      %v1704 = vmul.f32 %v1688, 1.442695
      %v1705 = vpow.pop %v1704
      %v1706 = vmul.f32 %v1689, 1.442695
      %v1707 = vpow.pop %v1706
      %v1708 = vmul.f32 %v1690, 1.442695
      %v1709 = vpow.pop %v1708
      %v1710 = vmul.f32 %v1691, 1.442695
      %v1711 = vpow.pop %v1710
      %v1712 = vmul.f32 %v1692, 1.442695
      %v1713 = vpow.pop %v1712
      %v1714 = vmul.f32 %v1693, 1.442695
      %v1715 = vpow.pop %v1714
      %v1716 = vmul.f32 %v1694, 1.442695
      %v1717 = vpow.pop %v1716
      %v1718 = vmul.f32 %v1695, 1.442695
      %v1719 = vpow.pop %v1718
      %v1720 = vmul.f32 %v1696, 1.442695
      %v1721 = vpow.pop %v1720
      %v1722 = vmul.f32 %v1697, 1.442695
      %v1723 = vpow.pop %v1722
      %v1724 = vmul.f32 %v1698, 1.442695
      %v1725 = vpow.pop %v1724
      %v1726 = vmul.f32 %v1699, 1.442695
      %v1727 = vpow.pop %v1726
      %v1728 = vmul.f32 %v1700, 1.442695
      %v1729 = vpow.pop %v1728
      %v1730 = vmul.f32 %v1701, 1.442695
      %v1731 = vpow.pop %v1730
      %v1732 = vmul.f32 %v1702, 1.442695
      %v1733 = vpow.pop %v1732
      %v1734 = vmul.f32 %v1703, 1.442695
      %v1735 = vpow.pop %v1734
      %1736 = vadd.xlane.f32.xlu0 %v1705
      %v1737 = vpop.xlane.xlu0 %1736
      %1738 = vadd.xlane.f32.xlu0 %v1707
      %v1739 = vpop.xlane.xlu0 %1738
      %1740 = vadd.xlane.f32.xlu0 %v1709
      %v1741 = vpop.xlane.xlu0 %1740
      %1742 = vadd.xlane.f32.xlu0 %v1711
      %v1743 = vpop.xlane.xlu0 %1742
      %1744 = vadd.xlane.f32.xlu0 %v1713
      %v1745 = vpop.xlane.xlu0 %1744
      %1746 = vadd.xlane.f32.xlu0 %v1715
      %v1747 = vpop.xlane.xlu0 %1746
      %1748 = vadd.xlane.f32.xlu0 %v1717
      %v1749 = vpop.xlane.xlu0 %1748
      %1750 = vadd.xlane.f32.xlu0 %v1719
      %v1751 = vpop.xlane.xlu0 %1750
      %1752 = vadd.xlane.f32.xlu0 %v1721
      %v1753 = vpop.xlane.xlu0 %1752
      %1754 = vadd.xlane.f32.xlu0 %v1723
      %v1755 = vpop.xlane.xlu0 %1754
      %1756 = vadd.xlane.f32.xlu0 %v1725
      %v1757 = vpop.xlane.xlu0 %1756
      %1758 = vadd.xlane.f32.xlu0 %v1727
      %v1759 = vpop.xlane.xlu0 %1758
      %1760 = vadd.xlane.f32.xlu0 %v1729
      %v1761 = vpop.xlane.xlu0 %1760
      %1762 = vadd.xlane.f32.xlu0 %v1731
      %v1763 = vpop.xlane.xlu0 %1762
      %1764 = vadd.xlane.f32.xlu0 %v1733
      %v1765 = vpop.xlane.xlu0 %1764
      %1766 = vadd.xlane.f32.xlu0 %v1735
      %v1767 = vpop.xlane.xlu0 %1766
      %v1768 = vrcp.pop %v1737
      %v1769 = vrcp.pop %v1739
      %v1770 = vrcp.pop %v1741
      %v1771 = vrcp.pop %v1743
      %v1772 = vrcp.pop %v1745
      %v1773 = vrcp.pop %v1747
      %v1774 = vrcp.pop %v1749
      %v1775 = vrcp.pop %v1751
      %v1776 = vrcp.pop %v1753
      %v1777 = vrcp.pop %v1755
      %v1778 = vrcp.pop %v1757
      %v1779 = vrcp.pop %v1759
      %v1780 = vrcp.pop %v1761
      %v1781 = vrcp.pop %v1763
      %v1782 = vrcp.pop %v1765
      %v1783 = vrcp.pop %v1767
      %v1784 = vmul.f32 %v1705, %v1768
      %v1785 = vmul.f32 %v1707, %v1769
      %v1786 = vmul.f32 %v1709, %v1770
      %v1787 = vmul.f32 %v1711, %v1771
      %v1788 = vmul.f32 %v1713, %v1772
      %v1789 = vmul.f32 %v1715, %v1773
      %v1790 = vmul.f32 %v1717, %v1774
      %v1791 = vmul.f32 %v1719, %v1775
      %v1792 = vmul.f32 %v1721, %v1776
      %v1793 = vmul.f32 %v1723, %v1777
      %v1794 = vmul.f32 %v1725, %v1778
      %v1795 = vmul.f32 %v1727, %v1779
      %v1796 = vmul.f32 %v1729, %v1780
      %v1797 = vmul.f32 %v1731, %v1781
      %v1798 = vmul.f32 %v1733, %v1782
      %v1799 = vmul.f32 %v1735, %v1783
      %v1800 = vpack.c.bf16 %v1785, %v1784
      %v1801 = vpack.c.bf16 %v1787, %v1786
      %v1802 = vpack.c.bf16 %v1789, %v1788
      %v1803 = vpack.c.bf16 %v1791, %v1790
      %v1804 = vpack.c.bf16 %v1793, %v1792
      %v1805 = vpack.c.bf16 %v1795, %v1794
      %v1806 = vpack.c.bf16 %v1797, %v1796
      %v1807 = vpack.c.bf16 %v1799, %v1798
      %1808 = vrot.lane.b32.xlu0 %v866, 56
      %v1809 = vpop.permute.xlu0 %1808
      %1810 = vrot.lane.b32.xlu0 %v867, 56
      %v1811 = vpop.permute.xlu0 %1810
      %1812 = vrot.lane.b32.xlu0 %v868, 56
      %v1813 = vpop.permute.xlu0 %1812
      %1814 = vrot.lane.b32.xlu0 %v869, 56
      %v1815 = vpop.permute.xlu0 %1814
      %1816 = vrot.lane.b32.xlu0 %v870, 56
      %v1817 = vpop.permute.xlu0 %1816
      %1818 = vrot.lane.b32.xlu0 %v871, 56
      %v1819 = vpop.permute.xlu0 %1818
      %1820 = vrot.lane.b32.xlu0 %v872, 56
      %v1821 = vpop.permute.xlu0 %1820
      %1822 = vrot.lane.b32.xlu0 %v873, 56
      %v1823 = vpop.permute.xlu0 %1822
      %1832 = vmatprep.subr.bf16.mxu0 0
      %1833 = vmatpush1.bf16.msra.mxu0 %v1823
      %1834 = vmatprep.subr.bf16.mxu0 0
      %1835 = vmatpush1.bf16.msra.mxu0 %v1821
      %1836 = vmatprep.subr.bf16.mxu0 0
      %1837 = vmatpush1.bf16.msra.mxu0 %v1819
      %1838 = vmatprep.subr.bf16.mxu0 0
      %1839 = vmatpush1.bf16.msra.mxu0 %v1817
      %1840 = vmatprep.subr.bf16.mxu0 0
      %1841 = vmatpush1.bf16.msra.mxu0 %v1815
      %1842 = vmatprep.subr.bf16.mxu0 0
      %1843 = vmatpush1.bf16.msra.mxu0 %v1813
      %1844 = vmatprep.subr.bf16.mxu0 0
      %1845 = vmatpush1.bf16.msra.mxu0 %v1811
      %1846 = vmatprep.subr.bf16.mxu0 0
      %1847 = vmatpush1.bf16.msra.mxu0 %v1809
      %1848 = vmatprep.subr.bf16.mxu0 0
      %1849 = vmatpush2.bf16.msra.mxu0 0
      %1850 = vmatprep.subr.bf16.mxu0 0
      %1851 = vmatpush2.bf16.msra.mxu0 0
      %1852 = vmatprep.subr.bf16.mxu0 0
      %1853 = vmatpush2.bf16.msra.mxu0 0
      %1854 = vmatprep.subr.bf16.mxu0 0
      %1855 = vmatpush2.bf16.msra.mxu0 0
      %1856 = vmatprep.subr.bf16.mxu0 0
      %1857 = vmatpush2.bf16.msra.mxu0 0
      %1858 = vmatprep.subr.bf16.mxu0 0
      %1859 = vmatpush2.bf16.msra.mxu0 0
      %1860 = vmatprep.subr.bf16.mxu0 0
      %1861 = vmatpush2.bf16.msra.mxu0 0
      %1862 = vmatprep.subr.bf16.mxu0 0
      %1863 = vmatpush2.bf16.msra.mxu0 0
      %1864 = vmatprep.mubr.bf16.mxu0 0
      %1865 = vmatmul.mubr.bf16.gmra.mxu0 %v1800
      %v1866 = vpop.f32.mrf.mxu0
      %v1867 = vadd.f32 0.0, %v1866
      %v1868 = vpop.f32.mrf.mxu0
      %v1869 = vpop.f32.mrf.mxu0
      %v1870 = vadd.f32 0.0, %v1869
      %v1871 = vpop.f32.mrf.mxu0
      %1872 = vmatprep.mubr.bf16.mxu0 0
      %1873 = vmatmul.mubr.bf16.gmra.mxu0 %v1801
      %v1874 = vpop.f32.mrf.mxu0
      %v1875 = vadd.f32 0.0, %v1874
      %v1876 = vpop.f32.mrf.mxu0
      %v1877 = vpop.f32.mrf.mxu0
      %v1878 = vadd.f32 0.0, %v1877
      %v1879 = vpop.f32.mrf.mxu0
      %1880 = vmatprep.mubr.bf16.mxu0 0
      %1881 = vmatmul.mubr.bf16.gmra.mxu0 %v1802
      %v1882 = vpop.f32.mrf.mxu0
      %v1883 = vadd.f32 0.0, %v1882
      %v1884 = vpop.f32.mrf.mxu0
      %v1885 = vpop.f32.mrf.mxu0
      %v1886 = vadd.f32 0.0, %v1885
      %v1887 = vpop.f32.mrf.mxu0
      %1888 = vmatprep.mubr.bf16.mxu0 0
      %1889 = vmatmul.mubr.bf16.gmra.mxu0 %v1803
      %v1890 = vpop.f32.mrf.mxu0
      %v1891 = vadd.f32 0.0, %v1890
      %v1892 = vpop.f32.mrf.mxu0
      %v1893 = vpop.f32.mrf.mxu0
      %v1894 = vadd.f32 0.0, %v1893
      %v1895 = vpop.f32.mrf.mxu0
      %1896 = vmatprep.mubr.bf16.mxu0 0
      %1897 = vmatmul.mubr.bf16.gmra.mxu0 %v1804
      %v1898 = vpop.f32.mrf.mxu0
      %v1899 = vadd.f32 0.0, %v1898
      %v1900 = vpop.f32.mrf.mxu0
      %v1901 = vpop.f32.mrf.mxu0
      %v1902 = vadd.f32 0.0, %v1901
      %v1903 = vpop.f32.mrf.mxu0
      %1904 = vmatprep.mubr.bf16.mxu0 0
      %1905 = vmatmul.mubr.bf16.gmra.mxu0 %v1805
      %v1906 = vpop.f32.mrf.mxu0
      %v1907 = vadd.f32 0.0, %v1906
      %v1908 = vpop.f32.mrf.mxu0
      %v1909 = vpop.f32.mrf.mxu0
      %v1910 = vadd.f32 0.0, %v1909
      %v1911 = vpop.f32.mrf.mxu0
      %1912 = vmatprep.mubr.bf16.mxu0 0
      %1913 = vmatmul.mubr.bf16.gmra.mxu0 %v1806
      %v1914 = vpop.f32.mrf.mxu0
      %v1915 = vadd.f32 0.0, %v1914
      %v1916 = vpop.f32.mrf.mxu0
      %v1917 = vpop.f32.mrf.mxu0
      %v1918 = vadd.f32 0.0, %v1917
      %v1919 = vpop.f32.mrf.mxu0
      %1920 = vmatprep.mubr.bf16.mxu0 0
      %1921 = vmatmul.mubr.bf16.gmra.mxu0 %v1807
      %v1922 = vpop.f32.mrf.mxu0
      %v1923 = vadd.f32 0.0, %v1922
      %v1924 = vpop.f32.mrf.mxu0
      %v1925 = vpop.f32.mrf.mxu0
      %v1926 = vadd.f32 0.0, %v1925
      %v1927 = vpop.f32.mrf.mxu0
      %1928 = vdwg.mxu0
      %v1929 = vpack.c.bf16 %v1870, %v1867
      %v1930 = vpack.c.bf16 %v1878, %v1875
      %v1931 = vpack.c.bf16 %v1886, %v1883
      %v1932 = vpack.c.bf16 %v1894, %v1891
      %v1933 = vpack.c.bf16 %v1902, %v1899
      %v1934 = vpack.c.bf16 %v1910, %v1907
      %v1935 = vpack.c.bf16 %v1918, %v1915
      %v1936 = vpack.c.bf16 %v1926, %v1923
      %v1937 = vld [vmem:[%s5 + $0x4] sm:$0xf]
      %v1939 = vsel %vm910, %v1929, 0
      %v1942 = vsel %vm910, %v1930, 0
      %v1945 = vsel %vm910, %v1931, 0
      %v1948 = vsel %vm910, %v1932, 0
      %v1951 = vsel %vm910, %v1933, 0
      %v1954 = vsel %vm910, %v1934, 0
      %v1957 = vsel %vm910, %v1935, 0
      %v1960 = vsel %vm910, %v1936, 0
      %v1963 = vsel %vm1362, %v1937, 0
      %1965 = vmatprep.subr.bf16.mxu0 0
      %1966 = vmatpush1.bf16.msra.mxu0 0
      %1967 = vmatprep.subr.bf16.mxu0 0
      %1968 = vmatpush1.bf16.msra.mxu0 0
      %1969 = vmatprep.subr.bf16.mxu0 0
      %1970 = vmatpush1.bf16.msra.mxu0 0
      %1971 = vmatprep.subr.bf16.mxu0 0
      %1972 = vmatpush1.bf16.msra.mxu0 0
      %1973 = vmatprep.subr.bf16.mxu0 0
      %1974 = vmatpush1.bf16.msra.mxu0 0
      %1975 = vmatprep.subr.bf16.mxu0 0
      %1976 = vmatpush1.bf16.msra.mxu0 0
      %1977 = vmatprep.subr.bf16.mxu0 0
      %1978 = vmatpush1.bf16.msra.mxu0 0
      %1979 = vmatprep.subr.bf16.mxu0 0
      %1980 = vmatpush1.bf16.msra.mxu0 %v1963
      %1981 = vmatprep.subr.bf16.mxu0 0
      %1982 = vmatpush2.bf16.msra.mxu0 0
      %1983 = vmatprep.subr.bf16.mxu0 0
      %1984 = vmatpush2.bf16.msra.mxu0 0
      %1985 = vmatprep.subr.bf16.mxu0 0
      %1986 = vmatpush2.bf16.msra.mxu0 0
      %1987 = vmatprep.subr.bf16.mxu0 0
      %1988 = vmatpush2.bf16.msra.mxu0 0
      %1989 = vmatprep.subr.bf16.mxu0 0
      %1990 = vmatpush2.bf16.msra.mxu0 0
      %1991 = vmatprep.subr.bf16.mxu0 0
      %1992 = vmatpush2.bf16.msra.mxu0 0
      %1993 = vmatprep.subr.bf16.mxu0 0
      %1994 = vmatpush2.bf16.msra.mxu0 0
      %1995 = vmatprep.subr.bf16.mxu0 0
      %1996 = vmatpush2.bf16.msra.mxu0 0
      %1997 = vmatprep.mubr.bf16.mxu0 0
      %1998 = vmatmul.mubr.bf16.gmra.mxu0 %v1939
      %v1999 = vpop.f32.mrf.mxu0
      %v2000 = vadd.f32 0.0, %v1999
      %v2001 = vpop.f32.mrf.mxu0
      %v2002 = vpop.f32.mrf.mxu0
      %v2003 = vadd.f32 0.0, %v2002
      %v2004 = vpop.f32.mrf.mxu0
      %2005 = vmatprep.mubr.bf16.mxu0 0
      %2006 = vmatmul.mubr.bf16.gmra.mxu0 %v1942
      %v2007 = vpop.f32.mrf.mxu0
      %v2008 = vadd.f32 0.0, %v2007
      %v2009 = vpop.f32.mrf.mxu0
      %v2010 = vpop.f32.mrf.mxu0
      %v2011 = vadd.f32 0.0, %v2010
      %v2012 = vpop.f32.mrf.mxu0
      %2013 = vmatprep.mubr.bf16.mxu0 0
      %2014 = vmatmul.mubr.bf16.gmra.mxu0 %v1945
      %v2015 = vpop.f32.mrf.mxu0
      %v2016 = vadd.f32 0.0, %v2015
      %v2017 = vpop.f32.mrf.mxu0
      %v2018 = vpop.f32.mrf.mxu0
      %v2019 = vadd.f32 0.0, %v2018
      %v2020 = vpop.f32.mrf.mxu0
      %2021 = vmatprep.mubr.bf16.mxu0 0
      %2022 = vmatmul.mubr.bf16.gmra.mxu0 %v1948
      %v2023 = vpop.f32.mrf.mxu0
      %v2024 = vadd.f32 0.0, %v2023
      %v2025 = vpop.f32.mrf.mxu0
      %v2026 = vpop.f32.mrf.mxu0
      %v2027 = vadd.f32 0.0, %v2026
      %v2028 = vpop.f32.mrf.mxu0
      %2029 = vmatprep.mubr.bf16.mxu0 0
      %2030 = vmatmul.mubr.bf16.gmra.mxu0 %v1951
      %v2031 = vpop.f32.mrf.mxu0
      %v2032 = vadd.f32 0.0, %v2031
      %v2033 = vpop.f32.mrf.mxu0
      %v2034 = vpop.f32.mrf.mxu0
      %v2035 = vadd.f32 0.0, %v2034
      %v2036 = vpop.f32.mrf.mxu0
      %2037 = vmatprep.mubr.bf16.mxu0 0
      %2038 = vmatmul.mubr.bf16.gmra.mxu0 %v1954
      %v2039 = vpop.f32.mrf.mxu0
      %v2040 = vadd.f32 0.0, %v2039
      %v2041 = vpop.f32.mrf.mxu0
      %v2042 = vpop.f32.mrf.mxu0
      %v2043 = vadd.f32 0.0, %v2042
      %v2044 = vpop.f32.mrf.mxu0
      %2045 = vmatprep.mubr.bf16.mxu0 0
      %2046 = vmatmul.mubr.bf16.gmra.mxu0 %v1957
      %v2047 = vpop.f32.mrf.mxu0
      %v2048 = vadd.f32 0.0, %v2047
      %v2049 = vpop.f32.mrf.mxu0
      %v2050 = vpop.f32.mrf.mxu0
      %v2051 = vadd.f32 0.0, %v2050
      %v2052 = vpop.f32.mrf.mxu0
      %2053 = vmatprep.mubr.bf16.mxu0 0
      %2054 = vmatmul.mubr.bf16.gmra.mxu0 %v1960
      %v2055 = vpop.f32.mrf.mxu0
      %v2056 = vadd.f32 0.0, %v2055
      %v2057 = vpop.f32.mrf.mxu0
      %v2058 = vpop.f32.mrf.mxu0
      %v2059 = vadd.f32 0.0, %v2058
      %v2060 = vpop.f32.mrf.mxu0
      %2061 = vdwg.mxu0
      %v2062 = vadd.f32 %v1463, %v2000
      %v2063 = vadd.f32 %v1464, %v2003
      %v2064 = vadd.f32 %v1465, %v2008
      %v2065 = vadd.f32 %v1466, %v2011
      %v2066 = vadd.f32 %v1467, %v2016
      %v2067 = vadd.f32 %v1468, %v2019
      %v2068 = vadd.f32 %v1469, %v2024
      %v2069 = vadd.f32 %v1470, %v2027
      %v2070 = vadd.f32 %v1471, %v2032
      %v2071 = vadd.f32 %v1472, %v2035
      %v2072 = vadd.f32 %v1473, %v2040
      %v2073 = vadd.f32 %v1474, %v2043
      %v2074 = vadd.f32 %v1475, %v2048
      %v2075 = vadd.f32 %v1476, %v2051
      %v2076 = vadd.f32 %v1477, %v2056
      %v2077 = vadd.f32 %v1478, %v2059
      %2078 = vrot.lane.b32.xlu0 %v866, 112
      %v2079 = vpop.permute.xlu0 %2078
      %2080 = vrot.lane.b32.xlu0 %v867, 112
      %v2081 = vpop.permute.xlu0 %2080
      %2082 = vrot.lane.b32.xlu0 %v868, 112
      %v2083 = vpop.permute.xlu0 %2082
      %2084 = vrot.lane.b32.xlu0 %v869, 112
      %v2085 = vpop.permute.xlu0 %2084
      %2086 = vrot.lane.b32.xlu0 %v870, 112
      %v2087 = vpop.permute.xlu0 %2086
      %2088 = vrot.lane.b32.xlu0 %v871, 112
      %v2089 = vpop.permute.xlu0 %2088
      %2090 = vrot.lane.b32.xlu0 %v872, 112
      %v2091 = vpop.permute.xlu0 %2090
      %2092 = vrot.lane.b32.xlu0 %v873, 112
      %v2093 = vpop.permute.xlu0 %2092
      %2094 = vrot.lane.b32.xlu0 %v866, 80
      %v2095 = vpop.permute.xlu0 %2094
      %2096 = vrot.lane.b32.xlu0 %v867, 80
      %v2097 = vpop.permute.xlu0 %2096
      %2098 = vrot.lane.b32.xlu0 %v868, 80
      %v2099 = vpop.permute.xlu0 %2098
      %2100 = vrot.lane.b32.xlu0 %v869, 80
      %v2101 = vpop.permute.xlu0 %2100
      %2102 = vrot.lane.b32.xlu0 %v870, 80
      %v2103 = vpop.permute.xlu0 %2102
      %2104 = vrot.lane.b32.xlu0 %v871, 80
      %v2105 = vpop.permute.xlu0 %2104
      %2106 = vrot.lane.b32.xlu0 %v872, 80
      %v2107 = vpop.permute.xlu0 %2106
      %2108 = vrot.lane.b32.xlu0 %v873, 80
      %v2109 = vpop.permute.xlu0 %2108
      %v2111 = vsel %vm910, %v2079, 0
      %v2114 = vsel %vm910, %v2081, 0
      %v2117 = vsel %vm910, %v2083, 0
      %v2120 = vsel %vm910, %v2085, 0
      %v2123 = vsel %vm910, %v2087, 0
      %v2126 = vsel %vm910, %v2089, 0
      %v2129 = vsel %vm910, %v2091, 0
      %v2132 = vsel %vm910, %v2093, 0
      %v2135 = vsel %vm910, %v2095, 0
      %v2138 = vsel %vm910, %v2097, 0
      %v2141 = vsel %vm910, %v2099, 0
      %v2144 = vsel %vm910, %v2101, 0
      %v2147 = vsel %vm910, %v2103, 0
      %v2150 = vsel %vm910, %v2105, 0
      %v2153 = vsel %vm910, %v2107, 0
      %v2156 = vsel %vm910, %v2109, 0
      %2158 = vmatprep.subr.bf16.mxu0 0
      %2159 = vmatpush1.bf16.xpose.msra.mxu0 %v2156
      %2160 = vmatprep.subr.bf16.mxu0 0
      %2161 = vmatpush1.bf16.xpose.msra.mxu0 %v2153
      %2162 = vmatprep.subr.bf16.mxu0 0
      %2163 = vmatpush1.bf16.xpose.msra.mxu0 %v2150
      %2164 = vmatprep.subr.bf16.mxu0 0
      %2165 = vmatpush1.bf16.xpose.msra.mxu0 %v2147
      %2166 = vmatprep.subr.bf16.mxu0 0
      %2167 = vmatpush1.bf16.xpose.msra.mxu0 %v2144
      %2168 = vmatprep.subr.bf16.mxu0 0
      %2169 = vmatpush1.bf16.xpose.msra.mxu0 %v2141
      %2170 = vmatprep.subr.bf16.mxu0 0
      %2171 = vmatpush1.bf16.xpose.msra.mxu0 %v2138
      %2172 = vmatprep.subr.bf16.mxu0 0
      %2173 = vmatpush1.bf16.xpose.msra.mxu0 %v2135
      %2174 = vmatprep.subr.bf16.mxu0 0
      %2175 = vmatpush2.bf16.xpose.msra.mxu0 0
      %2176 = vmatprep.subr.bf16.mxu0 0
      %2177 = vmatpush2.bf16.xpose.msra.mxu0 0
      %2178 = vmatprep.subr.bf16.mxu0 0
      %2179 = vmatpush2.bf16.xpose.msra.mxu0 0
      %2180 = vmatprep.subr.bf16.mxu0 0
      %2181 = vmatpush2.bf16.xpose.msra.mxu0 0
      %2182 = vmatprep.subr.bf16.mxu0 0
      %2183 = vmatpush2.bf16.xpose.msra.mxu0 0
      %2184 = vmatprep.subr.bf16.mxu0 0
      %2185 = vmatpush2.bf16.xpose.msra.mxu0 0
      %2186 = vmatprep.subr.bf16.mxu0 0
      %2187 = vmatpush2.bf16.xpose.msra.mxu0 0
      %2188 = vmatprep.subr.bf16.mxu0 0
      %2189 = vmatpush2.bf16.xpose.msra.mxu0 0
      %2190 = vmatprep.mubr.bf16.mxu0 0
      %2191 = vmatmul.mubr.bf16.gmra.mxu0 %v2111
      %v2192 = vpop.f32.mrf.mxu0
      %v2193 = vadd.f32 %v877, %v2192
      %v2194 = vpop.f32.mrf.mxu0
      %v2195 = vpop.f32.mrf.mxu0
      %v2196 = vadd.f32 %v877, %v2195
      %v2197 = vpop.f32.mrf.mxu0
      %2198 = vmatprep.mubr.bf16.mxu0 0
      %2199 = vmatmul.mubr.bf16.gmra.mxu0 %v2114
      %v2200 = vpop.f32.mrf.mxu0
      %v2201 = vadd.f32 %v877, %v2200
      %v2202 = vpop.f32.mrf.mxu0
      %v2203 = vpop.f32.mrf.mxu0
      %v2204 = vadd.f32 %v877, %v2203
      %v2205 = vpop.f32.mrf.mxu0
      %2206 = vmatprep.mubr.bf16.mxu0 0
      %2207 = vmatmul.mubr.bf16.gmra.mxu0 %v2117
      %v2208 = vpop.f32.mrf.mxu0
      %v2209 = vadd.f32 %v877, %v2208
      %v2210 = vpop.f32.mrf.mxu0
      %v2211 = vpop.f32.mrf.mxu0
      %v2212 = vadd.f32 %v877, %v2211
      %v2213 = vpop.f32.mrf.mxu0
      %2214 = vmatprep.mubr.bf16.mxu0 0
      %2215 = vmatmul.mubr.bf16.gmra.mxu0 %v2120
      %v2216 = vpop.f32.mrf.mxu0
      %v2217 = vadd.f32 %v877, %v2216
      %v2218 = vpop.f32.mrf.mxu0
      %v2219 = vpop.f32.mrf.mxu0
      %v2220 = vadd.f32 %v877, %v2219
      %v2221 = vpop.f32.mrf.mxu0
      %2222 = vmatprep.mubr.bf16.mxu0 0
      %2223 = vmatmul.mubr.bf16.gmra.mxu0 %v2123
      %v2224 = vpop.f32.mrf.mxu0
      %v2225 = vadd.f32 %v877, %v2224
      %v2226 = vpop.f32.mrf.mxu0
      %v2227 = vpop.f32.mrf.mxu0
      %v2228 = vadd.f32 %v877, %v2227
      %v2229 = vpop.f32.mrf.mxu0
      %2230 = vmatprep.mubr.bf16.mxu0 0
      %2231 = vmatmul.mubr.bf16.gmra.mxu0 %v2126
      %v2232 = vpop.f32.mrf.mxu0
      %v2233 = vadd.f32 %v877, %v2232
      %v2234 = vpop.f32.mrf.mxu0
      %v2235 = vpop.f32.mrf.mxu0
      %v2236 = vadd.f32 %v877, %v2235
      %v2237 = vpop.f32.mrf.mxu0
      %2238 = vmatprep.mubr.bf16.mxu0 0
      %2239 = vmatmul.mubr.bf16.gmra.mxu0 %v2129
      %v2240 = vpop.f32.mrf.mxu0
      %v2241 = vadd.f32 %v877, %v2240
      %v2242 = vpop.f32.mrf.mxu0
      %v2243 = vpop.f32.mrf.mxu0
      %v2244 = vadd.f32 %v877, %v2243
      %v2245 = vpop.f32.mrf.mxu0
      %2246 = vmatprep.mubr.bf16.mxu0 0
      %2247 = vmatmul.mubr.bf16.gmra.mxu0 %v2132
      %v2248 = vpop.f32.mrf.mxu0
      %v2249 = vadd.f32 %v877, %v2248
      %v2250 = vpop.f32.mrf.mxu0
      %v2251 = vpop.f32.mrf.mxu0
      %v2252 = vadd.f32 %v877, %v2251
      %v2253 = vpop.f32.mrf.mxu0
      %2254 = vdwg.mxu0
      %2255 = vmax.xlane.f32.xlu0 %v2193
      %v2256 = vpop.xlane.xlu0 %2255
      %2257 = vmax.xlane.f32.xlu0 %v2196
      %v2258 = vpop.xlane.xlu0 %2257
      %2259 = vmax.xlane.f32.xlu0 %v2201
      %v2260 = vpop.xlane.xlu0 %2259
      %2261 = vmax.xlane.f32.xlu0 %v2204
      %v2262 = vpop.xlane.xlu0 %2261
      %2263 = vmax.xlane.f32.xlu0 %v2209
      %v2264 = vpop.xlane.xlu0 %2263
      %2265 = vmax.xlane.f32.xlu0 %v2212
      %v2266 = vpop.xlane.xlu0 %2265
      %2267 = vmax.xlane.f32.xlu0 %v2217
      %v2268 = vpop.xlane.xlu0 %2267
      %2269 = vmax.xlane.f32.xlu0 %v2220
      %v2270 = vpop.xlane.xlu0 %2269
      %2271 = vmax.xlane.f32.xlu0 %v2225
      %v2272 = vpop.xlane.xlu0 %2271
      %2273 = vmax.xlane.f32.xlu0 %v2228
      %v2274 = vpop.xlane.xlu0 %2273
      %2275 = vmax.xlane.f32.xlu0 %v2233
      %v2276 = vpop.xlane.xlu0 %2275
      %2277 = vmax.xlane.f32.xlu0 %v2236
      %v2278 = vpop.xlane.xlu0 %2277
      %2279 = vmax.xlane.f32.xlu0 %v2241
      %v2280 = vpop.xlane.xlu0 %2279
      %2281 = vmax.xlane.f32.xlu0 %v2244
      %v2282 = vpop.xlane.xlu0 %2281
      %2283 = vmax.xlane.f32.xlu0 %v2249
      %v2284 = vpop.xlane.xlu0 %2283
      %2285 = vmax.xlane.f32.xlu0 %v2252
      %v2286 = vpop.xlane.xlu0 %2285
      %v2287 = vsub.f32 %v2193, %v2256
      %v2288 = vsub.f32 %v2196, %v2258
      %v2289 = vsub.f32 %v2201, %v2260
      %v2290 = vsub.f32 %v2204, %v2262
      %v2291 = vsub.f32 %v2209, %v2264
      %v2292 = vsub.f32 %v2212, %v2266
      %v2293 = vsub.f32 %v2217, %v2268
      %v2294 = vsub.f32 %v2220, %v2270
      %v2295 = vsub.f32 %v2225, %v2272
      %v2296 = vsub.f32 %v2228, %v2274
      %v2297 = vsub.f32 %v2233, %v2276
      %v2298 = vsub.f32 %v2236, %v2278
      %v2299 = vsub.f32 %v2241, %v2280
      %v2300 = vsub.f32 %v2244, %v2282
      %v2301 = vsub.f32 %v2249, %v2284
      %v2302 = vsub.f32 %v2252, %v2286
      %v2303 = vmul.f32 %v2287, 1.442695
      %v2304 = vpow.pop %v2303
      %v2305 = vmul.f32 %v2288, 1.442695
      %v2306 = vpow.pop %v2305
      %v2307 = vmul.f32 %v2289, 1.442695
      %v2308 = vpow.pop %v2307
      %v2309 = vmul.f32 %v2290, 1.442695
      %v2310 = vpow.pop %v2309
      %v2311 = vmul.f32 %v2291, 1.442695
      %v2312 = vpow.pop %v2311
      %v2313 = vmul.f32 %v2292, 1.442695
      %v2314 = vpow.pop %v2313
      %v2315 = vmul.f32 %v2293, 1.442695
      %v2316 = vpow.pop %v2315
      %v2317 = vmul.f32 %v2294, 1.442695
      %v2318 = vpow.pop %v2317
      %v2319 = vmul.f32 %v2295, 1.442695
      %v2320 = vpow.pop %v2319
      %v2321 = vmul.f32 %v2296, 1.442695
      %v2322 = vpow.pop %v2321
      %v2323 = vmul.f32 %v2297, 1.442695
      %v2324 = vpow.pop %v2323
      %v2325 = vmul.f32 %v2298, 1.442695
      %v2326 = vpow.pop %v2325
      %v2327 = vmul.f32 %v2299, 1.442695
      %v2328 = vpow.pop %v2327
      %v2329 = vmul.f32 %v2300, 1.442695
      %v2330 = vpow.pop %v2329
      %v2331 = vmul.f32 %v2301, 1.442695
      %v2332 = vpow.pop %v2331
      %v2333 = vmul.f32 %v2302, 1.442695
      %v2334 = vpow.pop %v2333
      %2335 = vadd.xlane.f32.xlu0 %v2304
      %v2336 = vpop.xlane.xlu0 %2335
      %2337 = vadd.xlane.f32.xlu0 %v2306
      %v2338 = vpop.xlane.xlu0 %2337
      %2339 = vadd.xlane.f32.xlu0 %v2308
      %v2340 = vpop.xlane.xlu0 %2339
      %2341 = vadd.xlane.f32.xlu0 %v2310
      %v2342 = vpop.xlane.xlu0 %2341
      %2343 = vadd.xlane.f32.xlu0 %v2312
      %v2344 = vpop.xlane.xlu0 %2343
      %2345 = vadd.xlane.f32.xlu0 %v2314
      %v2346 = vpop.xlane.xlu0 %2345
      %2347 = vadd.xlane.f32.xlu0 %v2316
      %v2348 = vpop.xlane.xlu0 %2347
      %2349 = vadd.xlane.f32.xlu0 %v2318
      %v2350 = vpop.xlane.xlu0 %2349
      %2351 = vadd.xlane.f32.xlu0 %v2320
      %v2352 = vpop.xlane.xlu0 %2351
      %2353 = vadd.xlane.f32.xlu0 %v2322
      %v2354 = vpop.xlane.xlu0 %2353
      %2355 = vadd.xlane.f32.xlu0 %v2324
      %v2356 = vpop.xlane.xlu0 %2355
      %2357 = vadd.xlane.f32.xlu0 %v2326
      %v2358 = vpop.xlane.xlu0 %2357
      %2359 = vadd.xlane.f32.xlu0 %v2328
      %v2360 = vpop.xlane.xlu0 %2359
      %2361 = vadd.xlane.f32.xlu0 %v2330
      %v2362 = vpop.xlane.xlu0 %2361
      %2363 = vadd.xlane.f32.xlu0 %v2332
      %v2364 = vpop.xlane.xlu0 %2363
      %2365 = vadd.xlane.f32.xlu0 %v2334
      %v2366 = vpop.xlane.xlu0 %2365
      %v2367 = vrcp.pop %v2336
      %v2368 = vrcp.pop %v2338
      %v2369 = vrcp.pop %v2340
      %v2370 = vrcp.pop %v2342
      %v2371 = vrcp.pop %v2344
      %v2372 = vrcp.pop %v2346
      %v2373 = vrcp.pop %v2348
      %v2374 = vrcp.pop %v2350
      %v2375 = vrcp.pop %v2352
      %v2376 = vrcp.pop %v2354
      %v2377 = vrcp.pop %v2356
      %v2378 = vrcp.pop %v2358
      %v2379 = vrcp.pop %v2360
      %v2380 = vrcp.pop %v2362
      %v2381 = vrcp.pop %v2364
      %v2382 = vrcp.pop %v2366
      %v2383 = vmul.f32 %v2304, %v2367
      %v2384 = vmul.f32 %v2306, %v2368
      %v2385 = vmul.f32 %v2308, %v2369
      %v2386 = vmul.f32 %v2310, %v2370
      %v2387 = vmul.f32 %v2312, %v2371
      %v2388 = vmul.f32 %v2314, %v2372
      %v2389 = vmul.f32 %v2316, %v2373
      %v2390 = vmul.f32 %v2318, %v2374
      %v2391 = vmul.f32 %v2320, %v2375
      %v2392 = vmul.f32 %v2322, %v2376
      %v2393 = vmul.f32 %v2324, %v2377
      %v2394 = vmul.f32 %v2326, %v2378
      %v2395 = vmul.f32 %v2328, %v2379
      %v2396 = vmul.f32 %v2330, %v2380
      %v2397 = vmul.f32 %v2332, %v2381
      %v2398 = vmul.f32 %v2334, %v2382
      %v2399 = vpack.c.bf16 %v2384, %v2383
      %v2400 = vpack.c.bf16 %v2386, %v2385
      %v2401 = vpack.c.bf16 %v2388, %v2387
      %v2402 = vpack.c.bf16 %v2390, %v2389
      %v2403 = vpack.c.bf16 %v2392, %v2391
      %v2404 = vpack.c.bf16 %v2394, %v2393
      %v2405 = vpack.c.bf16 %v2396, %v2395
      %v2406 = vpack.c.bf16 %v2398, %v2397
      %2407 = vrot.lane.b32.xlu0 %v866, 48
      %v2408 = vpop.permute.xlu0 %2407
      %2409 = vrot.lane.b32.xlu0 %v867, 48
      %v2410 = vpop.permute.xlu0 %2409
      %2411 = vrot.lane.b32.xlu0 %v868, 48
      %v2412 = vpop.permute.xlu0 %2411
      %2413 = vrot.lane.b32.xlu0 %v869, 48
      %v2414 = vpop.permute.xlu0 %2413
      %2415 = vrot.lane.b32.xlu0 %v870, 48
      %v2416 = vpop.permute.xlu0 %2415
      %2417 = vrot.lane.b32.xlu0 %v871, 48
      %v2418 = vpop.permute.xlu0 %2417
      %2419 = vrot.lane.b32.xlu0 %v872, 48
      %v2420 = vpop.permute.xlu0 %2419
      %2421 = vrot.lane.b32.xlu0 %v873, 48
      %v2422 = vpop.permute.xlu0 %2421
      %2431 = vmatprep.subr.bf16.mxu0 0
      %2432 = vmatpush1.bf16.msra.mxu0 %v2422
      %2433 = vmatprep.subr.bf16.mxu0 0
      %2434 = vmatpush1.bf16.msra.mxu0 %v2420
      %2435 = vmatprep.subr.bf16.mxu0 0
      %2436 = vmatpush1.bf16.msra.mxu0 %v2418
      %2437 = vmatprep.subr.bf16.mxu0 0
      %2438 = vmatpush1.bf16.msra.mxu0 %v2416
      %2439 = vmatprep.subr.bf16.mxu0 0
      %2440 = vmatpush1.bf16.msra.mxu0 %v2414
      %2441 = vmatprep.subr.bf16.mxu0 0
      %2442 = vmatpush1.bf16.msra.mxu0 %v2412
      %2443 = vmatprep.subr.bf16.mxu0 0
      %2444 = vmatpush1.bf16.msra.mxu0 %v2410
      %2445 = vmatprep.subr.bf16.mxu0 0
      %2446 = vmatpush1.bf16.msra.mxu0 %v2408
      %2447 = vmatprep.subr.bf16.mxu0 0
      %2448 = vmatpush2.bf16.msra.mxu0 0
      %2449 = vmatprep.subr.bf16.mxu0 0
      %2450 = vmatpush2.bf16.msra.mxu0 0
      %2451 = vmatprep.subr.bf16.mxu0 0
      %2452 = vmatpush2.bf16.msra.mxu0 0
      %2453 = vmatprep.subr.bf16.mxu0 0
      %2454 = vmatpush2.bf16.msra.mxu0 0
      %2455 = vmatprep.subr.bf16.mxu0 0
      %2456 = vmatpush2.bf16.msra.mxu0 0
      %2457 = vmatprep.subr.bf16.mxu0 0
      %2458 = vmatpush2.bf16.msra.mxu0 0
      %2459 = vmatprep.subr.bf16.mxu0 0
      %2460 = vmatpush2.bf16.msra.mxu0 0
      %2461 = vmatprep.subr.bf16.mxu0 0
      %2462 = vmatpush2.bf16.msra.mxu0 0
      %2463 = vmatprep.mubr.bf16.mxu0 0
      %2464 = vmatmul.mubr.bf16.gmra.mxu0 %v2399
      %v2465 = vpop.f32.mrf.mxu0
      %v2466 = vadd.f32 0.0, %v2465
      %v2467 = vpop.f32.mrf.mxu0
      %v2468 = vpop.f32.mrf.mxu0
      %v2469 = vadd.f32 0.0, %v2468
      %v2470 = vpop.f32.mrf.mxu0
      %2471 = vmatprep.mubr.bf16.mxu0 0
      %2472 = vmatmul.mubr.bf16.gmra.mxu0 %v2400
      %v2473 = vpop.f32.mrf.mxu0
      %v2474 = vadd.f32 0.0, %v2473
      %v2475 = vpop.f32.mrf.mxu0
      %v2476 = vpop.f32.mrf.mxu0
      %v2477 = vadd.f32 0.0, %v2476
      %v2478 = vpop.f32.mrf.mxu0
      %2479 = vmatprep.mubr.bf16.mxu0 0
      %2480 = vmatmul.mubr.bf16.gmra.mxu0 %v2401
      %v2481 = vpop.f32.mrf.mxu0
      %v2482 = vadd.f32 0.0, %v2481
      %v2483 = vpop.f32.mrf.mxu0
      %v2484 = vpop.f32.mrf.mxu0
      %v2485 = vadd.f32 0.0, %v2484
      %v2486 = vpop.f32.mrf.mxu0
      %2487 = vmatprep.mubr.bf16.mxu0 0
      %2488 = vmatmul.mubr.bf16.gmra.mxu0 %v2402
      %v2489 = vpop.f32.mrf.mxu0
      %v2490 = vadd.f32 0.0, %v2489
      %v2491 = vpop.f32.mrf.mxu0
      %v2492 = vpop.f32.mrf.mxu0
      %v2493 = vadd.f32 0.0, %v2492
      %v2494 = vpop.f32.mrf.mxu0
      %2495 = vmatprep.mubr.bf16.mxu0 0
      %2496 = vmatmul.mubr.bf16.gmra.mxu0 %v2403
      %v2497 = vpop.f32.mrf.mxu0
      %v2498 = vadd.f32 0.0, %v2497
      %v2499 = vpop.f32.mrf.mxu0
      %v2500 = vpop.f32.mrf.mxu0
      %v2501 = vadd.f32 0.0, %v2500
      %v2502 = vpop.f32.mrf.mxu0
      %2503 = vmatprep.mubr.bf16.mxu0 0
      %2504 = vmatmul.mubr.bf16.gmra.mxu0 %v2404
      %v2505 = vpop.f32.mrf.mxu0
      %v2506 = vadd.f32 0.0, %v2505
      %v2507 = vpop.f32.mrf.mxu0
      %v2508 = vpop.f32.mrf.mxu0
      %v2509 = vadd.f32 0.0, %v2508
      %v2510 = vpop.f32.mrf.mxu0
      %2511 = vmatprep.mubr.bf16.mxu0 0
      %2512 = vmatmul.mubr.bf16.gmra.mxu0 %v2405
      %v2513 = vpop.f32.mrf.mxu0
      %v2514 = vadd.f32 0.0, %v2513
      %v2515 = vpop.f32.mrf.mxu0
      %v2516 = vpop.f32.mrf.mxu0
      %v2517 = vadd.f32 0.0, %v2516
      %v2518 = vpop.f32.mrf.mxu0
      %2519 = vmatprep.mubr.bf16.mxu0 0
      %2520 = vmatmul.mubr.bf16.gmra.mxu0 %v2406
      %v2521 = vpop.f32.mrf.mxu0
      %v2522 = vadd.f32 0.0, %v2521
      %v2523 = vpop.f32.mrf.mxu0
      %v2524 = vpop.f32.mrf.mxu0
      %v2525 = vadd.f32 0.0, %v2524
      %v2526 = vpop.f32.mrf.mxu0
      %2527 = vdwg.mxu0
      %v2528 = vpack.c.bf16 %v2469, %v2466
      %v2529 = vpack.c.bf16 %v2477, %v2474
      %v2530 = vpack.c.bf16 %v2485, %v2482
      %v2531 = vpack.c.bf16 %v2493, %v2490
      %v2532 = vpack.c.bf16 %v2501, %v2498
      %v2533 = vpack.c.bf16 %v2509, %v2506
      %v2534 = vpack.c.bf16 %v2517, %v2514
      %v2535 = vpack.c.bf16 %v2525, %v2522
      %v2536 = vld [vmem:[%s5 + $0x8] sm:$0xf]
      %v2538 = vsel %vm910, %v2528, 0
      %v2541 = vsel %vm910, %v2529, 0
      %v2544 = vsel %vm910, %v2530, 0
      %v2547 = vsel %vm910, %v2531, 0
      %v2550 = vsel %vm910, %v2532, 0
      %v2553 = vsel %vm910, %v2533, 0
      %v2556 = vsel %vm910, %v2534, 0
      %v2559 = vsel %vm910, %v2535, 0
      %v2562 = vsel %vm1362, %v2536, 0
      %2564 = vmatprep.subr.bf16.mxu0 0
      %2565 = vmatpush1.bf16.msra.mxu0 0
      %2566 = vmatprep.subr.bf16.mxu0 0
      %2567 = vmatpush1.bf16.msra.mxu0 0
      %2568 = vmatprep.subr.bf16.mxu0 0
      %2569 = vmatpush1.bf16.msra.mxu0 0
      %2570 = vmatprep.subr.bf16.mxu0 0
      %2571 = vmatpush1.bf16.msra.mxu0 0
      %2572 = vmatprep.subr.bf16.mxu0 0
      %2573 = vmatpush1.bf16.msra.mxu0 0
      %2574 = vmatprep.subr.bf16.mxu0 0
      %2575 = vmatpush1.bf16.msra.mxu0 0
      %2576 = vmatprep.subr.bf16.mxu0 0
      %2577 = vmatpush1.bf16.msra.mxu0 0
      %2578 = vmatprep.subr.bf16.mxu0 0
      %2579 = vmatpush1.bf16.msra.mxu0 %v2562
      %2580 = vmatprep.subr.bf16.mxu0 0
      %2581 = vmatpush2.bf16.msra.mxu0 0
      %2582 = vmatprep.subr.bf16.mxu0 0
      %2583 = vmatpush2.bf16.msra.mxu0 0
      %2584 = vmatprep.subr.bf16.mxu0 0
      %2585 = vmatpush2.bf16.msra.mxu0 0
      %2586 = vmatprep.subr.bf16.mxu0 0
      %2587 = vmatpush2.bf16.msra.mxu0 0
      %2588 = vmatprep.subr.bf16.mxu0 0
      %2589 = vmatpush2.bf16.msra.mxu0 0
      %2590 = vmatprep.subr.bf16.mxu0 0
      %2591 = vmatpush2.bf16.msra.mxu0 0
      %2592 = vmatprep.subr.bf16.mxu0 0
      %2593 = vmatpush2.bf16.msra.mxu0 0
      %2594 = vmatprep.subr.bf16.mxu0 0
      %2595 = vmatpush2.bf16.msra.mxu0 0
      %2596 = vmatprep.mubr.bf16.mxu0 0
      %2597 = vmatmul.mubr.bf16.gmra.mxu0 %v2538
      %v2598 = vpop.f32.mrf.mxu0
      %v2599 = vadd.f32 0.0, %v2598
      %v2600 = vpop.f32.mrf.mxu0
      %v2601 = vpop.f32.mrf.mxu0
      %v2602 = vadd.f32 0.0, %v2601
      %v2603 = vpop.f32.mrf.mxu0
      %2604 = vmatprep.mubr.bf16.mxu0 0
      %2605 = vmatmul.mubr.bf16.gmra.mxu0 %v2541
      %v2606 = vpop.f32.mrf.mxu0
      %v2607 = vadd.f32 0.0, %v2606
      %v2608 = vpop.f32.mrf.mxu0
      %v2609 = vpop.f32.mrf.mxu0
      %v2610 = vadd.f32 0.0, %v2609
      %v2611 = vpop.f32.mrf.mxu0
      %2612 = vmatprep.mubr.bf16.mxu0 0
      %2613 = vmatmul.mubr.bf16.gmra.mxu0 %v2544
      %v2614 = vpop.f32.mrf.mxu0
      %v2615 = vadd.f32 0.0, %v2614
      %v2616 = vpop.f32.mrf.mxu0
      %v2617 = vpop.f32.mrf.mxu0
      %v2618 = vadd.f32 0.0, %v2617
      %v2619 = vpop.f32.mrf.mxu0
      %2620 = vmatprep.mubr.bf16.mxu0 0
      %2621 = vmatmul.mubr.bf16.gmra.mxu0 %v2547
      %v2622 = vpop.f32.mrf.mxu0
      %v2623 = vadd.f32 0.0, %v2622
      %v2624 = vpop.f32.mrf.mxu0
      %v2625 = vpop.f32.mrf.mxu0
      %v2626 = vadd.f32 0.0, %v2625
      %v2627 = vpop.f32.mrf.mxu0
      %2628 = vmatprep.mubr.bf16.mxu0 0
      %2629 = vmatmul.mubr.bf16.gmra.mxu0 %v2550
      %v2630 = vpop.f32.mrf.mxu0
      %v2631 = vadd.f32 0.0, %v2630
      %v2632 = vpop.f32.mrf.mxu0
      %v2633 = vpop.f32.mrf.mxu0
      %v2634 = vadd.f32 0.0, %v2633
      %v2635 = vpop.f32.mrf.mxu0
      %2636 = vmatprep.mubr.bf16.mxu0 0
      %2637 = vmatmul.mubr.bf16.gmra.mxu0 %v2553
      %v2638 = vpop.f32.mrf.mxu0
      %v2639 = vadd.f32 0.0, %v2638
      %v2640 = vpop.f32.mrf.mxu0
      %v2641 = vpop.f32.mrf.mxu0
      %v2642 = vadd.f32 0.0, %v2641
      %v2643 = vpop.f32.mrf.mxu0
      %2644 = vmatprep.mubr.bf16.mxu0 0
      %2645 = vmatmul.mubr.bf16.gmra.mxu0 %v2556
      %v2646 = vpop.f32.mrf.mxu0
      %v2647 = vadd.f32 0.0, %v2646
      %v2648 = vpop.f32.mrf.mxu0
      %v2649 = vpop.f32.mrf.mxu0
      %v2650 = vadd.f32 0.0, %v2649
      %v2651 = vpop.f32.mrf.mxu0
      %2652 = vmatprep.mubr.bf16.mxu0 0
      %2653 = vmatmul.mubr.bf16.gmra.mxu0 %v2559
      %v2654 = vpop.f32.mrf.mxu0
      %v2655 = vadd.f32 0.0, %v2654
      %v2656 = vpop.f32.mrf.mxu0
      %v2657 = vpop.f32.mrf.mxu0
      %v2658 = vadd.f32 0.0, %v2657
      %v2659 = vpop.f32.mrf.mxu0
      %2660 = vdwg.mxu0
      %v2661 = vadd.f32 %v2062, %v2599
      %v2662 = vadd.f32 %v2063, %v2602
      %v2663 = vadd.f32 %v2064, %v2607
      %v2664 = vadd.f32 %v2065, %v2610
      %v2665 = vadd.f32 %v2066, %v2615
      %v2666 = vadd.f32 %v2067, %v2618
      %v2667 = vadd.f32 %v2068, %v2623
      %v2668 = vadd.f32 %v2069, %v2626
      %v2669 = vadd.f32 %v2070, %v2631
      %v2670 = vadd.f32 %v2071, %v2634
      %v2671 = vadd.f32 %v2072, %v2639
      %v2672 = vadd.f32 %v2073, %v2642
      %v2673 = vadd.f32 %v2074, %v2647
      %v2674 = vadd.f32 %v2075, %v2650
      %v2675 = vadd.f32 %v2076, %v2655
      %v2676 = vadd.f32 %v2077, %v2658
      %2677 = vrot.lane.b32.xlu0 %v866, 104
      %v2678 = vpop.permute.xlu0 %2677
      %2679 = vrot.lane.b32.xlu0 %v867, 104
      %v2680 = vpop.permute.xlu0 %2679
      %2681 = vrot.lane.b32.xlu0 %v868, 104
      %v2682 = vpop.permute.xlu0 %2681
      %2683 = vrot.lane.b32.xlu0 %v869, 104
      %v2684 = vpop.permute.xlu0 %2683
      %2685 = vrot.lane.b32.xlu0 %v870, 104
      %v2686 = vpop.permute.xlu0 %2685
      %2687 = vrot.lane.b32.xlu0 %v871, 104
      %v2688 = vpop.permute.xlu0 %2687
      %2689 = vrot.lane.b32.xlu0 %v872, 104
      %v2690 = vpop.permute.xlu0 %2689
      %2691 = vrot.lane.b32.xlu0 %v873, 104
      %v2692 = vpop.permute.xlu0 %2691
      %2693 = vrot.lane.b32.xlu0 %v866, 72
      %v2694 = vpop.permute.xlu0 %2693
      %2695 = vrot.lane.b32.xlu0 %v867, 72
      %v2696 = vpop.permute.xlu0 %2695
      %2697 = vrot.lane.b32.xlu0 %v868, 72
      %v2698 = vpop.permute.xlu0 %2697
      %2699 = vrot.lane.b32.xlu0 %v869, 72
      %v2700 = vpop.permute.xlu0 %2699
      %2701 = vrot.lane.b32.xlu0 %v870, 72
      %v2702 = vpop.permute.xlu0 %2701
      %2703 = vrot.lane.b32.xlu0 %v871, 72
      %v2704 = vpop.permute.xlu0 %2703
      %2705 = vrot.lane.b32.xlu0 %v872, 72
      %v2706 = vpop.permute.xlu0 %2705
      %2707 = vrot.lane.b32.xlu0 %v873, 72
      %v2708 = vpop.permute.xlu0 %2707
      %v2710 = vsel %vm910, %v2678, 0
      %v2713 = vsel %vm910, %v2680, 0
      %v2716 = vsel %vm910, %v2682, 0
      %v2719 = vsel %vm910, %v2684, 0
      %v2722 = vsel %vm910, %v2686, 0
      %v2725 = vsel %vm910, %v2688, 0
      %v2728 = vsel %vm910, %v2690, 0
      %v2731 = vsel %vm910, %v2692, 0
      %v2734 = vsel %vm910, %v2694, 0
      %v2737 = vsel %vm910, %v2696, 0
      %v2740 = vsel %vm910, %v2698, 0
      %v2743 = vsel %vm910, %v2700, 0
      %v2746 = vsel %vm910, %v2702, 0
      %v2749 = vsel %vm910, %v2704, 0
      %v2752 = vsel %vm910, %v2706, 0
      %v2755 = vsel %vm910, %v2708, 0
      %2757 = vmatprep.subr.bf16.mxu0 0
      %2758 = vmatpush1.bf16.xpose.msra.mxu0 %v2755
      %2759 = vmatprep.subr.bf16.mxu0 0
      %2760 = vmatpush1.bf16.xpose.msra.mxu0 %v2752
      %2761 = vmatprep.subr.bf16.mxu0 0
      %2762 = vmatpush1.bf16.xpose.msra.mxu0 %v2749
      %2763 = vmatprep.subr.bf16.mxu0 0
      %2764 = vmatpush1.bf16.xpose.msra.mxu0 %v2746
      %2765 = vmatprep.subr.bf16.mxu0 0
      %2766 = vmatpush1.bf16.xpose.msra.mxu0 %v2743
      %2767 = vmatprep.subr.bf16.mxu0 0
      %2768 = vmatpush1.bf16.xpose.msra.mxu0 %v2740
      %2769 = vmatprep.subr.bf16.mxu0 0
      %2770 = vmatpush1.bf16.xpose.msra.mxu0 %v2737
      %2771 = vmatprep.subr.bf16.mxu0 0
      %2772 = vmatpush1.bf16.xpose.msra.mxu0 %v2734
      %2773 = vmatprep.subr.bf16.mxu0 0
      %2774 = vmatpush2.bf16.xpose.msra.mxu0 0
      %2775 = vmatprep.subr.bf16.mxu0 0
      %2776 = vmatpush2.bf16.xpose.msra.mxu0 0
      %2777 = vmatprep.subr.bf16.mxu0 0
      %2778 = vmatpush2.bf16.xpose.msra.mxu0 0
      %2779 = vmatprep.subr.bf16.mxu0 0
      %2780 = vmatpush2.bf16.xpose.msra.mxu0 0
      %2781 = vmatprep.subr.bf16.mxu0 0
      %2782 = vmatpush2.bf16.xpose.msra.mxu0 0
      %2783 = vmatprep.subr.bf16.mxu0 0
      %2784 = vmatpush2.bf16.xpose.msra.mxu0 0
      %2785 = vmatprep.subr.bf16.mxu0 0
      %2786 = vmatpush2.bf16.xpose.msra.mxu0 0
      %2787 = vmatprep.subr.bf16.mxu0 0
      %2788 = vmatpush2.bf16.xpose.msra.mxu0 0
      %2789 = vmatprep.mubr.bf16.mxu0 0
      %2790 = vmatmul.mubr.bf16.gmra.mxu0 %v2710
      %v2791 = vpop.f32.mrf.mxu0
      %v2792 = vadd.f32 %v877, %v2791
      %v2793 = vpop.f32.mrf.mxu0
      %v2794 = vpop.f32.mrf.mxu0
      %v2795 = vadd.f32 %v877, %v2794
      %v2796 = vpop.f32.mrf.mxu0
      %2797 = vmatprep.mubr.bf16.mxu0 0
      %2798 = vmatmul.mubr.bf16.gmra.mxu0 %v2713
      %v2799 = vpop.f32.mrf.mxu0
      %v2800 = vadd.f32 %v877, %v2799
      %v2801 = vpop.f32.mrf.mxu0
      %v2802 = vpop.f32.mrf.mxu0
      %v2803 = vadd.f32 %v877, %v2802
      %v2804 = vpop.f32.mrf.mxu0
      %2805 = vmatprep.mubr.bf16.mxu0 0
      %2806 = vmatmul.mubr.bf16.gmra.mxu0 %v2716
      %v2807 = vpop.f32.mrf.mxu0
      %v2808 = vadd.f32 %v877, %v2807
      %v2809 = vpop.f32.mrf.mxu0
      %v2810 = vpop.f32.mrf.mxu0
      %v2811 = vadd.f32 %v877, %v2810
      %v2812 = vpop.f32.mrf.mxu0
      %2813 = vmatprep.mubr.bf16.mxu0 0
      %2814 = vmatmul.mubr.bf16.gmra.mxu0 %v2719
      %v2815 = vpop.f32.mrf.mxu0
      %v2816 = vadd.f32 %v877, %v2815
      %v2817 = vpop.f32.mrf.mxu0
      %v2818 = vpop.f32.mrf.mxu0
      %v2819 = vadd.f32 %v877, %v2818
      %v2820 = vpop.f32.mrf.mxu0
      %2821 = vmatprep.mubr.bf16.mxu0 0
      %2822 = vmatmul.mubr.bf16.gmra.mxu0 %v2722
      %v2823 = vpop.f32.mrf.mxu0
      %v2824 = vadd.f32 %v877, %v2823
      %v2825 = vpop.f32.mrf.mxu0
      %v2826 = vpop.f32.mrf.mxu0
      %v2827 = vadd.f32 %v877, %v2826
      %v2828 = vpop.f32.mrf.mxu0
      %2829 = vmatprep.mubr.bf16.mxu0 0
      %2830 = vmatmul.mubr.bf16.gmra.mxu0 %v2725
      %v2831 = vpop.f32.mrf.mxu0
      %v2832 = vadd.f32 %v877, %v2831
      %v2833 = vpop.f32.mrf.mxu0
      %v2834 = vpop.f32.mrf.mxu0
      %v2835 = vadd.f32 %v877, %v2834
      %v2836 = vpop.f32.mrf.mxu0
      %2837 = vmatprep.mubr.bf16.mxu0 0
      %2838 = vmatmul.mubr.bf16.gmra.mxu0 %v2728
      %v2839 = vpop.f32.mrf.mxu0
      %v2840 = vadd.f32 %v877, %v2839
      %v2841 = vpop.f32.mrf.mxu0
      %v2842 = vpop.f32.mrf.mxu0
      %v2843 = vadd.f32 %v877, %v2842
      %v2844 = vpop.f32.mrf.mxu0
      %2845 = vmatprep.mubr.bf16.mxu0 0
      %2846 = vmatmul.mubr.bf16.gmra.mxu0 %v2731
      %v2847 = vpop.f32.mrf.mxu0
      %v2848 = vadd.f32 %v877, %v2847
      %v2849 = vpop.f32.mrf.mxu0
      %v2850 = vpop.f32.mrf.mxu0
      %v2851 = vadd.f32 %v877, %v2850
      %v2852 = vpop.f32.mrf.mxu0
      %2853 = vdwg.mxu0
      %2854 = vmax.xlane.f32.xlu0 %v2792
      %v2855 = vpop.xlane.xlu0 %2854
      %2856 = vmax.xlane.f32.xlu0 %v2795
      %v2857 = vpop.xlane.xlu0 %2856
      %2858 = vmax.xlane.f32.xlu0 %v2800
      %v2859 = vpop.xlane.xlu0 %2858
      %2860 = vmax.xlane.f32.xlu0 %v2803
      %v2861 = vpop.xlane.xlu0 %2860
      %2862 = vmax.xlane.f32.xlu0 %v2808
      %v2863 = vpop.xlane.xlu0 %2862
      %2864 = vmax.xlane.f32.xlu0 %v2811
      %v2865 = vpop.xlane.xlu0 %2864
      %2866 = vmax.xlane.f32.xlu0 %v2816
      %v2867 = vpop.xlane.xlu0 %2866
      %2868 = vmax.xlane.f32.xlu0 %v2819
      %v2869 = vpop.xlane.xlu0 %2868
      %2870 = vmax.xlane.f32.xlu0 %v2824
      %v2871 = vpop.xlane.xlu0 %2870
      %2872 = vmax.xlane.f32.xlu0 %v2827
      %v2873 = vpop.xlane.xlu0 %2872
      %2874 = vmax.xlane.f32.xlu0 %v2832
      %v2875 = vpop.xlane.xlu0 %2874
      %2876 = vmax.xlane.f32.xlu0 %v2835
      %v2877 = vpop.xlane.xlu0 %2876
      %2878 = vmax.xlane.f32.xlu0 %v2840
      %v2879 = vpop.xlane.xlu0 %2878
      %2880 = vmax.xlane.f32.xlu0 %v2843
      %v2881 = vpop.xlane.xlu0 %2880
      %2882 = vmax.xlane.f32.xlu0 %v2848
      %v2883 = vpop.xlane.xlu0 %2882
      %2884 = vmax.xlane.f32.xlu0 %v2851
      %v2885 = vpop.xlane.xlu0 %2884
      %v2886 = vsub.f32 %v2792, %v2855
      %v2887 = vsub.f32 %v2795, %v2857
      %v2888 = vsub.f32 %v2800, %v2859
      %v2889 = vsub.f32 %v2803, %v2861
      %v2890 = vsub.f32 %v2808, %v2863
      %v2891 = vsub.f32 %v2811, %v2865
      %v2892 = vsub.f32 %v2816, %v2867
      %v2893 = vsub.f32 %v2819, %v2869
      %v2894 = vsub.f32 %v2824, %v2871
      %v2895 = vsub.f32 %v2827, %v2873
      %v2896 = vsub.f32 %v2832, %v2875
      %v2897 = vsub.f32 %v2835, %v2877
      %v2898 = vsub.f32 %v2840, %v2879
      %v2899 = vsub.f32 %v2843, %v2881
      %v2900 = vsub.f32 %v2848, %v2883
      %v2901 = vsub.f32 %v2851, %v2885
      %v2902 = vmul.f32 %v2886, 1.442695
      %v2903 = vpow.pop %v2902
      %v2904 = vmul.f32 %v2887, 1.442695
      %v2905 = vpow.pop %v2904
      %v2906 = vmul.f32 %v2888, 1.442695
      %v2907 = vpow.pop %v2906
      %v2908 = vmul.f32 %v2889, 1.442695
      %v2909 = vpow.pop %v2908
      %v2910 = vmul.f32 %v2890, 1.442695
      %v2911 = vpow.pop %v2910
      %v2912 = vmul.f32 %v2891, 1.442695
      %v2913 = vpow.pop %v2912
      %v2914 = vmul.f32 %v2892, 1.442695
      %v2915 = vpow.pop %v2914
      %v2916 = vmul.f32 %v2893, 1.442695
      %v2917 = vpow.pop %v2916
      %v2918 = vmul.f32 %v2894, 1.442695
      %v2919 = vpow.pop %v2918
      %v2920 = vmul.f32 %v2895, 1.442695
      %v2921 = vpow.pop %v2920
      %v2922 = vmul.f32 %v2896, 1.442695
      %v2923 = vpow.pop %v2922
      %v2924 = vmul.f32 %v2897, 1.442695
      %v2925 = vpow.pop %v2924
      %v2926 = vmul.f32 %v2898, 1.442695
      %v2927 = vpow.pop %v2926
      %v2928 = vmul.f32 %v2899, 1.442695
      %v2929 = vpow.pop %v2928
      %v2930 = vmul.f32 %v2900, 1.442695
      %v2931 = vpow.pop %v2930
      %v2932 = vmul.f32 %v2901, 1.442695
      %v2933 = vpow.pop %v2932
      %2934 = vadd.xlane.f32.xlu0 %v2903
      %v2935 = vpop.xlane.xlu0 %2934
      %2936 = vadd.xlane.f32.xlu0 %v2905
      %v2937 = vpop.xlane.xlu0 %2936
      %2938 = vadd.xlane.f32.xlu0 %v2907
      %v2939 = vpop.xlane.xlu0 %2938
      %2940 = vadd.xlane.f32.xlu0 %v2909
      %v2941 = vpop.xlane.xlu0 %2940
      %2942 = vadd.xlane.f32.xlu0 %v2911
      %v2943 = vpop.xlane.xlu0 %2942
      %2944 = vadd.xlane.f32.xlu0 %v2913
      %v2945 = vpop.xlane.xlu0 %2944
      %2946 = vadd.xlane.f32.xlu0 %v2915
      %v2947 = vpop.xlane.xlu0 %2946
      %2948 = vadd.xlane.f32.xlu0 %v2917
      %v2949 = vpop.xlane.xlu0 %2948
      %2950 = vadd.xlane.f32.xlu0 %v2919
      %v2951 = vpop.xlane.xlu0 %2950
      %2952 = vadd.xlane.f32.xlu0 %v2921
      %v2953 = vpop.xlane.xlu0 %2952
      %2954 = vadd.xlane.f32.xlu0 %v2923
      %v2955 = vpop.xlane.xlu0 %2954
      %2956 = vadd.xlane.f32.xlu0 %v2925
      %v2957 = vpop.xlane.xlu0 %2956
      %2958 = vadd.xlane.f32.xlu0 %v2927
      %v2959 = vpop.xlane.xlu0 %2958
      %2960 = vadd.xlane.f32.xlu0 %v2929
      %v2961 = vpop.xlane.xlu0 %2960
      %2962 = vadd.xlane.f32.xlu0 %v2931
      %v2963 = vpop.xlane.xlu0 %2962
      %2964 = vadd.xlane.f32.xlu0 %v2933
      %v2965 = vpop.xlane.xlu0 %2964
      %v2966 = vrcp.pop %v2935
      %v2967 = vrcp.pop %v2937
      %v2968 = vrcp.pop %v2939
      %v2969 = vrcp.pop %v2941
      %v2970 = vrcp.pop %v2943
      %v2971 = vrcp.pop %v2945
      %v2972 = vrcp.pop %v2947
      %v2973 = vrcp.pop %v2949
      %v2974 = vrcp.pop %v2951
      %v2975 = vrcp.pop %v2953
      %v2976 = vrcp.pop %v2955
      %v2977 = vrcp.pop %v2957
      %v2978 = vrcp.pop %v2959
      %v2979 = vrcp.pop %v2961
      %v2980 = vrcp.pop %v2963
      %v2981 = vrcp.pop %v2965
      %v2982 = vmul.f32 %v2903, %v2966
      %v2983 = vmul.f32 %v2905, %v2967
      %v2984 = vmul.f32 %v2907, %v2968
      %v2985 = vmul.f32 %v2909, %v2969
      %v2986 = vmul.f32 %v2911, %v2970
      %v2987 = vmul.f32 %v2913, %v2971
      %v2988 = vmul.f32 %v2915, %v2972
      %v2989 = vmul.f32 %v2917, %v2973
      %v2990 = vmul.f32 %v2919, %v2974
      %v2991 = vmul.f32 %v2921, %v2975
      %v2992 = vmul.f32 %v2923, %v2976
      %v2993 = vmul.f32 %v2925, %v2977
      %v2994 = vmul.f32 %v2927, %v2978
      %v2995 = vmul.f32 %v2929, %v2979
      %v2996 = vmul.f32 %v2931, %v2980
      %v2997 = vmul.f32 %v2933, %v2981
      %v2998 = vpack.c.bf16 %v2983, %v2982
      %v2999 = vpack.c.bf16 %v2985, %v2984
      %v3000 = vpack.c.bf16 %v2987, %v2986
      %v3001 = vpack.c.bf16 %v2989, %v2988
      %v3002 = vpack.c.bf16 %v2991, %v2990
      %v3003 = vpack.c.bf16 %v2993, %v2992
      %v3004 = vpack.c.bf16 %v2995, %v2994
      %v3005 = vpack.c.bf16 %v2997, %v2996
      %3006 = vrot.lane.b32.xlu0 %v866, 40
      %v3007 = vpop.permute.xlu0 %3006
      %3008 = vrot.lane.b32.xlu0 %v867, 40
      %v3009 = vpop.permute.xlu0 %3008
      %3010 = vrot.lane.b32.xlu0 %v868, 40
      %v3011 = vpop.permute.xlu0 %3010
      %3012 = vrot.lane.b32.xlu0 %v869, 40
      %v3013 = vpop.permute.xlu0 %3012
      %3014 = vrot.lane.b32.xlu0 %v870, 40
      %v3015 = vpop.permute.xlu0 %3014
      %3016 = vrot.lane.b32.xlu0 %v871, 40
      %v3017 = vpop.permute.xlu0 %3016
      %3018 = vrot.lane.b32.xlu0 %v872, 40
      %v3019 = vpop.permute.xlu0 %3018
      %3020 = vrot.lane.b32.xlu0 %v873, 40
      %v3021 = vpop.permute.xlu0 %3020
      %3030 = vmatprep.subr.bf16.mxu0 0
      %3031 = vmatpush1.bf16.msra.mxu0 %v3021
      %3032 = vmatprep.subr.bf16.mxu0 0
      %3033 = vmatpush1.bf16.msra.mxu0 %v3019
      %3034 = vmatprep.subr.bf16.mxu0 0
      %3035 = vmatpush1.bf16.msra.mxu0 %v3017
      %3036 = vmatprep.subr.bf16.mxu0 0
      %3037 = vmatpush1.bf16.msra.mxu0 %v3015
      %3038 = vmatprep.subr.bf16.mxu0 0
      %3039 = vmatpush1.bf16.msra.mxu0 %v3013
      %3040 = vmatprep.subr.bf16.mxu0 0
      %3041 = vmatpush1.bf16.msra.mxu0 %v3011
      %3042 = vmatprep.subr.bf16.mxu0 0
      %3043 = vmatpush1.bf16.msra.mxu0 %v3009
      %3044 = vmatprep.subr.bf16.mxu0 0
      %3045 = vmatpush1.bf16.msra.mxu0 %v3007
      %3046 = vmatprep.subr.bf16.mxu0 0
      %3047 = vmatpush2.bf16.msra.mxu0 0
      %3048 = vmatprep.subr.bf16.mxu0 0
      %3049 = vmatpush2.bf16.msra.mxu0 0
      %3050 = vmatprep.subr.bf16.mxu0 0
      %3051 = vmatpush2.bf16.msra.mxu0 0
      %3052 = vmatprep.subr.bf16.mxu0 0
      %3053 = vmatpush2.bf16.msra.mxu0 0
      %3054 = vmatprep.subr.bf16.mxu0 0
      %3055 = vmatpush2.bf16.msra.mxu0 0
      %3056 = vmatprep.subr.bf16.mxu0 0
      %3057 = vmatpush2.bf16.msra.mxu0 0
      %3058 = vmatprep.subr.bf16.mxu0 0
      %3059 = vmatpush2.bf16.msra.mxu0 0
      %3060 = vmatprep.subr.bf16.mxu0 0
      %3061 = vmatpush2.bf16.msra.mxu0 0
      %3062 = vmatprep.mubr.bf16.mxu0 0
      %3063 = vmatmul.mubr.bf16.gmra.mxu0 %v2998
      %v3064 = vpop.f32.mrf.mxu0
      %v3065 = vadd.f32 0.0, %v3064
      %v3066 = vpop.f32.mrf.mxu0
      %v3067 = vpop.f32.mrf.mxu0
      %v3068 = vadd.f32 0.0, %v3067
      %v3069 = vpop.f32.mrf.mxu0
      %3070 = vmatprep.mubr.bf16.mxu0 0
      %3071 = vmatmul.mubr.bf16.gmra.mxu0 %v2999
      %v3072 = vpop.f32.mrf.mxu0
      %v3073 = vadd.f32 0.0, %v3072
      %v3074 = vpop.f32.mrf.mxu0
      %v3075 = vpop.f32.mrf.mxu0
      %v3076 = vadd.f32 0.0, %v3075
      %v3077 = vpop.f32.mrf.mxu0
      %3078 = vmatprep.mubr.bf16.mxu0 0
      %3079 = vmatmul.mubr.bf16.gmra.mxu0 %v3000
      %v3080 = vpop.f32.mrf.mxu0
      %v3081 = vadd.f32 0.0, %v3080
      %v3082 = vpop.f32.mrf.mxu0
      %v3083 = vpop.f32.mrf.mxu0
      %v3084 = vadd.f32 0.0, %v3083
      %v3085 = vpop.f32.mrf.mxu0
      %3086 = vmatprep.mubr.bf16.mxu0 0
      %3087 = vmatmul.mubr.bf16.gmra.mxu0 %v3001
      %v3088 = vpop.f32.mrf.mxu0
      %v3089 = vadd.f32 0.0, %v3088
      %v3090 = vpop.f32.mrf.mxu0
      %v3091 = vpop.f32.mrf.mxu0
      %v3092 = vadd.f32 0.0, %v3091
      %v3093 = vpop.f32.mrf.mxu0
      %3094 = vmatprep.mubr.bf16.mxu0 0
      %3095 = vmatmul.mubr.bf16.gmra.mxu0 %v3002
      %v3096 = vpop.f32.mrf.mxu0
      %v3097 = vadd.f32 0.0, %v3096
      %v3098 = vpop.f32.mrf.mxu0
      %v3099 = vpop.f32.mrf.mxu0
      %v3100 = vadd.f32 0.0, %v3099
      %v3101 = vpop.f32.mrf.mxu0
      %3102 = vmatprep.mubr.bf16.mxu0 0
      %3103 = vmatmul.mubr.bf16.gmra.mxu0 %v3003
      %v3104 = vpop.f32.mrf.mxu0
      %v3105 = vadd.f32 0.0, %v3104
      %v3106 = vpop.f32.mrf.mxu0
      %v3107 = vpop.f32.mrf.mxu0
      %v3108 = vadd.f32 0.0, %v3107
      %v3109 = vpop.f32.mrf.mxu0
      %3110 = vmatprep.mubr.bf16.mxu0 0
      %3111 = vmatmul.mubr.bf16.gmra.mxu0 %v3004
      %v3112 = vpop.f32.mrf.mxu0
      %v3113 = vadd.f32 0.0, %v3112
      %v3114 = vpop.f32.mrf.mxu0
      %v3115 = vpop.f32.mrf.mxu0
      %v3116 = vadd.f32 0.0, %v3115
      %v3117 = vpop.f32.mrf.mxu0
      %3118 = vmatprep.mubr.bf16.mxu0 0
      %3119 = vmatmul.mubr.bf16.gmra.mxu0 %v3005
      %v3120 = vpop.f32.mrf.mxu0
      %v3121 = vadd.f32 0.0, %v3120
      %v3122 = vpop.f32.mrf.mxu0
      %v3123 = vpop.f32.mrf.mxu0
      %v3124 = vadd.f32 0.0, %v3123
      %v3125 = vpop.f32.mrf.mxu0
      %3126 = vdwg.mxu0
      %v3127 = vpack.c.bf16 %v3068, %v3065
      %v3128 = vpack.c.bf16 %v3076, %v3073
      %v3129 = vpack.c.bf16 %v3084, %v3081
      %v3130 = vpack.c.bf16 %v3092, %v3089
      %v3131 = vpack.c.bf16 %v3100, %v3097
      %v3132 = vpack.c.bf16 %v3108, %v3105
      %v3133 = vpack.c.bf16 %v3116, %v3113
      %v3134 = vpack.c.bf16 %v3124, %v3121
      %v3135 = vld [vmem:[%s5 + $0xc] sm:$0xf]
      %v3137 = vsel %vm910, %v3127, 0
      %v3140 = vsel %vm910, %v3128, 0
      %v3143 = vsel %vm910, %v3129, 0
      %v3146 = vsel %vm910, %v3130, 0
      %v3149 = vsel %vm910, %v3131, 0
      %v3152 = vsel %vm910, %v3132, 0
      %v3155 = vsel %vm910, %v3133, 0
      %v3158 = vsel %vm910, %v3134, 0
      %v3161 = vsel %vm1362, %v3135, 0
      %3163 = vmatprep.subr.bf16.mxu0 0
      %3164 = vmatpush1.bf16.msra.mxu0 0
      %3165 = vmatprep.subr.bf16.mxu0 0
      %3166 = vmatpush1.bf16.msra.mxu0 0
      %3167 = vmatprep.subr.bf16.mxu0 0
      %3168 = vmatpush1.bf16.msra.mxu0 0
      %3169 = vmatprep.subr.bf16.mxu0 0
      %3170 = vmatpush1.bf16.msra.mxu0 0
      %3171 = vmatprep.subr.bf16.mxu0 0
      %3172 = vmatpush1.bf16.msra.mxu0 0
      %3173 = vmatprep.subr.bf16.mxu0 0
      %3174 = vmatpush1.bf16.msra.mxu0 0
      %3175 = vmatprep.subr.bf16.mxu0 0
      %3176 = vmatpush1.bf16.msra.mxu0 0
      %3177 = vmatprep.subr.bf16.mxu0 0
      %3178 = vmatpush1.bf16.msra.mxu0 %v3161
      %3179 = vmatprep.subr.bf16.mxu0 0
      %3180 = vmatpush2.bf16.msra.mxu0 0
      %3181 = vmatprep.subr.bf16.mxu0 0
      %3182 = vmatpush2.bf16.msra.mxu0 0
      %3183 = vmatprep.subr.bf16.mxu0 0
      %3184 = vmatpush2.bf16.msra.mxu0 0
      %3185 = vmatprep.subr.bf16.mxu0 0
      %3186 = vmatpush2.bf16.msra.mxu0 0
      %3187 = vmatprep.subr.bf16.mxu0 0
      %3188 = vmatpush2.bf16.msra.mxu0 0
      %3189 = vmatprep.subr.bf16.mxu0 0
      %3190 = vmatpush2.bf16.msra.mxu0 0
      %3191 = vmatprep.subr.bf16.mxu0 0
      %3192 = vmatpush2.bf16.msra.mxu0 0
      %3193 = vmatprep.subr.bf16.mxu0 0
      %3194 = vmatpush2.bf16.msra.mxu0 0
      %3195 = vmatprep.mubr.bf16.mxu0 0
      %3196 = vmatmul.mubr.bf16.gmra.mxu0 %v3137
      %v3197 = vpop.f32.mrf.mxu0
      %v3198 = vadd.f32 0.0, %v3197
      %v3199 = vpop.f32.mrf.mxu0
      %v3200 = vpop.f32.mrf.mxu0
      %v3201 = vadd.f32 0.0, %v3200
      %v3202 = vpop.f32.mrf.mxu0
      %3203 = vmatprep.mubr.bf16.mxu0 0
      %3204 = vmatmul.mubr.bf16.gmra.mxu0 %v3140
      %v3205 = vpop.f32.mrf.mxu0
      %v3206 = vadd.f32 0.0, %v3205
      %v3207 = vpop.f32.mrf.mxu0
      %v3208 = vpop.f32.mrf.mxu0
      %v3209 = vadd.f32 0.0, %v3208
      %v3210 = vpop.f32.mrf.mxu0
      %3211 = vmatprep.mubr.bf16.mxu0 0
      %3212 = vmatmul.mubr.bf16.gmra.mxu0 %v3143
      %v3213 = vpop.f32.mrf.mxu0
      %v3214 = vadd.f32 0.0, %v3213
      %v3215 = vpop.f32.mrf.mxu0
      %v3216 = vpop.f32.mrf.mxu0
      %v3217 = vadd.f32 0.0, %v3216
      %v3218 = vpop.f32.mrf.mxu0
      %3219 = vmatprep.mubr.bf16.mxu0 0
      %3220 = vmatmul.mubr.bf16.gmra.mxu0 %v3146
      %v3221 = vpop.f32.mrf.mxu0
      %v3222 = vadd.f32 0.0, %v3221
      %v3223 = vpop.f32.mrf.mxu0
      %v3224 = vpop.f32.mrf.mxu0
      %v3225 = vadd.f32 0.0, %v3224
      %v3226 = vpop.f32.mrf.mxu0
      %3227 = vmatprep.mubr.bf16.mxu0 0
      %3228 = vmatmul.mubr.bf16.gmra.mxu0 %v3149
      %v3229 = vpop.f32.mrf.mxu0
      %v3230 = vadd.f32 0.0, %v3229
      %v3231 = vpop.f32.mrf.mxu0
      %v3232 = vpop.f32.mrf.mxu0
      %v3233 = vadd.f32 0.0, %v3232
      %v3234 = vpop.f32.mrf.mxu0
      %3235 = vmatprep.mubr.bf16.mxu0 0
      %3236 = vmatmul.mubr.bf16.gmra.mxu0 %v3152
      %v3237 = vpop.f32.mrf.mxu0
      %v3238 = vadd.f32 0.0, %v3237
      %v3239 = vpop.f32.mrf.mxu0
      %v3240 = vpop.f32.mrf.mxu0
      %v3241 = vadd.f32 0.0, %v3240
      %v3242 = vpop.f32.mrf.mxu0
      %3243 = vmatprep.mubr.bf16.mxu0 0
      %3244 = vmatmul.mubr.bf16.gmra.mxu0 %v3155
      %v3245 = vpop.f32.mrf.mxu0
      %v3246 = vadd.f32 0.0, %v3245
      %v3247 = vpop.f32.mrf.mxu0
      %v3248 = vpop.f32.mrf.mxu0
      %v3249 = vadd.f32 0.0, %v3248
      %v3250 = vpop.f32.mrf.mxu0
      %3251 = vmatprep.mubr.bf16.mxu0 0
      %3252 = vmatmul.mubr.bf16.gmra.mxu0 %v3158
      %v3253 = vpop.f32.mrf.mxu0
      %v3254 = vadd.f32 0.0, %v3253
      %v3255 = vpop.f32.mrf.mxu0
      %v3256 = vpop.f32.mrf.mxu0
      %v3257 = vadd.f32 0.0, %v3256
      %v3258 = vpop.f32.mrf.mxu0
      %3259 = vdwg.mxu0
      %v3260 = vadd.f32 %v2661, %v3198
      %v3261 = vadd.f32 %v2662, %v3201
      %v3262 = vadd.f32 %v2663, %v3206
      %v3263 = vadd.f32 %v2664, %v3209
      %v3264 = vadd.f32 %v2665, %v3214
      %v3265 = vadd.f32 %v2666, %v3217
      %v3266 = vadd.f32 %v2667, %v3222
      %v3267 = vadd.f32 %v2668, %v3225
      %v3268 = vadd.f32 %v2669, %v3230
      %v3269 = vadd.f32 %v2670, %v3233
      %v3270 = vadd.f32 %v2671, %v3238
      %v3271 = vadd.f32 %v2672, %v3241
      %v3272 = vadd.f32 %v2673, %v3246
      %v3273 = vadd.f32 %v2674, %v3249
      %v3274 = vadd.f32 %v2675, %v3254
      %v3275 = vadd.f32 %v2676, %v3257
      %v3276 = vadd.f32 %v442, %v3260
      %v3277 = vadd.f32 %v443, %v3261
      %v3278 = vadd.f32 %v444, %v3262
      %v3279 = vadd.f32 %v445, %v3263
      %v3280 = vadd.f32 %v446, %v3264
      %v3281 = vadd.f32 %v447, %v3265
      %v3282 = vadd.f32 %v448, %v3266
      %v3283 = vadd.f32 %v449, %v3267
      %v3284 = vadd.f32 %v450, %v3268
      %v3285 = vadd.f32 %v451, %v3269
      %v3286 = vadd.f32 %v452, %v3270
      %v3287 = vadd.f32 %v453, %v3271
      %v3288 = vadd.f32 %v454, %v3272
      %v3289 = vadd.f32 %v455, %v3273
      %v3290 = vadd.f32 %v456, %v3274
      %v3291 = vadd.f32 %v457, %v3275
      %v3292 = vld [vmem:[%s7] sm:$0x1]
      %v3293 = vld [vmem:[%s8] sm:$0x1]
      %v3294 = vsel %vm460, %v3276, 0.0
      %3295 = vadd.xlane.f32.xlu0 %v3294
      %v3296 = vpop.xlane.xlu0 %3295
      %v3297 = vsel %vm460, %v3277, 0.0
      %3298 = vadd.xlane.f32.xlu0 %v3297
      %v3299 = vpop.xlane.xlu0 %3298
      %v3300 = vsel %vm460, %v3278, 0.0
      %3301 = vadd.xlane.f32.xlu0 %v3300
      %v3302 = vpop.xlane.xlu0 %3301
      %v3303 = vsel %vm460, %v3279, 0.0
      %3304 = vadd.xlane.f32.xlu0 %v3303
      %v3305 = vpop.xlane.xlu0 %3304
      %v3306 = vsel %vm460, %v3280, 0.0
      %3307 = vadd.xlane.f32.xlu0 %v3306
      %v3308 = vpop.xlane.xlu0 %3307
      %v3309 = vsel %vm460, %v3281, 0.0
      %3310 = vadd.xlane.f32.xlu0 %v3309
      %v3311 = vpop.xlane.xlu0 %3310
      %v3312 = vsel %vm460, %v3282, 0.0
      %3313 = vadd.xlane.f32.xlu0 %v3312
      %v3314 = vpop.xlane.xlu0 %3313
      %v3315 = vsel %vm460, %v3283, 0.0
      %3316 = vadd.xlane.f32.xlu0 %v3315
      %v3317 = vpop.xlane.xlu0 %3316
      %v3318 = vsel %vm460, %v3284, 0.0
      %3319 = vadd.xlane.f32.xlu0 %v3318
      %v3320 = vpop.xlane.xlu0 %3319
      %v3321 = vsel %vm460, %v3285, 0.0
      %3322 = vadd.xlane.f32.xlu0 %v3321
      %v3323 = vpop.xlane.xlu0 %3322
      %v3324 = vsel %vm460, %v3286, 0.0
      %3325 = vadd.xlane.f32.xlu0 %v3324
      %v3326 = vpop.xlane.xlu0 %3325
      %v3327 = vsel %vm460, %v3287, 0.0
      %3328 = vadd.xlane.f32.xlu0 %v3327
      %v3329 = vpop.xlane.xlu0 %3328
      %v3330 = vsel %vm460, %v3288, 0.0
      %3331 = vadd.xlane.f32.xlu0 %v3330
      %v3332 = vpop.xlane.xlu0 %3331
      %v3333 = vsel %vm460, %v3289, 0.0
      %3334 = vadd.xlane.f32.xlu0 %v3333
      %v3335 = vpop.xlane.xlu0 %3334
      %v3336 = vsel %vm460, %v3290, 0.0
      %3337 = vadd.xlane.f32.xlu0 %v3336
      %v3338 = vpop.xlane.xlu0 %3337
      %v3339 = vsel %vm460, %v3291, 0.0
      %3340 = vadd.xlane.f32.xlu0 %v3339
      %v3341 = vpop.xlane.xlu0 %3340
      %v3342 = vmul.f32 %v3296, %v509
      %v3343 = vmul.f32 %v3299, %v509
      %v3344 = vmul.f32 %v3302, %v509
      %v3345 = vmul.f32 %v3305, %v509
      %v3346 = vmul.f32 %v3308, %v509
      %v3347 = vmul.f32 %v3311, %v509
      %v3348 = vmul.f32 %v3314, %v509
      %v3349 = vmul.f32 %v3317, %v509
      %v3350 = vmul.f32 %v3320, %v509
      %v3351 = vmul.f32 %v3323, %v509
      %v3352 = vmul.f32 %v3326, %v509
      %v3353 = vmul.f32 %v3329, %v509
      %v3354 = vmul.f32 %v3332, %v509
      %v3355 = vmul.f32 %v3335, %v509
      %v3356 = vmul.f32 %v3338, %v509
      %v3357 = vmul.f32 %v3341, %v509
      %v3358 = vsub.f32 %v3276, %v3342
      %v3359 = vsub.f32 %v3277, %v3343
      %v3360 = vsub.f32 %v3278, %v3344
      %v3361 = vsub.f32 %v3279, %v3345
      %v3362 = vsub.f32 %v3280, %v3346
      %v3363 = vsub.f32 %v3281, %v3347
      %v3364 = vsub.f32 %v3282, %v3348
      %v3365 = vsub.f32 %v3283, %v3349
      %v3366 = vsub.f32 %v3284, %v3350
      %v3367 = vsub.f32 %v3285, %v3351
      %v3368 = vsub.f32 %v3286, %v3352
      %v3369 = vsub.f32 %v3287, %v3353
      %v3370 = vsub.f32 %v3288, %v3354
      %v3371 = vsub.f32 %v3289, %v3355
      %v3372 = vsub.f32 %v3290, %v3356
      %v3373 = vsub.f32 %v3291, %v3357
      %v3374 = vmul.f32 %v3358, %v3358
      %v3375 = vmul.f32 %v3359, %v3359
      %v3376 = vmul.f32 %v3360, %v3360
      %v3377 = vmul.f32 %v3361, %v3361
      %v3378 = vmul.f32 %v3362, %v3362
      %v3379 = vmul.f32 %v3363, %v3363
      %v3380 = vmul.f32 %v3364, %v3364
      %v3381 = vmul.f32 %v3365, %v3365
      %v3382 = vmul.f32 %v3366, %v3366
      %v3383 = vmul.f32 %v3367, %v3367
      %v3384 = vmul.f32 %v3368, %v3368
      %v3385 = vmul.f32 %v3369, %v3369
      %v3386 = vmul.f32 %v3370, %v3370
      %v3387 = vmul.f32 %v3371, %v3371
      %v3388 = vmul.f32 %v3372, %v3372
      %v3389 = vmul.f32 %v3373, %v3373
      %v3390 = vsel %vm460, %v3374, 0.0
      %3391 = vadd.xlane.f32.xlu0 %v3390
      %v3392 = vpop.xlane.xlu0 %3391
      %v3393 = vsel %vm460, %v3375, 0.0
      %3394 = vadd.xlane.f32.xlu0 %v3393
      %v3395 = vpop.xlane.xlu0 %3394
      %v3396 = vsel %vm460, %v3376, 0.0
      %3397 = vadd.xlane.f32.xlu0 %v3396
      %v3398 = vpop.xlane.xlu0 %3397
      %v3399 = vsel %vm460, %v3377, 0.0
      %3400 = vadd.xlane.f32.xlu0 %v3399
      %v3401 = vpop.xlane.xlu0 %3400
      %v3402 = vsel %vm460, %v3378, 0.0
      %3403 = vadd.xlane.f32.xlu0 %v3402
      %v3404 = vpop.xlane.xlu0 %3403
      %v3405 = vsel %vm460, %v3379, 0.0
      %3406 = vadd.xlane.f32.xlu0 %v3405
      %v3407 = vpop.xlane.xlu0 %3406
      %v3408 = vsel %vm460, %v3380, 0.0
      %3409 = vadd.xlane.f32.xlu0 %v3408
      %v3410 = vpop.xlane.xlu0 %3409
      %v3411 = vsel %vm460, %v3381, 0.0
      %3412 = vadd.xlane.f32.xlu0 %v3411
      %v3413 = vpop.xlane.xlu0 %3412
      %v3414 = vsel %vm460, %v3382, 0.0
      %3415 = vadd.xlane.f32.xlu0 %v3414
      %v3416 = vpop.xlane.xlu0 %3415
      %v3417 = vsel %vm460, %v3383, 0.0
      %3418 = vadd.xlane.f32.xlu0 %v3417
      %v3419 = vpop.xlane.xlu0 %3418
      %v3420 = vsel %vm460, %v3384, 0.0
      %3421 = vadd.xlane.f32.xlu0 %v3420
      %v3422 = vpop.xlane.xlu0 %3421
      %v3423 = vsel %vm460, %v3385, 0.0
      %3424 = vadd.xlane.f32.xlu0 %v3423
      %v3425 = vpop.xlane.xlu0 %3424
      %v3426 = vsel %vm460, %v3386, 0.0
      %3427 = vadd.xlane.f32.xlu0 %v3426
      %v3428 = vpop.xlane.xlu0 %3427
      %v3429 = vsel %vm460, %v3387, 0.0
      %3430 = vadd.xlane.f32.xlu0 %v3429
      %v3431 = vpop.xlane.xlu0 %3430
      %v3432 = vsel %vm460, %v3388, 0.0
      %3433 = vadd.xlane.f32.xlu0 %v3432
      %v3434 = vpop.xlane.xlu0 %3433
      %v3435 = vsel %vm460, %v3389, 0.0
      %3436 = vadd.xlane.f32.xlu0 %v3435
      %v3437 = vpop.xlane.xlu0 %3436
      %v3438 = vmul.f32 %v3392, %v509
      %v3439 = vmul.f32 %v3395, %v509
      %v3440 = vmul.f32 %v3398, %v509
      %v3441 = vmul.f32 %v3401, %v509
      %v3442 = vmul.f32 %v3404, %v509
      %v3443 = vmul.f32 %v3407, %v509
      %v3444 = vmul.f32 %v3410, %v509
      %v3445 = vmul.f32 %v3413, %v509
      %v3446 = vmul.f32 %v3416, %v509
      %v3447 = vmul.f32 %v3419, %v509
      %v3448 = vmul.f32 %v3422, %v509
      %v3449 = vmul.f32 %v3425, %v509
      %v3450 = vmul.f32 %v3428, %v509
      %v3451 = vmul.f32 %v3431, %v509
      %v3452 = vmul.f32 %v3434, %v509
      %v3453 = vmul.f32 %v3437, %v509
      %v3454 = vadd.f32 %v3438, 1e-05
      %v3455 = vadd.f32 %v3439, 1e-05
      %v3456 = vadd.f32 %v3440, 1e-05
      %v3457 = vadd.f32 %v3441, 1e-05
      %v3458 = vadd.f32 %v3442, 1e-05
      %v3459 = vadd.f32 %v3443, 1e-05
      %v3460 = vadd.f32 %v3444, 1e-05
      %v3461 = vadd.f32 %v3445, 1e-05
      %v3462 = vadd.f32 %v3446, 1e-05
      %v3463 = vadd.f32 %v3447, 1e-05
      %v3464 = vadd.f32 %v3448, 1e-05
      %v3465 = vadd.f32 %v3449, 1e-05
      %v3466 = vadd.f32 %v3450, 1e-05
      %v3467 = vadd.f32 %v3451, 1e-05
      %v3468 = vadd.f32 %v3452, 1e-05
      %v3469 = vadd.f32 %v3453, 1e-05
      %v3470 = vrsqrt.pop %v3454
      %v3471 = vrsqrt.pop %v3455
      %v3472 = vrsqrt.pop %v3456
      %v3473 = vrsqrt.pop %v3457
      %v3474 = vrsqrt.pop %v3458
      %v3475 = vrsqrt.pop %v3459
      %v3476 = vrsqrt.pop %v3460
      %v3477 = vrsqrt.pop %v3461
      %v3478 = vrsqrt.pop %v3462
      %v3479 = vrsqrt.pop %v3463
      %v3480 = vrsqrt.pop %v3464
      %v3481 = vrsqrt.pop %v3465
      %v3482 = vrsqrt.pop %v3466
      %v3483 = vrsqrt.pop %v3467
      %v3484 = vrsqrt.pop %v3468
      %v3485 = vrsqrt.pop %v3469
      %v3486 = vmul.f32 %v3358, %v3470
      %v3487 = vmul.f32 %v3359, %v3471
      %v3488 = vmul.f32 %v3360, %v3472
      %v3489 = vmul.f32 %v3361, %v3473
      %v3490 = vmul.f32 %v3362, %v3474
      %v3491 = vmul.f32 %v3363, %v3475
      %v3492 = vmul.f32 %v3364, %v3476
      %v3493 = vmul.f32 %v3365, %v3477
      %v3494 = vmul.f32 %v3366, %v3478
      %v3495 = vmul.f32 %v3367, %v3479
      %v3496 = vmul.f32 %v3368, %v3480
      %v3497 = vmul.f32 %v3369, %v3481
      %v3498 = vmul.f32 %v3370, %v3482
      %v3499 = vmul.f32 %v3371, %v3483
      %v3500 = vmul.f32 %v3372, %v3484
      %v3501 = vmul.f32 %v3373, %v3485
      %v3503 = vlaneseq
      %v3504 = vshrl.u32 %v3503, 7
      %v3505 = vsub.s32 0, %v3504
      %v3506 = vrot.slane %v3292, %v3505
      %v3508 = vmul.f32 %v3486, %v3506
      %v3509 = vmul.f32 %v3487, %v3506
      %v3510 = vmul.f32 %v3488, %v3506
      %v3511 = vmul.f32 %v3489, %v3506
      %v3512 = vmul.f32 %v3490, %v3506
      %v3513 = vmul.f32 %v3491, %v3506
      %v3514 = vmul.f32 %v3492, %v3506
      %v3515 = vmul.f32 %v3493, %v3506
      %v3516 = vmul.f32 %v3494, %v3506
      %v3517 = vmul.f32 %v3495, %v3506
      %v3518 = vmul.f32 %v3496, %v3506
      %v3519 = vmul.f32 %v3497, %v3506
      %v3520 = vmul.f32 %v3498, %v3506
      %v3521 = vmul.f32 %v3499, %v3506
      %v3522 = vmul.f32 %v3500, %v3506
      %v3523 = vmul.f32 %v3501, %v3506
      %v3525 = vlaneseq
      %v3526 = vshrl.u32 %v3525, 7
      %v3527 = vsub.s32 0, %v3526
      %v3528 = vrot.slane %v3293, %v3527
      %v3530 = vadd.f32 %v3508, %v3528
      %v3531 = vadd.f32 %v3509, %v3528
      %v3532 = vadd.f32 %v3510, %v3528
      %v3533 = vadd.f32 %v3511, %v3528
      %v3534 = vadd.f32 %v3512, %v3528
      %v3535 = vadd.f32 %v3513, %v3528
      %v3536 = vadd.f32 %v3514, %v3528
      %v3537 = vadd.f32 %v3515, %v3528
      %v3538 = vadd.f32 %v3516, %v3528
      %v3539 = vadd.f32 %v3517, %v3528
      %v3540 = vadd.f32 %v3518, %v3528
      %v3541 = vadd.f32 %v3519, %v3528
      %v3542 = vadd.f32 %v3520, %v3528
      %v3543 = vadd.f32 %v3521, %v3528
      %v3544 = vadd.f32 %v3522, %v3528
      %v3545 = vadd.f32 %v3523, %v3528
      %v3546 = vpack.c.bf16 %v3531, %v3530
      %v3547 = vpack.c.bf16 %v3533, %v3532
      %v3548 = vpack.c.bf16 %v3535, %v3534
      %v3549 = vpack.c.bf16 %v3537, %v3536
      %v3550 = vpack.c.bf16 %v3539, %v3538
      %v3551 = vpack.c.bf16 %v3541, %v3540
      %v3552 = vpack.c.bf16 %v3543, %v3542
      %v3553 = vpack.c.bf16 %v3545, %v3544
      %v3554 = vld [vmem:[%s12] sm:$0x1]
      %v3556 = vlaneseq
      %v3557 = vshrl.u32 %v3556, 7
      %v3558 = vsub.s32 0, %v3557
      %v3559 = vrot.slane %v3554, %v3558
      %v3561 = vadd.f32 %v3559, 0.0
      %v3562 = vld [vmem:[%s9] sm:$0xf]
      %v3563 = vld [vmem:[%s9 + $0x4] sm:$0xf]
      %v3564 = vld [vmem:[%s9 + $0x8] sm:$0xf]
      %v3565 = vld [vmem:[%s9 + $0xc] sm:$0xf]
      %v3566 = vld [vmem:[%s10] sm:$0x1]
      %v3568 = vlaneseq
      %v3569 = vshrl.u32 %v3568, 7
      %v3570 = vsub.s32 0, %v3569
      %v3571 = vrot.slane %v3566, %v3570
      %v3577 = vunpack.c.l.b16 %v3562
      %v3578 = vunpack.c.l.b16 %v3563
      %v3579 = vunpack.c.l.b16 %v3564
      %v3580 = vunpack.c.l.b16 %v3565
      %v3581 = vpack.c.b16 %v3578, %v3577
      %v3582 = vpack.c.b16 %v3580, %v3579
      %v3586 = vsel %vm460, %v3546, 0
      %v3589 = vsel %vm460, %v3547, 0
      %v3592 = vsel %vm460, %v3548, 0
      %v3595 = vsel %vm460, %v3549, 0
      %v3598 = vsel %vm460, %v3550, 0
      %v3601 = vsel %vm460, %v3551, 0
      %v3604 = vsel %vm460, %v3552, 0
      %v3607 = vsel %vm460, %v3553, 0
      %3609 = vmatprep.subr.bf16.mxu0 0
      %3610 = vmatpush1.bf16.msra.mxu0 0
      %3611 = vmatprep.subr.bf16.mxu0 0
      %3612 = vmatpush1.bf16.msra.mxu0 0
      %3613 = vmatprep.subr.bf16.mxu0 0
      %3614 = vmatpush1.bf16.msra.mxu0 0
      %3615 = vmatprep.subr.bf16.mxu0 0
      %3616 = vmatpush1.bf16.msra.mxu0 0
      %3617 = vmatprep.subr.bf16.mxu0 0
      %3618 = vmatpush1.bf16.msra.mxu0 0
      %3619 = vmatprep.subr.bf16.mxu0 0
      %3620 = vmatpush1.bf16.msra.mxu0 0
      %3621 = vmatprep.subr.bf16.mxu0 0
      %3622 = vmatpush1.bf16.msra.mxu0 %v3582
      %3623 = vmatprep.subr.bf16.mxu0 0
      %3624 = vmatpush1.bf16.msra.mxu0 %v3581
      %3625 = vmatprep.subr.bf16.mxu0 0
      %3626 = vmatpush2.bf16.msra.mxu0 0
      %3627 = vmatprep.subr.bf16.mxu0 0
      %3628 = vmatpush2.bf16.msra.mxu0 0
      %3629 = vmatprep.subr.bf16.mxu0 0
      %3630 = vmatpush2.bf16.msra.mxu0 0
      %3631 = vmatprep.subr.bf16.mxu0 0
      %3632 = vmatpush2.bf16.msra.mxu0 0
      %3633 = vmatprep.subr.bf16.mxu0 0
      %3634 = vmatpush2.bf16.msra.mxu0 0
      %3635 = vmatprep.subr.bf16.mxu0 0
      %3636 = vmatpush2.bf16.msra.mxu0 0
      %3637 = vmatprep.subr.bf16.mxu0 0
      %3638 = vmatpush2.bf16.msra.mxu0 0
      %3639 = vmatprep.subr.bf16.mxu0 0
      %3640 = vmatpush2.bf16.msra.mxu0 0
      %3641 = vmatprep.mubr.bf16.mxu0 0
      %3642 = vmatmul.mubr.bf16.gmra.mxu0 %v3586
      %v3643 = vpop.f32.mrf.mxu0
      %v3644 = vadd.f32 %v3571, %v3643
      %v3645 = vpop.f32.mrf.mxu0
      %v3646 = vpop.f32.mrf.mxu0
      %v3647 = vadd.f32 %v3571, %v3646
      %v3648 = vpop.f32.mrf.mxu0
      %3649 = vmatprep.mubr.bf16.mxu0 0
      %3650 = vmatmul.mubr.bf16.gmra.mxu0 %v3589
      %v3651 = vpop.f32.mrf.mxu0
      %v3652 = vadd.f32 %v3571, %v3651
      %v3653 = vpop.f32.mrf.mxu0
      %v3654 = vpop.f32.mrf.mxu0
      %v3655 = vadd.f32 %v3571, %v3654
      %v3656 = vpop.f32.mrf.mxu0
      %3657 = vmatprep.mubr.bf16.mxu0 0
      %3658 = vmatmul.mubr.bf16.gmra.mxu0 %v3592
      %v3659 = vpop.f32.mrf.mxu0
      %v3660 = vadd.f32 %v3571, %v3659
      %v3661 = vpop.f32.mrf.mxu0
      %v3662 = vpop.f32.mrf.mxu0
      %v3663 = vadd.f32 %v3571, %v3662
      %v3664 = vpop.f32.mrf.mxu0
      %3665 = vmatprep.mubr.bf16.mxu0 0
      %3666 = vmatmul.mubr.bf16.gmra.mxu0 %v3595
      %v3667 = vpop.f32.mrf.mxu0
      %v3668 = vadd.f32 %v3571, %v3667
      %v3669 = vpop.f32.mrf.mxu0
      %v3670 = vpop.f32.mrf.mxu0
      %v3671 = vadd.f32 %v3571, %v3670
      %v3672 = vpop.f32.mrf.mxu0
      %3673 = vmatprep.mubr.bf16.mxu0 0
      %3674 = vmatmul.mubr.bf16.gmra.mxu0 %v3598
      %v3675 = vpop.f32.mrf.mxu0
      %v3676 = vadd.f32 %v3571, %v3675
      %v3677 = vpop.f32.mrf.mxu0
      %v3678 = vpop.f32.mrf.mxu0
      %v3679 = vadd.f32 %v3571, %v3678
      %v3680 = vpop.f32.mrf.mxu0
      %3681 = vmatprep.mubr.bf16.mxu0 0
      %3682 = vmatmul.mubr.bf16.gmra.mxu0 %v3601
      %v3683 = vpop.f32.mrf.mxu0
      %v3684 = vadd.f32 %v3571, %v3683
      %v3685 = vpop.f32.mrf.mxu0
      %v3686 = vpop.f32.mrf.mxu0
      %v3687 = vadd.f32 %v3571, %v3686
      %v3688 = vpop.f32.mrf.mxu0
      %3689 = vmatprep.mubr.bf16.mxu0 0
      %3690 = vmatmul.mubr.bf16.gmra.mxu0 %v3604
      %v3691 = vpop.f32.mrf.mxu0
      %v3692 = vadd.f32 %v3571, %v3691
      %v3693 = vpop.f32.mrf.mxu0
      %v3694 = vpop.f32.mrf.mxu0
      %v3695 = vadd.f32 %v3571, %v3694
      %v3696 = vpop.f32.mrf.mxu0
      %3697 = vmatprep.mubr.bf16.mxu0 0
      %3698 = vmatmul.mubr.bf16.gmra.mxu0 %v3607
      %v3699 = vpop.f32.mrf.mxu0
      %v3700 = vadd.f32 %v3571, %v3699
      %v3701 = vpop.f32.mrf.mxu0
      %v3702 = vpop.f32.mrf.mxu0
      %v3703 = vadd.f32 %v3571, %v3702
      %v3704 = vpop.f32.mrf.mxu0
      %3705 = vdwg.mxu0
      %v3706 = vmul.f32 %v3644, 1.702
      %v3707 = vmul.f32 %v3647, 1.702
      %v3708 = vmul.f32 %v3652, 1.702
      %v3709 = vmul.f32 %v3655, 1.702
      %v3710 = vmul.f32 %v3660, 1.702
      %v3711 = vmul.f32 %v3663, 1.702
      %v3712 = vmul.f32 %v3668, 1.702
      %v3713 = vmul.f32 %v3671, 1.702
      %v3714 = vmul.f32 %v3676, 1.702
      %v3715 = vmul.f32 %v3679, 1.702
      %v3716 = vmul.f32 %v3684, 1.702
      %v3717 = vmul.f32 %v3687, 1.702
      %v3718 = vmul.f32 %v3692, 1.702
      %v3719 = vmul.f32 %v3695, 1.702
      %v3720 = vmul.f32 %v3700, 1.702
      %v3721 = vmul.f32 %v3703, 1.702
      %v3722 = vxor.u32 %v3706, 2147483648
      %v3723 = vxor.u32 %v3707, 2147483648
      %v3724 = vxor.u32 %v3708, 2147483648
      %v3725 = vxor.u32 %v3709, 2147483648
      %v3726 = vxor.u32 %v3710, 2147483648
      %v3727 = vxor.u32 %v3711, 2147483648
      %v3728 = vxor.u32 %v3712, 2147483648
      %v3729 = vxor.u32 %v3713, 2147483648
      %v3730 = vxor.u32 %v3714, 2147483648
      %v3731 = vxor.u32 %v3715, 2147483648
      %v3732 = vxor.u32 %v3716, 2147483648
      %v3733 = vxor.u32 %v3717, 2147483648
      %v3734 = vxor.u32 %v3718, 2147483648
      %v3735 = vxor.u32 %v3719, 2147483648
      %v3736 = vxor.u32 %v3720, 2147483648
      %v3737 = vxor.u32 %v3721, 2147483648
      %v3738 = vmul.f32 %v3722, 1.442695
      %v3739 = vpow.pop %v3738
      %v3740 = vmul.f32 %v3723, 1.442695
      %v3741 = vpow.pop %v3740
      %v3742 = vmul.f32 %v3724, 1.442695
      %v3743 = vpow.pop %v3742
      %v3744 = vmul.f32 %v3725, 1.442695
      %v3745 = vpow.pop %v3744
      %v3746 = vmul.f32 %v3726, 1.442695
      %v3747 = vpow.pop %v3746
      %v3748 = vmul.f32 %v3727, 1.442695
      %v3749 = vpow.pop %v3748
      %v3750 = vmul.f32 %v3728, 1.442695
      %v3751 = vpow.pop %v3750
      %v3752 = vmul.f32 %v3729, 1.442695
      %v3753 = vpow.pop %v3752
      %v3754 = vmul.f32 %v3730, 1.442695
      %v3755 = vpow.pop %v3754
      %v3756 = vmul.f32 %v3731, 1.442695
      %v3757 = vpow.pop %v3756
      %v3758 = vmul.f32 %v3732, 1.442695
      %v3759 = vpow.pop %v3758
      %v3760 = vmul.f32 %v3733, 1.442695
      %v3761 = vpow.pop %v3760
      %v3762 = vmul.f32 %v3734, 1.442695
      %v3763 = vpow.pop %v3762
      %v3764 = vmul.f32 %v3735, 1.442695
      %v3765 = vpow.pop %v3764
      %v3766 = vmul.f32 %v3736, 1.442695
      %v3767 = vpow.pop %v3766
      %v3768 = vmul.f32 %v3737, 1.442695
      %v3769 = vpow.pop %v3768
      %v3770 = vadd.f32 %v3739, 1.0
      %v3771 = vadd.f32 %v3741, 1.0
      %v3772 = vadd.f32 %v3743, 1.0
      %v3773 = vadd.f32 %v3745, 1.0
      %v3774 = vadd.f32 %v3747, 1.0
      %v3775 = vadd.f32 %v3749, 1.0
      %v3776 = vadd.f32 %v3751, 1.0
      %v3777 = vadd.f32 %v3753, 1.0
      %v3778 = vadd.f32 %v3755, 1.0
      %v3779 = vadd.f32 %v3757, 1.0
      %v3780 = vadd.f32 %v3759, 1.0
      %v3781 = vadd.f32 %v3761, 1.0
      %v3782 = vadd.f32 %v3763, 1.0
      %v3783 = vadd.f32 %v3765, 1.0
      %v3784 = vadd.f32 %v3767, 1.0
      %v3785 = vadd.f32 %v3769, 1.0
      %v3786 = vrcp.pop %v3770
      %v3787 = vmul.f32 1.0, %v3786
      %v3788 = vrcp.pop %v3771
      %v3789 = vmul.f32 1.0, %v3788
      %v3790 = vrcp.pop %v3772
      %v3791 = vmul.f32 1.0, %v3790
      %v3792 = vrcp.pop %v3773
      %v3793 = vmul.f32 1.0, %v3792
      %v3794 = vrcp.pop %v3774
      %v3795 = vmul.f32 1.0, %v3794
      %v3796 = vrcp.pop %v3775
      %v3797 = vmul.f32 1.0, %v3796
      %v3798 = vrcp.pop %v3776
      %v3799 = vmul.f32 1.0, %v3798
      %v3800 = vrcp.pop %v3777
      %v3801 = vmul.f32 1.0, %v3800
      %v3802 = vrcp.pop %v3778
      %v3803 = vmul.f32 1.0, %v3802
      %v3804 = vrcp.pop %v3779
      %v3805 = vmul.f32 1.0, %v3804
      %v3806 = vrcp.pop %v3780
      %v3807 = vmul.f32 1.0, %v3806
      %v3808 = vrcp.pop %v3781
      %v3809 = vmul.f32 1.0, %v3808
      %v3810 = vrcp.pop %v3782
      %v3811 = vmul.f32 1.0, %v3810
      %v3812 = vrcp.pop %v3783
      %v3813 = vmul.f32 1.0, %v3812
      %v3814 = vrcp.pop %v3784
      %v3815 = vmul.f32 1.0, %v3814
      %v3816 = vrcp.pop %v3785
      %v3817 = vmul.f32 1.0, %v3816
      %v3818 = vmul.f32 %v3644, %v3787
      %v3819 = vmul.f32 %v3647, %v3789
      %v3820 = vmul.f32 %v3652, %v3791
      %v3821 = vmul.f32 %v3655, %v3793
      %v3822 = vmul.f32 %v3660, %v3795
      %v3823 = vmul.f32 %v3663, %v3797
      %v3824 = vmul.f32 %v3668, %v3799
      %v3825 = vmul.f32 %v3671, %v3801
      %v3826 = vmul.f32 %v3676, %v3803
      %v3827 = vmul.f32 %v3679, %v3805
      %v3828 = vmul.f32 %v3684, %v3807
      %v3829 = vmul.f32 %v3687, %v3809
      %v3830 = vmul.f32 %v3692, %v3811
      %v3831 = vmul.f32 %v3695, %v3813
      %v3832 = vmul.f32 %v3700, %v3815
      %v3833 = vmul.f32 %v3703, %v3817
      %v3834 = vpack.c.bf16 %v3819, %v3818
      %v3835 = vpack.c.bf16 %v3821, %v3820
      %v3836 = vpack.c.bf16 %v3823, %v3822
      %v3837 = vpack.c.bf16 %v3825, %v3824
      %v3838 = vpack.c.bf16 %v3827, %v3826
      %v3839 = vpack.c.bf16 %v3829, %v3828
      %v3840 = vpack.c.bf16 %v3831, %v3830
      %v3841 = vpack.c.bf16 %v3833, %v3832
      %v3842 = vld [vmem:[%s11] sm:$0xf]
      %v3843 = vld [vmem:[%s11 + $0x4] sm:$0xf]
      %v3844 = vld [vmem:[%s11 + $0x8] sm:$0xf]
      %v3845 = vld [vmem:[%s11 + $0xc] sm:$0xf]
      %v3846 = vld [vmem:[%s11 + $0x10] sm:$0xf]
      %v3847 = vld [vmem:[%s11 + $0x14] sm:$0xf]
      %v3848 = vld [vmem:[%s11 + $0x18] sm:$0xf]
      %v3849 = vld [vmem:[%s11 + $0x1c] sm:$0xf]
      %v3850 = vld [vmem:[%s11 + $0x20] sm:$0xf]
      %v3851 = vld [vmem:[%s11 + $0x24] sm:$0xf]
      %v3852 = vld [vmem:[%s11 + $0x28] sm:$0xf]
      %v3853 = vld [vmem:[%s11 + $0x2c] sm:$0xf]
      %v3854 = vld [vmem:[%s11 + $0x30] sm:$0xf]
      %v3855 = vld [vmem:[%s11 + $0x34] sm:$0xf]
      %v3856 = vld [vmem:[%s11 + $0x38] sm:$0xf]
      %v3857 = vld [vmem:[%s11 + $0x3c] sm:$0xf]
      %v3874 = vunpack.c.l.b16 %v3842
      %v3875 = vunpack.c.l.b16 %v3843
      %v3876 = vunpack.c.l.b16 %v3844
      %v3877 = vunpack.c.l.b16 %v3845
      %v3878 = vunpack.c.l.b16 %v3846
      %v3879 = vunpack.c.l.b16 %v3847
      %v3880 = vunpack.c.l.b16 %v3848
      %v3881 = vunpack.c.l.b16 %v3849
      %v3882 = vunpack.c.l.b16 %v3850
      %v3883 = vunpack.c.l.b16 %v3851
      %v3884 = vunpack.c.l.b16 %v3852
      %v3885 = vunpack.c.l.b16 %v3853
      %v3886 = vunpack.c.l.b16 %v3854
      %v3887 = vunpack.c.l.b16 %v3855
      %v3888 = vunpack.c.l.b16 %v3856
      %v3889 = vunpack.c.l.b16 %v3857
      %v3890 = vpack.c.b16 %v3875, %v3874
      %v3891 = vpack.c.b16 %v3877, %v3876
      %v3892 = vpack.c.b16 %v3879, %v3878
      %v3893 = vpack.c.b16 %v3881, %v3880
      %v3894 = vpack.c.b16 %v3883, %v3882
      %v3895 = vpack.c.b16 %v3885, %v3884
      %v3896 = vpack.c.b16 %v3887, %v3886
      %v3897 = vpack.c.b16 %v3889, %v3888
      %3906 = vmatprep.subr.bf16.mxu0 0
      %3907 = vmatpush1.bf16.msra.mxu0 %v3897
      %3908 = vmatprep.subr.bf16.mxu0 0
      %3909 = vmatpush1.bf16.msra.mxu0 %v3896
      %3910 = vmatprep.subr.bf16.mxu0 0
      %3911 = vmatpush1.bf16.msra.mxu0 %v3895
      %3912 = vmatprep.subr.bf16.mxu0 0
      %3913 = vmatpush1.bf16.msra.mxu0 %v3894
      %3914 = vmatprep.subr.bf16.mxu0 0
      %3915 = vmatpush1.bf16.msra.mxu0 %v3893
      %3916 = vmatprep.subr.bf16.mxu0 0
      %3917 = vmatpush1.bf16.msra.mxu0 %v3892
      %3918 = vmatprep.subr.bf16.mxu0 0
      %3919 = vmatpush1.bf16.msra.mxu0 %v3891
      %3920 = vmatprep.subr.bf16.mxu0 0
      %3921 = vmatpush1.bf16.msra.mxu0 %v3890
      %3922 = vmatprep.subr.bf16.mxu0 0
      %3923 = vmatpush2.bf16.msra.mxu0 0
      %3924 = vmatprep.subr.bf16.mxu0 0
      %3925 = vmatpush2.bf16.msra.mxu0 0
      %3926 = vmatprep.subr.bf16.mxu0 0
      %3927 = vmatpush2.bf16.msra.mxu0 0
      %3928 = vmatprep.subr.bf16.mxu0 0
      %3929 = vmatpush2.bf16.msra.mxu0 0
      %3930 = vmatprep.subr.bf16.mxu0 0
      %3931 = vmatpush2.bf16.msra.mxu0 0
      %3932 = vmatprep.subr.bf16.mxu0 0
      %3933 = vmatpush2.bf16.msra.mxu0 0
      %3934 = vmatprep.subr.bf16.mxu0 0
      %3935 = vmatpush2.bf16.msra.mxu0 0
      %3936 = vmatprep.subr.bf16.mxu0 0
      %3937 = vmatpush2.bf16.msra.mxu0 0
      %3938 = vmatprep.mubr.bf16.mxu0 0
      %3939 = vmatmul.mubr.bf16.gmra.mxu0 %v3834
      %v3940 = vpop.f32.mrf.mxu0
      %v3941 = vadd.f32 0.0, %v3940
      %v3942 = vpop.f32.mrf.mxu0
      %v3943 = vpop.f32.mrf.mxu0
      %v3944 = vadd.f32 0.0, %v3943
      %v3945 = vpop.f32.mrf.mxu0
      %3946 = vmatprep.mubr.bf16.mxu0 0
      %3947 = vmatmul.mubr.bf16.gmra.mxu0 %v3835
      %v3948 = vpop.f32.mrf.mxu0
      %v3949 = vadd.f32 0.0, %v3948
      %v3950 = vpop.f32.mrf.mxu0
      %v3951 = vpop.f32.mrf.mxu0
      %v3952 = vadd.f32 0.0, %v3951
      %v3953 = vpop.f32.mrf.mxu0
      %3954 = vmatprep.mubr.bf16.mxu0 0
      %3955 = vmatmul.mubr.bf16.gmra.mxu0 %v3836
      %v3956 = vpop.f32.mrf.mxu0
      %v3957 = vadd.f32 0.0, %v3956
      %v3958 = vpop.f32.mrf.mxu0
      %v3959 = vpop.f32.mrf.mxu0
      %v3960 = vadd.f32 0.0, %v3959
      %v3961 = vpop.f32.mrf.mxu0
      %3962 = vmatprep.mubr.bf16.mxu0 0
      %3963 = vmatmul.mubr.bf16.gmra.mxu0 %v3837
      %v3964 = vpop.f32.mrf.mxu0
      %v3965 = vadd.f32 0.0, %v3964
      %v3966 = vpop.f32.mrf.mxu0
      %v3967 = vpop.f32.mrf.mxu0
      %v3968 = vadd.f32 0.0, %v3967
      %v3969 = vpop.f32.mrf.mxu0
      %3970 = vmatprep.mubr.bf16.mxu0 0
      %3971 = vmatmul.mubr.bf16.gmra.mxu0 %v3838
      %v3972 = vpop.f32.mrf.mxu0
      %v3973 = vadd.f32 0.0, %v3972
      %v3974 = vpop.f32.mrf.mxu0
      %v3975 = vpop.f32.mrf.mxu0
      %v3976 = vadd.f32 0.0, %v3975
      %v3977 = vpop.f32.mrf.mxu0
      %3978 = vmatprep.mubr.bf16.mxu0 0
      %3979 = vmatmul.mubr.bf16.gmra.mxu0 %v3839
      %v3980 = vpop.f32.mrf.mxu0
      %v3981 = vadd.f32 0.0, %v3980
      %v3982 = vpop.f32.mrf.mxu0
      %v3983 = vpop.f32.mrf.mxu0
      %v3984 = vadd.f32 0.0, %v3983
      %v3985 = vpop.f32.mrf.mxu0
      %3986 = vmatprep.mubr.bf16.mxu0 0
      %3987 = vmatmul.mubr.bf16.gmra.mxu0 %v3840
      %v3988 = vpop.f32.mrf.mxu0
      %v3989 = vadd.f32 0.0, %v3988
      %v3990 = vpop.f32.mrf.mxu0
      %v3991 = vpop.f32.mrf.mxu0
      %v3992 = vadd.f32 0.0, %v3991
      %v3993 = vpop.f32.mrf.mxu0
      %3994 = vmatprep.mubr.bf16.mxu0 0
      %3995 = vmatmul.mubr.bf16.gmra.mxu0 %v3841
      %v3996 = vpop.f32.mrf.mxu0
      %v3997 = vadd.f32 0.0, %v3996
      %v3998 = vpop.f32.mrf.mxu0
      %v3999 = vpop.f32.mrf.mxu0
      %v4000 = vadd.f32 0.0, %v3999
      %v4001 = vpop.f32.mrf.mxu0
      %4002 = vdwg.mxu0
      %v4003 = vadd.f32 %v3561, %v3941
      %v4004 = vadd.f32 %v3561, %v3944
      %v4005 = vadd.f32 %v3561, %v3949
      %v4006 = vadd.f32 %v3561, %v3952
      %v4007 = vadd.f32 %v3561, %v3957
      %v4008 = vadd.f32 %v3561, %v3960
      %v4009 = vadd.f32 %v3561, %v3965
      %v4010 = vadd.f32 %v3561, %v3968
      %v4011 = vadd.f32 %v3561, %v3973
      %v4012 = vadd.f32 %v3561, %v3976
      %v4013 = vadd.f32 %v3561, %v3981
      %v4014 = vadd.f32 %v3561, %v3984
      %v4015 = vadd.f32 %v3561, %v3989
      %v4016 = vadd.f32 %v3561, %v3992
      %v4017 = vadd.f32 %v3561, %v3997
      %v4018 = vadd.f32 %v3561, %v4000
      %v4019 = vadd.f32 %v3276, %v4003
      %v4020 = vadd.f32 %v3277, %v4004
      %v4021 = vadd.f32 %v3278, %v4005
      %v4022 = vadd.f32 %v3279, %v4006
      %v4023 = vadd.f32 %v3280, %v4007
      %v4024 = vadd.f32 %v3281, %v4008
      %v4025 = vadd.f32 %v3282, %v4009
      %v4026 = vadd.f32 %v3283, %v4010
      %v4027 = vadd.f32 %v3284, %v4011
      %v4028 = vadd.f32 %v3285, %v4012
      %v4029 = vadd.f32 %v3286, %v4013
      %v4030 = vadd.f32 %v3287, %v4014
      %v4031 = vadd.f32 %v3288, %v4015
      %v4032 = vadd.f32 %v3289, %v4016
      %v4033 = vadd.f32 %v3290, %v4017
      %v4034 = vadd.f32 %v3291, %v4018
      %4035 = vst.msk [vmem:[%s440] sm:$0xff] %vm460, %v4019
      %4036 = vst.msk [vmem:[%s440 + $0x8] sm:$0xff] %vm460, %v4020
      %4037 = vst.msk [vmem:[%s440 + $0x10] sm:$0xff] %vm460, %v4021
      %4038 = vst.msk [vmem:[%s440 + $0x18] sm:$0xff] %vm460, %v4022
      %4039 = vst.msk [vmem:[%s440 + $0x20] sm:$0xff] %vm460, %v4023
      %4040 = vst.msk [vmem:[%s440 + $0x28] sm:$0xff] %vm460, %v4024
      %4041 = vst.msk [vmem:[%s440 + $0x30] sm:$0xff] %vm460, %v4025
      %4042 = vst.msk [vmem:[%s440 + $0x38] sm:$0xff] %vm460, %v4026
      %4043 = vst.msk [vmem:[%s440 + $0x40] sm:$0xff] %vm460, %v4027
      %4044 = vst.msk [vmem:[%s440 + $0x48] sm:$0xff] %vm460, %v4028
      %4045 = vst.msk [vmem:[%s440 + $0x50] sm:$0xff] %vm460, %v4029
      %4046 = vst.msk [vmem:[%s440 + $0x58] sm:$0xff] %vm460, %v4030
      %4047 = vst.msk [vmem:[%s440 + $0x60] sm:$0xff] %vm460, %v4031
      %4048 = vst.msk [vmem:[%s440 + $0x68] sm:$0xff] %vm460, %v4032
      %4049 = vst.msk [vmem:[%s440 + $0x70] sm:$0xff] %vm460, %v4033
      %4050 = vst.msk [vmem:[%s440 + $0x78] sm:$0xff] %vm460, %v4034
      %p4051 = scmp.lt.s32.totalorder %s24, 1
      %s4052 = scalar_select %p4051, %s24, 1
      %s4053 = smul.addr %s4052, 16
      %s4054 = smul.addr %s4053, 8
      %s4055 = scalar_lea.vmem %s13, %s4054
      // Predicated region
      $region73: #{tpu_custom_call.1} parent=71 // pred_check
        %p4056 = pneg %p320
      $region74: #{tpu_custom_call.1} parent=71 // pred_check_branch
        %4058 = sbr.rel (%p4056) target = $region76
      $region75: #{tpu_custom_call.1} parent=71 // pred_region
        _
      $region76: #{tpu_custom_call.1} parent=71 // pred_fallthru
        _
    $region72: #{tpu_custom_call.1} parent=5 // pred_fallthru
      _
    %p4059 = scmp.le.s32.totalorder 2, %s19
    // Predicated region
    $region77: #{tpu_custom_call.1} parent=5 // pred_check
      %p4060 = pneg %p4059
    $region78: #{tpu_custom_call.1} parent=5 // pred_check_branch
      %4062 = sbr.rel (%p4060) target = $region80
    $region79: #{tpu_custom_call.1} parent=5 // pred_region
      %s4063 = ssub.s32 %s19, 2
      // Predicated region
      $region81: #{tpu_custom_call.1} parent=79 // pred_check
        %p4064 = pneg %p326
      $region82: #{tpu_custom_call.1} parent=79 // pred_check_branch
        %4066 = sbr.rel (%p4064) target = $region84
      $region83: #{tpu_custom_call.1} parent=79 // pred_region
        %p4067 = scmp.lt.s32.totalorder %s25, 1
        %s4068 = scalar_select %p4067, %s25, 1
        %s4069 = smul.addr %s4068, 16
        %s4070 = smul.addr %s4069, 8
        %s4071 = scalar_lea.vmem %s13, %s4070
      $region84: #{tpu_custom_call.1} parent=79 // pred_fallthru
        _
    $region80: #{tpu_custom_call.1} parent=5 // pred_fallthru
      _
  $region6: #{tpu_custom_call.1} parent=0 // loop_footer
    %s23 = sadd.s32 1, %s19
  $region7: #{tpu_custom_call.1} parent=0 // loop_footer_branch
    %18 = sbr.rel target = $region3
  $region8: #{tpu_custom_call.1} parent=0 // loop_exit
    _

// kernel: tpu_custom_call.1
$region0: #{tpu_custom_call.1}
  #allocation0 [shape = 'u32[]', space=smem, size = 0x4, offset = 0x4, fixed_abs, tag = 'smem constant byte address 0x4 - core index']
  #allocation1 [shape = 'u32[144,128]{1,0:T(1,128)}', space=vmem, size = 0x12000, scoped, tag = 'internal scratch']
  %s0 = inlined_call_operand.vmem [shape: f32[2,128,32], index: 0, kind: input, shape index: {}]
  %s1 = inlined_call_operand.vmem [shape: f32[1,32], index: 1, kind: input, shape index: {}]
  %s2 = inlined_call_operand.vmem [shape: f32[1,32], index: 2, kind: input, shape index: {}]
  %s3 = inlined_call_operand.vmem [shape: bf16[32,96], index: 3, kind: input, shape index: {}]
  %s4 = inlined_call_operand.vmem [shape: f32[1,96], index: 4, kind: input, shape index: {}]
  %s5 = inlined_call_operand.vmem [shape: bf16[32,32], index: 5, kind: input, shape index: {}]
  %s6 = inlined_call_operand.vmem [shape: f32[1,32], index: 6, kind: input, shape index: {}]
  %s7 = inlined_call_operand.vmem [shape: f32[1,32], index: 7, kind: input, shape index: {}]
  %s8 = inlined_call_operand.vmem [shape: f32[1,32], index: 8, kind: input, shape index: {}]
  %s9 = inlined_call_operand.vmem [shape: bf16[32,128], index: 9, kind: input, shape index: {}]
  %s10 = inlined_call_operand.vmem [shape: f32[1,128], index: 10, kind: input, shape index: {}]
  %s11 = inlined_call_operand.vmem [shape: bf16[128,32], index: 11, kind: input, shape index: {}]
  %s12 = inlined_call_operand.vmem [shape: f32[1,32], index: 12, kind: input, shape index: {}]
  %s13 = inlined_call_operand.vmem [shape: f32[2,128,32], index: 13, kind: output, shape index: {}]
  %s14 = sld [smem:[#allocation0]]
  $region85: #{tpu_custom_call.1} parent=0
    _
  %s16 = ssub.s32 1, %s14
  %s17 = scalar_select 0, %s16, %s14
  loop: start=0, step=1, limit=4
  $region2: #{tpu_custom_call.1} parent=0 // loop_pre_header
    _
  $region3: #{tpu_custom_call.1} parent=0 // loop_header
    %s19 = sphi 0, %s23
    %p20 = scmp.ge.s32.totalorder %s19, 4
    %s29 = sphi 0, %s31
    %s32 = sphi 0, %s29
    %s33 = sphi 0, %s32
    %s49 = sphi 0, %s33
    %s53 = sphi 0, %s53
    %s55 = sphi 0, %s53
    %s56 = sphi 0, %s55
    %s70 = sphi 0, %s56
    %s74 = sphi 0, %s74
    %s76 = sphi 0, %s74
    %s77 = sphi 0, %s76
    %s91 = sphi 0, %s77
    %s95 = sphi 0, %s95
    %s97 = sphi 0, %s95
    %s98 = sphi 0, %s97
    %s112 = sphi 0, %s98
    %s116 = sphi 0, %s116
    %s118 = sphi 0, %s116
    %s119 = sphi 0, %s118
    %s133 = sphi 0, %s119
    %s137 = sphi 0, %s137
    %s139 = sphi 0, %s137
    %s140 = sphi 0, %s139
    %s154 = sphi 0, %s140
    %s158 = sphi 0, %s158
    %s160 = sphi 0, %s158
    %s161 = sphi 0, %s160
    %s175 = sphi 0, %s161
    %s179 = sphi 0, %s179
    %s181 = sphi 0, %s179
    %s182 = sphi 0, %s181
    %s196 = sphi 0, %s182
    %s200 = sphi 0, %s200
    %s202 = sphi 0, %s200
    %s203 = sphi 0, %s202
    %s217 = sphi 0, %s203
    %s221 = sphi 0, %s221
    %s223 = sphi 0, %s221
    %s224 = sphi 0, %s223
    %s238 = sphi 0, %s224
    %s242 = sphi 0, %s242
    %s244 = sphi 0, %s242
    %s245 = sphi 0, %s244
    %s259 = sphi 0, %s245
    %s263 = sphi 0, %s263
    %s265 = sphi 0, %s263
    %s266 = sphi 0, %s265
    %s280 = sphi 0, %s266
    %s284 = sphi 0, %s284
    %s286 = sphi 0, %s284
    %s287 = sphi 0, %s286
    %s301 = sphi 0, %s287
    %s307 = sphi 0, %s309
    %s310 = sphi 0, %s307
    %s311 = sphi 0, %s310
    %s327 = sphi 0, %s311
  $region4: #{tpu_custom_call.1} parent=0 // loop_header_branch
    %22 = sbr.rel (%p20) target = $region8
  $region5: #{tpu_custom_call.1} parent=0 // loop_body
    %s24 = ssub.s32 %s19, 1
    %s25 = ssub.s32 %s19, 2
    %s26 = sadd.s32 %s19, 1
    %s27 = ssub.s32 %s19, %s26
    %p28 = scmp.eq.s32.totalorder %s27, 0
    %s30 = sadd.s32 %s29, 1
    %s31 = scalar_select %p28, %s29, %s30
    %p34 = pneg %p28
    %p35 = scmp.eq.s32.totalorder %s19, 1
    %p36 = por %p34, %p35
    %p37 = scmp.ne.s32.totalorder %s29, %s32
    %p38 = scmp.eq.s32.totalorder %s19, 0
    %p39 = por %p37, %p38
    %p40 = scmp.ne.s32.totalorder %s29, %s32
    %p41 = scmp.eq.s32.totalorder %s24, 1
    %p42 = por %p40, %p41
    %p43 = scmp.ne.s32.totalorder %s32, %s33
    %p44 = scmp.eq.s32.totalorder %s24, 0
    %p45 = por %p43, %p44
    %p46 = scmp.ne.s32.totalorder %s32, %s33
    %p47 = scmp.eq.s32.totalorder %s25, 1
    %p48 = por %p46, %p47
    %p50 = scmp.ne.s32.totalorder %s33, %s49
    %p51 = scmp.eq.s32.totalorder %s25, 0
    %p52 = por %p50, %p51
    %s54 = sadd.s32 %s53, 1
    %p57 = scmp.eq.s32.totalorder %s19, 1
    %p58 = scmp.ne.s32.totalorder %s53, %s55
    %p59 = scmp.eq.s32.totalorder %s19, 0
    %p60 = por %p58, %p59
    %p61 = scmp.ne.s32.totalorder %s53, %s55
    %p62 = scmp.eq.s32.totalorder %s24, 1
    %p63 = por %p61, %p62
    %p64 = scmp.ne.s32.totalorder %s55, %s56
    %p65 = scmp.eq.s32.totalorder %s24, 0
    %p66 = por %p64, %p65
    %p67 = scmp.ne.s32.totalorder %s55, %s56
    %p68 = scmp.eq.s32.totalorder %s25, 1
    %p69 = por %p67, %p68
    %p71 = scmp.ne.s32.totalorder %s56, %s70
    %p72 = scmp.eq.s32.totalorder %s25, 0
    %p73 = por %p71, %p72
    %s75 = sadd.s32 %s74, 1
    %p78 = scmp.eq.s32.totalorder %s19, 1
    %p79 = scmp.ne.s32.totalorder %s74, %s76
    %p80 = scmp.eq.s32.totalorder %s19, 0
    %p81 = por %p79, %p80
    %p82 = scmp.ne.s32.totalorder %s74, %s76
    %p83 = scmp.eq.s32.totalorder %s24, 1
    %p84 = por %p82, %p83
    %p85 = scmp.ne.s32.totalorder %s76, %s77
    %p86 = scmp.eq.s32.totalorder %s24, 0
    %p87 = por %p85, %p86
    %p88 = scmp.ne.s32.totalorder %s76, %s77
    %p89 = scmp.eq.s32.totalorder %s25, 1
    %p90 = por %p88, %p89
    %p92 = scmp.ne.s32.totalorder %s77, %s91
    %p93 = scmp.eq.s32.totalorder %s25, 0
    %p94 = por %p92, %p93
    %s96 = sadd.s32 %s95, 1
    %p99 = scmp.eq.s32.totalorder %s19, 1
    %p100 = scmp.ne.s32.totalorder %s95, %s97
    %p101 = scmp.eq.s32.totalorder %s19, 0
    %p102 = por %p100, %p101
    %p103 = scmp.ne.s32.totalorder %s95, %s97
    %p104 = scmp.eq.s32.totalorder %s24, 1
    %p105 = por %p103, %p104
    %p106 = scmp.ne.s32.totalorder %s97, %s98
    %p107 = scmp.eq.s32.totalorder %s24, 0
    %p108 = por %p106, %p107
    %p109 = scmp.ne.s32.totalorder %s97, %s98
    %p110 = scmp.eq.s32.totalorder %s25, 1
    %p111 = por %p109, %p110
    %p113 = scmp.ne.s32.totalorder %s98, %s112
    %p114 = scmp.eq.s32.totalorder %s25, 0
    %p115 = por %p113, %p114
    %s117 = sadd.s32 %s116, 1
    %p120 = scmp.eq.s32.totalorder %s19, 1
    %p121 = scmp.ne.s32.totalorder %s116, %s118
    %p122 = scmp.eq.s32.totalorder %s19, 0
    %p123 = por %p121, %p122
    %p124 = scmp.ne.s32.totalorder %s116, %s118
    %p125 = scmp.eq.s32.totalorder %s24, 1
    %p126 = por %p124, %p125
    %p127 = scmp.ne.s32.totalorder %s118, %s119
    %p128 = scmp.eq.s32.totalorder %s24, 0
    %p129 = por %p127, %p128
    %p130 = scmp.ne.s32.totalorder %s118, %s119
    %p131 = scmp.eq.s32.totalorder %s25, 1
    %p132 = por %p130, %p131
    %p134 = scmp.ne.s32.totalorder %s119, %s133
    %p135 = scmp.eq.s32.totalorder %s25, 0
    %p136 = por %p134, %p135
    %s138 = sadd.s32 %s137, 1
    %p141 = scmp.eq.s32.totalorder %s19, 1
    %p142 = scmp.ne.s32.totalorder %s137, %s139
    %p143 = scmp.eq.s32.totalorder %s19, 0
    %p144 = por %p142, %p143
    %p145 = scmp.ne.s32.totalorder %s137, %s139
    %p146 = scmp.eq.s32.totalorder %s24, 1
    %p147 = por %p145, %p146
    %p148 = scmp.ne.s32.totalorder %s139, %s140
    %p149 = scmp.eq.s32.totalorder %s24, 0
    %p150 = por %p148, %p149
    %p151 = scmp.ne.s32.totalorder %s139, %s140
    %p152 = scmp.eq.s32.totalorder %s25, 1
    %p153 = por %p151, %p152
    %p155 = scmp.ne.s32.totalorder %s140, %s154
    %p156 = scmp.eq.s32.totalorder %s25, 0
    %p157 = por %p155, %p156
    %s159 = sadd.s32 %s158, 1
    %p162 = scmp.eq.s32.totalorder %s19, 1
    %p163 = scmp.ne.s32.totalorder %s158, %s160
    %p164 = scmp.eq.s32.totalorder %s19, 0
    %p165 = por %p163, %p164
    %p166 = scmp.ne.s32.totalorder %s158, %s160
    %p167 = scmp.eq.s32.totalorder %s24, 1
    %p168 = por %p166, %p167
    %p169 = scmp.ne.s32.totalorder %s160, %s161
    %p170 = scmp.eq.s32.totalorder %s24, 0
    %p171 = por %p169, %p170
    %p172 = scmp.ne.s32.totalorder %s160, %s161
    %p173 = scmp.eq.s32.totalorder %s25, 1
    %p174 = por %p172, %p173
    %p176 = scmp.ne.s32.totalorder %s161, %s175
    %p177 = scmp.eq.s32.totalorder %s25, 0
    %p178 = por %p176, %p177
    %s180 = sadd.s32 %s179, 1
    %p183 = scmp.eq.s32.totalorder %s19, 1
    %p184 = scmp.ne.s32.totalorder %s179, %s181
    %p185 = scmp.eq.s32.totalorder %s19, 0
    %p186 = por %p184, %p185
    %p187 = scmp.ne.s32.totalorder %s179, %s181
    %p188 = scmp.eq.s32.totalorder %s24, 1
    %p189 = por %p187, %p188
    %p190 = scmp.ne.s32.totalorder %s181, %s182
    %p191 = scmp.eq.s32.totalorder %s24, 0
    %p192 = por %p190, %p191
    %p193 = scmp.ne.s32.totalorder %s181, %s182
    %p194 = scmp.eq.s32.totalorder %s25, 1
    %p195 = por %p193, %p194
    %p197 = scmp.ne.s32.totalorder %s182, %s196
    %p198 = scmp.eq.s32.totalorder %s25, 0
    %p199 = por %p197, %p198
    %s201 = sadd.s32 %s200, 1
    %p204 = scmp.eq.s32.totalorder %s19, 1
    %p205 = scmp.ne.s32.totalorder %s200, %s202
    %p206 = scmp.eq.s32.totalorder %s19, 0
    %p207 = por %p205, %p206
    %p208 = scmp.ne.s32.totalorder %s200, %s202
    %p209 = scmp.eq.s32.totalorder %s24, 1
    %p210 = por %p208, %p209
    %p211 = scmp.ne.s32.totalorder %s202, %s203
    %p212 = scmp.eq.s32.totalorder %s24, 0
    %p213 = por %p211, %p212
    %p214 = scmp.ne.s32.totalorder %s202, %s203
    %p215 = scmp.eq.s32.totalorder %s25, 1
    %p216 = por %p214, %p215
    %p218 = scmp.ne.s32.totalorder %s203, %s217
    %p219 = scmp.eq.s32.totalorder %s25, 0
    %p220 = por %p218, %p219
    %s222 = sadd.s32 %s221, 1
    %p225 = scmp.eq.s32.totalorder %s19, 1
    %p226 = scmp.ne.s32.totalorder %s221, %s223
    %p227 = scmp.eq.s32.totalorder %s19, 0
    %p228 = por %p226, %p227
    %p229 = scmp.ne.s32.totalorder %s221, %s223
    %p230 = scmp.eq.s32.totalorder %s24, 1
    %p231 = por %p229, %p230
    %p232 = scmp.ne.s32.totalorder %s223, %s224
    %p233 = scmp.eq.s32.totalorder %s24, 0
    %p234 = por %p232, %p233
    %p235 = scmp.ne.s32.totalorder %s223, %s224
    %p236 = scmp.eq.s32.totalorder %s25, 1
    %p237 = por %p235, %p236
    %p239 = scmp.ne.s32.totalorder %s224, %s238
    %p240 = scmp.eq.s32.totalorder %s25, 0
    %p241 = por %p239, %p240
    %s243 = sadd.s32 %s242, 1
    %p246 = scmp.eq.s32.totalorder %s19, 1
    %p247 = scmp.ne.s32.totalorder %s242, %s244
    %p248 = scmp.eq.s32.totalorder %s19, 0
    %p249 = por %p247, %p248
    %p250 = scmp.ne.s32.totalorder %s242, %s244
    %p251 = scmp.eq.s32.totalorder %s24, 1
    %p252 = por %p250, %p251
    %p253 = scmp.ne.s32.totalorder %s244, %s245
    %p254 = scmp.eq.s32.totalorder %s24, 0
    %p255 = por %p253, %p254
    %p256 = scmp.ne.s32.totalorder %s244, %s245
    %p257 = scmp.eq.s32.totalorder %s25, 1
    %p258 = por %p256, %p257
    %p260 = scmp.ne.s32.totalorder %s245, %s259
    %p261 = scmp.eq.s32.totalorder %s25, 0
    %p262 = por %p260, %p261
    %s264 = sadd.s32 %s263, 1
    %p267 = scmp.eq.s32.totalorder %s19, 1
    %p268 = scmp.ne.s32.totalorder %s263, %s265
    %p269 = scmp.eq.s32.totalorder %s19, 0
    %p270 = por %p268, %p269
    %p271 = scmp.ne.s32.totalorder %s263, %s265
    %p272 = scmp.eq.s32.totalorder %s24, 1
    %p273 = por %p271, %p272
    %p274 = scmp.ne.s32.totalorder %s265, %s266
    %p275 = scmp.eq.s32.totalorder %s24, 0
    %p276 = por %p274, %p275
    %p277 = scmp.ne.s32.totalorder %s265, %s266
    %p278 = scmp.eq.s32.totalorder %s25, 1
    %p279 = por %p277, %p278
    %p281 = scmp.ne.s32.totalorder %s266, %s280
    %p282 = scmp.eq.s32.totalorder %s25, 0
    %p283 = por %p281, %p282
    %s285 = sadd.s32 %s284, 1
    %p288 = scmp.eq.s32.totalorder %s19, 1
    %p289 = scmp.ne.s32.totalorder %s284, %s286
    %p290 = scmp.eq.s32.totalorder %s19, 0
    %p291 = por %p289, %p290
    %p292 = scmp.ne.s32.totalorder %s284, %s286
    %p293 = scmp.eq.s32.totalorder %s24, 1
    %p294 = por %p292, %p293
    %p295 = scmp.ne.s32.totalorder %s286, %s287
    %p296 = scmp.eq.s32.totalorder %s24, 0
    %p297 = por %p295, %p296
    %p298 = scmp.ne.s32.totalorder %s286, %s287
    %p299 = scmp.eq.s32.totalorder %s25, 1
    %p300 = por %p298, %p299
    %p302 = scmp.ne.s32.totalorder %s287, %s301
    %p303 = scmp.eq.s32.totalorder %s25, 0
    %p304 = por %p302, %p303
    %s305 = ssub.s32 %s19, %s26
    %p306 = scmp.eq.s32.totalorder %s305, 0
    %s308 = sadd.s32 %s307, 1
    %s309 = scalar_select %p306, %s307, %s308
    %p312 = pneg %p306
    %p313 = scmp.eq.s32.totalorder %s19, 1
    %p314 = por %p312, %p313
    %p315 = scmp.ne.s32.totalorder %s307, %s310
    %p316 = scmp.eq.s32.totalorder %s19, 0
    %p317 = por %p315, %p316
    %p318 = scmp.ne.s32.totalorder %s307, %s310
    %p319 = scmp.eq.s32.totalorder %s24, 1
    %p320 = por %p318, %p319
    %p321 = scmp.ne.s32.totalorder %s310, %s311
    %p322 = scmp.eq.s32.totalorder %s24, 0
    %p323 = por %p321, %p322
    %p324 = scmp.ne.s32.totalorder %s310, %s311
    %p325 = scmp.eq.s32.totalorder %s25, 1
    %p326 = por %p324, %p325
    %p328 = scmp.ne.s32.totalorder %s311, %s327
    %p329 = scmp.eq.s32.totalorder %s25, 0
    %p330 = por %p328, %p329
    %p331 = scmp.le.s32.totalorder 1, %s19
    %p332 = scmp.lt.s32.totalorder %s19, 3
    %p333 = pnand %p331, %p332
    %p334 = pneg %p333
    // Predicated region
    $region9: #{tpu_custom_call.1} parent=5 // pred_check
      _
    $region10: #{tpu_custom_call.1} parent=5 // pred_check_branch
      %336 = sbr.rel (%p333) target = $region12
    $region11: #{tpu_custom_call.1} parent=5 // pred_region
      %s337 = ssub.s32 %s19, 1
      // Predicated region
      $region13: #{tpu_custom_call.1} parent=11 // pred_check
        %p338 = pneg %p66
      $region14: #{tpu_custom_call.1} parent=11 // pred_check_branch
        %340 = sbr.rel (%p338) target = $region16
      $region15: #{tpu_custom_call.1} parent=11 // pred_region
        _
      $region16: #{tpu_custom_call.1} parent=11 // pred_fallthru
        _
      // Predicated region
      $region17: #{tpu_custom_call.1} parent=11 // pred_check
        %p341 = pneg %p87
      $region18: #{tpu_custom_call.1} parent=11 // pred_check_branch
        %343 = sbr.rel (%p341) target = $region20
      $region19: #{tpu_custom_call.1} parent=11 // pred_region
        _
      $region20: #{tpu_custom_call.1} parent=11 // pred_fallthru
        _
      // Predicated region
      $region21: #{tpu_custom_call.1} parent=11 // pred_check
        %p344 = pneg %p108
      $region22: #{tpu_custom_call.1} parent=11 // pred_check_branch
        %346 = sbr.rel (%p344) target = $region24
      $region23: #{tpu_custom_call.1} parent=11 // pred_region
        _
      $region24: #{tpu_custom_call.1} parent=11 // pred_fallthru
        _
      // Predicated region
      $region25: #{tpu_custom_call.1} parent=11 // pred_check
        %p347 = pneg %p129
      $region26: #{tpu_custom_call.1} parent=11 // pred_check_branch
        %349 = sbr.rel (%p347) target = $region28
      $region27: #{tpu_custom_call.1} parent=11 // pred_region
        _
      $region28: #{tpu_custom_call.1} parent=11 // pred_fallthru
        _
      // Predicated region
      $region29: #{tpu_custom_call.1} parent=11 // pred_check
        %p350 = pneg %p150
      $region30: #{tpu_custom_call.1} parent=11 // pred_check_branch
        %352 = sbr.rel (%p350) target = $region32
      $region31: #{tpu_custom_call.1} parent=11 // pred_region
        _
      $region32: #{tpu_custom_call.1} parent=11 // pred_fallthru
        _
      // Predicated region
      $region33: #{tpu_custom_call.1} parent=11 // pred_check
        %p353 = pneg %p171
      $region34: #{tpu_custom_call.1} parent=11 // pred_check_branch
        %355 = sbr.rel (%p353) target = $region36
      $region35: #{tpu_custom_call.1} parent=11 // pred_region
        _
      $region36: #{tpu_custom_call.1} parent=11 // pred_fallthru
        _
      // Predicated region
      $region37: #{tpu_custom_call.1} parent=11 // pred_check
        %p356 = pneg %p192
      $region38: #{tpu_custom_call.1} parent=11 // pred_check_branch
        %358 = sbr.rel (%p356) target = $region40
      $region39: #{tpu_custom_call.1} parent=11 // pred_region
        _
      $region40: #{tpu_custom_call.1} parent=11 // pred_fallthru
        _
      // Predicated region
      $region41: #{tpu_custom_call.1} parent=11 // pred_check
        %p359 = pneg %p213
      $region42: #{tpu_custom_call.1} parent=11 // pred_check_branch
        %361 = sbr.rel (%p359) target = $region44
      $region43: #{tpu_custom_call.1} parent=11 // pred_region
        _
      $region44: #{tpu_custom_call.1} parent=11 // pred_fallthru
        _
      // Predicated region
      $region45: #{tpu_custom_call.1} parent=11 // pred_check
        %p362 = pneg %p234
      $region46: #{tpu_custom_call.1} parent=11 // pred_check_branch
        %364 = sbr.rel (%p362) target = $region48
      $region47: #{tpu_custom_call.1} parent=11 // pred_region
        _
      $region48: #{tpu_custom_call.1} parent=11 // pred_fallthru
        _
      // Predicated region
      $region49: #{tpu_custom_call.1} parent=11 // pred_check
        %p365 = pneg %p255
      $region50: #{tpu_custom_call.1} parent=11 // pred_check_branch
        %367 = sbr.rel (%p365) target = $region52
      $region51: #{tpu_custom_call.1} parent=11 // pred_region
        _
      $region52: #{tpu_custom_call.1} parent=11 // pred_fallthru
        _
      // Predicated region
      $region53: #{tpu_custom_call.1} parent=11 // pred_check
        %p368 = pneg %p276
      $region54: #{tpu_custom_call.1} parent=11 // pred_check_branch
        %370 = sbr.rel (%p368) target = $region56
      $region55: #{tpu_custom_call.1} parent=11 // pred_region
        _
      $region56: #{tpu_custom_call.1} parent=11 // pred_fallthru
        _
      // Predicated region
      $region57: #{tpu_custom_call.1} parent=11 // pred_check
        %p371 = pneg %p297
      $region58: #{tpu_custom_call.1} parent=11 // pred_check_branch
        %373 = sbr.rel (%p371) target = $region60
      $region59: #{tpu_custom_call.1} parent=11 // pred_region
        _
      $region60: #{tpu_custom_call.1} parent=11 // pred_fallthru
        _
    $region12: #{tpu_custom_call.1} parent=5 // pred_fallthru
      _
    %p374 = scmp.lt.s32.totalorder %s19, 2
    // Predicated region
    $region61: #{tpu_custom_call.1} parent=5 // pred_check
      %p375 = pneg %p374
    $region62: #{tpu_custom_call.1} parent=5 // pred_check_branch
      %377 = sbr.rel (%p375) target = $region64
    $region63: #{tpu_custom_call.1} parent=5 // pred_region
      // Predicated region
      $region65: #{tpu_custom_call.1} parent=63 // pred_check
        %p378 = pneg %p39
      $region66: #{tpu_custom_call.1} parent=63 // pred_check_branch
        %380 = sbr.rel (%p378) target = $region68
      $region67: #{tpu_custom_call.1} parent=63 // pred_region
        %p381 = scmp.lt.s32.totalorder %s19, 1
        %s382 = scalar_select %p381, %s19, 1
        %s383 = smul.addr %s382, 16
        %s384 = smul.addr %s383, 8
        %s385 = scalar_lea.vmem %s0, %s384
      $region68: #{tpu_custom_call.1} parent=63 // pred_fallthru
        _
    $region64: #{tpu_custom_call.1} parent=5 // pred_fallthru
      _
    %p386 = scmp.le.s32.totalorder 1, %s19
    %p387 = scmp.lt.s32.totalorder %s19, 3
    %p388 = pnand %p386, %p387
    %p389 = pneg %p388
    // Predicated region
    $region69: #{tpu_custom_call.1} parent=5 // pred_check
      _
    $region70: #{tpu_custom_call.1} parent=5 // pred_check_branch
      %391 = sbr.rel (%p388) target = $region72
    $region71: #{tpu_custom_call.1} parent=5 // pred_region
      %s392 = ssub.s32 %s19, 1
      %p393 = scmp.lt.s32.totalorder %s24, 1
      %s394 = scalar_select %p393, %s24, 1
      %s395 = smul.addr %s394, 16
      %s396 = smul.addr %s395, 8
      %s397 = scalar_lea.vmem %s0, %s396
      %p398 = pneg %p45
      %p399 = pneg %p42
      %p400 = pneg %p66
      %p401 = pneg %p63
      %p402 = pneg %p87
      %p403 = pneg %p84
      %p404 = pneg %p108
      %p405 = pneg %p105
      %p406 = pneg %p129
      %p407 = pneg %p126
      %p408 = pneg %p150
      %p409 = pneg %p147
      %p410 = pneg %p171
      %p411 = pneg %p168
      %p412 = pneg %p192
      %p413 = pneg %p189
      %p414 = pneg %p213
      %p415 = pneg %p210
      %p416 = pneg %p234
      %p417 = pneg %p231
      %p418 = pneg %p255
      %p419 = pneg %p252
      %p420 = pneg %p276
      %p421 = pneg %p273
      %p422 = pneg %p297
      %p423 = pneg %p294
      %p424 = pneg %p323
      %p425 = pneg %p320
      %p426 = scmp.lt.s32.totalorder %s24, 1
      %s427 = scalar_select %p426, %s24, 1
      %s428 = smul.addr %s427, 16
      %s429 = smul.addr %s428, 8
      %s430 = scalar_lea.vmem %s13, %s429
      %p431 = scmp.lt.s32.totalorder %s24, 1
      %s432 = scalar_select %p431, %s24, 1
      %s433 = smul.addr %s432, 16
      %s434 = smul.addr %s433, 8
      %s435 = scalar_lea.vmem %s0, %s434
      %p436 = scmp.lt.s32.totalorder %s24, 1
      %s437 = scalar_select %p436, %s24, 1
      %s438 = smul.addr %s437, 16
      %s439 = smul.addr %s438, 8
      %s440 = scalar_lea.vmem %s13, %s439
      %v442 = vld [vmem:[%s435] sm:$0xff]
      %v443 = vld [vmem:[%s435 + $0x8] sm:$0xff]
      %v444 = vld [vmem:[%s435 + $0x10] sm:$0xff]
      %v445 = vld [vmem:[%s435 + $0x18] sm:$0xff]
      %v446 = vld [vmem:[%s435 + $0x20] sm:$0xff]
      %v447 = vld [vmem:[%s435 + $0x28] sm:$0xff]
      %v448 = vld [vmem:[%s435 + $0x30] sm:$0xff]
      %v449 = vld [vmem:[%s435 + $0x38] sm:$0xff]
      %v450 = vld [vmem:[%s435 + $0x40] sm:$0xff]
      %v451 = vld [vmem:[%s435 + $0x48] sm:$0xff]
      %v452 = vld [vmem:[%s435 + $0x50] sm:$0xff]
      %v453 = vld [vmem:[%s435 + $0x58] sm:$0xff]
      %v454 = vld [vmem:[%s435 + $0x60] sm:$0xff]
      %v455 = vld [vmem:[%s435 + $0x68] sm:$0xff]
      %v456 = vld [vmem:[%s435 + $0x70] sm:$0xff]
      %v457 = vld [vmem:[%s435 + $0x78] sm:$0xff]
      %v458 = vld [vmem:[%s1] sm:$0x1]
      %v459 = vld [vmem:[%s2] sm:$0x1]
      %vm460 = vcmask 261120
      %v461 = vsel %vm460, %v442, 0.0
      %462 = vadd.xlane.f32.xlu0 %v461
      %v463 = vpop.xlane.xlu0 %462
      %v464 = vsel %vm460, %v443, 0.0
      %465 = vadd.xlane.f32.xlu0 %v464
      %v466 = vpop.xlane.xlu0 %465
      %v467 = vsel %vm460, %v444, 0.0
      %468 = vadd.xlane.f32.xlu0 %v467
      %v469 = vpop.xlane.xlu0 %468
      %v470 = vsel %vm460, %v445, 0.0
      %471 = vadd.xlane.f32.xlu0 %v470
      %v472 = vpop.xlane.xlu0 %471
      %v473 = vsel %vm460, %v446, 0.0
      %474 = vadd.xlane.f32.xlu0 %v473
      %v475 = vpop.xlane.xlu0 %474
      %v476 = vsel %vm460, %v447, 0.0
      %477 = vadd.xlane.f32.xlu0 %v476
      %v478 = vpop.xlane.xlu0 %477
      %v479 = vsel %vm460, %v448, 0.0
      %480 = vadd.xlane.f32.xlu0 %v479
      %v481 = vpop.xlane.xlu0 %480
      %v482 = vsel %vm460, %v449, 0.0
      %483 = vadd.xlane.f32.xlu0 %v482
      %v484 = vpop.xlane.xlu0 %483
      %v485 = vsel %vm460, %v450, 0.0
      %486 = vadd.xlane.f32.xlu0 %v485
      %v487 = vpop.xlane.xlu0 %486
      %v488 = vsel %vm460, %v451, 0.0
      %489 = vadd.xlane.f32.xlu0 %v488
      %v490 = vpop.xlane.xlu0 %489
      %v491 = vsel %vm460, %v452, 0.0
      %492 = vadd.xlane.f32.xlu0 %v491
      %v493 = vpop.xlane.xlu0 %492
      %v494 = vsel %vm460, %v453, 0.0
      %495 = vadd.xlane.f32.xlu0 %v494
      %v496 = vpop.xlane.xlu0 %495
      %v497 = vsel %vm460, %v454, 0.0
      %498 = vadd.xlane.f32.xlu0 %v497
      %v499 = vpop.xlane.xlu0 %498
      %v500 = vsel %vm460, %v455, 0.0
      %501 = vadd.xlane.f32.xlu0 %v500
      %v502 = vpop.xlane.xlu0 %501
      %v503 = vsel %vm460, %v456, 0.0
      %504 = vadd.xlane.f32.xlu0 %v503
      %v505 = vpop.xlane.xlu0 %504
      %v506 = vsel %vm460, %v457, 0.0
      %507 = vadd.xlane.f32.xlu0 %v506
      %v508 = vpop.xlane.xlu0 %507
      %v509 = vrcp.pop 32.0
      %v510 = vmul.f32 %v463, %v509
      %v511 = vmul.f32 %v466, %v509
      %v512 = vmul.f32 %v469, %v509
      %v513 = vmul.f32 %v472, %v509
      %v514 = vmul.f32 %v475, %v509
      %v515 = vmul.f32 %v478, %v509
      %v516 = vmul.f32 %v481, %v509
      %v517 = vmul.f32 %v484, %v509
      %v518 = vmul.f32 %v487, %v509
      %v519 = vmul.f32 %v490, %v509
      %v520 = vmul.f32 %v493, %v509
      %v521 = vmul.f32 %v496, %v509
      %v522 = vmul.f32 %v499, %v509
      %v523 = vmul.f32 %v502, %v509
      %v524 = vmul.f32 %v505, %v509
      %v525 = vmul.f32 %v508, %v509
      %v526 = vsub.f32 %v442, %v510
      %v527 = vsub.f32 %v443, %v511
      %v528 = vsub.f32 %v444, %v512
      %v529 = vsub.f32 %v445, %v513
      %v530 = vsub.f32 %v446, %v514
      %v531 = vsub.f32 %v447, %v515
      %v532 = vsub.f32 %v448, %v516
      %v533 = vsub.f32 %v449, %v517
      %v534 = vsub.f32 %v450, %v518
      %v535 = vsub.f32 %v451, %v519
      %v536 = vsub.f32 %v452, %v520
      %v537 = vsub.f32 %v453, %v521
      %v538 = vsub.f32 %v454, %v522
      %v539 = vsub.f32 %v455, %v523
      %v540 = vsub.f32 %v456, %v524
      %v541 = vsub.f32 %v457, %v525
      %v542 = vmul.f32 %v526, %v526
      %v543 = vmul.f32 %v527, %v527
      %v544 = vmul.f32 %v528, %v528
      %v545 = vmul.f32 %v529, %v529
      %v546 = vmul.f32 %v530, %v530
      %v547 = vmul.f32 %v531, %v531
      %v548 = vmul.f32 %v532, %v532
      %v549 = vmul.f32 %v533, %v533
      %v550 = vmul.f32 %v534, %v534
      %v551 = vmul.f32 %v535, %v535
      %v552 = vmul.f32 %v536, %v536
      %v553 = vmul.f32 %v537, %v537
      %v554 = vmul.f32 %v538, %v538
      %v555 = vmul.f32 %v539, %v539
      %v556 = vmul.f32 %v540, %v540
      %v557 = vmul.f32 %v541, %v541
      %v558 = vsel %vm460, %v542, 0.0
      %559 = vadd.xlane.f32.xlu0 %v558
      %v560 = vpop.xlane.xlu0 %559
      %v561 = vsel %vm460, %v543, 0.0
      %562 = vadd.xlane.f32.xlu0 %v561
      %v563 = vpop.xlane.xlu0 %562
      %v564 = vsel %vm460, %v544, 0.0
      %565 = vadd.xlane.f32.xlu0 %v564
      %v566 = vpop.xlane.xlu0 %565
      %v567 = vsel %vm460, %v545, 0.0
      %568 = vadd.xlane.f32.xlu0 %v567
      %v569 = vpop.xlane.xlu0 %568
      %v570 = vsel %vm460, %v546, 0.0
      %571 = vadd.xlane.f32.xlu0 %v570
      %v572 = vpop.xlane.xlu0 %571
      %v573 = vsel %vm460, %v547, 0.0
      %574 = vadd.xlane.f32.xlu0 %v573
      %v575 = vpop.xlane.xlu0 %574
      %v576 = vsel %vm460, %v548, 0.0
      %577 = vadd.xlane.f32.xlu0 %v576
      %v578 = vpop.xlane.xlu0 %577
      %v579 = vsel %vm460, %v549, 0.0
      %580 = vadd.xlane.f32.xlu0 %v579
      %v581 = vpop.xlane.xlu0 %580
      %v582 = vsel %vm460, %v550, 0.0
      %583 = vadd.xlane.f32.xlu0 %v582
      %v584 = vpop.xlane.xlu0 %583
      %v585 = vsel %vm460, %v551, 0.0
      %586 = vadd.xlane.f32.xlu0 %v585
      %v587 = vpop.xlane.xlu0 %586
      %v588 = vsel %vm460, %v552, 0.0
      %589 = vadd.xlane.f32.xlu0 %v588
      %v590 = vpop.xlane.xlu0 %589
      %v591 = vsel %vm460, %v553, 0.0
      %592 = vadd.xlane.f32.xlu0 %v591
      %v593 = vpop.xlane.xlu0 %592
      %v594 = vsel %vm460, %v554, 0.0
      %595 = vadd.xlane.f32.xlu0 %v594
      %v596 = vpop.xlane.xlu0 %595
      %v597 = vsel %vm460, %v555, 0.0
      %598 = vadd.xlane.f32.xlu0 %v597
      %v599 = vpop.xlane.xlu0 %598
      %v600 = vsel %vm460, %v556, 0.0
      %601 = vadd.xlane.f32.xlu0 %v600
      %v602 = vpop.xlane.xlu0 %601
      %v603 = vsel %vm460, %v557, 0.0
      %604 = vadd.xlane.f32.xlu0 %v603
      %v605 = vpop.xlane.xlu0 %604
      %v606 = vmul.f32 %v560, %v509
      %v607 = vmul.f32 %v563, %v509
      %v608 = vmul.f32 %v566, %v509
      %v609 = vmul.f32 %v569, %v509
      %v610 = vmul.f32 %v572, %v509
      %v611 = vmul.f32 %v575, %v509
      %v612 = vmul.f32 %v578, %v509
      %v613 = vmul.f32 %v581, %v509
      %v614 = vmul.f32 %v584, %v509
      %v615 = vmul.f32 %v587, %v509
      %v616 = vmul.f32 %v590, %v509
      %v617 = vmul.f32 %v593, %v509
      %v618 = vmul.f32 %v596, %v509
      %v619 = vmul.f32 %v599, %v509
      %v620 = vmul.f32 %v602, %v509
      %v621 = vmul.f32 %v605, %v509
      %v622 = vadd.f32 %v606, 1e-05
      %v623 = vadd.f32 %v607, 1e-05
      %v624 = vadd.f32 %v608, 1e-05
      %v625 = vadd.f32 %v609, 1e-05
      %v626 = vadd.f32 %v610, 1e-05
      %v627 = vadd.f32 %v611, 1e-05
      %v628 = vadd.f32 %v612, 1e-05
      %v629 = vadd.f32 %v613, 1e-05
      %v630 = vadd.f32 %v614, 1e-05
      %v631 = vadd.f32 %v615, 1e-05
      %v632 = vadd.f32 %v616, 1e-05
      %v633 = vadd.f32 %v617, 1e-05
      %v634 = vadd.f32 %v618, 1e-05
      %v635 = vadd.f32 %v619, 1e-05
      %v636 = vadd.f32 %v620, 1e-05
      %v637 = vadd.f32 %v621, 1e-05
      %v638 = vrsqrt.pop %v622
      %v639 = vrsqrt.pop %v623
      %v640 = vrsqrt.pop %v624
      %v641 = vrsqrt.pop %v625
      %v642 = vrsqrt.pop %v626
      %v643 = vrsqrt.pop %v627
      %v644 = vrsqrt.pop %v628
      %v645 = vrsqrt.pop %v629
      %v646 = vrsqrt.pop %v630
      %v647 = vrsqrt.pop %v631
      %v648 = vrsqrt.pop %v632
      %v649 = vrsqrt.pop %v633
      %v650 = vrsqrt.pop %v634
      %v651 = vrsqrt.pop %v635
      %v652 = vrsqrt.pop %v636
      %v653 = vrsqrt.pop %v637
      %v654 = vmul.f32 %v526, %v638
      %v655 = vmul.f32 %v527, %v639
      %v656 = vmul.f32 %v528, %v640
      %v657 = vmul.f32 %v529, %v641
      %v658 = vmul.f32 %v530, %v642
      %v659 = vmul.f32 %v531, %v643
      %v660 = vmul.f32 %v532, %v644
      %v661 = vmul.f32 %v533, %v645
      %v662 = vmul.f32 %v534, %v646
      %v663 = vmul.f32 %v535, %v647
      %v664 = vmul.f32 %v536, %v648
      %v665 = vmul.f32 %v537, %v649
      %v666 = vmul.f32 %v538, %v650
      %v667 = vmul.f32 %v539, %v651
      %v668 = vmul.f32 %v540, %v652
      %v669 = vmul.f32 %v541, %v653
      %v671 = vlaneseq
      %v672 = vshrl.u32 %v671, 7
      %v673 = vsub.s32 0, %v672
      %v674 = vrot.slane %v458, %v673
      %v676 = vmul.f32 %v654, %v674
      %v677 = vmul.f32 %v655, %v674
      %v678 = vmul.f32 %v656, %v674
      %v679 = vmul.f32 %v657, %v674
      %v680 = vmul.f32 %v658, %v674
      %v681 = vmul.f32 %v659, %v674
      %v682 = vmul.f32 %v660, %v674
      %v683 = vmul.f32 %v661, %v674
      %v684 = vmul.f32 %v662, %v674
      %v685 = vmul.f32 %v663, %v674
      %v686 = vmul.f32 %v664, %v674
      %v687 = vmul.f32 %v665, %v674
      %v688 = vmul.f32 %v666, %v674
      %v689 = vmul.f32 %v667, %v674
      %v690 = vmul.f32 %v668, %v674
      %v691 = vmul.f32 %v669, %v674
      %v693 = vlaneseq
      %v694 = vshrl.u32 %v693, 7
      %v695 = vsub.s32 0, %v694
      %v696 = vrot.slane %v459, %v695
      %v698 = vadd.f32 %v676, %v696
      %v699 = vadd.f32 %v677, %v696
      %v700 = vadd.f32 %v678, %v696
      %v701 = vadd.f32 %v679, %v696
      %v702 = vadd.f32 %v680, %v696
      %v703 = vadd.f32 %v681, %v696
      %v704 = vadd.f32 %v682, %v696
      %v705 = vadd.f32 %v683, %v696
      %v706 = vadd.f32 %v684, %v696
      %v707 = vadd.f32 %v685, %v696
      %v708 = vadd.f32 %v686, %v696
      %v709 = vadd.f32 %v687, %v696
      %v710 = vadd.f32 %v688, %v696
      %v711 = vadd.f32 %v689, %v696
      %v712 = vadd.f32 %v690, %v696
      %v713 = vadd.f32 %v691, %v696
      %v714 = vpack.c.bf16 %v699, %v698
      %v715 = vpack.c.bf16 %v701, %v700
      %v716 = vpack.c.bf16 %v703, %v702
      %v717 = vpack.c.bf16 %v705, %v704
      %v718 = vpack.c.bf16 %v707, %v706
      %v719 = vpack.c.bf16 %v709, %v708
      %v720 = vpack.c.bf16 %v711, %v710
      %v721 = vpack.c.bf16 %v713, %v712
      %v722 = vld [vmem:[%s3] sm:$0xf]
      %v723 = vld [vmem:[%s3 + $0x4] sm:$0xf]
      %v724 = vld [vmem:[%s3 + $0x8] sm:$0xf]
      %v725 = vld [vmem:[%s3 + $0xc] sm:$0xf]
      %v726 = vld [vmem:[%s4] sm:$0x1]
      %v728 = vlaneseq
      %v729 = vshrl.u32 %v728, 7
      %v730 = vsub.s32 0, %v729
      %v731 = vrot.slane %v726, %v730
      %v737 = vunpack.c.l.b16 %v722
      %v738 = vunpack.c.l.b16 %v723
      %v739 = vunpack.c.l.b16 %v724
      %v740 = vunpack.c.l.b16 %v725
      %v741 = vpack.c.b16 %v738, %v737
      %v742 = vpack.c.b16 %v740, %v739
      %v746 = vsel %vm460, %v714, 0
      %v749 = vsel %vm460, %v715, 0
      %v752 = vsel %vm460, %v716, 0
      %v755 = vsel %vm460, %v717, 0
      %v758 = vsel %vm460, %v718, 0
      %v761 = vsel %vm460, %v719, 0
      %v764 = vsel %vm460, %v720, 0
      %v767 = vsel %vm460, %v721, 0
      %769 = vmatprep.subr.bf16.mxu0 0
      %770 = vmatpush1.bf16.msra.mxu0 0
      %771 = vmatprep.subr.bf16.mxu0 0
      %772 = vmatpush1.bf16.msra.mxu0 0
      %773 = vmatprep.subr.bf16.mxu0 0
      %774 = vmatpush1.bf16.msra.mxu0 0
      %775 = vmatprep.subr.bf16.mxu0 0
      %776 = vmatpush1.bf16.msra.mxu0 0
      %777 = vmatprep.subr.bf16.mxu0 0
      %778 = vmatpush1.bf16.msra.mxu0 0
      %779 = vmatprep.subr.bf16.mxu0 0
      %780 = vmatpush1.bf16.msra.mxu0 0
      %781 = vmatprep.subr.bf16.mxu0 0
      %782 = vmatpush1.bf16.msra.mxu0 %v742
      %783 = vmatprep.subr.bf16.mxu0 0
      %784 = vmatpush1.bf16.msra.mxu0 %v741
      %785 = vmatprep.subr.bf16.mxu0 0
      %786 = vmatpush2.bf16.msra.mxu0 0
      %787 = vmatprep.subr.bf16.mxu0 0
      %788 = vmatpush2.bf16.msra.mxu0 0
      %789 = vmatprep.subr.bf16.mxu0 0
      %790 = vmatpush2.bf16.msra.mxu0 0
      %791 = vmatprep.subr.bf16.mxu0 0
      %792 = vmatpush2.bf16.msra.mxu0 0
      %793 = vmatprep.subr.bf16.mxu0 0
      %794 = vmatpush2.bf16.msra.mxu0 0
      %795 = vmatprep.subr.bf16.mxu0 0
      %796 = vmatpush2.bf16.msra.mxu0 0
      %797 = vmatprep.subr.bf16.mxu0 0
      %798 = vmatpush2.bf16.msra.mxu0 0
      %799 = vmatprep.subr.bf16.mxu0 0
      %800 = vmatpush2.bf16.msra.mxu0 0
      %801 = vmatprep.mubr.bf16.mxu0 0
      %802 = vmatmul.mubr.bf16.gmra.mxu0 %v746
      %v803 = vpop.f32.mrf.mxu0
      %v804 = vadd.f32 %v731, %v803
      %v805 = vpop.f32.mrf.mxu0
      %v806 = vpop.f32.mrf.mxu0
      %v807 = vadd.f32 %v731, %v806
      %v808 = vpop.f32.mrf.mxu0
      %809 = vmatprep.mubr.bf16.mxu0 0
      %810 = vmatmul.mubr.bf16.gmra.mxu0 %v749
      %v811 = vpop.f32.mrf.mxu0
      %v812 = vadd.f32 %v731, %v811
      %v813 = vpop.f32.mrf.mxu0
      %v814 = vpop.f32.mrf.mxu0
      %v815 = vadd.f32 %v731, %v814
      %v816 = vpop.f32.mrf.mxu0
      %817 = vmatprep.mubr.bf16.mxu0 0
      %818 = vmatmul.mubr.bf16.gmra.mxu0 %v752
      %v819 = vpop.f32.mrf.mxu0
      %v820 = vadd.f32 %v731, %v819
      %v821 = vpop.f32.mrf.mxu0
      %v822 = vpop.f32.mrf.mxu0
      %v823 = vadd.f32 %v731, %v822
      %v824 = vpop.f32.mrf.mxu0
      %825 = vmatprep.mubr.bf16.mxu0 0
      %826 = vmatmul.mubr.bf16.gmra.mxu0 %v755
      %v827 = vpop.f32.mrf.mxu0
      %v828 = vadd.f32 %v731, %v827
      %v829 = vpop.f32.mrf.mxu0
      %v830 = vpop.f32.mrf.mxu0
      %v831 = vadd.f32 %v731, %v830
      %v832 = vpop.f32.mrf.mxu0
      %833 = vmatprep.mubr.bf16.mxu0 0
      %834 = vmatmul.mubr.bf16.gmra.mxu0 %v758
      %v835 = vpop.f32.mrf.mxu0
      %v836 = vadd.f32 %v731, %v835
      %v837 = vpop.f32.mrf.mxu0
      %v838 = vpop.f32.mrf.mxu0
      %v839 = vadd.f32 %v731, %v838
      %v840 = vpop.f32.mrf.mxu0
      %841 = vmatprep.mubr.bf16.mxu0 0
      %842 = vmatmul.mubr.bf16.gmra.mxu0 %v761
      %v843 = vpop.f32.mrf.mxu0
      %v844 = vadd.f32 %v731, %v843
      %v845 = vpop.f32.mrf.mxu0
      %v846 = vpop.f32.mrf.mxu0
      %v847 = vadd.f32 %v731, %v846
      %v848 = vpop.f32.mrf.mxu0
      %849 = vmatprep.mubr.bf16.mxu0 0
      %850 = vmatmul.mubr.bf16.gmra.mxu0 %v764
      %v851 = vpop.f32.mrf.mxu0
      %v852 = vadd.f32 %v731, %v851
      %v853 = vpop.f32.mrf.mxu0
      %v854 = vpop.f32.mrf.mxu0
      %v855 = vadd.f32 %v731, %v854
      %v856 = vpop.f32.mrf.mxu0
      %857 = vmatprep.mubr.bf16.mxu0 0
      %858 = vmatmul.mubr.bf16.gmra.mxu0 %v767
      %v859 = vpop.f32.mrf.mxu0
      %v860 = vadd.f32 %v731, %v859
      %v861 = vpop.f32.mrf.mxu0
      %v862 = vpop.f32.mrf.mxu0
      %v863 = vadd.f32 %v731, %v862
      %v864 = vpop.f32.mrf.mxu0
      %865 = vdwg.mxu0
      %v866 = vpack.c.bf16 %v807, %v804
      %v867 = vpack.c.bf16 %v815, %v812
      %v868 = vpack.c.bf16 %v823, %v820
      %v869 = vpack.c.bf16 %v831, %v828
      %v870 = vpack.c.bf16 %v839, %v836
      %v871 = vpack.c.bf16 %v847, %v844
      %v872 = vpack.c.bf16 %v855, %v852
      %v873 = vpack.c.bf16 %v863, %v860
      %v874 = vlaneseq
      %v875 = vand.u32 %v874, 127
      %vm876 = vcmp.lt.s32.totalorder %v875, 8
      %v877 = vsel %vm876, 0.0, -1e+30
      %v878 = vld [vmem:[%s6] sm:$0x1]
      %v880 = vlaneseq
      %v881 = vshrl.u32 %v880, 7
      %v882 = vsub.s32 0, %v881
      %v883 = vrot.slane %v878, %v882
      %v885 = vadd.f32 %v883, 0.0
      %894 = vrot.lane.b32.xlu0 %v866, 96
      %v895 = vpop.permute.xlu0 %894
      %896 = vrot.lane.b32.xlu0 %v867, 96
      %v897 = vpop.permute.xlu0 %896
      %898 = vrot.lane.b32.xlu0 %v868, 96
      %v899 = vpop.permute.xlu0 %898
      %900 = vrot.lane.b32.xlu0 %v869, 96
      %v901 = vpop.permute.xlu0 %900
      %902 = vrot.lane.b32.xlu0 %v870, 96
      %v903 = vpop.permute.xlu0 %902
      %904 = vrot.lane.b32.xlu0 %v871, 96
      %v905 = vpop.permute.xlu0 %904
      %906 = vrot.lane.b32.xlu0 %v872, 96
      %v907 = vpop.permute.xlu0 %906
      %908 = vrot.lane.b32.xlu0 %v873, 96
      %v909 = vpop.permute.xlu0 %908
      %vm910 = vcmask 64512
      %v912 = vsel %vm910, %v866, 0
      %v915 = vsel %vm910, %v867, 0
      %v918 = vsel %vm910, %v868, 0
      %v921 = vsel %vm910, %v869, 0
      %v924 = vsel %vm910, %v870, 0
      %v927 = vsel %vm910, %v871, 0
      %v930 = vsel %vm910, %v872, 0
      %v933 = vsel %vm910, %v873, 0
      %v936 = vsel %vm910, %v895, 0
      %v939 = vsel %vm910, %v897, 0
      %v942 = vsel %vm910, %v899, 0
      %v945 = vsel %vm910, %v901, 0
      %v948 = vsel %vm910, %v903, 0
      %v951 = vsel %vm910, %v905, 0
      %v954 = vsel %vm910, %v907, 0
      %v957 = vsel %vm910, %v909, 0
      %959 = vmatprep.subr.bf16.mxu0 0
      %960 = vmatpush1.bf16.xpose.msra.mxu0 %v957
      %961 = vmatprep.subr.bf16.mxu0 0
      %962 = vmatpush1.bf16.xpose.msra.mxu0 %v954
      %963 = vmatprep.subr.bf16.mxu0 0
      %964 = vmatpush1.bf16.xpose.msra.mxu0 %v951
      %965 = vmatprep.subr.bf16.mxu0 0
      %966 = vmatpush1.bf16.xpose.msra.mxu0 %v948
      %967 = vmatprep.subr.bf16.mxu0 0
      %968 = vmatpush1.bf16.xpose.msra.mxu0 %v945
      %969 = vmatprep.subr.bf16.mxu0 0
      %970 = vmatpush1.bf16.xpose.msra.mxu0 %v942
      %971 = vmatprep.subr.bf16.mxu0 0
      %972 = vmatpush1.bf16.xpose.msra.mxu0 %v939
      %973 = vmatprep.subr.bf16.mxu0 0
      %974 = vmatpush1.bf16.xpose.msra.mxu0 %v936
      %975 = vmatprep.subr.bf16.mxu0 0
      %976 = vmatpush2.bf16.xpose.msra.mxu0 0
      %977 = vmatprep.subr.bf16.mxu0 0
      %978 = vmatpush2.bf16.xpose.msra.mxu0 0
      %979 = vmatprep.subr.bf16.mxu0 0
      %980 = vmatpush2.bf16.xpose.msra.mxu0 0
      %981 = vmatprep.subr.bf16.mxu0 0
      %982 = vmatpush2.bf16.xpose.msra.mxu0 0
      %983 = vmatprep.subr.bf16.mxu0 0
      %984 = vmatpush2.bf16.xpose.msra.mxu0 0
      %985 = vmatprep.subr.bf16.mxu0 0
      %986 = vmatpush2.bf16.xpose.msra.mxu0 0
      %987 = vmatprep.subr.bf16.mxu0 0
      %988 = vmatpush2.bf16.xpose.msra.mxu0 0
      %989 = vmatprep.subr.bf16.mxu0 0
      %990 = vmatpush2.bf16.xpose.msra.mxu0 0
      %991 = vmatprep.mubr.bf16.mxu0 0
      %992 = vmatmul.mubr.bf16.gmra.mxu0 %v912
      %v993 = vpop.f32.mrf.mxu0
      %v994 = vadd.f32 %v877, %v993
      %v995 = vpop.f32.mrf.mxu0
      %v996 = vpop.f32.mrf.mxu0
      %v997 = vadd.f32 %v877, %v996
      %v998 = vpop.f32.mrf.mxu0
      %999 = vmatprep.mubr.bf16.mxu0 0
      %1000 = vmatmul.mubr.bf16.gmra.mxu0 %v915
      %v1001 = vpop.f32.mrf.mxu0
      %v1002 = vadd.f32 %v877, %v1001
      %v1003 = vpop.f32.mrf.mxu0
      %v1004 = vpop.f32.mrf.mxu0
      %v1005 = vadd.f32 %v877, %v1004
      %v1006 = vpop.f32.mrf.mxu0
      %1007 = vmatprep.mubr.bf16.mxu0 0
      %1008 = vmatmul.mubr.bf16.gmra.mxu0 %v918
      %v1009 = vpop.f32.mrf.mxu0
      %v1010 = vadd.f32 %v877, %v1009
      %v1011 = vpop.f32.mrf.mxu0
      %v1012 = vpop.f32.mrf.mxu0
      %v1013 = vadd.f32 %v877, %v1012
      %v1014 = vpop.f32.mrf.mxu0
      %1015 = vmatprep.mubr.bf16.mxu0 0
      %1016 = vmatmul.mubr.bf16.gmra.mxu0 %v921
      %v1017 = vpop.f32.mrf.mxu0
      %v1018 = vadd.f32 %v877, %v1017
      %v1019 = vpop.f32.mrf.mxu0
      %v1020 = vpop.f32.mrf.mxu0
      %v1021 = vadd.f32 %v877, %v1020
      %v1022 = vpop.f32.mrf.mxu0
      %1023 = vmatprep.mubr.bf16.mxu0 0
      %1024 = vmatmul.mubr.bf16.gmra.mxu0 %v924
      %v1025 = vpop.f32.mrf.mxu0
      %v1026 = vadd.f32 %v877, %v1025
      %v1027 = vpop.f32.mrf.mxu0
      %v1028 = vpop.f32.mrf.mxu0
      %v1029 = vadd.f32 %v877, %v1028
      %v1030 = vpop.f32.mrf.mxu0
      %1031 = vmatprep.mubr.bf16.mxu0 0
      %1032 = vmatmul.mubr.bf16.gmra.mxu0 %v927
      %v1033 = vpop.f32.mrf.mxu0
      %v1034 = vadd.f32 %v877, %v1033
      %v1035 = vpop.f32.mrf.mxu0
      %v1036 = vpop.f32.mrf.mxu0
      %v1037 = vadd.f32 %v877, %v1036
      %v1038 = vpop.f32.mrf.mxu0
      %1039 = vmatprep.mubr.bf16.mxu0 0
      %1040 = vmatmul.mubr.bf16.gmra.mxu0 %v930
      %v1041 = vpop.f32.mrf.mxu0
      %v1042 = vadd.f32 %v877, %v1041
      %v1043 = vpop.f32.mrf.mxu0
      %v1044 = vpop.f32.mrf.mxu0
      %v1045 = vadd.f32 %v877, %v1044
      %v1046 = vpop.f32.mrf.mxu0
      %1047 = vmatprep.mubr.bf16.mxu0 0
      %1048 = vmatmul.mubr.bf16.gmra.mxu0 %v933
      %v1049 = vpop.f32.mrf.mxu0
      %v1050 = vadd.f32 %v877, %v1049
      %v1051 = vpop.f32.mrf.mxu0
      %v1052 = vpop.f32.mrf.mxu0
      %v1053 = vadd.f32 %v877, %v1052
      %v1054 = vpop.f32.mrf.mxu0
      %1055 = vdwg.mxu0
      %1056 = vmax.xlane.f32.xlu0 %v994
      %v1057 = vpop.xlane.xlu0 %1056
      %1058 = vmax.xlane.f32.xlu0 %v997
      %v1059 = vpop.xlane.xlu0 %1058
      %1060 = vmax.xlane.f32.xlu0 %v1002
      %v1061 = vpop.xlane.xlu0 %1060
      %1062 = vmax.xlane.f32.xlu0 %v1005
      %v1063 = vpop.xlane.xlu0 %1062
      %1064 = vmax.xlane.f32.xlu0 %v1010
      %v1065 = vpop.xlane.xlu0 %1064
      %1066 = vmax.xlane.f32.xlu0 %v1013
      %v1067 = vpop.xlane.xlu0 %1066
      %1068 = vmax.xlane.f32.xlu0 %v1018
      %v1069 = vpop.xlane.xlu0 %1068
      %1070 = vmax.xlane.f32.xlu0 %v1021
      %v1071 = vpop.xlane.xlu0 %1070
      %1072 = vmax.xlane.f32.xlu0 %v1026
      %v1073 = vpop.xlane.xlu0 %1072
      %1074 = vmax.xlane.f32.xlu0 %v1029
      %v1075 = vpop.xlane.xlu0 %1074
      %1076 = vmax.xlane.f32.xlu0 %v1034
      %v1077 = vpop.xlane.xlu0 %1076
      %1078 = vmax.xlane.f32.xlu0 %v1037
      %v1079 = vpop.xlane.xlu0 %1078
      %1080 = vmax.xlane.f32.xlu0 %v1042
      %v1081 = vpop.xlane.xlu0 %1080
      %1082 = vmax.xlane.f32.xlu0 %v1045
      %v1083 = vpop.xlane.xlu0 %1082
      %1084 = vmax.xlane.f32.xlu0 %v1050
      %v1085 = vpop.xlane.xlu0 %1084
      %1086 = vmax.xlane.f32.xlu0 %v1053
      %v1087 = vpop.xlane.xlu0 %1086
      %v1088 = vsub.f32 %v994, %v1057
      %v1089 = vsub.f32 %v997, %v1059
      %v1090 = vsub.f32 %v1002, %v1061
      %v1091 = vsub.f32 %v1005, %v1063
      %v1092 = vsub.f32 %v1010, %v1065
      %v1093 = vsub.f32 %v1013, %v1067
      %v1094 = vsub.f32 %v1018, %v1069
      %v1095 = vsub.f32 %v1021, %v1071
      %v1096 = vsub.f32 %v1026, %v1073
      %v1097 = vsub.f32 %v1029, %v1075
      %v1098 = vsub.f32 %v1034, %v1077
      %v1099 = vsub.f32 %v1037, %v1079
      %v1100 = vsub.f32 %v1042, %v1081
      %v1101 = vsub.f32 %v1045, %v1083
      %v1102 = vsub.f32 %v1050, %v1085
      %v1103 = vsub.f32 %v1053, %v1087
      %v1104 = vmul.f32 %v1088, 1.442695
      %v1105 = vpow.pop %v1104
      %v1106 = vmul.f32 %v1089, 1.442695
      %v1107 = vpow.pop %v1106
      %v1108 = vmul.f32 %v1090, 1.442695
      %v1109 = vpow.pop %v1108
      %v1110 = vmul.f32 %v1091, 1.442695
      %v1111 = vpow.pop %v1110
      %v1112 = vmul.f32 %v1092, 1.442695
      %v1113 = vpow.pop %v1112
      %v1114 = vmul.f32 %v1093, 1.442695
      %v1115 = vpow.pop %v1114
      %v1116 = vmul.f32 %v1094, 1.442695
      %v1117 = vpow.pop %v1116
      %v1118 = vmul.f32 %v1095, 1.442695
      %v1119 = vpow.pop %v1118
      %v1120 = vmul.f32 %v1096, 1.442695
      %v1121 = vpow.pop %v1120
      %v1122 = vmul.f32 %v1097, 1.442695
      %v1123 = vpow.pop %v1122
      %v1124 = vmul.f32 %v1098, 1.442695
      %v1125 = vpow.pop %v1124
      %v1126 = vmul.f32 %v1099, 1.442695
      %v1127 = vpow.pop %v1126
      %v1128 = vmul.f32 %v1100, 1.442695
      %v1129 = vpow.pop %v1128
      %v1130 = vmul.f32 %v1101, 1.442695
      %v1131 = vpow.pop %v1130
      %v1132 = vmul.f32 %v1102, 1.442695
      %v1133 = vpow.pop %v1132
      %v1134 = vmul.f32 %v1103, 1.442695
      %v1135 = vpow.pop %v1134
      %1136 = vadd.xlane.f32.xlu0 %v1105
      %v1137 = vpop.xlane.xlu0 %1136
      %1138 = vadd.xlane.f32.xlu0 %v1107
      %v1139 = vpop.xlane.xlu0 %1138
      %1140 = vadd.xlane.f32.xlu0 %v1109
      %v1141 = vpop.xlane.xlu0 %1140
      %1142 = vadd.xlane.f32.xlu0 %v1111
      %v1143 = vpop.xlane.xlu0 %1142
      %1144 = vadd.xlane.f32.xlu0 %v1113
      %v1145 = vpop.xlane.xlu0 %1144
      %1146 = vadd.xlane.f32.xlu0 %v1115
      %v1147 = vpop.xlane.xlu0 %1146
      %1148 = vadd.xlane.f32.xlu0 %v1117
      %v1149 = vpop.xlane.xlu0 %1148
      %1150 = vadd.xlane.f32.xlu0 %v1119
      %v1151 = vpop.xlane.xlu0 %1150
      %1152 = vadd.xlane.f32.xlu0 %v1121
      %v1153 = vpop.xlane.xlu0 %1152
      %1154 = vadd.xlane.f32.xlu0 %v1123
      %v1155 = vpop.xlane.xlu0 %1154
      %1156 = vadd.xlane.f32.xlu0 %v1125
      %v1157 = vpop.xlane.xlu0 %1156
      %1158 = vadd.xlane.f32.xlu0 %v1127
      %v1159 = vpop.xlane.xlu0 %1158
      %1160 = vadd.xlane.f32.xlu0 %v1129
      %v1161 = vpop.xlane.xlu0 %1160
      %1162 = vadd.xlane.f32.xlu0 %v1131
      %v1163 = vpop.xlane.xlu0 %1162
      %1164 = vadd.xlane.f32.xlu0 %v1133
      %v1165 = vpop.xlane.xlu0 %1164
      %1166 = vadd.xlane.f32.xlu0 %v1135
      %v1167 = vpop.xlane.xlu0 %1166
      %v1168 = vrcp.pop %v1137
      %v1169 = vrcp.pop %v1139
      %v1170 = vrcp.pop %v1141
      %v1171 = vrcp.pop %v1143
      %v1172 = vrcp.pop %v1145
      %v1173 = vrcp.pop %v1147
      %v1174 = vrcp.pop %v1149
      %v1175 = vrcp.pop %v1151
      %v1176 = vrcp.pop %v1153
      %v1177 = vrcp.pop %v1155
      %v1178 = vrcp.pop %v1157
      %v1179 = vrcp.pop %v1159
      %v1180 = vrcp.pop %v1161
      %v1181 = vrcp.pop %v1163
      %v1182 = vrcp.pop %v1165
      %v1183 = vrcp.pop %v1167
      %v1184 = vmul.f32 %v1105, %v1168
      %v1185 = vmul.f32 %v1107, %v1169
      %v1186 = vmul.f32 %v1109, %v1170
      %v1187 = vmul.f32 %v1111, %v1171
      %v1188 = vmul.f32 %v1113, %v1172
      %v1189 = vmul.f32 %v1115, %v1173
      %v1190 = vmul.f32 %v1117, %v1174
      %v1191 = vmul.f32 %v1119, %v1175
      %v1192 = vmul.f32 %v1121, %v1176
      %v1193 = vmul.f32 %v1123, %v1177
      %v1194 = vmul.f32 %v1125, %v1178
      %v1195 = vmul.f32 %v1127, %v1179
      %v1196 = vmul.f32 %v1129, %v1180
      %v1197 = vmul.f32 %v1131, %v1181
      %v1198 = vmul.f32 %v1133, %v1182
      %v1199 = vmul.f32 %v1135, %v1183
      %v1200 = vpack.c.bf16 %v1185, %v1184
      %v1201 = vpack.c.bf16 %v1187, %v1186
      %v1202 = vpack.c.bf16 %v1189, %v1188
      %v1203 = vpack.c.bf16 %v1191, %v1190
      %v1204 = vpack.c.bf16 %v1193, %v1192
      %v1205 = vpack.c.bf16 %v1195, %v1194
      %v1206 = vpack.c.bf16 %v1197, %v1196
      %v1207 = vpack.c.bf16 %v1199, %v1198
      %1208 = vrot.lane.b32.xlu0 %v866, 64
      %v1209 = vpop.permute.xlu0 %1208
      %1210 = vrot.lane.b32.xlu0 %v867, 64
      %v1211 = vpop.permute.xlu0 %1210
      %1212 = vrot.lane.b32.xlu0 %v868, 64
      %v1213 = vpop.permute.xlu0 %1212
      %1214 = vrot.lane.b32.xlu0 %v869, 64
      %v1215 = vpop.permute.xlu0 %1214
      %1216 = vrot.lane.b32.xlu0 %v870, 64
      %v1217 = vpop.permute.xlu0 %1216
      %1218 = vrot.lane.b32.xlu0 %v871, 64
      %v1219 = vpop.permute.xlu0 %1218
      %1220 = vrot.lane.b32.xlu0 %v872, 64
      %v1221 = vpop.permute.xlu0 %1220
      %1222 = vrot.lane.b32.xlu0 %v873, 64
      %v1223 = vpop.permute.xlu0 %1222
      %1232 = vmatprep.subr.bf16.mxu0 0
      %1233 = vmatpush1.bf16.msra.mxu0 %v1223
      %1234 = vmatprep.subr.bf16.mxu0 0
      %1235 = vmatpush1.bf16.msra.mxu0 %v1221
      %1236 = vmatprep.subr.bf16.mxu0 0
      %1237 = vmatpush1.bf16.msra.mxu0 %v1219
      %1238 = vmatprep.subr.bf16.mxu0 0
      %1239 = vmatpush1.bf16.msra.mxu0 %v1217
      %1240 = vmatprep.subr.bf16.mxu0 0
      %1241 = vmatpush1.bf16.msra.mxu0 %v1215
      %1242 = vmatprep.subr.bf16.mxu0 0
      %1243 = vmatpush1.bf16.msra.mxu0 %v1213
      %1244 = vmatprep.subr.bf16.mxu0 0
      %1245 = vmatpush1.bf16.msra.mxu0 %v1211
      %1246 = vmatprep.subr.bf16.mxu0 0
      %1247 = vmatpush1.bf16.msra.mxu0 %v1209
      %1248 = vmatprep.subr.bf16.mxu0 0
      %1249 = vmatpush2.bf16.msra.mxu0 0
      %1250 = vmatprep.subr.bf16.mxu0 0
      %1251 = vmatpush2.bf16.msra.mxu0 0
      %1252 = vmatprep.subr.bf16.mxu0 0
      %1253 = vmatpush2.bf16.msra.mxu0 0
      %1254 = vmatprep.subr.bf16.mxu0 0
      %1255 = vmatpush2.bf16.msra.mxu0 0
      %1256 = vmatprep.subr.bf16.mxu0 0
      %1257 = vmatpush2.bf16.msra.mxu0 0
      %1258 = vmatprep.subr.bf16.mxu0 0
      %1259 = vmatpush2.bf16.msra.mxu0 0
      %1260 = vmatprep.subr.bf16.mxu0 0
      %1261 = vmatpush2.bf16.msra.mxu0 0
      %1262 = vmatprep.subr.bf16.mxu0 0
      %1263 = vmatpush2.bf16.msra.mxu0 0
      %1264 = vmatprep.mubr.bf16.mxu0 0
      %1265 = vmatmul.mubr.bf16.gmra.mxu0 %v1200
      %v1266 = vpop.f32.mrf.mxu0
      %v1267 = vadd.f32 0.0, %v1266
      %v1268 = vpop.f32.mrf.mxu0
      %v1269 = vpop.f32.mrf.mxu0
      %v1270 = vadd.f32 0.0, %v1269
      %v1271 = vpop.f32.mrf.mxu0
      %1272 = vmatprep.mubr.bf16.mxu0 0
      %1273 = vmatmul.mubr.bf16.gmra.mxu0 %v1201
      %v1274 = vpop.f32.mrf.mxu0
      %v1275 = vadd.f32 0.0, %v1274
      %v1276 = vpop.f32.mrf.mxu0
      %v1277 = vpop.f32.mrf.mxu0
      %v1278 = vadd.f32 0.0, %v1277
      %v1279 = vpop.f32.mrf.mxu0
      %1280 = vmatprep.mubr.bf16.mxu0 0
      %1281 = vmatmul.mubr.bf16.gmra.mxu0 %v1202
      %v1282 = vpop.f32.mrf.mxu0
      %v1283 = vadd.f32 0.0, %v1282
      %v1284 = vpop.f32.mrf.mxu0
      %v1285 = vpop.f32.mrf.mxu0
      %v1286 = vadd.f32 0.0, %v1285
      %v1287 = vpop.f32.mrf.mxu0
      %1288 = vmatprep.mubr.bf16.mxu0 0
      %1289 = vmatmul.mubr.bf16.gmra.mxu0 %v1203
      %v1290 = vpop.f32.mrf.mxu0
      %v1291 = vadd.f32 0.0, %v1290
      %v1292 = vpop.f32.mrf.mxu0
      %v1293 = vpop.f32.mrf.mxu0
      %v1294 = vadd.f32 0.0, %v1293
      %v1295 = vpop.f32.mrf.mxu0
      %1296 = vmatprep.mubr.bf16.mxu0 0
      %1297 = vmatmul.mubr.bf16.gmra.mxu0 %v1204
      %v1298 = vpop.f32.mrf.mxu0
      %v1299 = vadd.f32 0.0, %v1298
      %v1300 = vpop.f32.mrf.mxu0
      %v1301 = vpop.f32.mrf.mxu0
      %v1302 = vadd.f32 0.0, %v1301
      %v1303 = vpop.f32.mrf.mxu0
      %1304 = vmatprep.mubr.bf16.mxu0 0
      %1305 = vmatmul.mubr.bf16.gmra.mxu0 %v1205
      %v1306 = vpop.f32.mrf.mxu0
      %v1307 = vadd.f32 0.0, %v1306
      %v1308 = vpop.f32.mrf.mxu0
      %v1309 = vpop.f32.mrf.mxu0
      %v1310 = vadd.f32 0.0, %v1309
      %v1311 = vpop.f32.mrf.mxu0
      %1312 = vmatprep.mubr.bf16.mxu0 0
      %1313 = vmatmul.mubr.bf16.gmra.mxu0 %v1206
      %v1314 = vpop.f32.mrf.mxu0
      %v1315 = vadd.f32 0.0, %v1314
      %v1316 = vpop.f32.mrf.mxu0
      %v1317 = vpop.f32.mrf.mxu0
      %v1318 = vadd.f32 0.0, %v1317
      %v1319 = vpop.f32.mrf.mxu0
      %1320 = vmatprep.mubr.bf16.mxu0 0
      %1321 = vmatmul.mubr.bf16.gmra.mxu0 %v1207
      %v1322 = vpop.f32.mrf.mxu0
      %v1323 = vadd.f32 0.0, %v1322
      %v1324 = vpop.f32.mrf.mxu0
      %v1325 = vpop.f32.mrf.mxu0
      %v1326 = vadd.f32 0.0, %v1325
      %v1327 = vpop.f32.mrf.mxu0
      %1328 = vdwg.mxu0
      %v1329 = vpack.c.bf16 %v1270, %v1267
      %v1330 = vpack.c.bf16 %v1278, %v1275
      %v1331 = vpack.c.bf16 %v1286, %v1283
      %v1332 = vpack.c.bf16 %v1294, %v1291
      %v1333 = vpack.c.bf16 %v1302, %v1299
      %v1334 = vpack.c.bf16 %v1310, %v1307
      %v1335 = vpack.c.bf16 %v1318, %v1315
      %v1336 = vpack.c.bf16 %v1326, %v1323
      %v1337 = vld [vmem:[%s5] sm:$0xf]
      %v1339 = vsel %vm910, %v1329, 0
      %v1342 = vsel %vm910, %v1330, 0
      %v1345 = vsel %vm910, %v1331, 0
      %v1348 = vsel %vm910, %v1332, 0
      %v1351 = vsel %vm910, %v1333, 0
      %v1354 = vsel %vm910, %v1334, 0
      %v1357 = vsel %vm910, %v1335, 0
      %v1360 = vsel %vm910, %v1336, 0
      %vm1362 = vcmask 1043456
      %v1364 = vsel %vm1362, %v1337, 0
      %1366 = vmatprep.subr.bf16.mxu0 0
      %1367 = vmatpush1.bf16.msra.mxu0 0
      %1368 = vmatprep.subr.bf16.mxu0 0
      %1369 = vmatpush1.bf16.msra.mxu0 0
      %1370 = vmatprep.subr.bf16.mxu0 0
      %1371 = vmatpush1.bf16.msra.mxu0 0
      %1372 = vmatprep.subr.bf16.mxu0 0
      %1373 = vmatpush1.bf16.msra.mxu0 0
      %1374 = vmatprep.subr.bf16.mxu0 0
      %1375 = vmatpush1.bf16.msra.mxu0 0
      %1376 = vmatprep.subr.bf16.mxu0 0
      %1377 = vmatpush1.bf16.msra.mxu0 0
      %1378 = vmatprep.subr.bf16.mxu0 0
      %1379 = vmatpush1.bf16.msra.mxu0 0
      %1380 = vmatprep.subr.bf16.mxu0 0
      %1381 = vmatpush1.bf16.msra.mxu0 %v1364
      %1382 = vmatprep.subr.bf16.mxu0 0
      %1383 = vmatpush2.bf16.msra.mxu0 0
      %1384 = vmatprep.subr.bf16.mxu0 0
      %1385 = vmatpush2.bf16.msra.mxu0 0
      %1386 = vmatprep.subr.bf16.mxu0 0
      %1387 = vmatpush2.bf16.msra.mxu0 0
      %1388 = vmatprep.subr.bf16.mxu0 0
      %1389 = vmatpush2.bf16.msra.mxu0 0
      %1390 = vmatprep.subr.bf16.mxu0 0
      %1391 = vmatpush2.bf16.msra.mxu0 0
      %1392 = vmatprep.subr.bf16.mxu0 0
      %1393 = vmatpush2.bf16.msra.mxu0 0
      %1394 = vmatprep.subr.bf16.mxu0 0
      %1395 = vmatpush2.bf16.msra.mxu0 0
      %1396 = vmatprep.subr.bf16.mxu0 0
      %1397 = vmatpush2.bf16.msra.mxu0 0
      %1398 = vmatprep.mubr.bf16.mxu0 0
      %1399 = vmatmul.mubr.bf16.gmra.mxu0 %v1339
      %v1400 = vpop.f32.mrf.mxu0
      %v1401 = vadd.f32 0.0, %v1400
      %v1402 = vpop.f32.mrf.mxu0
      %v1403 = vpop.f32.mrf.mxu0
      %v1404 = vadd.f32 0.0, %v1403
      %v1405 = vpop.f32.mrf.mxu0
      %1406 = vmatprep.mubr.bf16.mxu0 0
      %1407 = vmatmul.mubr.bf16.gmra.mxu0 %v1342
      %v1408 = vpop.f32.mrf.mxu0
      %v1409 = vadd.f32 0.0, %v1408
      %v1410 = vpop.f32.mrf.mxu0
      %v1411 = vpop.f32.mrf.mxu0
      %v1412 = vadd.f32 0.0, %v1411
      %v1413 = vpop.f32.mrf.mxu0
      %1414 = vmatprep.mubr.bf16.mxu0 0
      %1415 = vmatmul.mubr.bf16.gmra.mxu0 %v1345
      %v1416 = vpop.f32.mrf.mxu0
      %v1417 = vadd.f32 0.0, %v1416
      %v1418 = vpop.f32.mrf.mxu0
      %v1419 = vpop.f32.mrf.mxu0
      %v1420 = vadd.f32 0.0, %v1419
      %v1421 = vpop.f32.mrf.mxu0
      %1422 = vmatprep.mubr.bf16.mxu0 0
      %1423 = vmatmul.mubr.bf16.gmra.mxu0 %v1348
      %v1424 = vpop.f32.mrf.mxu0
      %v1425 = vadd.f32 0.0, %v1424
      %v1426 = vpop.f32.mrf.mxu0
      %v1427 = vpop.f32.mrf.mxu0
      %v1428 = vadd.f32 0.0, %v1427
      %v1429 = vpop.f32.mrf.mxu0
      %1430 = vmatprep.mubr.bf16.mxu0 0
      %1431 = vmatmul.mubr.bf16.gmra.mxu0 %v1351
      %v1432 = vpop.f32.mrf.mxu0
      %v1433 = vadd.f32 0.0, %v1432
      %v1434 = vpop.f32.mrf.mxu0
      %v1435 = vpop.f32.mrf.mxu0
      %v1436 = vadd.f32 0.0, %v1435
      %v1437 = vpop.f32.mrf.mxu0
      %1438 = vmatprep.mubr.bf16.mxu0 0
      %1439 = vmatmul.mubr.bf16.gmra.mxu0 %v1354
      %v1440 = vpop.f32.mrf.mxu0
      %v1441 = vadd.f32 0.0, %v1440
      %v1442 = vpop.f32.mrf.mxu0
      %v1443 = vpop.f32.mrf.mxu0
      %v1444 = vadd.f32 0.0, %v1443
      %v1445 = vpop.f32.mrf.mxu0
      %1446 = vmatprep.mubr.bf16.mxu0 0
      %1447 = vmatmul.mubr.bf16.gmra.mxu0 %v1357
      %v1448 = vpop.f32.mrf.mxu0
      %v1449 = vadd.f32 0.0, %v1448
      %v1450 = vpop.f32.mrf.mxu0
      %v1451 = vpop.f32.mrf.mxu0
      %v1452 = vadd.f32 0.0, %v1451
      %v1453 = vpop.f32.mrf.mxu0
      %1454 = vmatprep.mubr.bf16.mxu0 0
      %1455 = vmatmul.mubr.bf16.gmra.mxu0 %v1360
      %v1456 = vpop.f32.mrf.mxu0
      %v1457 = vadd.f32 0.0, %v1456
      %v1458 = vpop.f32.mrf.mxu0
      %v1459 = vpop.f32.mrf.mxu0
      %v1460 = vadd.f32 0.0, %v1459
      %v1461 = vpop.f32.mrf.mxu0
      %1462 = vdwg.mxu0
      %v1463 = vadd.f32 %v885, %v1401
      %v1464 = vadd.f32 %v885, %v1404
      %v1465 = vadd.f32 %v885, %v1409
      %v1466 = vadd.f32 %v885, %v1412
      %v1467 = vadd.f32 %v885, %v1417
      %v1468 = vadd.f32 %v885, %v1420
      %v1469 = vadd.f32 %v885, %v1425
      %v1470 = vadd.f32 %v885, %v1428
      %v1471 = vadd.f32 %v885, %v1433
      %v1472 = vadd.f32 %v885, %v1436
      %v1473 = vadd.f32 %v885, %v1441
      %v1474 = vadd.f32 %v885, %v1444
      %v1475 = vadd.f32 %v885, %v1449
      %v1476 = vadd.f32 %v885, %v1452
      %v1477 = vadd.f32 %v885, %v1457
      %v1478 = vadd.f32 %v885, %v1460
      %1479 = vrot.lane.b32.xlu0 %v866, 120
      %v1480 = vpop.permute.xlu0 %1479
      %1481 = vrot.lane.b32.xlu0 %v867, 120
      %v1482 = vpop.permute.xlu0 %1481
      %1483 = vrot.lane.b32.xlu0 %v868, 120
      %v1484 = vpop.permute.xlu0 %1483
      %1485 = vrot.lane.b32.xlu0 %v869, 120
      %v1486 = vpop.permute.xlu0 %1485
      %1487 = vrot.lane.b32.xlu0 %v870, 120
      %v1488 = vpop.permute.xlu0 %1487
      %1489 = vrot.lane.b32.xlu0 %v871, 120
      %v1490 = vpop.permute.xlu0 %1489
      %1491 = vrot.lane.b32.xlu0 %v872, 120
      %v1492 = vpop.permute.xlu0 %1491
      %1493 = vrot.lane.b32.xlu0 %v873, 120
      %v1494 = vpop.permute.xlu0 %1493
      %1495 = vrot.lane.b32.xlu0 %v866, 88
      %v1496 = vpop.permute.xlu0 %1495
      %1497 = vrot.lane.b32.xlu0 %v867, 88
      %v1498 = vpop.permute.xlu0 %1497
      %1499 = vrot.lane.b32.xlu0 %v868, 88
      %v1500 = vpop.permute.xlu0 %1499
      %1501 = vrot.lane.b32.xlu0 %v869, 88
      %v1502 = vpop.permute.xlu0 %1501
      %1503 = vrot.lane.b32.xlu0 %v870, 88
      %v1504 = vpop.permute.xlu0 %1503
      %1505 = vrot.lane.b32.xlu0 %v871, 88
      %v1506 = vpop.permute.xlu0 %1505
      %1507 = vrot.lane.b32.xlu0 %v872, 88
      %v1508 = vpop.permute.xlu0 %1507
      %1509 = vrot.lane.b32.xlu0 %v873, 88
      %v1510 = vpop.permute.xlu0 %1509
      %v1512 = vsel %vm910, %v1480, 0
      %v1515 = vsel %vm910, %v1482, 0
      %v1518 = vsel %vm910, %v1484, 0
      %v1521 = vsel %vm910, %v1486, 0
      %v1524 = vsel %vm910, %v1488, 0
      %v1527 = vsel %vm910, %v1490, 0
      %v1530 = vsel %vm910, %v1492, 0
      %v1533 = vsel %vm910, %v1494, 0
      %v1536 = vsel %vm910, %v1496, 0
      %v1539 = vsel %vm910, %v1498, 0
      %v1542 = vsel %vm910, %v1500, 0
      %v1545 = vsel %vm910, %v1502, 0
      %v1548 = vsel %vm910, %v1504, 0
      %v1551 = vsel %vm910, %v1506, 0
      %v1554 = vsel %vm910, %v1508, 0
      %v1557 = vsel %vm910, %v1510, 0
      %1559 = vmatprep.subr.bf16.mxu0 0
      %1560 = vmatpush1.bf16.xpose.msra.mxu0 %v1557
      %1561 = vmatprep.subr.bf16.mxu0 0
      %1562 = vmatpush1.bf16.xpose.msra.mxu0 %v1554
      %1563 = vmatprep.subr.bf16.mxu0 0
      %1564 = vmatpush1.bf16.xpose.msra.mxu0 %v1551
      %1565 = vmatprep.subr.bf16.mxu0 0
      %1566 = vmatpush1.bf16.xpose.msra.mxu0 %v1548
      %1567 = vmatprep.subr.bf16.mxu0 0
      %1568 = vmatpush1.bf16.xpose.msra.mxu0 %v1545
      %1569 = vmatprep.subr.bf16.mxu0 0
      %1570 = vmatpush1.bf16.xpose.msra.mxu0 %v1542
      %1571 = vmatprep.subr.bf16.mxu0 0
      %1572 = vmatpush1.bf16.xpose.msra.mxu0 %v1539
      %1573 = vmatprep.subr.bf16.mxu0 0
      %1574 = vmatpush1.bf16.xpose.msra.mxu0 %v1536
      %1575 = vmatprep.subr.bf16.mxu0 0
      %1576 = vmatpush2.bf16.xpose.msra.mxu0 0
      %1577 = vmatprep.subr.bf16.mxu0 0
      %1578 = vmatpush2.bf16.xpose.msra.mxu0 0
      %1579 = vmatprep.subr.bf16.mxu0 0
      %1580 = vmatpush2.bf16.xpose.msra.mxu0 0
      %1581 = vmatprep.subr.bf16.mxu0 0
      %1582 = vmatpush2.bf16.xpose.msra.mxu0 0
      %1583 = vmatprep.subr.bf16.mxu0 0
      %1584 = vmatpush2.bf16.xpose.msra.mxu0 0
      %1585 = vmatprep.subr.bf16.mxu0 0
      %1586 = vmatpush2.bf16.xpose.msra.mxu0 0
      %1587 = vmatprep.subr.bf16.mxu0 0
      %1588 = vmatpush2.bf16.xpose.msra.mxu0 0
      %1589 = vmatprep.subr.bf16.mxu0 0
      %1590 = vmatpush2.bf16.xpose.msra.mxu0 0
      %1591 = vmatprep.mubr.bf16.mxu0 0
      %1592 = vmatmul.mubr.bf16.gmra.mxu0 %v1512
      %v1593 = vpop.f32.mrf.mxu0
      %v1594 = vadd.f32 %v877, %v1593
      %v1595 = vpop.f32.mrf.mxu0
      %v1596 = vpop.f32.mrf.mxu0
      %v1597 = vadd.f32 %v877, %v1596
      %v1598 = vpop.f32.mrf.mxu0
      %1599 = vmatprep.mubr.bf16.mxu0 0
      %1600 = vmatmul.mubr.bf16.gmra.mxu0 %v1515
      %v1601 = vpop.f32.mrf.mxu0
      %v1602 = vadd.f32 %v877, %v1601
      %v1603 = vpop.f32.mrf.mxu0
      %v1604 = vpop.f32.mrf.mxu0
      %v1605 = vadd.f32 %v877, %v1604
      %v1606 = vpop.f32.mrf.mxu0
      %1607 = vmatprep.mubr.bf16.mxu0 0
      %1608 = vmatmul.mubr.bf16.gmra.mxu0 %v1518
      %v1609 = vpop.f32.mrf.mxu0
      %v1610 = vadd.f32 %v877, %v1609
      %v1611 = vpop.f32.mrf.mxu0
      %v1612 = vpop.f32.mrf.mxu0
      %v1613 = vadd.f32 %v877, %v1612
      %v1614 = vpop.f32.mrf.mxu0
      %1615 = vmatprep.mubr.bf16.mxu0 0
      %1616 = vmatmul.mubr.bf16.gmra.mxu0 %v1521
      %v1617 = vpop.f32.mrf.mxu0
      %v1618 = vadd.f32 %v877, %v1617
      %v1619 = vpop.f32.mrf.mxu0
      %v1620 = vpop.f32.mrf.mxu0
      %v1621 = vadd.f32 %v877, %v1620
      %v1622 = vpop.f32.mrf.mxu0
      %1623 = vmatprep.mubr.bf16.mxu0 0
      %1624 = vmatmul.mubr.bf16.gmra.mxu0 %v1524
      %v1625 = vpop.f32.mrf.mxu0
      %v1626 = vadd.f32 %v877, %v1625
      %v1627 = vpop.f32.mrf.mxu0
      %v1628 = vpop.f32.mrf.mxu0
      %v1629 = vadd.f32 %v877, %v1628
      %v1630 = vpop.f32.mrf.mxu0
      %1631 = vmatprep.mubr.bf16.mxu0 0
      %1632 = vmatmul.mubr.bf16.gmra.mxu0 %v1527
      %v1633 = vpop.f32.mrf.mxu0
      %v1634 = vadd.f32 %v877, %v1633
      %v1635 = vpop.f32.mrf.mxu0
      %v1636 = vpop.f32.mrf.mxu0
      %v1637 = vadd.f32 %v877, %v1636
      %v1638 = vpop.f32.mrf.mxu0
      %1639 = vmatprep.mubr.bf16.mxu0 0
      %1640 = vmatmul.mubr.bf16.gmra.mxu0 %v1530
      %v1641 = vpop.f32.mrf.mxu0
      %v1642 = vadd.f32 %v877, %v1641
      %v1643 = vpop.f32.mrf.mxu0
      %v1644 = vpop.f32.mrf.mxu0
      %v1645 = vadd.f32 %v877, %v1644
      %v1646 = vpop.f32.mrf.mxu0
      %1647 = vmatprep.mubr.bf16.mxu0 0
      %1648 = vmatmul.mubr.bf16.gmra.mxu0 %v1533
      %v1649 = vpop.f32.mrf.mxu0
      %v1650 = vadd.f32 %v877, %v1649
      %v1651 = vpop.f32.mrf.mxu0
      %v1652 = vpop.f32.mrf.mxu0
      %v1653 = vadd.f32 %v877, %v1652
      %v1654 = vpop.f32.mrf.mxu0
      %1655 = vdwg.mxu0
      %1656 = vmax.xlane.f32.xlu0 %v1594
      %v1657 = vpop.xlane.xlu0 %1656
      %1658 = vmax.xlane.f32.xlu0 %v1597
      %v1659 = vpop.xlane.xlu0 %1658
      %1660 = vmax.xlane.f32.xlu0 %v1602
      %v1661 = vpop.xlane.xlu0 %1660
      %1662 = vmax.xlane.f32.xlu0 %v1605
      %v1663 = vpop.xlane.xlu0 %1662
      %1664 = vmax.xlane.f32.xlu0 %v1610
      %v1665 = vpop.xlane.xlu0 %1664
      %1666 = vmax.xlane.f32.xlu0 %v1613
      %v1667 = vpop.xlane.xlu0 %1666
      %1668 = vmax.xlane.f32.xlu0 %v1618
      %v1669 = vpop.xlane.xlu0 %1668
      %1670 = vmax.xlane.f32.xlu0 %v1621
      %v1671 = vpop.xlane.xlu0 %1670
      %1672 = vmax.xlane.f32.xlu0 %v1626
      %v1673 = vpop.xlane.xlu0 %1672
      %1674 = vmax.xlane.f32.xlu0 %v1629
      %v1675 = vpop.xlane.xlu0 %1674
      %1676 = vmax.xlane.f32.xlu0 %v1634
      %v1677 = vpop.xlane.xlu0 %1676
      %1678 = vmax.xlane.f32.xlu0 %v1637
      %v1679 = vpop.xlane.xlu0 %1678
      %1680 = vmax.xlane.f32.xlu0 %v1642
      %v1681 = vpop.xlane.xlu0 %1680
      %1682 = vmax.xlane.f32.xlu0 %v1645
      %v1683 = vpop.xlane.xlu0 %1682
      %1684 = vmax.xlane.f32.xlu0 %v1650
      %v1685 = vpop.xlane.xlu0 %1684
      %1686 = vmax.xlane.f32.xlu0 %v1653
      %v1687 = vpop.xlane.xlu0 %1686
      %v1688 = vsub.f32 %v1594, %v1657
      %v1689 = vsub.f32 %v1597, %v1659
      %v1690 = vsub.f32 %v1602, %v1661
      %v1691 = vsub.f32 %v1605, %v1663
      %v1692 = vsub.f32 %v1610, %v1665
      %v1693 = vsub.f32 %v1613, %v1667
      %v1694 = vsub.f32 %v1618, %v1669
      %v1695 = vsub.f32 %v1621, %v1671
      %v1696 = vsub.f32 %v1626, %v1673
      %v1697 = vsub.f32 %v1629, %v1675
      %v1698 = vsub.f32 %v1634, %v1677
      %v1699 = vsub.f32 %v1637, %v1679
      %v1700 = vsub.f32 %v1642, %v1681
      %v1701 = vsub.f32 %v1645, %v1683
      %v1702 = vsub.f32 %v1650, %v1685
      %v1703 = vsub.f32 %v1653, %v1687
      %v1704 = vmul.f32 %v1688, 1.442695
      %v1705 = vpow.pop %v1704
      %v1706 = vmul.f32 %v1689, 1.442695
      %v1707 = vpow.pop %v1706
      %v1708 = vmul.f32 %v1690, 1.442695
      %v1709 = vpow.pop %v1708
      %v1710 = vmul.f32 %v1691, 1.442695
      %v1711 = vpow.pop %v1710
      %v1712 = vmul.f32 %v1692, 1.442695
      %v1713 = vpow.pop %v1712
      %v1714 = vmul.f32 %v1693, 1.442695
      %v1715 = vpow.pop %v1714
      %v1716 = vmul.f32 %v1694, 1.442695
      %v1717 = vpow.pop %v1716
      %v1718 = vmul.f32 %v1695, 1.442695
      %v1719 = vpow.pop %v1718
      %v1720 = vmul.f32 %v1696, 1.442695
      %v1721 = vpow.pop %v1720
      %v1722 = vmul.f32 %v1697, 1.442695
      %v1723 = vpow.pop %v1722
      %v1724 = vmul.f32 %v1698, 1.442695
      %v1725 = vpow.pop %v1724
      %v1726 = vmul.f32 %v1699, 1.442695
      %v1727 = vpow.pop %v1726
      %v1728 = vmul.f32 %v1700, 1.442695
      %v1729 = vpow.pop %v1728
      %v1730 = vmul.f32 %v1701, 1.442695
      %v1731 = vpow.pop %v1730
      %v1732 = vmul.f32 %v1702, 1.442695
      %v1733 = vpow.pop %v1732
      %v1734 = vmul.f32 %v1703, 1.442695
      %v1735 = vpow.pop %v1734
      %1736 = vadd.xlane.f32.xlu0 %v1705
      %v1737 = vpop.xlane.xlu0 %1736
      %1738 = vadd.xlane.f32.xlu0 %v1707
      %v1739 = vpop.xlane.xlu0 %1738
      %1740 = vadd.xlane.f32.xlu0 %v1709
      %v1741 = vpop.xlane.xlu0 %1740
      %1742 = vadd.xlane.f32.xlu0 %v1711
      %v1743 = vpop.xlane.xlu0 %1742
      %1744 = vadd.xlane.f32.xlu0 %v1713
      %v1745 = vpop.xlane.xlu0 %1744
      %1746 = vadd.xlane.f32.xlu0 %v1715
      %v1747 = vpop.xlane.xlu0 %1746
      %1748 = vadd.xlane.f32.xlu0 %v1717
      %v1749 = vpop.xlane.xlu0 %1748
      %1750 = vadd.xlane.f32.xlu0 %v1719
      %v1751 = vpop.xlane.xlu0 %1750
      %1752 = vadd.xlane.f32.xlu0 %v1721
      %v1753 = vpop.xlane.xlu0 %1752
      %1754 = vadd.xlane.f32.xlu0 %v1723
      %v1755 = vpop.xlane.xlu0 %1754
      %1756 = vadd.xlane.f32.xlu0 %v1725
      %v1757 = vpop.xlane.xlu0 %1756
      %1758 = vadd.xlane.f32.xlu0 %v1727
      %v1759 = vpop.xlane.xlu0 %1758
      %1760 = vadd.xlane.f32.xlu0 %v1729
      %v1761 = vpop.xlane.xlu0 %1760
      %1762 = vadd.xlane.f32.xlu0 %v1731
      %v1763 = vpop.xlane.xlu0 %1762
      %1764 = vadd.xlane.f32.xlu0 %v1733
      %v1765 = vpop.xlane.xlu0 %1764
      %1766 = vadd.xlane.f32.xlu0 %v1735
      %v1767 = vpop.xlane.xlu0 %1766
      %v1768 = vrcp.pop %v1737
      %v1769 = vrcp.pop %v1739
      %v1770 = vrcp.pop %v1741
      %v1771 = vrcp.pop %v1743
      %v1772 = vrcp.pop %v1745
      %v1773 = vrcp.pop %v1747
      %v1774 = vrcp.pop %v1749
      %v1775 = vrcp.pop %v1751
      %v1776 = vrcp.pop %v1753
      %v1777 = vrcp.pop %v1755
      %v1778 = vrcp.pop %v1757
      %v1779 = vrcp.pop %v1759
      %v1780 = vrcp.pop %v1761
      %v1781 = vrcp.pop %v1763
      %v1782 = vrcp.pop %v1765
      %v1783 = vrcp.pop %v1767
      %v1784 = vmul.f32 %v1705, %v1768
      %v1785 = vmul.f32 %v1707, %v1769
      %v1786 = vmul.f32 %v1709, %v1770
      %v1787 = vmul.f32 %v1711, %v1771
      %v1788 = vmul.f32 %v1713, %v1772
      %v1789 = vmul.f32 %v1715, %v1773
      %v1790 = vmul.f32 %v1717, %v1774
      %v1791 = vmul.f32 %v1719, %v1775
      %v1792 = vmul.f32 %v1721, %v1776
      %v1793 = vmul.f32 %v1723, %v1777
      %v1794 = vmul.f32 %v1725, %v1778
      %v1795 = vmul.f32 %v1727, %v1779
      %v1796 = vmul.f32 %v1729, %v1780
      %v1797 = vmul.f32 %v1731, %v1781
      %v1798 = vmul.f32 %v1733, %v1782
      %v1799 = vmul.f32 %v1735, %v1783
      %v1800 = vpack.c.bf16 %v1785, %v1784
      %v1801 = vpack.c.bf16 %v1787, %v1786
      %v1802 = vpack.c.bf16 %v1789, %v1788
      %v1803 = vpack.c.bf16 %v1791, %v1790
      %v1804 = vpack.c.bf16 %v1793, %v1792
      %v1805 = vpack.c.bf16 %v1795, %v1794
      %v1806 = vpack.c.bf16 %v1797, %v1796
      %v1807 = vpack.c.bf16 %v1799, %v1798
      %1808 = vrot.lane.b32.xlu0 %v866, 56
      %v1809 = vpop.permute.xlu0 %1808
      %1810 = vrot.lane.b32.xlu0 %v867, 56
      %v1811 = vpop.permute.xlu0 %1810
      %1812 = vrot.lane.b32.xlu0 %v868, 56
      %v1813 = vpop.permute.xlu0 %1812
      %1814 = vrot.lane.b32.xlu0 %v869, 56
      %v1815 = vpop.permute.xlu0 %1814
      %1816 = vrot.lane.b32.xlu0 %v870, 56
      %v1817 = vpop.permute.xlu0 %1816
      %1818 = vrot.lane.b32.xlu0 %v871, 56
      %v1819 = vpop.permute.xlu0 %1818
      %1820 = vrot.lane.b32.xlu0 %v872, 56
      %v1821 = vpop.permute.xlu0 %1820
      %1822 = vrot.lane.b32.xlu0 %v873, 56
      %v1823 = vpop.permute.xlu0 %1822
      %1832 = vmatprep.subr.bf16.mxu0 0
      %1833 = vmatpush1.bf16.msra.mxu0 %v1823
      %1834 = vmatprep.subr.bf16.mxu0 0
      %1835 = vmatpush1.bf16.msra.mxu0 %v1821
      %1836 = vmatprep.subr.bf16.mxu0 0
      %1837 = vmatpush1.bf16.msra.mxu0 %v1819
      %1838 = vmatprep.subr.bf16.mxu0 0
      %1839 = vmatpush1.bf16.msra.mxu0 %v1817
      %1840 = vmatprep.subr.bf16.mxu0 0
      %1841 = vmatpush1.bf16.msra.mxu0 %v1815
      %1842 = vmatprep.subr.bf16.mxu0 0
      %1843 = vmatpush1.bf16.msra.mxu0 %v1813
      %1844 = vmatprep.subr.bf16.mxu0 0
      %1845 = vmatpush1.bf16.msra.mxu0 %v1811
      %1846 = vmatprep.subr.bf16.mxu0 0
      %1847 = vmatpush1.bf16.msra.mxu0 %v1809
      %1848 = vmatprep.subr.bf16.mxu0 0
      %1849 = vmatpush2.bf16.msra.mxu0 0
      %1850 = vmatprep.subr.bf16.mxu0 0
      %1851 = vmatpush2.bf16.msra.mxu0 0
      %1852 = vmatprep.subr.bf16.mxu0 0
      %1853 = vmatpush2.bf16.msra.mxu0 0
      %1854 = vmatprep.subr.bf16.mxu0 0
      %1855 = vmatpush2.bf16.msra.mxu0 0
      %1856 = vmatprep.subr.bf16.mxu0 0
      %1857 = vmatpush2.bf16.msra.mxu0 0
      %1858 = vmatprep.subr.bf16.mxu0 0
      %1859 = vmatpush2.bf16.msra.mxu0 0
      %1860 = vmatprep.subr.bf16.mxu0 0
      %1861 = vmatpush2.bf16.msra.mxu0 0
      %1862 = vmatprep.subr.bf16.mxu0 0
      %1863 = vmatpush2.bf16.msra.mxu0 0
      %1864 = vmatprep.mubr.bf16.mxu0 0
      %1865 = vmatmul.mubr.bf16.gmra.mxu0 %v1800
      %v1866 = vpop.f32.mrf.mxu0
      %v1867 = vadd.f32 0.0, %v1866
      %v1868 = vpop.f32.mrf.mxu0
      %v1869 = vpop.f32.mrf.mxu0
      %v1870 = vadd.f32 0.0, %v1869
      %v1871 = vpop.f32.mrf.mxu0
      %1872 = vmatprep.mubr.bf16.mxu0 0
      %1873 = vmatmul.mubr.bf16.gmra.mxu0 %v1801
      %v1874 = vpop.f32.mrf.mxu0
      %v1875 = vadd.f32 0.0, %v1874
      %v1876 = vpop.f32.mrf.mxu0
      %v1877 = vpop.f32.mrf.mxu0
      %v1878 = vadd.f32 0.0, %v1877
      %v1879 = vpop.f32.mrf.mxu0
      %1880 = vmatprep.mubr.bf16.mxu0 0
      %1881 = vmatmul.mubr.bf16.gmra.mxu0 %v1802
      %v1882 = vpop.f32.mrf.mxu0
      %v1883 = vadd.f32 0.0, %v1882
      %v1884 = vpop.f32.mrf.mxu0
      %v1885 = vpop.f32.mrf.mxu0
      %v1886 = vadd.f32 0.0, %v1885
      %v1887 = vpop.f32.mrf.mxu0
      %1888 = vmatprep.mubr.bf16.mxu0 0
      %1889 = vmatmul.mubr.bf16.gmra.mxu0 %v1803
      %v1890 = vpop.f32.mrf.mxu0
      %v1891 = vadd.f32 0.0, %v1890
      %v1892 = vpop.f32.mrf.mxu0
      %v1893 = vpop.f32.mrf.mxu0
      %v1894 = vadd.f32 0.0, %v1893
      %v1895 = vpop.f32.mrf.mxu0
      %1896 = vmatprep.mubr.bf16.mxu0 0
      %1897 = vmatmul.mubr.bf16.gmra.mxu0 %v1804
      %v1898 = vpop.f32.mrf.mxu0
      %v1899 = vadd.f32 0.0, %v1898
      %v1900 = vpop.f32.mrf.mxu0
      %v1901 = vpop.f32.mrf.mxu0
      %v1902 = vadd.f32 0.0, %v1901
      %v1903 = vpop.f32.mrf.mxu0
      %1904 = vmatprep.mubr.bf16.mxu0 0
      %1905 = vmatmul.mubr.bf16.gmra.mxu0 %v1805
      %v1906 = vpop.f32.mrf.mxu0
      %v1907 = vadd.f32 0.0, %v1906
      %v1908 = vpop.f32.mrf.mxu0
      %v1909 = vpop.f32.mrf.mxu0
      %v1910 = vadd.f32 0.0, %v1909
      %v1911 = vpop.f32.mrf.mxu0
      %1912 = vmatprep.mubr.bf16.mxu0 0
      %1913 = vmatmul.mubr.bf16.gmra.mxu0 %v1806
      %v1914 = vpop.f32.mrf.mxu0
      %v1915 = vadd.f32 0.0, %v1914
      %v1916 = vpop.f32.mrf.mxu0
      %v1917 = vpop.f32.mrf.mxu0
      %v1918 = vadd.f32 0.0, %v1917
      %v1919 = vpop.f32.mrf.mxu0
      %1920 = vmatprep.mubr.bf16.mxu0 0
      %1921 = vmatmul.mubr.bf16.gmra.mxu0 %v1807
      %v1922 = vpop.f32.mrf.mxu0
      %v1923 = vadd.f32 0.0, %v1922
      %v1924 = vpop.f32.mrf.mxu0
      %v1925 = vpop.f32.mrf.mxu0
      %v1926 = vadd.f32 0.0, %v1925
      %v1927 = vpop.f32.mrf.mxu0
      %1928 = vdwg.mxu0
      %v1929 = vpack.c.bf16 %v1870, %v1867
      %v1930 = vpack.c.bf16 %v1878, %v1875
      %v1931 = vpack.c.bf16 %v1886, %v1883
      %v1932 = vpack.c.bf16 %v1894, %v1891
      %v1933 = vpack.c.bf16 %v1902, %v1899
      %v1934 = vpack.c.bf16 %v1910, %v1907
      %v1935 = vpack.c.bf16 %v1918, %v1915
      %v1936 = vpack.c.bf16 %v1926, %v1923
      %v1937 = vld [vmem:[%s5 + $0x4] sm:$0xf]
      %v1939 = vsel %vm910, %v1929, 0
      %v1942 = vsel %vm910, %v1930, 0
      %v1945 = vsel %vm910, %v1931, 0
      %v1948 = vsel %vm910, %v1932, 0
      %v1951 = vsel %vm910, %v1933, 0
      %v1954 = vsel %vm910, %v1934, 0
      %v1957 = vsel %vm910, %v1935, 0
      %v1960 = vsel %vm910, %v1936, 0
      %v1963 = vsel %vm1362, %v1937, 0
      %1965 = vmatprep.subr.bf16.mxu0 0
      %1966 = vmatpush1.bf16.msra.mxu0 0
      %1967 = vmatprep.subr.bf16.mxu0 0
      %1968 = vmatpush1.bf16.msra.mxu0 0
      %1969 = vmatprep.subr.bf16.mxu0 0
      %1970 = vmatpush1.bf16.msra.mxu0 0
      %1971 = vmatprep.subr.bf16.mxu0 0
      %1972 = vmatpush1.bf16.msra.mxu0 0
      %1973 = vmatprep.subr.bf16.mxu0 0
      %1974 = vmatpush1.bf16.msra.mxu0 0
      %1975 = vmatprep.subr.bf16.mxu0 0
      %1976 = vmatpush1.bf16.msra.mxu0 0
      %1977 = vmatprep.subr.bf16.mxu0 0
      %1978 = vmatpush1.bf16.msra.mxu0 0
      %1979 = vmatprep.subr.bf16.mxu0 0
      %1980 = vmatpush1.bf16.msra.mxu0 %v1963
      %1981 = vmatprep.subr.bf16.mxu0 0
      %1982 = vmatpush2.bf16.msra.mxu0 0
      %1983 = vmatprep.subr.bf16.mxu0 0
      %1984 = vmatpush2.bf16.msra.mxu0 0
      %1985 = vmatprep.subr.bf16.mxu0 0
      %1986 = vmatpush2.bf16.msra.mxu0 0
      %1987 = vmatprep.subr.bf16.mxu0 0
      %1988 = vmatpush2.bf16.msra.mxu0 0
      %1989 = vmatprep.subr.bf16.mxu0 0
      %1990 = vmatpush2.bf16.msra.mxu0 0
      %1991 = vmatprep.subr.bf16.mxu0 0
      %1992 = vmatpush2.bf16.msra.mxu0 0
      %1993 = vmatprep.subr.bf16.mxu0 0
      %1994 = vmatpush2.bf16.msra.mxu0 0
      %1995 = vmatprep.subr.bf16.mxu0 0
      %1996 = vmatpush2.bf16.msra.mxu0 0
      %1997 = vmatprep.mubr.bf16.mxu0 0
      %1998 = vmatmul.mubr.bf16.gmra.mxu0 %v1939
      %v1999 = vpop.f32.mrf.mxu0
      %v2000 = vadd.f32 0.0, %v1999
      %v2001 = vpop.f32.mrf.mxu0
      %v2002 = vpop.f32.mrf.mxu0
      %v2003 = vadd.f32 0.0, %v2002
      %v2004 = vpop.f32.mrf.mxu0
      %2005 = vmatprep.mubr.bf16.mxu0 0
      %2006 = vmatmul.mubr.bf16.gmra.mxu0 %v1942
      %v2007 = vpop.f32.mrf.mxu0
      %v2008 = vadd.f32 0.0, %v2007
      %v2009 = vpop.f32.mrf.mxu0
      %v2010 = vpop.f32.mrf.mxu0
      %v2011 = vadd.f32 0.0, %v2010
      %v2012 = vpop.f32.mrf.mxu0
      %2013 = vmatprep.mubr.bf16.mxu0 0
      %2014 = vmatmul.mubr.bf16.gmra.mxu0 %v1945
      %v2015 = vpop.f32.mrf.mxu0
      %v2016 = vadd.f32 0.0, %v2015
      %v2017 = vpop.f32.mrf.mxu0
      %v2018 = vpop.f32.mrf.mxu0
      %v2019 = vadd.f32 0.0, %v2018
      %v2020 = vpop.f32.mrf.mxu0
      %2021 = vmatprep.mubr.bf16.mxu0 0
      %2022 = vmatmul.mubr.bf16.gmra.mxu0 %v1948
      %v2023 = vpop.f32.mrf.mxu0
      %v2024 = vadd.f32 0.0, %v2023
      %v2025 = vpop.f32.mrf.mxu0
      %v2026 = vpop.f32.mrf.mxu0
      %v2027 = vadd.f32 0.0, %v2026
      %v2028 = vpop.f32.mrf.mxu0
      %2029 = vmatprep.mubr.bf16.mxu0 0
      %2030 = vmatmul.mubr.bf16.gmra.mxu0 %v1951
      %v2031 = vpop.f32.mrf.mxu0
      %v2032 = vadd.f32 0.0, %v2031
      %v2033 = vpop.f32.mrf.mxu0
      %v2034 = vpop.f32.mrf.mxu0
      %v2035 = vadd.f32 0.0, %v2034
      %v2036 = vpop.f32.mrf.mxu0
      %2037 = vmatprep.mubr.bf16.mxu0 0
      %2038 = vmatmul.mubr.bf16.gmra.mxu0 %v1954
      %v2039 = vpop.f32.mrf.mxu0
      %v2040 = vadd.f32 0.0, %v2039
      %v2041 = vpop.f32.mrf.mxu0
      %v2042 = vpop.f32.mrf.mxu0
      %v2043 = vadd.f32 0.0, %v2042
      %v2044 = vpop.f32.mrf.mxu0
      %2045 = vmatprep.mubr.bf16.mxu0 0
      %2046 = vmatmul.mubr.bf16.gmra.mxu0 %v1957
      %v2047 = vpop.f32.mrf.mxu0
      %v2048 = vadd.f32 0.0, %v2047
      %v2049 = vpop.f32.mrf.mxu0
      %v2050 = vpop.f32.mrf.mxu0
      %v2051 = vadd.f32 0.0, %v2050
      %v2052 = vpop.f32.mrf.mxu0
      %2053 = vmatprep.mubr.bf16.mxu0 0
      %2054 = vmatmul.mubr.bf16.gmra.mxu0 %v1960
      %v2055 = vpop.f32.mrf.mxu0
      %v2056 = vadd.f32 0.0, %v2055
      %v2057 = vpop.f32.mrf.mxu0
      %v2058 = vpop.f32.mrf.mxu0
      %v2059 = vadd.f32 0.0, %v2058
      %v2060 = vpop.f32.mrf.mxu0
      %2061 = vdwg.mxu0
      %v2062 = vadd.f32 %v1463, %v2000
      %v2063 = vadd.f32 %v1464, %v2003
      %v2064 = vadd.f32 %v1465, %v2008
      %v2065 = vadd.f32 %v1466, %v2011
      %v2066 = vadd.f32 %v1467, %v2016
      %v2067 = vadd.f32 %v1468, %v2019
      %v2068 = vadd.f32 %v1469, %v2024
      %v2069 = vadd.f32 %v1470, %v2027
      %v2070 = vadd.f32 %v1471, %v2032
      %v2071 = vadd.f32 %v1472, %v2035
      %v2072 = vadd.f32 %v1473, %v2040
      %v2073 = vadd.f32 %v1474, %v2043
      %v2074 = vadd.f32 %v1475, %v2048
      %v2075 = vadd.f32 %v1476, %v2051
      %v2076 = vadd.f32 %v1477, %v2056
      %v2077 = vadd.f32 %v1478, %v2059
      %2078 = vrot.lane.b32.xlu0 %v866, 112
      %v2079 = vpop.permute.xlu0 %2078
      %2080 = vrot.lane.b32.xlu0 %v867, 112
      %v2081 = vpop.permute.xlu0 %2080
      %2082 = vrot.lane.b32.xlu0 %v868, 112
      %v2083 = vpop.permute.xlu0 %2082
      %2084 = vrot.lane.b32.xlu0 %v869, 112
      %v2085 = vpop.permute.xlu0 %2084
      %2086 = vrot.lane.b32.xlu0 %v870, 112
      %v2087 = vpop.permute.xlu0 %2086
      %2088 = vrot.lane.b32.xlu0 %v871, 112
      %v2089 = vpop.permute.xlu0 %2088
      %2090 = vrot.lane.b32.xlu0 %v872, 112
      %v2091 = vpop.permute.xlu0 %2090
      %2092 = vrot.lane.b32.xlu0 %v873, 112
      %v2093 = vpop.permute.xlu0 %2092
      %2094 = vrot.lane.b32.xlu0 %v866, 80
      %v2095 = vpop.permute.xlu0 %2094
      %2096 = vrot.lane.b32.xlu0 %v867, 80
      %v2097 = vpop.permute.xlu0 %2096
      %2098 = vrot.lane.b32.xlu0 %v868, 80
      %v2099 = vpop.permute.xlu0 %2098
      %2100 = vrot.lane.b32.xlu0 %v869, 80
      %v2101 = vpop.permute.xlu0 %2100
      %2102 = vrot.lane.b32.xlu0 %v870, 80
      %v2103 = vpop.permute.xlu0 %2102
      %2104 = vrot.lane.b32.xlu0 %v871, 80
      %v2105 = vpop.permute.xlu0 %2104
      %2106 = vrot.lane.b32.xlu0 %v872, 80
      %v2107 = vpop.permute.xlu0 %2106
      %2108 = vrot.lane.b32.xlu0 %v873, 80
      %v2109 = vpop.permute.xlu0 %2108
      %v2111 = vsel %vm910, %v2079, 0
      %v2114 = vsel %vm910, %v2081, 0
      %v2117 = vsel %vm910, %v2083, 0
      %v2120 = vsel %vm910, %v2085, 0
      %v2123 = vsel %vm910, %v2087, 0
      %v2126 = vsel %vm910, %v2089, 0
      %v2129 = vsel %vm910, %v2091, 0
      %v2132 = vsel %vm910, %v2093, 0
      %v2135 = vsel %vm910, %v2095, 0
      %v2138 = vsel %vm910, %v2097, 0
      %v2141 = vsel %vm910, %v2099, 0
      %v2144 = vsel %vm910, %v2101, 0
      %v2147 = vsel %vm910, %v2103, 0
      %v2150 = vsel %vm910, %v2105, 0
      %v2153 = vsel %vm910, %v2107, 0
      %v2156 = vsel %vm910, %v2109, 0
      %2158 = vmatprep.subr.bf16.mxu0 0
      %2159 = vmatpush1.bf16.xpose.msra.mxu0 %v2156
      %2160 = vmatprep.subr.bf16.mxu0 0
      %2161 = vmatpush1.bf16.xpose.msra.mxu0 %v2153
      %2162 = vmatprep.subr.bf16.mxu0 0
      %2163 = vmatpush1.bf16.xpose.msra.mxu0 %v2150
      %2164 = vmatprep.subr.bf16.mxu0 0
      %2165 = vmatpush1.bf16.xpose.msra.mxu0 %v2147
      %2166 = vmatprep.subr.bf16.mxu0 0
      %2167 = vmatpush1.bf16.xpose.msra.mxu0 %v2144
      %2168 = vmatprep.subr.bf16.mxu0 0
      %2169 = vmatpush1.bf16.xpose.msra.mxu0 %v2141
      %2170 = vmatprep.subr.bf16.mxu0 0
      %2171 = vmatpush1.bf16.xpose.msra.mxu0 %v2138
      %2172 = vmatprep.subr.bf16.mxu0 0
      %2173 = vmatpush1.bf16.xpose.msra.mxu0 %v2135
      %2174 = vmatprep.subr.bf16.mxu0 0
      %2175 = vmatpush2.bf16.xpose.msra.mxu0 0
      %2176 = vmatprep.subr.bf16.mxu0 0
      %2177 = vmatpush2.bf16.xpose.msra.mxu0 0
      %2178 = vmatprep.subr.bf16.mxu0 0
      %2179 = vmatpush2.bf16.xpose.msra.mxu0 0
      %2180 = vmatprep.subr.bf16.mxu0 0
      %2181 = vmatpush2.bf16.xpose.msra.mxu0 0
      %2182 = vmatprep.subr.bf16.mxu0 0
      %2183 = vmatpush2.bf16.xpose.msra.mxu0 0
      %2184 = vmatprep.subr.bf16.mxu0 0
      %2185 = vmatpush2.bf16.xpose.msra.mxu0 0
      %2186 = vmatprep.subr.bf16.mxu0 0
      %2187 = vmatpush2.bf16.xpose.msra.mxu0 0
      %2188 = vmatprep.subr.bf16.mxu0 0
      %2189 = vmatpush2.bf16.xpose.msra.mxu0 0
      %2190 = vmatprep.mubr.bf16.mxu0 0
      %2191 = vmatmul.mubr.bf16.gmra.mxu0 %v2111
      %v2192 = vpop.f32.mrf.mxu0
      %v2193 = vadd.f32 %v877, %v2192
      %v2194 = vpop.f32.mrf.mxu0
      %v2195 = vpop.f32.mrf.mxu0
      %v2196 = vadd.f32 %v877, %v2195
      %v2197 = vpop.f32.mrf.mxu0
      %2198 = vmatprep.mubr.bf16.mxu0 0
      %2199 = vmatmul.mubr.bf16.gmra.mxu0 %v2114
      %v2200 = vpop.f32.mrf.mxu0
      %v2201 = vadd.f32 %v877, %v2200
      %v2202 = vpop.f32.mrf.mxu0
      %v2203 = vpop.f32.mrf.mxu0
      %v2204 = vadd.f32 %v877, %v2203
      %v2205 = vpop.f32.mrf.mxu0
      %2206 = vmatprep.mubr.bf16.mxu0 0
      %2207 = vmatmul.mubr.bf16.gmra.mxu0 %v2117
      %v2208 = vpop.f32.mrf.mxu0
      %v2209 = vadd.f32 %v877, %v2208
      %v2210 = vpop.f32.mrf.mxu0
      %v2211 = vpop.f32.mrf.mxu0
      %v2212 = vadd.f32 %v877, %v2211
      %v2213 = vpop.f32.mrf.mxu0
      %2214 = vmatprep.mubr.bf16.mxu0 0
      %2215 = vmatmul.mubr.bf16.gmra.mxu0 %v2120
      %v2216 = vpop.f32.mrf.mxu0
      %v2217 = vadd.f32 %v877, %v2216
      %v2218 = vpop.f32.mrf.mxu0
      %v2219 = vpop.f32.mrf.mxu0
      %v2220 = vadd.f32 %v877, %v2219
      %v2221 = vpop.f32.mrf.mxu0
      %2222 = vmatprep.mubr.bf16.mxu0 0
      %2223 = vmatmul.mubr.bf16.gmra.mxu0 %v2123
      %v2224 = vpop.f32.mrf.mxu0
      %v2225 = vadd.f32 %v877, %v2224
      %v2226 = vpop.f32.mrf.mxu0
      %v2227 = vpop.f32.mrf.mxu0
      %v2228 = vadd.f32 %v877, %v2227
      %v2229 = vpop.f32.mrf.mxu0
      %2230 = vmatprep.mubr.bf16.mxu0 0
      %2231 = vmatmul.mubr.bf16.gmra.mxu0 %v2126
      %v2232 = vpop.f32.mrf.mxu0
      %v2233 = vadd.f32 %v877, %v2232
      %v2234 = vpop.f32.mrf.mxu0
      %v2235 = vpop.f32.mrf.mxu0
      %v2236 = vadd.f32 %v877, %v2235
      %v2237 = vpop.f32.mrf.mxu0
      %2238 = vmatprep.mubr.bf16.mxu0 0
      %2239 = vmatmul.mubr.bf16.gmra.mxu0 %v2129
      %v2240 = vpop.f32.mrf.mxu0
      %v2241 = vadd.f32 %v877, %v2240
      %v2242 = vpop.f32.mrf.mxu0
      %v2243 = vpop.f32.mrf.mxu0
      %v2244 = vadd.f32 %v877, %v2243
      %v2245 = vpop.f32.mrf.mxu0
      %2246 = vmatprep.mubr.bf16.mxu0 0
      %2247 = vmatmul.mubr.bf16.gmra.mxu0 %v2132
      %v2248 = vpop.f32.mrf.mxu0
      %v2249 = vadd.f32 %v877, %v2248
      %v2250 = vpop.f32.mrf.mxu0
      %v2251 = vpop.f32.mrf.mxu0
      %v2252 = vadd.f32 %v877, %v2251
      %v2253 = vpop.f32.mrf.mxu0
      %2254 = vdwg.mxu0
      %2255 = vmax.xlane.f32.xlu0 %v2193
      %v2256 = vpop.xlane.xlu0 %2255
      %2257 = vmax.xlane.f32.xlu0 %v2196
      %v2258 = vpop.xlane.xlu0 %2257
      %2259 = vmax.xlane.f32.xlu0 %v2201
      %v2260 = vpop.xlane.xlu0 %2259
      %2261 = vmax.xlane.f32.xlu0 %v2204
      %v2262 = vpop.xlane.xlu0 %2261
      %2263 = vmax.xlane.f32.xlu0 %v2209
      %v2264 = vpop.xlane.xlu0 %2263
      %2265 = vmax.xlane.f32.xlu0 %v2212
      %v2266 = vpop.xlane.xlu0 %2265
      %2267 = vmax.xlane.f32.xlu0 %v2217
      %v2268 = vpop.xlane.xlu0 %2267
      %2269 = vmax.xlane.f32.xlu0 %v2220
      %v2270 = vpop.xlane.xlu0 %2269
      %2271 = vmax.xlane.f32.xlu0 %v2225
      %v2272 = vpop.xlane.xlu0 %2271
      %2273 = vmax.xlane.f32.xlu0 %v2228
      %v2274 = vpop.xlane.xlu0 %2273
      %2275 = vmax.xlane.f32.xlu0 %v2233
      %v2276 = vpop.xlane.xlu0 %2275
      %2277 = vmax.xlane.f32.xlu0 %v2236
      %v2278 = vpop.xlane.xlu0 %2277
      %2279 = vmax.xlane.f32.xlu0 %v2241
      %v2280 = vpop.xlane.xlu0 %2279
      %2281 = vmax.xlane.f32.xlu0 %v2244
      %v2282 = vpop.xlane.xlu0 %2281
      %2283 = vmax.xlane.f32.xlu0 %v2249
      %v2284 = vpop.xlane.xlu0 %2283
      %2285 = vmax.xlane.f32.xlu0 %v2252
      %v2286 = vpop.xlane.xlu0 %2285
      %v2287 = vsub.f32 %v2193, %v2256
      %v2288 = vsub.f32 %v2196, %v2258
      %v2289 = vsub.f32 %v2201, %v2260
      %v2290 = vsub.f32 %v2204, %v2262
      %v2291 = vsub.f32 %v2209, %v2264
      %v2292 = vsub.f32 %v2212, %v2266
      %v2293 = vsub.f32 %v2217, %v2268
      %v2294 = vsub.f32 %v2220, %v2270
      %v2295 = vsub.f32 %v2225, %v2272
      %v2296 = vsub.f32 %v2228, %v2274
      %v2297 = vsub.f32 %v2233, %v2276
      %v2298 = vsub.f32 %v2236, %v2278
      %v2299 = vsub.f32 %v2241, %v2280
      %v2300 = vsub.f32 %v2244, %v2282
      %v2301 = vsub.f32 %v2249, %v2284
      %v2302 = vsub.f32 %v2252, %v2286
      %v2303 = vmul.f32 %v2287, 1.442695
      %v2304 = vpow.pop %v2303
      %v2305 = vmul.f32 %v2288, 1.442695
      %v2306 = vpow.pop %v2305
      %v2307 = vmul.f32 %v2289, 1.442695
      %v2308 = vpow.pop %v2307
      %v2309 = vmul.f32 %v2290, 1.442695
      %v2310 = vpow.pop %v2309
      %v2311 = vmul.f32 %v2291, 1.442695
      %v2312 = vpow.pop %v2311
      %v2313 = vmul.f32 %v2292, 1.442695
      %v2314 = vpow.pop %v2313
      %v2315 = vmul.f32 %v2293, 1.442695
      %v2316 = vpow.pop %v2315
      %v2317 = vmul.f32 %v2294, 1.442695
      %v2318 = vpow.pop %v2317
      %v2319 = vmul.f32 %v2295, 1.442695
      %v2320 = vpow.pop %v2319
      %v2321 = vmul.f32 %v2296, 1.442695
      %v2322 = vpow.pop %v2321
      %v2323 = vmul.f32 %v2297, 1.442695
      %v2324 = vpow.pop %v2323
      %v2325 = vmul.f32 %v2298, 1.442695
      %v2326 = vpow.pop %v2325
      %v2327 = vmul.f32 %v2299, 1.442695
      %v2328 = vpow.pop %v2327
      %v2329 = vmul.f32 %v2300, 1.442695
      %v2330 = vpow.pop %v2329
      %v2331 = vmul.f32 %v2301, 1.442695
      %v2332 = vpow.pop %v2331
      %v2333 = vmul.f32 %v2302, 1.442695
      %v2334 = vpow.pop %v2333
      %2335 = vadd.xlane.f32.xlu0 %v2304
      %v2336 = vpop.xlane.xlu0 %2335
      %2337 = vadd.xlane.f32.xlu0 %v2306
      %v2338 = vpop.xlane.xlu0 %2337
      %2339 = vadd.xlane.f32.xlu0 %v2308
      %v2340 = vpop.xlane.xlu0 %2339
      %2341 = vadd.xlane.f32.xlu0 %v2310
      %v2342 = vpop.xlane.xlu0 %2341
      %2343 = vadd.xlane.f32.xlu0 %v2312
      %v2344 = vpop.xlane.xlu0 %2343
      %2345 = vadd.xlane.f32.xlu0 %v2314
      %v2346 = vpop.xlane.xlu0 %2345
      %2347 = vadd.xlane.f32.xlu0 %v2316
      %v2348 = vpop.xlane.xlu0 %2347
      %2349 = vadd.xlane.f32.xlu0 %v2318
      %v2350 = vpop.xlane.xlu0 %2349
      %2351 = vadd.xlane.f32.xlu0 %v2320
      %v2352 = vpop.xlane.xlu0 %2351
      %2353 = vadd.xlane.f32.xlu0 %v2322
      %v2354 = vpop.xlane.xlu0 %2353
      %2355 = vadd.xlane.f32.xlu0 %v2324
      %v2356 = vpop.xlane.xlu0 %2355
      %2357 = vadd.xlane.f32.xlu0 %v2326
      %v2358 = vpop.xlane.xlu0 %2357
      %2359 = vadd.xlane.f32.xlu0 %v2328
      %v2360 = vpop.xlane.xlu0 %2359
      %2361 = vadd.xlane.f32.xlu0 %v2330
      %v2362 = vpop.xlane.xlu0 %2361
      %2363 = vadd.xlane.f32.xlu0 %v2332
      %v2364 = vpop.xlane.xlu0 %2363
      %2365 = vadd.xlane.f32.xlu0 %v2334
      %v2366 = vpop.xlane.xlu0 %2365
      %v2367 = vrcp.pop %v2336
      %v2368 = vrcp.pop %v2338
      %v2369 = vrcp.pop %v2340
      %v2370 = vrcp.pop %v2342
      %v2371 = vrcp.pop %v2344
      %v2372 = vrcp.pop %v2346
      %v2373 = vrcp.pop %v2348
      %v2374 = vrcp.pop %v2350
      %v2375 = vrcp.pop %v2352
      %v2376 = vrcp.pop %v2354
      %v2377 = vrcp.pop %v2356
      %v2378 = vrcp.pop %v2358
      %v2379 = vrcp.pop %v2360
      %v2380 = vrcp.pop %v2362
      %v2381 = vrcp.pop %v2364
      %v2382 = vrcp.pop %v2366
      %v2383 = vmul.f32 %v2304, %v2367
      %v2384 = vmul.f32 %v2306, %v2368
      %v2385 = vmul.f32 %v2308, %v2369
      %v2386 = vmul.f32 %v2310, %v2370
      %v2387 = vmul.f32 %v2312, %v2371
      %v2388 = vmul.f32 %v2314, %v2372
      %v2389 = vmul.f32 %v2316, %v2373
      %v2390 = vmul.f32 %v2318, %v2374
      %v2391 = vmul.f32 %v2320, %v2375
      %v2392 = vmul.f32 %v2322, %v2376
      %v2393 = vmul.f32 %v2324, %v2377
      %v2394 = vmul.f32 %v2326, %v2378
      %v2395 = vmul.f32 %v2328, %v2379
      %v2396 = vmul.f32 %v2330, %v2380
      %v2397 = vmul.f32 %v2332, %v2381
      %v2398 = vmul.f32 %v2334, %v2382
      %v2399 = vpack.c.bf16 %v2384, %v2383
      %v2400 = vpack.c.bf16 %v2386, %v2385
      %v2401 = vpack.c.bf16 %v2388, %v2387
      %v2402 = vpack.c.bf16 %v2390, %v2389
      %v2403 = vpack.c.bf16 %v2392, %v2391
      %v2404 = vpack.c.bf16 %v2394, %v2393
      %v2405 = vpack.c.bf16 %v2396, %v2395
      %v2406 = vpack.c.bf16 %v2398, %v2397
      %2407 = vrot.lane.b32.xlu0 %v866, 48
      %v2408 = vpop.permute.xlu0 %2407
      %2409 = vrot.lane.b32.xlu0 %v867, 48
      %v2410 = vpop.permute.xlu0 %2409
      %2411 = vrot.lane.b32.xlu0 %v868, 48
      %v2412 = vpop.permute.xlu0 %2411
      %2413 = vrot.lane.b32.xlu0 %v869, 48
      %v2414 = vpop.permute.xlu0 %2413
      %2415 = vrot.lane.b32.xlu0 %v870, 48
      %v2416 = vpop.permute.xlu0 %2415
      %2417 = vrot.lane.b32.xlu0 %v871, 48
      %v2418 = vpop.permute.xlu0 %2417
      %2419 = vrot.lane.b32.xlu0 %v872, 48
      %v2420 = vpop.permute.xlu0 %2419
      %2421 = vrot.lane.b32.xlu0 %v873, 48
      %v2422 = vpop.permute.xlu0 %2421
      %2431 = vmatprep.subr.bf16.mxu0 0
      %2432 = vmatpush1.bf16.msra.mxu0 %v2422
      %2433 = vmatprep.subr.bf16.mxu0 0
      %2434 = vmatpush1.bf16.msra.mxu0 %v2420
      %2435 = vmatprep.subr.bf16.mxu0 0
      %2436 = vmatpush1.bf16.msra.mxu0 %v2418
      %2437 = vmatprep.subr.bf16.mxu0 0
      %2438 = vmatpush1.bf16.msra.mxu0 %v2416
      %2439 = vmatprep.subr.bf16.mxu0 0
      %2440 = vmatpush1.bf16.msra.mxu0 %v2414
      %2441 = vmatprep.subr.bf16.mxu0 0
      %2442 = vmatpush1.bf16.msra.mxu0 %v2412
      %2443 = vmatprep.subr.bf16.mxu0 0
      %2444 = vmatpush1.bf16.msra.mxu0 %v2410
      %2445 = vmatprep.subr.bf16.mxu0 0
      %2446 = vmatpush1.bf16.msra.mxu0 %v2408
      %2447 = vmatprep.subr.bf16.mxu0 0
      %2448 = vmatpush2.bf16.msra.mxu0 0
      %2449 = vmatprep.subr.bf16.mxu0 0
      %2450 = vmatpush2.bf16.msra.mxu0 0
      %2451 = vmatprep.subr.bf16.mxu0 0
      %2452 = vmatpush2.bf16.msra.mxu0 0
      %2453 = vmatprep.subr.bf16.mxu0 0
      %2454 = vmatpush2.bf16.msra.mxu0 0
      %2455 = vmatprep.subr.bf16.mxu0 0
      %2456 = vmatpush2.bf16.msra.mxu0 0
      %2457 = vmatprep.subr.bf16.mxu0 0
      %2458 = vmatpush2.bf16.msra.mxu0 0
      %2459 = vmatprep.subr.bf16.mxu0 0
      %2460 = vmatpush2.bf16.msra.mxu0 0
      %2461 = vmatprep.subr.bf16.mxu0 0
      %2462 = vmatpush2.bf16.msra.mxu0 0
      %2463 = vmatprep.mubr.bf16.mxu0 0
      %2464 = vmatmul.mubr.bf16.gmra.mxu0 %v2399
      %v2465 = vpop.f32.mrf.mxu0
      %v2466 = vadd.f32 0.0, %v2465
      %v2467 = vpop.f32.mrf.mxu0
      %v2468 = vpop.f32.mrf.mxu0
      %v2469 = vadd.f32 0.0, %v2468
      %v2470 = vpop.f32.mrf.mxu0
      %2471 = vmatprep.mubr.bf16.mxu0 0
      %2472 = vmatmul.mubr.bf16.gmra.mxu0 %v2400
      %v2473 = vpop.f32.mrf.mxu0
      %v2474 = vadd.f32 0.0, %v2473
      %v2475 = vpop.f32.mrf.mxu0
      %v2476 = vpop.f32.mrf.mxu0
      %v2477 = vadd.f32 0.0, %v2476
      %v2478 = vpop.f32.mrf.mxu0
      %2479 = vmatprep.mubr.bf16.mxu0 0
      %2480 = vmatmul.mubr.bf16.gmra.mxu0 %v2401
      %v2481 = vpop.f32.mrf.mxu0
      %v2482 = vadd.f32 0.0, %v2481
      %v2483 = vpop.f32.mrf.mxu0
      %v2484 = vpop.f32.mrf.mxu0
      %v2485 = vadd.f32 0.0, %v2484
      %v2486 = vpop.f32.mrf.mxu0
      %2487 = vmatprep.mubr.bf16.mxu0 0
      %2488 = vmatmul.mubr.bf16.gmra.mxu0 %v2402
      %v2489 = vpop.f32.mrf.mxu0
      %v2490 = vadd.f32 0.0, %v2489
      %v2491 = vpop.f32.mrf.mxu0
      %v2492 = vpop.f32.mrf.mxu0
      %v2493 = vadd.f32 0.0, %v2492
      %v2494 = vpop.f32.mrf.mxu0
      %2495 = vmatprep.mubr.bf16.mxu0 0
      %2496 = vmatmul.mubr.bf16.gmra.mxu0 %v2403
      %v2497 = vpop.f32.mrf.mxu0
      %v2498 = vadd.f32 0.0, %v2497
      %v2499 = vpop.f32.mrf.mxu0
      %v2500 = vpop.f32.mrf.mxu0
      %v2501 = vadd.f32 0.0, %v2500
      %v2502 = vpop.f32.mrf.mxu0
      %2503 = vmatprep.mubr.bf16.mxu0 0
      %2504 = vmatmul.mubr.bf16.gmra.mxu0 %v2404
      %v2505 = vpop.f32.mrf.mxu0
      %v2506 = vadd.f32 0.0, %v2505
      %v2507 = vpop.f32.mrf.mxu0
      %v2508 = vpop.f32.mrf.mxu0
      %v2509 = vadd.f32 0.0, %v2508
      %v2510 = vpop.f32.mrf.mxu0
      %2511 = vmatprep.mubr.bf16.mxu0 0
      %2512 = vmatmul.mubr.bf16.gmra.mxu0 %v2405
      %v2513 = vpop.f32.mrf.mxu0
      %v2514 = vadd.f32 0.0, %v2513
      %v2515 = vpop.f32.mrf.mxu0
      %v2516 = vpop.f32.mrf.mxu0
      %v2517 = vadd.f32 0.0, %v2516
      %v2518 = vpop.f32.mrf.mxu0
      %2519 = vmatprep.mubr.bf16.mxu0 0
      %2520 = vmatmul.mubr.bf16.gmra.mxu0 %v2406
      %v2521 = vpop.f32.mrf.mxu0
      %v2522 = vadd.f32 0.0, %v2521
      %v2523 = vpop.f32.mrf.mxu0
      %v2524 = vpop.f32.mrf.mxu0
      %v2525 = vadd.f32 0.0, %v2524
      %v2526 = vpop.f32.mrf.mxu0
      %2527 = vdwg.mxu0
      %v2528 = vpack.c.bf16 %v2469, %v2466
      %v2529 = vpack.c.bf16 %v2477, %v2474
      %v2530 = vpack.c.bf16 %v2485, %v2482
      %v2531 = vpack.c.bf16 %v2493, %v2490
      %v2532 = vpack.c.bf16 %v2501, %v2498
      %v2533 = vpack.c.bf16 %v2509, %v2506
      %v2534 = vpack.c.bf16 %v2517, %v2514
      %v2535 = vpack.c.bf16 %v2525, %v2522
      %v2536 = vld [vmem:[%s5 + $0x8] sm:$0xf]
      %v2538 = vsel %vm910, %v2528, 0
      %v2541 = vsel %vm910, %v2529, 0
      %v2544 = vsel %vm910, %v2530, 0
      %v2547 = vsel %vm910, %v2531, 0
      %v2550 = vsel %vm910, %v2532, 0
      %v2553 = vsel %vm910, %v2533, 0
      %v2556 = vsel %vm910, %v2534, 0
      %v2559 = vsel %vm910, %v2535, 0
      %v2562 = vsel %vm1362, %v2536, 0
      %2564 = vmatprep.subr.bf16.mxu0 0
      %2565 = vmatpush1.bf16.msra.mxu0 0
      %2566 = vmatprep.subr.bf16.mxu0 0
      %2567 = vmatpush1.bf16.msra.mxu0 0
      %2568 = vmatprep.subr.bf16.mxu0 0
      %2569 = vmatpush1.bf16.msra.mxu0 0
      %2570 = vmatprep.subr.bf16.mxu0 0
      %2571 = vmatpush1.bf16.msra.mxu0 0
      %2572 = vmatprep.subr.bf16.mxu0 0
      %2573 = vmatpush1.bf16.msra.mxu0 0
      %2574 = vmatprep.subr.bf16.mxu0 0
      %2575 = vmatpush1.bf16.msra.mxu0 0
      %2576 = vmatprep.subr.bf16.mxu0 0
      %2577 = vmatpush1.bf16.msra.mxu0 0
      %2578 = vmatprep.subr.bf16.mxu0 0
      %2579 = vmatpush1.bf16.msra.mxu0 %v2562
      %2580 = vmatprep.subr.bf16.mxu0 0
      %2581 = vmatpush2.bf16.msra.mxu0 0
      %2582 = vmatprep.subr.bf16.mxu0 0
      %2583 = vmatpush2.bf16.msra.mxu0 0
      %2584 = vmatprep.subr.bf16.mxu0 0
      %2585 = vmatpush2.bf16.msra.mxu0 0
      %2586 = vmatprep.subr.bf16.mxu0 0
      %2587 = vmatpush2.bf16.msra.mxu0 0
      %2588 = vmatprep.subr.bf16.mxu0 0
      %2589 = vmatpush2.bf16.msra.mxu0 0
      %2590 = vmatprep.subr.bf16.mxu0 0
      %2591 = vmatpush2.bf16.msra.mxu0 0
      %2592 = vmatprep.subr.bf16.mxu0 0
      %2593 = vmatpush2.bf16.msra.mxu0 0
      %2594 = vmatprep.subr.bf16.mxu0 0
      %2595 = vmatpush2.bf16.msra.mxu0 0
      %2596 = vmatprep.mubr.bf16.mxu0 0
      %2597 = vmatmul.mubr.bf16.gmra.mxu0 %v2538
      %v2598 = vpop.f32.mrf.mxu0
      %v2599 = vadd.f32 0.0, %v2598
      %v2600 = vpop.f32.mrf.mxu0
      %v2601 = vpop.f32.mrf.mxu0
      %v2602 = vadd.f32 0.0, %v2601
      %v2603 = vpop.f32.mrf.mxu0
      %2604 = vmatprep.mubr.bf16.mxu0 0
      %2605 = vmatmul.mubr.bf16.gmra.mxu0 %v2541
      %v2606 = vpop.f32.mrf.mxu0
      %v2607 = vadd.f32 0.0, %v2606
      %v2608 = vpop.f32.mrf.mxu0
      %v2609 = vpop.f32.mrf.mxu0
      %v2610 = vadd.f32 0.0, %v2609
      %v2611 = vpop.f32.mrf.mxu0
      %2612 = vmatprep.mubr.bf16.mxu0 0
      %2613 = vmatmul.mubr.bf16.gmra.mxu0 %v2544
      %v2614 = vpop.f32.mrf.mxu0
      %v2615 = vadd.f32 0.0, %v2614
      %v2616 = vpop.f32.mrf.mxu0
      %v2617 = vpop.f32.mrf.mxu0
      %v2618 = vadd.f32 0.0, %v2617
      %v2619 = vpop.f32.mrf.mxu0
      %2620 = vmatprep.mubr.bf16.mxu0 0
      %2621 = vmatmul.mubr.bf16.gmra.mxu0 %v2547
      %v2622 = vpop.f32.mrf.mxu0
      %v2623 = vadd.f32 0.0, %v2622
      %v2624 = vpop.f32.mrf.mxu0
      %v2625 = vpop.f32.mrf.mxu0
      %v2626 = vadd.f32 0.0, %v2625
      %v2627 = vpop.f32.mrf.mxu0
      %2628 = vmatprep.mubr.bf16.mxu0 0
      %2629 = vmatmul.mubr.bf16.gmra.mxu0 %v2550
      %v2630 = vpop.f32.mrf.mxu0
      %v2631 = vadd.f32 0.0, %v2630
      %v2632 = vpop.f32.mrf.mxu0
      %v2633 = vpop.f32.mrf.mxu0
      %v2634 = vadd.f32 0.0, %v2633
      %v2635 = vpop.f32.mrf.mxu0
      %2636 = vmatprep.mubr.bf16.mxu0 0
      %2637 = vmatmul.mubr.bf16.gmra.mxu0 %v2553
      %v2638 = vpop.f32.mrf.mxu0
      %v2639 = vadd.f32 0.0, %v2638
      %v2640 = vpop.f32.mrf.mxu0
      %v2641 = vpop.f32.mrf.mxu0
      %v2642 = vadd.f32 0.0, %v2641
      %v2643 = vpop.f32.mrf.mxu0
      %2644 = vmatprep.mubr.bf16.mxu0 0
      %2645 = vmatmul.mubr.bf16.gmra.mxu0 %v2556
      %v2646 = vpop.f32.mrf.mxu0
      %v2647 = vadd.f32 0.0, %v2646
      %v2648 = vpop.f32.mrf.mxu0
      %v2649 = vpop.f32.mrf.mxu0
      %v2650 = vadd.f32 0.0, %v2649
      %v2651 = vpop.f32.mrf.mxu0
      %2652 = vmatprep.mubr.bf16.mxu0 0
      %2653 = vmatmul.mubr.bf16.gmra.mxu0 %v2559
      %v2654 = vpop.f32.mrf.mxu0
      %v2655 = vadd.f32 0.0, %v2654
      %v2656 = vpop.f32.mrf.mxu0
      %v2657 = vpop.f32.mrf.mxu0
      %v2658 = vadd.f32 0.0, %v2657
      %v2659 = vpop.f32.mrf.mxu0
      %2660 = vdwg.mxu0
      %v2661 = vadd.f32 %v2062, %v2599
      %v2662 = vadd.f32 %v2063, %v2602
      %v2663 = vadd.f32 %v2064, %v2607
      %v2664 = vadd.f32 %v2065, %v2610
      %v2665 = vadd.f32 %v2066, %v2615
      %v2666 = vadd.f32 %v2067, %v2618
      %v2667 = vadd.f32 %v2068, %v2623
      %v2668 = vadd.f32 %v2069, %v2626
      %v2669 = vadd.f32 %v2070, %v2631
      %v2670 = vadd.f32 %v2071, %v2634
      %v2671 = vadd.f32 %v2072, %v2639
      %v2672 = vadd.f32 %v2073, %v2642
      %v2673 = vadd.f32 %v2074, %v2647
      %v2674 = vadd.f32 %v2075, %v2650
      %v2675 = vadd.f32 %v2076, %v2655
      %v2676 = vadd.f32 %v2077, %v2658
      %2677 = vrot.lane.b32.xlu0 %v866, 104
      %v2678 = vpop.permute.xlu0 %2677
      %2679 = vrot.lane.b32.xlu0 %v867, 104
      %v2680 = vpop.permute.xlu0 %2679
      %2681 = vrot.lane.b32.xlu0 %v868, 104
      %v2682 = vpop.permute.xlu0 %2681
      %2683 = vrot.lane.b32.xlu0 %v869, 104
      %v2684 = vpop.permute.xlu0 %2683
      %2685 = vrot.lane.b32.xlu0 %v870, 104
      %v2686 = vpop.permute.xlu0 %2685
      %2687 = vrot.lane.b32.xlu0 %v871, 104
      %v2688 = vpop.permute.xlu0 %2687
      %2689 = vrot.lane.b32.xlu0 %v872, 104
      %v2690 = vpop.permute.xlu0 %2689
      %2691 = vrot.lane.b32.xlu0 %v873, 104
      %v2692 = vpop.permute.xlu0 %2691
      %2693 = vrot.lane.b32.xlu0 %v866, 72
      %v2694 = vpop.permute.xlu0 %2693
      %2695 = vrot.lane.b32.xlu0 %v867, 72
      %v2696 = vpop.permute.xlu0 %2695
      %2697 = vrot.lane.b32.xlu0 %v868, 72
      %v2698 = vpop.permute.xlu0 %2697
      %2699 = vrot.lane.b32.xlu0 %v869, 72
      %v2700 = vpop.permute.xlu0 %2699
      %2701 = vrot.lane.b32.xlu0 %v870, 72
      %v2702 = vpop.permute.xlu0 %2701
      %2703 = vrot.lane.b32.xlu0 %v871, 72
      %v2704 = vpop.permute.xlu0 %2703
      %2705 = vrot.lane.b32.xlu0 %v872, 72
      %v2706 = vpop.permute.xlu0 %2705
      %2707 = vrot.lane.b32.xlu0 %v873, 72
      %v2708 = vpop.permute.xlu0 %2707
      %v2710 = vsel %vm910, %v2678, 0
      %v2713 = vsel %vm910, %v2680, 0
      %v2716 = vsel %vm910, %v2682, 0
      %v2719 = vsel %vm910, %v2684, 0
      %v2722 = vsel %vm910, %v2686, 0
      %v2725 = vsel %vm910, %v2688, 0
      %v2728 = vsel %vm910, %v2690, 0
      %v2731 = vsel %vm910, %v2692, 0
      %v2734 = vsel %vm910, %v2694, 0
      %v2737 = vsel %vm910, %v2696, 0
      %v2740 = vsel %vm910, %v2698, 0
      %v2743 = vsel %vm910, %v2700, 0
      %v2746 = vsel %vm910, %v2702, 0
      %v2749 = vsel %vm910, %v2704, 0
      %v2752 = vsel %vm910, %v2706, 0
      %v2755 = vsel %vm910, %v2708, 0
      %2757 = vmatprep.subr.bf16.mxu0 0
      %2758 = vmatpush1.bf16.xpose.msra.mxu0 %v2755
      %2759 = vmatprep.subr.bf16.mxu0 0
      %2760 = vmatpush1.bf16.xpose.msra.mxu0 %v2752
      %2761 = vmatprep.subr.bf16.mxu0 0
      %2762 = vmatpush1.bf16.xpose.msra.mxu0 %v2749
      %2763 = vmatprep.subr.bf16.mxu0 0
      %2764 = vmatpush1.bf16.xpose.msra.mxu0 %v2746
      %2765 = vmatprep.subr.bf16.mxu0 0
      %2766 = vmatpush1.bf16.xpose.msra.mxu0 %v2743
      %2767 = vmatprep.subr.bf16.mxu0 0
      %2768 = vmatpush1.bf16.xpose.msra.mxu0 %v2740
      %2769 = vmatprep.subr.bf16.mxu0 0
      %2770 = vmatpush1.bf16.xpose.msra.mxu0 %v2737
      %2771 = vmatprep.subr.bf16.mxu0 0
      %2772 = vmatpush1.bf16.xpose.msra.mxu0 %v2734
      %2773 = vmatprep.subr.bf16.mxu0 0
      %2774 = vmatpush2.bf16.xpose.msra.mxu0 0
      %2775 = vmatprep.subr.bf16.mxu0 0
      %2776 = vmatpush2.bf16.xpose.msra.mxu0 0
      %2777 = vmatprep.subr.bf16.mxu0 0
      %2778 = vmatpush2.bf16.xpose.msra.mxu0 0
      %2779 = vmatprep.subr.bf16.mxu0 0
      %2780 = vmatpush2.bf16.xpose.msra.mxu0 0
      %2781 = vmatprep.subr.bf16.mxu0 0
      %2782 = vmatpush2.bf16.xpose.msra.mxu0 0
      %2783 = vmatprep.subr.bf16.mxu0 0
      %2784 = vmatpush2.bf16.xpose.msra.mxu0 0
      %2785 = vmatprep.subr.bf16.mxu0 0
      %2786 = vmatpush2.bf16.xpose.msra.mxu0 0
      %2787 = vmatprep.subr.bf16.mxu0 0
      %2788 = vmatpush2.bf16.xpose.msra.mxu0 0
      %2789 = vmatprep.mubr.bf16.mxu0 0
      %2790 = vmatmul.mubr.bf16.gmra.mxu0 %v2710
      %v2791 = vpop.f32.mrf.mxu0
      %v2792 = vadd.f32 %v877, %v2791
      %v2793 = vpop.f32.mrf.mxu0
      %v2794 = vpop.f32.mrf.mxu0
      %v2795 = vadd.f32 %v877, %v2794
      %v2796 = vpop.f32.mrf.mxu0
      %2797 = vmatprep.mubr.bf16.mxu0 0
      %2798 = vmatmul.mubr.bf16.gmra.mxu0 %v2713
      %v2799 = vpop.f32.mrf.mxu0
      %v2800 = vadd.f32 %v877, %v2799
      %v2801 = vpop.f32.mrf.mxu0
      %v2802 = vpop.f32.mrf.mxu0
      %v2803 = vadd.f32 %v877, %v2802
      %v2804 = vpop.f32.mrf.mxu0
      %2805 = vmatprep.mubr.bf16.mxu0 0
      %2806 = vmatmul.mubr.bf16.gmra.mxu0 %v2716
      %v2807 = vpop.f32.mrf.mxu0
      %v2808 = vadd.f32 %v877, %v2807
      %v2809 = vpop.f32.mrf.mxu0
      %v2810 = vpop.f32.mrf.mxu0
      %v2811 = vadd.f32 %v877, %v2810
      %v2812 = vpop.f32.mrf.mxu0
      %2813 = vmatprep.mubr.bf16.mxu0 0
      %2814 = vmatmul.mubr.bf16.gmra.mxu0 %v2719
      %v2815 = vpop.f32.mrf.mxu0
      %v2816 = vadd.f32 %v877, %v2815
      %v2817 = vpop.f32.mrf.mxu0
      %v2818 = vpop.f32.mrf.mxu0
      %v2819 = vadd.f32 %v877, %v2818
      %v2820 = vpop.f32.mrf.mxu0
      %2821 = vmatprep.mubr.bf16.mxu0 0
      %2822 = vmatmul.mubr.bf16.gmra.mxu0 %v2722
      %v2823 = vpop.f32.mrf.mxu0
      %v2824 = vadd.f32 %v877, %v2823
      %v2825 = vpop.f32.mrf.mxu0
      %v2826 = vpop.f32.mrf.mxu0
      %v2827 = vadd.f32 %v877, %v2826
      %v2828 = vpop.f32.mrf.mxu0
      %2829 = vmatprep.mubr.bf16.mxu0 0
      %2830 = vmatmul.mubr.bf16.gmra.mxu0 %v2725
      %v2831 = vpop.f32.mrf.mxu0
      %v2832 = vadd.f32 %v877, %v2831
      %v2833 = vpop.f32.mrf.mxu0
      %v2834 = vpop.f32.mrf.mxu0
      %v2835 = vadd.f32 %v877, %v2834
      %v2836 = vpop.f32.mrf.mxu0
      %2837 = vmatprep.mubr.bf16.mxu0 0
      %2838 = vmatmul.mubr.bf16.gmra.mxu0 %v2728
      %v2839 = vpop.f32.mrf.mxu0
      %v2840 = vadd.f32 %v877, %v2839
      %v2841 = vpop.f32.mrf.mxu0
      %v2842 = vpop.f32.mrf.mxu0
      %v2843 = vadd.f32 %v877, %v2842
      %v2844 = vpop.f32.mrf.mxu0
      %2845 = vmatprep.mubr.bf16.mxu0 0
      %2846 = vmatmul.mubr.bf16.gmra.mxu0 %v2731
      %v2847 = vpop.f32.mrf.mxu0
      %v2848 = vadd.f32 %v877, %v2847
      %v2849 = vpop.f32.mrf.mxu0
      %v2850 = vpop.f32.mrf.mxu0
      %v2851 = vadd.f32 %v877, %v2850
      %v2852 = vpop.f32.mrf.mxu0
      %2853 = vdwg.mxu0
      %2854 = vmax.xlane.f32.xlu0 %v2792
      %v2855 = vpop.xlane.xlu0 %2854
      %2856 = vmax.xlane.f32.xlu0 %v2795
      %v2857 = vpop.xlane.xlu0 %2856
      %2858 = vmax.xlane.f32.xlu0 %v2800
      %v2859 = vpop.xlane.xlu0 %2858
      %2860 = vmax.xlane.f32.xlu0 %v2803
      %v2861 = vpop.xlane.xlu0 %2860
      %2862 = vmax.xlane.f32.xlu0 %v2808
      %v2863 = vpop.xlane.xlu0 %2862
      %2864 = vmax.xlane.f32.xlu0 %v2811
      %v2865 = vpop.xlane.xlu0 %2864
      %2866 = vmax.xlane.f32.xlu0 %v2816
      %v2867 = vpop.xlane.xlu0 %2866
      %2868 = vmax.xlane.f32.xlu0 %v2819
      %v2869 = vpop.xlane.xlu0 %2868
      %2870 = vmax.xlane.f32.xlu0 %v2824
      %v2871 = vpop.xlane.xlu0 %2870
      %2872 = vmax.xlane.f32.xlu0 %v2827
      %v2873 = vpop.xlane.xlu0 %2872
      %2874 = vmax.xlane.f32.xlu0 %v2832
      %v2875 = vpop.xlane.xlu0 %2874
      %2876 = vmax.xlane.f32.xlu0 %v2835
      %v2877 = vpop.xlane.xlu0 %2876
      %2878 = vmax.xlane.f32.xlu0 %v2840
      %v2879 = vpop.xlane.xlu0 %2878
      %2880 = vmax.xlane.f32.xlu0 %v2843
      %v2881 = vpop.xlane.xlu0 %2880
      %2882 = vmax.xlane.f32.xlu0 %v2848
      %v2883 = vpop.xlane.xlu0 %2882
      %2884 = vmax.xlane.f32.xlu0 %v2851
      %v2885 = vpop.xlane.xlu0 %2884
      %v2886 = vsub.f32 %v2792, %v2855
      %v2887 = vsub.f32 %v2795, %v2857
      %v2888 = vsub.f32 %v2800, %v2859
      %v2889 = vsub.f32 %v2803, %v2861
      %v2890 = vsub.f32 %v2808, %v2863
      %v2891 = vsub.f32 %v2811, %v2865
      %v2892 = vsub.f32 %v2816, %v2867
      %v2893 = vsub.f32 %v2819, %v2869
      %v2894 = vsub.f32 %v2824, %v2871
      %v2895 = vsub.f32 %v2827, %v2873
      %v2896 = vsub.f32 %v2832, %v2875
      %v2897 = vsub.f32 %v2835, %v2877
      %v2898 = vsub.f32 %v2840, %v2879
      %v2899 = vsub.f32 %v2843, %v2881
      %v2900 = vsub.f32 %v2848, %v2883
      %v2901 = vsub.f32 %v2851, %v2885
      %v2902 = vmul.f32 %v2886, 1.442695
      %v2903 = vpow.pop %v2902
      %v2904 = vmul.f32 %v2887, 1.442695
      %v2905 = vpow.pop %v2904
      %v2906 = vmul.f32 %v2888, 1.442695
      %v2907 = vpow.pop %v2906
      %v2908 = vmul.f32 %v2889, 1.442695
      %v2909 = vpow.pop %v2908
      %v2910 = vmul.f32 %v2890, 1.442695
      %v2911 = vpow.pop %v2910
      %v2912 = vmul.f32 %v2891, 1.442695
      %v2913 = vpow.pop %v2912
      %v2914 = vmul.f32 %v2892, 1.442695
      %v2915 = vpow.pop %v2914
      %v2916 = vmul.f32 %v2893, 1.442695
      %v2917 = vpow.pop %v2916
      %v2918 = vmul.f32 %v2894, 1.442695
      %v2919 = vpow.pop %v2918
      %v2920 = vmul.f32 %v2895, 1.442695
      %v2921 = vpow.pop %v2920
      %v2922 = vmul.f32 %v2896, 1.442695
      %v2923 = vpow.pop %v2922
      %v2924 = vmul.f32 %v2897, 1.442695
      %v2925 = vpow.pop %v2924
      %v2926 = vmul.f32 %v2898, 1.442695
      %v2927 = vpow.pop %v2926
      %v2928 = vmul.f32 %v2899, 1.442695
      %v2929 = vpow.pop %v2928
      %v2930 = vmul.f32 %v2900, 1.442695
      %v2931 = vpow.pop %v2930
      %v2932 = vmul.f32 %v2901, 1.442695
      %v2933 = vpow.pop %v2932
      %2934 = vadd.xlane.f32.xlu0 %v2903
      %v2935 = vpop.xlane.xlu0 %2934
      %2936 = vadd.xlane.f32.xlu0 %v2905
      %v2937 = vpop.xlane.xlu0 %2936
      %2938 = vadd.xlane.f32.xlu0 %v2907
      %v2939 = vpop.xlane.xlu0 %2938
      %2940 = vadd.xlane.f32.xlu0 %v2909
      %v2941 = vpop.xlane.xlu0 %2940
      %2942 = vadd.xlane.f32.xlu0 %v2911
      %v2943 = vpop.xlane.xlu0 %2942
      %2944 = vadd.xlane.f32.xlu0 %v2913
      %v2945 = vpop.xlane.xlu0 %2944
      %2946 = vadd.xlane.f32.xlu0 %v2915
      %v2947 = vpop.xlane.xlu0 %2946
      %2948 = vadd.xlane.f32.xlu0 %v2917
      %v2949 = vpop.xlane.xlu0 %2948
      %2950 = vadd.xlane.f32.xlu0 %v2919
      %v2951 = vpop.xlane.xlu0 %2950
      %2952 = vadd.xlane.f32.xlu0 %v2921
      %v2953 = vpop.xlane.xlu0 %2952
      %2954 = vadd.xlane.f32.xlu0 %v2923
      %v2955 = vpop.xlane.xlu0 %2954
      %2956 = vadd.xlane.f32.xlu0 %v2925
      %v2957 = vpop.xlane.xlu0 %2956
      %2958 = vadd.xlane.f32.xlu0 %v2927
      %v2959 = vpop.xlane.xlu0 %2958
      %2960 = vadd.xlane.f32.xlu0 %v2929
      %v2961 = vpop.xlane.xlu0 %2960
      %2962 = vadd.xlane.f32.xlu0 %v2931
      %v2963 = vpop.xlane.xlu0 %2962
      %2964 = vadd.xlane.f32.xlu0 %v2933
      %v2965 = vpop.xlane.xlu0 %2964
      %v2966 = vrcp.pop %v2935
      %v2967 = vrcp.pop %v2937
      %v2968 = vrcp.pop %v2939
      %v2969 = vrcp.pop %v2941
      %v2970 = vrcp.pop %v2943
      %v2971 = vrcp.pop %v2945
      %v2972 = vrcp.pop %v2947
      %v2973 = vrcp.pop %v2949
      %v2974 = vrcp.pop %v2951
      %v2975 = vrcp.pop %v2953
      %v2976 = vrcp.pop %v2955
      %v2977 = vrcp.pop %v2957
      %v2978 = vrcp.pop %v2959
      %v2979 = vrcp.pop %v2961
      %v2980 = vrcp.pop %v2963
      %v2981 = vrcp.pop %v2965
      %v2982 = vmul.f32 %v2903, %v2966
      %v2983 = vmul.f32 %v2905, %v2967
      %v2984 = vmul.f32 %v2907, %v2968
      %v2985 = vmul.f32 %v2909, %v2969
      %v2986 = vmul.f32 %v2911, %v2970
      %v2987 = vmul.f32 %v2913, %v2971
      %v2988 = vmul.f32 %v2915, %v2972
      %v2989 = vmul.f32 %v2917, %v2973
      %v2990 = vmul.f32 %v2919, %v2974
      %v2991 = vmul.f32 %v2921, %v2975
      %v2992 = vmul.f32 %v2923, %v2976
      %v2993 = vmul.f32 %v2925, %v2977
      %v2994 = vmul.f32 %v2927, %v2978
      %v2995 = vmul.f32 %v2929, %v2979
      %v2996 = vmul.f32 %v2931, %v2980
      %v2997 = vmul.f32 %v2933, %v2981
      %v2998 = vpack.c.bf16 %v2983, %v2982
      %v2999 = vpack.c.bf16 %v2985, %v2984
      %v3000 = vpack.c.bf16 %v2987, %v2986
      %v3001 = vpack.c.bf16 %v2989, %v2988
      %v3002 = vpack.c.bf16 %v2991, %v2990
      %v3003 = vpack.c.bf16 %v2993, %v2992
      %v3004 = vpack.c.bf16 %v2995, %v2994
      %v3005 = vpack.c.bf16 %v2997, %v2996
      %3006 = vrot.lane.b32.xlu0 %v866, 40
      %v3007 = vpop.permute.xlu0 %3006
      %3008 = vrot.lane.b32.xlu0 %v867, 40
      %v3009 = vpop.permute.xlu0 %3008
      %3010 = vrot.lane.b32.xlu0 %v868, 40
      %v3011 = vpop.permute.xlu0 %3010
      %3012 = vrot.lane.b32.xlu0 %v869, 40
      %v3013 = vpop.permute.xlu0 %3012
      %3014 = vrot.lane.b32.xlu0 %v870, 40
      %v3015 = vpop.permute.xlu0 %3014
      %3016 = vrot.lane.b32.xlu0 %v871, 40
      %v3017 = vpop.permute.xlu0 %3016
      %3018 = vrot.lane.b32.xlu0 %v872, 40
      %v3019 = vpop.permute.xlu0 %3018
      %3020 = vrot.lane.b32.xlu0 %v873, 40
      %v3021 = vpop.permute.xlu0 %3020
      %3030 = vmatprep.subr.bf16.mxu0 0
      %3031 = vmatpush1.bf16.msra.mxu0 %v3021
      %3032 = vmatprep.subr.bf16.mxu0 0
      %3033 = vmatpush1.bf16.msra.mxu0 %v3019
      %3034 = vmatprep.subr.bf16.mxu0 0
      %3035 = vmatpush1.bf16.msra.mxu0 %v3017
      %3036 = vmatprep.subr.bf16.mxu0 0
      %3037 = vmatpush1.bf16.msra.mxu0 %v3015
      %3038 = vmatprep.subr.bf16.mxu0 0
      %3039 = vmatpush1.bf16.msra.mxu0 %v3013
      %3040 = vmatprep.subr.bf16.mxu0 0
      %3041 = vmatpush1.bf16.msra.mxu0 %v3011
      %3042 = vmatprep.subr.bf16.mxu0 0
      %3043 = vmatpush1.bf16.msra.mxu0 %v3009
      %3044 = vmatprep.subr.bf16.mxu0 0
      %3045 = vmatpush1.bf16.msra.mxu0 %v3007
      %3046 = vmatprep.subr.bf16.mxu0 0
      %3047 = vmatpush2.bf16.msra.mxu0 0
      %3048 = vmatprep.subr.bf16.mxu0 0
      %3049 = vmatpush2.bf16.msra.mxu0 0
      %3050 = vmatprep.subr.bf16.mxu0 0
      %3051 = vmatpush2.bf16.msra.mxu0 0
      %3052 = vmatprep.subr.bf16.mxu0 0
      %3053 = vmatpush2.bf16.msra.mxu0 0
      %3054 = vmatprep.subr.bf16.mxu0 0
      %3055 = vmatpush2.bf16.msra.mxu0 0
      %3056 = vmatprep.subr.bf16.mxu0 0
      %3057 = vmatpush2.bf16.msra.mxu0 0
      %3058 = vmatprep.subr.bf16.mxu0 0
      %3059 = vmatpush2.bf16.msra.mxu0 0
      %3060 = vmatprep.subr.bf16.mxu0 0
      %3061 = vmatpush2.bf16.msra.mxu0 0
      %3062 = vmatprep.mubr.bf16.mxu0 0
      %3063 = vmatmul.mubr.bf16.gmra.mxu0 %v2998
      %v3064 = vpop.f32.mrf.mxu0
      %v3065 = vadd.f32 0.0, %v3064
      %v3066 = vpop.f32.mrf.mxu0
      %v3067 = vpop.f32.mrf.mxu0
      %v3068 = vadd.f32 0.0, %v3067
      %v3069 = vpop.f32.mrf.mxu0
      %3070 = vmatprep.mubr.bf16.mxu0 0
      %3071 = vmatmul.mubr.bf16.gmra.mxu0 %v2999
      %v3072 = vpop.f32.mrf.mxu0
      %v3073 = vadd.f32 0.0, %v3072
      %v3074 = vpop.f32.mrf.mxu0
      %v3075 = vpop.f32.mrf.mxu0
      %v3076 = vadd.f32 0.0, %v3075
      %v3077 = vpop.f32.mrf.mxu0
      %3078 = vmatprep.mubr.bf16.mxu0 0
      %3079 = vmatmul.mubr.bf16.gmra.mxu0 %v3000
      %v3080 = vpop.f32.mrf.mxu0
      %v3081 = vadd.f32 0.0, %v3080
      %v3082 = vpop.f32.mrf.mxu0
      %v3083 = vpop.f32.mrf.mxu0
      %v3084 = vadd.f32 0.0, %v3083
      %v3085 = vpop.f32.mrf.mxu0
      %3086 = vmatprep.mubr.bf16.mxu0 0
      %3087 = vmatmul.mubr.bf16.gmra.mxu0 %v3001
      %v3088 = vpop.f32.mrf.mxu0
      %v3089 = vadd.f32 0.0, %v3088
      %v3090 = vpop.f32.mrf.mxu0
      %v3091 = vpop.f32.mrf.mxu0
      %v3092 = vadd.f32 0.0, %v3091
      %v3093 = vpop.f32.mrf.mxu0
      %3094 = vmatprep.mubr.bf16.mxu0 0
      %3095 = vmatmul.mubr.bf16.gmra.mxu0 %v3002
      %v3096 = vpop.f32.mrf.mxu0
      %v3097 = vadd.f32 0.0, %v3096
      %v3098 = vpop.f32.mrf.mxu0
      %v3099 = vpop.f32.mrf.mxu0
      %v3100 = vadd.f32 0.0, %v3099
      %v3101 = vpop.f32.mrf.mxu0
      %3102 = vmatprep.mubr.bf16.mxu0 0
      %3103 = vmatmul.mubr.bf16.gmra.mxu0 %v3003
      %v3104 = vpop.f32.mrf.mxu0
      %v3105 = vadd.f32 0.0, %v3104
      %v3106 = vpop.f32.mrf.mxu0
      %v3107 = vpop.f32.mrf.mxu0
      %v3108 = vadd.f32 0.0, %v3107
      %v3109 = vpop.f32.mrf.mxu0
      %3110 = vmatprep.mubr.bf16.mxu0 0
      %3111 = vmatmul.mubr.bf16.gmra.mxu0 %v3004
      %v3112 = vpop.f32.mrf.mxu0
      %v3113 = vadd.f32 0.0, %v3112
      %v3114 = vpop.f32.mrf.mxu0
      %v3115 = vpop.f32.mrf.mxu0
      %v3116 = vadd.f32 0.0, %v3115
      %v3117 = vpop.f32.mrf.mxu0
      %3118 = vmatprep.mubr.bf16.mxu0 0
      %3119 = vmatmul.mubr.bf16.gmra.mxu0 %v3005
      %v3120 = vpop.f32.mrf.mxu0
      %v3121 = vadd.f32 0.0, %v3120
      %v3122 = vpop.f32.mrf.mxu0
      %v3123 = vpop.f32.mrf.mxu0
      %v3124 = vadd.f32 0.0, %v3123
      %v3125 = vpop.f32.mrf.mxu0
      %3126 = vdwg.mxu0
      %v3127 = vpack.c.bf16 %v3068, %v3065
      %v3128 = vpack.c.bf16 %v3076, %v3073
      %v3129 = vpack.c.bf16 %v3084, %v3081
      %v3130 = vpack.c.bf16 %v3092, %v3089
      %v3131 = vpack.c.bf16 %v3100, %v3097
      %v3132 = vpack.c.bf16 %v3108, %v3105
      %v3133 = vpack.c.bf16 %v3116, %v3113
      %v3134 = vpack.c.bf16 %v3124, %v3121
      %v3135 = vld [vmem:[%s5 + $0xc] sm:$0xf]
      %v3137 = vsel %vm910, %v3127, 0
      %v3140 = vsel %vm910, %v3128, 0
      %v3143 = vsel %vm910, %v3129, 0
      %v3146 = vsel %vm910, %v3130, 0
      %v3149 = vsel %vm910, %v3131, 0
      %v3152 = vsel %vm910, %v3132, 0
      %v3155 = vsel %vm910, %v3133, 0
      %v3158 = vsel %vm910, %v3134, 0
      %v3161 = vsel %vm1362, %v3135, 0
      %3163 = vmatprep.subr.bf16.mxu0 0
      %3164 = vmatpush1.bf16.msra.mxu0 0
      %3165 = vmatprep.subr.bf16.mxu0 0
      %3166 = vmatpush1.bf16.msra.mxu0 0
      %3167 = vmatprep.subr.bf16.mxu0 0
      %3168 = vmatpush1.bf16.msra.mxu0 0
      %3169 = vmatprep.subr.bf16.mxu0 0
      %3170 = vmatpush1.bf16.msra.mxu0 0
      %3171 = vmatprep.subr.bf16.mxu0 0
      %3172 = vmatpush1.bf16.msra.mxu0 0
      %3173 = vmatprep.subr.bf16.mxu0 0
      %3174 = vmatpush1.bf16.msra.mxu0 0
      %3175 = vmatprep.subr.bf16.mxu0 0
      %3176 = vmatpush1.bf16.msra.mxu0 0
      %3177 = vmatprep.subr.bf16.mxu0 0
      %3178 = vmatpush1.bf16.msra.mxu0 %v3161
      %3179 = vmatprep.subr.bf16.mxu0 0
      %3180 = vmatpush2.bf16.msra.mxu0 0
      %3181 = vmatprep.subr.bf16.mxu0 0
      %3182 = vmatpush2.bf16.msra.mxu0 0
      %3183 = vmatprep.subr.bf16.mxu0 0
      %3184 = vmatpush2.bf16.msra.mxu0 0
      %3185 = vmatprep.subr.bf16.mxu0 0
      %3186 = vmatpush2.bf16.msra.mxu0 0
      %3187 = vmatprep.subr.bf16.mxu0 0
      %3188 = vmatpush2.bf16.msra.mxu0 0
      %3189 = vmatprep.subr.bf16.mxu0 0
      %3190 = vmatpush2.bf16.msra.mxu0 0
      %3191 = vmatprep.subr.bf16.mxu0 0
      %3192 = vmatpush2.bf16.msra.mxu0 0
      %3193 = vmatprep.subr.bf16.mxu0 0
      %3194 = vmatpush2.bf16.msra.mxu0 0
      %3195 = vmatprep.mubr.bf16.mxu0 0
      %3196 = vmatmul.mubr.bf16.gmra.mxu0 %v3137
      %v3197 = vpop.f32.mrf.mxu0
      %v3198 = vadd.f32 0.0, %v3197
      %v3199 = vpop.f32.mrf.mxu0
      %v3200 = vpop.f32.mrf.mxu0
      %v3201 = vadd.f32 0.0, %v3200
      %v3202 = vpop.f32.mrf.mxu0
      %3203 = vmatprep.mubr.bf16.mxu0 0
      %3204 = vmatmul.mubr.bf16.gmra.mxu0 %v3140
      %v3205 = vpop.f32.mrf.mxu0
      %v3206 = vadd.f32 0.0, %v3205
      %v3207 = vpop.f32.mrf.mxu0
      %v3208 = vpop.f32.mrf.mxu0
      %v3209 = vadd.f32 0.0, %v3208
      %v3210 = vpop.f32.mrf.mxu0
      %3211 = vmatprep.mubr.bf16.mxu0 0
      %3212 = vmatmul.mubr.bf16.gmra.mxu0 %v3143
      %v3213 = vpop.f32.mrf.mxu0
      %v3214 = vadd.f32 0.0, %v3213
      %v3215 = vpop.f32.mrf.mxu0
      %v3216 = vpop.f32.mrf.mxu0
      %v3217 = vadd.f32 0.0, %v3216
      %v3218 = vpop.f32.mrf.mxu0
      %3219 = vmatprep.mubr.bf16.mxu0 0
      %3220 = vmatmul.mubr.bf16.gmra.mxu0 %v3146
      %v3221 = vpop.f32.mrf.mxu0
      %v3222 = vadd.f32 0.0, %v3221
      %v3223 = vpop.f32.mrf.mxu0
      %v3224 = vpop.f32.mrf.mxu0
      %v3225 = vadd.f32 0.0, %v3224
      %v3226 = vpop.f32.mrf.mxu0
      %3227 = vmatprep.mubr.bf16.mxu0 0
      %3228 = vmatmul.mubr.bf16.gmra.mxu0 %v3149
      %v3229 = vpop.f32.mrf.mxu0
      %v3230 = vadd.f32 0.0, %v3229
      %v3231 = vpop.f32.mrf.mxu0
      %v3232 = vpop.f32.mrf.mxu0
      %v3233 = vadd.f32 0.0, %v3232
      %v3234 = vpop.f32.mrf.mxu0
      %3235 = vmatprep.mubr.bf16.mxu0 0
      %3236 = vmatmul.mubr.bf16.gmra.mxu0 %v3152
      %v3237 = vpop.f32.mrf.mxu0
      %v3238 = vadd.f32 0.0, %v3237
      %v3239 = vpop.f32.mrf.mxu0
      %v3240 = vpop.f32.mrf.mxu0
      %v3241 = vadd.f32 0.0, %v3240
      %v3242 = vpop.f32.mrf.mxu0
      %3243 = vmatprep.mubr.bf16.mxu0 0
      %3244 = vmatmul.mubr.bf16.gmra.mxu0 %v3155
      %v3245 = vpop.f32.mrf.mxu0
      %v3246 = vadd.f32 0.0, %v3245
      %v3247 = vpop.f32.mrf.mxu0
      %v3248 = vpop.f32.mrf.mxu0
      %v3249 = vadd.f32 0.0, %v3248
      %v3250 = vpop.f32.mrf.mxu0
      %3251 = vmatprep.mubr.bf16.mxu0 0
      %3252 = vmatmul.mubr.bf16.gmra.mxu0 %v3158
      %v3253 = vpop.f32.mrf.mxu0
      %v3254 = vadd.f32 0.0, %v3253
      %v3255 = vpop.f32.mrf.mxu0
      %v3256 = vpop.f32.mrf.mxu0
      %v3257 = vadd.f32 0.0, %v3256
      %v3258 = vpop.f32.mrf.mxu0
      %3259 = vdwg.mxu0
      %v3260 = vadd.f32 %v2661, %v3198
      %v3261 = vadd.f32 %v2662, %v3201
      %v3262 = vadd.f32 %v2663, %v3206
      %v3263 = vadd.f32 %v2664, %v3209
      %v3264 = vadd.f32 %v2665, %v3214
      %v3265 = vadd.f32 %v2666, %v3217
      %v3266 = vadd.f32 %v2667, %v3222
      %v3267 = vadd.f32 %v2668, %v3225
      %v3268 = vadd.f32 %v2669, %v3230
      %v3269 = vadd.f32 %v2670, %v3233
      %v3270 = vadd.f32 %v2671, %v3238
      %v3271 = vadd.f32 %v2672, %v3241
      %v3272 = vadd.f32 %v2673, %v3246
      %v3273 = vadd.f32 %v2674, %v3249
      %v3274 = vadd.f32 %v2675, %v3254
      %v3275 = vadd.f32 %v2676, %v3257
      %v3276 = vadd.f32 %v442, %v3260
      %v3277 = vadd.f32 %v443, %v3261
      %v3278 = vadd.f32 %v444, %v3262
      %v3279 = vadd.f32 %v445, %v3263
      %v3280 = vadd.f32 %v446, %v3264
      %v3281 = vadd.f32 %v447, %v3265
      %v3282 = vadd.f32 %v448, %v3266
      %v3283 = vadd.f32 %v449, %v3267
      %v3284 = vadd.f32 %v450, %v3268
      %v3285 = vadd.f32 %v451, %v3269
      %v3286 = vadd.f32 %v452, %v3270
      %v3287 = vadd.f32 %v453, %v3271
      %v3288 = vadd.f32 %v454, %v3272
      %v3289 = vadd.f32 %v455, %v3273
      %v3290 = vadd.f32 %v456, %v3274
      %v3291 = vadd.f32 %v457, %v3275
      %v3292 = vld [vmem:[%s7] sm:$0x1]
      %v3293 = vld [vmem:[%s8] sm:$0x1]
      %v3294 = vsel %vm460, %v3276, 0.0
      %3295 = vadd.xlane.f32.xlu0 %v3294
      %v3296 = vpop.xlane.xlu0 %3295
      %v3297 = vsel %vm460, %v3277, 0.0
      %3298 = vadd.xlane.f32.xlu0 %v3297
      %v3299 = vpop.xlane.xlu0 %3298
      %v3300 = vsel %vm460, %v3278, 0.0
      %3301 = vadd.xlane.f32.xlu0 %v3300
      %v3302 = vpop.xlane.xlu0 %3301
      %v3303 = vsel %vm460, %v3279, 0.0
      %3304 = vadd.xlane.f32.xlu0 %v3303
      %v3305 = vpop.xlane.xlu0 %3304
      %v3306 = vsel %vm460, %v3280, 0.0
      %3307 = vadd.xlane.f32.xlu0 %v3306
      %v3308 = vpop.xlane.xlu0 %3307
      %v3309 = vsel %vm460, %v3281, 0.0
      %3310 = vadd.xlane.f32.xlu0 %v3309
      %v3311 = vpop.xlane.xlu0 %3310
      %v3312 = vsel %vm460, %v3282, 0.0
      %3313 = vadd.xlane.f32.xlu0 %v3312
      %v3314 = vpop.xlane.xlu0 %3313
      %v3315 = vsel %vm460, %v3283, 0.0
      %3316 = vadd.xlane.f32.xlu0 %v3315
      %v3317 = vpop.xlane.xlu0 %3316
      %v3318 = vsel %vm460, %v3284, 0.0
      %3319 = vadd.xlane.f32.xlu0 %v3318
      %v3320 = vpop.xlane.xlu0 %3319
      %v3321 = vsel %vm460, %v3285, 0.0
      %3322 = vadd.xlane.f32.xlu0 %v3321
      %v3323 = vpop.xlane.xlu0 %3322
      %v3324 = vsel %vm460, %v3286, 0.0
      %3325 = vadd.xlane.f32.xlu0 %v3324
      %v3326 = vpop.xlane.xlu0 %3325
      %v3327 = vsel %vm460, %v3287, 0.0
      %3328 = vadd.xlane.f32.xlu0 %v3327
      %v3329 = vpop.xlane.xlu0 %3328
      %v3330 = vsel %vm460, %v3288, 0.0
      %3331 = vadd.xlane.f32.xlu0 %v3330
      %v3332 = vpop.xlane.xlu0 %3331
      %v3333 = vsel %vm460, %v3289, 0.0
      %3334 = vadd.xlane.f32.xlu0 %v3333
      %v3335 = vpop.xlane.xlu0 %3334
      %v3336 = vsel %vm460, %v3290, 0.0
      %3337 = vadd.xlane.f32.xlu0 %v3336
      %v3338 = vpop.xlane.xlu0 %3337
      %v3339 = vsel %vm460, %v3291, 0.0
      %3340 = vadd.xlane.f32.xlu0 %v3339
      %v3341 = vpop.xlane.xlu0 %3340
      %v3342 = vmul.f32 %v3296, %v509
      %v3343 = vmul.f32 %v3299, %v509
      %v3344 = vmul.f32 %v3302, %v509
      %v3345 = vmul.f32 %v3305, %v509
      %v3346 = vmul.f32 %v3308, %v509
      %v3347 = vmul.f32 %v3311, %v509
      %v3348 = vmul.f32 %v3314, %v509
      %v3349 = vmul.f32 %v3317, %v509
      %v3350 = vmul.f32 %v3320, %v509
      %v3351 = vmul.f32 %v3323, %v509
      %v3352 = vmul.f32 %v3326, %v509
      %v3353 = vmul.f32 %v3329, %v509
      %v3354 = vmul.f32 %v3332, %v509
      %v3355 = vmul.f32 %v3335, %v509
      %v3356 = vmul.f32 %v3338, %v509
      %v3357 = vmul.f32 %v3341, %v509
      %v3358 = vsub.f32 %v3276, %v3342
      %v3359 = vsub.f32 %v3277, %v3343
      %v3360 = vsub.f32 %v3278, %v3344
      %v3361 = vsub.f32 %v3279, %v3345
      %v3362 = vsub.f32 %v3280, %v3346
      %v3363 = vsub.f32 %v3281, %v3347
      %v3364 = vsub.f32 %v3282, %v3348
      %v3365 = vsub.f32 %v3283, %v3349
      %v3366 = vsub.f32 %v3284, %v3350
      %v3367 = vsub.f32 %v3285, %v3351
      %v3368 = vsub.f32 %v3286, %v3352
      %v3369 = vsub.f32 %v3287, %v3353
      %v3370 = vsub.f32 %v3288, %v3354
      %v3371 = vsub.f32 %v3289, %v3355
      %v3372 = vsub.f32 %v3290, %v3356
      %v3373 = vsub.f32 %v3291, %v3357
      %v3374 = vmul.f32 %v3358, %v3358
      %v3375 = vmul.f32 %v3359, %v3359
      %v3376 = vmul.f32 %v3360, %v3360
      %v3377 = vmul.f32 %v3361, %v3361
      %v3378 = vmul.f32 %v3362, %v3362
      %v3379 = vmul.f32 %v3363, %v3363
      %v3380 = vmul.f32 %v3364, %v3364
      %v3381 = vmul.f32 %v3365, %v3365
      %v3382 = vmul.f32 %v3366, %v3366
      %v3383 = vmul.f32 %v3367, %v3367
      %v3384 = vmul.f32 %v3368, %v3368
      %v3385 = vmul.f32 %v3369, %v3369
      %v3386 = vmul.f32 %v3370, %v3370
      %v3387 = vmul.f32 %v3371, %v3371
      %v3388 = vmul.f32 %v3372, %v3372
      %v3389 = vmul.f32 %v3373, %v3373
      %v3390 = vsel %vm460, %v3374, 0.0
      %3391 = vadd.xlane.f32.xlu0 %v3390
      %v3392 = vpop.xlane.xlu0 %3391
      %v3393 = vsel %vm460, %v3375, 0.0
      %3394 = vadd.xlane.f32.xlu0 %v3393
      %v3395 = vpop.xlane.xlu0 %3394
      %v3396 = vsel %vm460, %v3376, 0.0
      %3397 = vadd.xlane.f32.xlu0 %v3396
      %v3398 = vpop.xlane.xlu0 %3397
      %v3399 = vsel %vm460, %v3377, 0.0
      %3400 = vadd.xlane.f32.xlu0 %v3399
      %v3401 = vpop.xlane.xlu0 %3400
      %v3402 = vsel %vm460, %v3378, 0.0
      %3403 = vadd.xlane.f32.xlu0 %v3402
      %v3404 = vpop.xlane.xlu0 %3403
      %v3405 = vsel %vm460, %v3379, 0.0
      %3406 = vadd.xlane.f32.xlu0 %v3405
      %v3407 = vpop.xlane.xlu0 %3406
      %v3408 = vsel %vm460, %v3380, 0.0
      %3409 = vadd.xlane.f32.xlu0 %v3408
      %v3410 = vpop.xlane.xlu0 %3409
      %v3411 = vsel %vm460, %v3381, 0.0
      %3412 = vadd.xlane.f32.xlu0 %v3411
      %v3413 = vpop.xlane.xlu0 %3412
      %v3414 = vsel %vm460, %v3382, 0.0
      %3415 = vadd.xlane.f32.xlu0 %v3414
      %v3416 = vpop.xlane.xlu0 %3415
      %v3417 = vsel %vm460, %v3383, 0.0
      %3418 = vadd.xlane.f32.xlu0 %v3417
      %v3419 = vpop.xlane.xlu0 %3418
      %v3420 = vsel %vm460, %v3384, 0.0
      %3421 = vadd.xlane.f32.xlu0 %v3420
      %v3422 = vpop.xlane.xlu0 %3421
      %v3423 = vsel %vm460, %v3385, 0.0
      %3424 = vadd.xlane.f32.xlu0 %v3423
      %v3425 = vpop.xlane.xlu0 %3424
      %v3426 = vsel %vm460, %v3386, 0.0
      %3427 = vadd.xlane.f32.xlu0 %v3426
      %v3428 = vpop.xlane.xlu0 %3427
      %v3429 = vsel %vm460, %v3387, 0.0
      %3430 = vadd.xlane.f32.xlu0 %v3429
      %v3431 = vpop.xlane.xlu0 %3430
      %v3432 = vsel %vm460, %v3388, 0.0
      %3433 = vadd.xlane.f32.xlu0 %v3432
      %v3434 = vpop.xlane.xlu0 %3433
      %v3435 = vsel %vm460, %v3389, 0.0
      %3436 = vadd.xlane.f32.xlu0 %v3435
      %v3437 = vpop.xlane.xlu0 %3436
      %v3438 = vmul.f32 %v3392, %v509
      %v3439 = vmul.f32 %v3395, %v509
      %v3440 = vmul.f32 %v3398, %v509
      %v3441 = vmul.f32 %v3401, %v509
      %v3442 = vmul.f32 %v3404, %v509
      %v3443 = vmul.f32 %v3407, %v509
      %v3444 = vmul.f32 %v3410, %v509
      %v3445 = vmul.f32 %v3413, %v509
      %v3446 = vmul.f32 %v3416, %v509
      %v3447 = vmul.f32 %v3419, %v509
      %v3448 = vmul.f32 %v3422, %v509
      %v3449 = vmul.f32 %v3425, %v509
      %v3450 = vmul.f32 %v3428, %v509
      %v3451 = vmul.f32 %v3431, %v509
      %v3452 = vmul.f32 %v3434, %v509
      %v3453 = vmul.f32 %v3437, %v509
      %v3454 = vadd.f32 %v3438, 1e-05
      %v3455 = vadd.f32 %v3439, 1e-05
      %v3456 = vadd.f32 %v3440, 1e-05
      %v3457 = vadd.f32 %v3441, 1e-05
      %v3458 = vadd.f32 %v3442, 1e-05
      %v3459 = vadd.f32 %v3443, 1e-05
      %v3460 = vadd.f32 %v3444, 1e-05
      %v3461 = vadd.f32 %v3445, 1e-05
      %v3462 = vadd.f32 %v3446, 1e-05
      %v3463 = vadd.f32 %v3447, 1e-05
      %v3464 = vadd.f32 %v3448, 1e-05
      %v3465 = vadd.f32 %v3449, 1e-05
      %v3466 = vadd.f32 %v3450, 1e-05
      %v3467 = vadd.f32 %v3451, 1e-05
      %v3468 = vadd.f32 %v3452, 1e-05
      %v3469 = vadd.f32 %v3453, 1e-05
      %v3470 = vrsqrt.pop %v3454
      %v3471 = vrsqrt.pop %v3455
      %v3472 = vrsqrt.pop %v3456
      %v3473 = vrsqrt.pop %v3457
      %v3474 = vrsqrt.pop %v3458
      %v3475 = vrsqrt.pop %v3459
      %v3476 = vrsqrt.pop %v3460
      %v3477 = vrsqrt.pop %v3461
      %v3478 = vrsqrt.pop %v3462
      %v3479 = vrsqrt.pop %v3463
      %v3480 = vrsqrt.pop %v3464
      %v3481 = vrsqrt.pop %v3465
      %v3482 = vrsqrt.pop %v3466
      %v3483 = vrsqrt.pop %v3467
      %v3484 = vrsqrt.pop %v3468
      %v3485 = vrsqrt.pop %v3469
      %v3486 = vmul.f32 %v3358, %v3470
      %v3487 = vmul.f32 %v3359, %v3471
      %v3488 = vmul.f32 %v3360, %v3472
      %v3489 = vmul.f32 %v3361, %v3473
      %v3490 = vmul.f32 %v3362, %v3474
      %v3491 = vmul.f32 %v3363, %v3475
      %v3492 = vmul.f32 %v3364, %v3476
      %v3493 = vmul.f32 %v3365, %v3477
      %v3494 = vmul.f32 %v3366, %v3478
      %v3495 = vmul.f32 %v3367, %v3479
      %v3496 = vmul.f32 %v3368, %v3480
      %v3497 = vmul.f32 %v3369, %v3481
      %v3498 = vmul.f32 %v3370, %v3482
      %v3499 = vmul.f32 %v3371, %v3483
      %v3500 = vmul.f32 %v3372, %v3484
      %v3501 = vmul.f32 %v3373, %v3485
      %v3503 = vlaneseq
      %v3504 = vshrl.u32 %v3503, 7
      %v3505 = vsub.s32 0, %v3504
      %v3506 = vrot.slane %v3292, %v3505
      %v3508 = vmul.f32 %v3486, %v3506
      %v3509 = vmul.f32 %v3487, %v3506
      %v3510 = vmul.f32 %v3488, %v3506
      %v3511 = vmul.f32 %v3489, %v3506
      %v3512 = vmul.f32 %v3490, %v3506
      %v3513 = vmul.f32 %v3491, %v3506
      %v3514 = vmul.f32 %v3492, %v3506
      %v3515 = vmul.f32 %v3493, %v3506
      %v3516 = vmul.f32 %v3494, %v3506
      %v3517 = vmul.f32 %v3495, %v3506
      %v3518 = vmul.f32 %v3496, %v3506
      %v3519 = vmul.f32 %v3497, %v3506
      %v3520 = vmul.f32 %v3498, %v3506
      %v3521 = vmul.f32 %v3499, %v3506
      %v3522 = vmul.f32 %v3500, %v3506
      %v3523 = vmul.f32 %v3501, %v3506
      %v3525 = vlaneseq
      %v3526 = vshrl.u32 %v3525, 7
      %v3527 = vsub.s32 0, %v3526
      %v3528 = vrot.slane %v3293, %v3527
      %v3530 = vadd.f32 %v3508, %v3528
      %v3531 = vadd.f32 %v3509, %v3528
      %v3532 = vadd.f32 %v3510, %v3528
      %v3533 = vadd.f32 %v3511, %v3528
      %v3534 = vadd.f32 %v3512, %v3528
      %v3535 = vadd.f32 %v3513, %v3528
      %v3536 = vadd.f32 %v3514, %v3528
      %v3537 = vadd.f32 %v3515, %v3528
      %v3538 = vadd.f32 %v3516, %v3528
      %v3539 = vadd.f32 %v3517, %v3528
      %v3540 = vadd.f32 %v3518, %v3528
      %v3541 = vadd.f32 %v3519, %v3528
      %v3542 = vadd.f32 %v3520, %v3528
      %v3543 = vadd.f32 %v3521, %v3528
      %v3544 = vadd.f32 %v3522, %v3528
      %v3545 = vadd.f32 %v3523, %v3528
      %v3546 = vpack.c.bf16 %v3531, %v3530
      %v3547 = vpack.c.bf16 %v3533, %v3532
      %v3548 = vpack.c.bf16 %v3535, %v3534
      %v3549 = vpack.c.bf16 %v3537, %v3536
      %v3550 = vpack.c.bf16 %v3539, %v3538
      %v3551 = vpack.c.bf16 %v3541, %v3540
      %v3552 = vpack.c.bf16 %v3543, %v3542
      %v3553 = vpack.c.bf16 %v3545, %v3544
      %v3554 = vld [vmem:[%s12] sm:$0x1]
      %v3556 = vlaneseq
      %v3557 = vshrl.u32 %v3556, 7
      %v3558 = vsub.s32 0, %v3557
      %v3559 = vrot.slane %v3554, %v3558
      %v3561 = vadd.f32 %v3559, 0.0
      %v3562 = vld [vmem:[%s9] sm:$0xf]
      %v3563 = vld [vmem:[%s9 + $0x4] sm:$0xf]
      %v3564 = vld [vmem:[%s9 + $0x8] sm:$0xf]
      %v3565 = vld [vmem:[%s9 + $0xc] sm:$0xf]
      %v3566 = vld [vmem:[%s10] sm:$0x1]
      %v3568 = vlaneseq
      %v3569 = vshrl.u32 %v3568, 7
      %v3570 = vsub.s32 0, %v3569
      %v3571 = vrot.slane %v3566, %v3570
      %v3577 = vunpack.c.l.b16 %v3562
      %v3578 = vunpack.c.l.b16 %v3563
      %v3579 = vunpack.c.l.b16 %v3564
      %v3580 = vunpack.c.l.b16 %v3565
      %v3581 = vpack.c.b16 %v3578, %v3577
      %v3582 = vpack.c.b16 %v3580, %v3579
      %v3586 = vsel %vm460, %v3546, 0
      %v3589 = vsel %vm460, %v3547, 0
      %v3592 = vsel %vm460, %v3548, 0
      %v3595 = vsel %vm460, %v3549, 0
      %v3598 = vsel %vm460, %v3550, 0
      %v3601 = vsel %vm460, %v3551, 0
      %v3604 = vsel %vm460, %v3552, 0
      %v3607 = vsel %vm460, %v3553, 0
      %3609 = vmatprep.subr.bf16.mxu0 0
      %3610 = vmatpush1.bf16.msra.mxu0 0
      %3611 = vmatprep.subr.bf16.mxu0 0
      %3612 = vmatpush1.bf16.msra.mxu0 0
      %3613 = vmatprep.subr.bf16.mxu0 0
      %3614 = vmatpush1.bf16.msra.mxu0 0
      %3615 = vmatprep.subr.bf16.mxu0 0
      %3616 = vmatpush1.bf16.msra.mxu0 0
      %3617 = vmatprep.subr.bf16.mxu0 0
      %3618 = vmatpush1.bf16.msra.mxu0 0
      %3619 = vmatprep.subr.bf16.mxu0 0
      %3620 = vmatpush1.bf16.msra.mxu0 0
      %3621 = vmatprep.subr.bf16.mxu0 0
      %3622 = vmatpush1.bf16.msra.mxu0 %v3582
      %3623 = vmatprep.subr.bf16.mxu0 0
      %3624 = vmatpush1.bf16.msra.mxu0 %v3581
      %3625 = vmatprep.subr.bf16.mxu0 0
      %3626 = vmatpush2.bf16.msra.mxu0 0
      %3627 = vmatprep.subr.bf16.mxu0 0
      %3628 = vmatpush2.bf16.msra.mxu0 0
      %3629 = vmatprep.subr.bf16.mxu0 0
      %3630 = vmatpush2.bf16.msra.mxu0 0
      %3631 = vmatprep.subr.bf16.mxu0 0
      %3632 = vmatpush2.bf16.msra.mxu0 0
      %3633 = vmatprep.subr.bf16.mxu0 0
      %3634 = vmatpush2.bf16.msra.mxu0 0
      %3635 = vmatprep.subr.bf16.mxu0 0
      %3636 = vmatpush2.bf16.msra.mxu0 0
      %3637 = vmatprep.subr.bf16.mxu0 0
      %3638 = vmatpush2.bf16.msra.mxu0 0
      %3639 = vmatprep.subr.bf16.mxu0 0
      %3640 = vmatpush2.bf16.msra.mxu0 0
      %3641 = vmatprep.mubr.bf16.mxu0 0
      %3642 = vmatmul.mubr.bf16.gmra.mxu0 %v3586
      %v3643 = vpop.f32.mrf.mxu0
      %v3644 = vadd.f32 %v3571, %v3643
      %v3645 = vpop.f32.mrf.mxu0
      %v3646 = vpop.f32.mrf.mxu0
      %v3647 = vadd.f32 %v3571, %v3646
      %v3648 = vpop.f32.mrf.mxu0
      %3649 = vmatprep.mubr.bf16.mxu0 0
      %3650 = vmatmul.mubr.bf16.gmra.mxu0 %v3589
      %v3651 = vpop.f32.mrf.mxu0
      %v3652 = vadd.f32 %v3571, %v3651
      %v3653 = vpop.f32.mrf.mxu0
      %v3654 = vpop.f32.mrf.mxu0
      %v3655 = vadd.f32 %v3571, %v3654
      %v3656 = vpop.f32.mrf.mxu0
      %3657 = vmatprep.mubr.bf16.mxu0 0
      %3658 = vmatmul.mubr.bf16.gmra.mxu0 %v3592
      %v3659 = vpop.f32.mrf.mxu0
      %v3660 = vadd.f32 %v3571, %v3659
      %v3661 = vpop.f32.mrf.mxu0
      %v3662 = vpop.f32.mrf.mxu0
      %v3663 = vadd.f32 %v3571, %v3662
      %v3664 = vpop.f32.mrf.mxu0
      %3665 = vmatprep.mubr.bf16.mxu0 0
      %3666 = vmatmul.mubr.bf16.gmra.mxu0 %v3595
      %v3667 = vpop.f32.mrf.mxu0
      %v3668 = vadd.f32 %v3571, %v3667
      %v3669 = vpop.f32.mrf.mxu0
      %v3670 = vpop.f32.mrf.mxu0
      %v3671 = vadd.f32 %v3571, %v3670
      %v3672 = vpop.f32.mrf.mxu0
      %3673 = vmatprep.mubr.bf16.mxu0 0
      %3674 = vmatmul.mubr.bf16.gmra.mxu0 %v3598
      %v3675 = vpop.f32.mrf.mxu0
      %v3676 = vadd.f32 %v3571, %v3675
      %v3677 = vpop.f32.mrf.mxu0
      %v3678 = vpop.f32.mrf.mxu0
      %v3679 = vadd.f32 %v3571, %v3678
      %v3680 = vpop.f32.mrf.mxu0
      %3681 = vmatprep.mubr.bf16.mxu0 0
      %3682 = vmatmul.mubr.bf16.gmra.mxu0 %v3601
      %v3683 = vpop.f32.mrf.mxu0
      %v3684 = vadd.f32 %v3571, %v3683
      %v3685 = vpop.f32.mrf.mxu0
      %v3686 = vpop.f32.mrf.mxu0
      %v3687 = vadd.f32 %v3571, %v3686
      %v3688 = vpop.f32.mrf.mxu0
      %3689 = vmatprep.mubr.bf16.mxu0 0
      %3690 = vmatmul.mubr.bf16.gmra.mxu0 %v3604
      %v3691 = vpop.f32.mrf.mxu0
      %v3692 = vadd.f32 %v3571, %v3691
      %v3693 = vpop.f32.mrf.mxu0
      %v3694 = vpop.f32.mrf.mxu0
      %v3695 = vadd.f32 %v3571, %v3694
      %v3696 = vpop.f32.mrf.mxu0
      %3697 = vmatprep.mubr.bf16.mxu0 0
      %3698 = vmatmul.mubr.bf16.gmra.mxu0 %v3607
      %v3699 = vpop.f32.mrf.mxu0
      %v3700 = vadd.f32 %v3571, %v3699
      %v3701 = vpop.f32.mrf.mxu0
      %v3702 = vpop.f32.mrf.mxu0
      %v3703 = vadd.f32 %v3571, %v3702
      %v3704 = vpop.f32.mrf.mxu0
      %3705 = vdwg.mxu0
      %v3706 = vmul.f32 %v3644, 1.702
      %v3707 = vmul.f32 %v3647, 1.702
      %v3708 = vmul.f32 %v3652, 1.702
      %v3709 = vmul.f32 %v3655, 1.702
      %v3710 = vmul.f32 %v3660, 1.702
      %v3711 = vmul.f32 %v3663, 1.702
      %v3712 = vmul.f32 %v3668, 1.702
      %v3713 = vmul.f32 %v3671, 1.702
      %v3714 = vmul.f32 %v3676, 1.702
      %v3715 = vmul.f32 %v3679, 1.702
      %v3716 = vmul.f32 %v3684, 1.702
      %v3717 = vmul.f32 %v3687, 1.702
      %v3718 = vmul.f32 %v3692, 1.702
      %v3719 = vmul.f32 %v3695, 1.702
      %v3720 = vmul.f32 %v3700, 1.702
      %v3721 = vmul.f32 %v3703, 1.702
      %v3722 = vxor.u32 %v3706, 2147483648
      %v3723 = vxor.u32 %v3707, 2147483648
      %v3724 = vxor.u32 %v3708, 2147483648
      %v3725 = vxor.u32 %v3709, 2147483648
      %v3726 = vxor.u32 %v3710, 2147483648
      %v3727 = vxor.u32 %v3711, 2147483648
      %v3728 = vxor.u32 %v3712, 2147483648
      %v3729 = vxor.u32 %v3713, 2147483648
      %v3730 = vxor.u32 %v3714, 2147483648
      %v3731 = vxor.u32 %v3715, 2147483648
      %v3732 = vxor.u32 %v3716, 2147483648
      %v3733 = vxor.u32 %v3717, 2147483648
      %v3734 = vxor.u32 %v3718, 2147483648
      %v3735 = vxor.u32 %v3719, 2147483648
      %v3736 = vxor.u32 %v3720, 2147483648
      %v3737 = vxor.u32 %v3721, 2147483648
      %v3738 = vmul.f32 %v3722, 1.442695
      %v3739 = vpow.pop %v3738
      %v3740 = vmul.f32 %v3723, 1.442695
      %v3741 = vpow.pop %v3740
      %v3742 = vmul.f32 %v3724, 1.442695
      %v3743 = vpow.pop %v3742
      %v3744 = vmul.f32 %v3725, 1.442695
      %v3745 = vpow.pop %v3744
      %v3746 = vmul.f32 %v3726, 1.442695
      %v3747 = vpow.pop %v3746
      %v3748 = vmul.f32 %v3727, 1.442695
      %v3749 = vpow.pop %v3748
      %v3750 = vmul.f32 %v3728, 1.442695
      %v3751 = vpow.pop %v3750
      %v3752 = vmul.f32 %v3729, 1.442695
      %v3753 = vpow.pop %v3752
      %v3754 = vmul.f32 %v3730, 1.442695
      %v3755 = vpow.pop %v3754
      %v3756 = vmul.f32 %v3731, 1.442695
      %v3757 = vpow.pop %v3756
      %v3758 = vmul.f32 %v3732, 1.442695
      %v3759 = vpow.pop %v3758
      %v3760 = vmul.f32 %v3733, 1.442695
      %v3761 = vpow.pop %v3760
      %v3762 = vmul.f32 %v3734, 1.442695
      %v3763 = vpow.pop %v3762
      %v3764 = vmul.f32 %v3735, 1.442695
      %v3765 = vpow.pop %v3764
      %v3766 = vmul.f32 %v3736, 1.442695
      %v3767 = vpow.pop %v3766
      %v3768 = vmul.f32 %v3737, 1.442695
      %v3769 = vpow.pop %v3768
      %v3770 = vadd.f32 %v3739, 1.0
      %v3771 = vadd.f32 %v3741, 1.0
      %v3772 = vadd.f32 %v3743, 1.0
      %v3773 = vadd.f32 %v3745, 1.0
      %v3774 = vadd.f32 %v3747, 1.0
      %v3775 = vadd.f32 %v3749, 1.0
      %v3776 = vadd.f32 %v3751, 1.0
      %v3777 = vadd.f32 %v3753, 1.0
      %v3778 = vadd.f32 %v3755, 1.0
      %v3779 = vadd.f32 %v3757, 1.0
      %v3780 = vadd.f32 %v3759, 1.0
      %v3781 = vadd.f32 %v3761, 1.0
      %v3782 = vadd.f32 %v3763, 1.0
      %v3783 = vadd.f32 %v3765, 1.0
      %v3784 = vadd.f32 %v3767, 1.0
      %v3785 = vadd.f32 %v3769, 1.0
      %v3786 = vrcp.pop %v3770
      %v3787 = vmul.f32 1.0, %v3786
      %v3788 = vrcp.pop %v3771
      %v3789 = vmul.f32 1.0, %v3788
      %v3790 = vrcp.pop %v3772
      %v3791 = vmul.f32 1.0, %v3790
      %v3792 = vrcp.pop %v3773
      %v3793 = vmul.f32 1.0, %v3792
      %v3794 = vrcp.pop %v3774
      %v3795 = vmul.f32 1.0, %v3794
      %v3796 = vrcp.pop %v3775
      %v3797 = vmul.f32 1.0, %v3796
      %v3798 = vrcp.pop %v3776
      %v3799 = vmul.f32 1.0, %v3798
      %v3800 = vrcp.pop %v3777
      %v3801 = vmul.f32 1.0, %v3800
      %v3802 = vrcp.pop %v3778
      %v3803 = vmul.f32 1.0, %v3802
      %v3804 = vrcp.pop %v3779
      %v3805 = vmul.f32 1.0, %v3804
      %v3806 = vrcp.pop %v3780
      %v3807 = vmul.f32 1.0, %v3806
      %v3808 = vrcp.pop %v3781
      %v3809 = vmul.f32 1.0, %v3808
      %v3810 = vrcp.pop %v3782
      %v3811 = vmul.f32 1.0, %v3810
      %v3812 = vrcp.pop %v3783
      %v3813 = vmul.f32 1.0, %v3812
      %v3814 = vrcp.pop %v3784
      %v3815 = vmul.f32 1.0, %v3814
      %v3816 = vrcp.pop %v3785
      %v3817 = vmul.f32 1.0, %v3816
      %v3818 = vmul.f32 %v3644, %v3787
      %v3819 = vmul.f32 %v3647, %v3789
      %v3820 = vmul.f32 %v3652, %v3791
      %v3821 = vmul.f32 %v3655, %v3793
      %v3822 = vmul.f32 %v3660, %v3795
      %v3823 = vmul.f32 %v3663, %v3797
      %v3824 = vmul.f32 %v3668, %v3799
      %v3825 = vmul.f32 %v3671, %v3801
      %v3826 = vmul.f32 %v3676, %v3803
      %v3827 = vmul.f32 %v3679, %v3805
      %v3828 = vmul.f32 %v3684, %v3807
      %v3829 = vmul.f32 %v3687, %v3809
      %v3830 = vmul.f32 %v3692, %v3811
      %v3831 = vmul.f32 %v3695, %v3813
      %v3832 = vmul.f32 %v3700, %v3815
      %v3833 = vmul.f32 %v3703, %v3817
      %v3834 = vpack.c.bf16 %v3819, %v3818
      %v3835 = vpack.c.bf16 %v3821, %v3820
      %v3836 = vpack.c.bf16 %v3823, %v3822
      %v3837 = vpack.c.bf16 %v3825, %v3824
      %v3838 = vpack.c.bf16 %v3827, %v3826
      %v3839 = vpack.c.bf16 %v3829, %v3828
      %v3840 = vpack.c.bf16 %v3831, %v3830
      %v3841 = vpack.c.bf16 %v3833, %v3832
      %v3842 = vld [vmem:[%s11] sm:$0xf]
      %v3843 = vld [vmem:[%s11 + $0x4] sm:$0xf]
      %v3844 = vld [vmem:[%s11 + $0x8] sm:$0xf]
      %v3845 = vld [vmem:[%s11 + $0xc] sm:$0xf]
      %v3846 = vld [vmem:[%s11 + $0x10] sm:$0xf]
      %v3847 = vld [vmem:[%s11 + $0x14] sm:$0xf]
      %v3848 = vld [vmem:[%s11 + $0x18] sm:$0xf]
      %v3849 = vld [vmem:[%s11 + $0x1c] sm:$0xf]
      %v3850 = vld [vmem:[%s11 + $0x20] sm:$0xf]
      %v3851 = vld [vmem:[%s11 + $0x24] sm:$0xf]
      %v3852 = vld [vmem:[%s11 + $0x28] sm:$0xf]
      %v3853 = vld [vmem:[%s11 + $0x2c] sm:$0xf]
      %v3854 = vld [vmem:[%s11 + $0x30] sm:$0xf]
      %v3855 = vld [vmem:[%s11 + $0x34] sm:$0xf]
      %v3856 = vld [vmem:[%s11 + $0x38] sm:$0xf]
      %v3857 = vld [vmem:[%s11 + $0x3c] sm:$0xf]
      %v3874 = vunpack.c.l.b16 %v3842
      %v3875 = vunpack.c.l.b16 %v3843
      %v3876 = vunpack.c.l.b16 %v3844
      %v3877 = vunpack.c.l.b16 %v3845
      %v3878 = vunpack.c.l.b16 %v3846
      %v3879 = vunpack.c.l.b16 %v3847
      %v3880 = vunpack.c.l.b16 %v3848
      %v3881 = vunpack.c.l.b16 %v3849
      %v3882 = vunpack.c.l.b16 %v3850
      %v3883 = vunpack.c.l.b16 %v3851
      %v3884 = vunpack.c.l.b16 %v3852
      %v3885 = vunpack.c.l.b16 %v3853
      %v3886 = vunpack.c.l.b16 %v3854
      %v3887 = vunpack.c.l.b16 %v3855
      %v3888 = vunpack.c.l.b16 %v3856
      %v3889 = vunpack.c.l.b16 %v3857
      %v3890 = vpack.c.b16 %v3875, %v3874
      %v3891 = vpack.c.b16 %v3877, %v3876
      %v3892 = vpack.c.b16 %v3879, %v3878
      %v3893 = vpack.c.b16 %v3881, %v3880
      %v3894 = vpack.c.b16 %v3883, %v3882
      %v3895 = vpack.c.b16 %v3885, %v3884
      %v3896 = vpack.c.b16 %v3887, %v3886
      %v3897 = vpack.c.b16 %v3889, %v3888
      %3906 = vmatprep.subr.bf16.mxu0 0
      %3907 = vmatpush1.bf16.msra.mxu0 %v3897
      %3908 = vmatprep.subr.bf16.mxu0 0
      %3909 = vmatpush1.bf16.msra.mxu0 %v3896
      %3910 = vmatprep.subr.bf16.mxu0 0
      %3911 = vmatpush1.bf16.msra.mxu0 %v3895
      %3912 = vmatprep.subr.bf16.mxu0 0
      %3913 = vmatpush1.bf16.msra.mxu0 %v3894
      %3914 = vmatprep.subr.bf16.mxu0 0
      %3915 = vmatpush1.bf16.msra.mxu0 %v3893
      %3916 = vmatprep.subr.bf16.mxu0 0
      %3917 = vmatpush1.bf16.msra.mxu0 %v3892
      %3918 = vmatprep.subr.bf16.mxu0 0
      %3919 = vmatpush1.bf16.msra.mxu0 %v3891
      %3920 = vmatprep.subr.bf16.mxu0 0
      %3921 = vmatpush1.bf16.msra.mxu0 %v3890
      %3922 = vmatprep.subr.bf16.mxu0 0
      %3923 = vmatpush2.bf16.msra.mxu0 0
      %3924 = vmatprep.subr.bf16.mxu0 0
      %3925 = vmatpush2.bf16.msra.mxu0 0
      %3926 = vmatprep.subr.bf16.mxu0 0
      %3927 = vmatpush2.bf16.msra.mxu0 0
      %3928 = vmatprep.subr.bf16.mxu0 0
      %3929 = vmatpush2.bf16.msra.mxu0 0
      %3930 = vmatprep.subr.bf16.mxu0 0
      %3931 = vmatpush2.bf16.msra.mxu0 0
      %3932 = vmatprep.subr.bf16.mxu0 0
      %3933 = vmatpush2.bf16.msra.mxu0 0
      %3934 = vmatprep.subr.bf16.mxu0 0
      %3935 = vmatpush2.bf16.msra.mxu0 0
      %3936 = vmatprep.subr.bf16.mxu0 0
      %3937 = vmatpush2.bf16.msra.mxu0 0
      %3938 = vmatprep.mubr.bf16.mxu0 0
      %3939 = vmatmul.mubr.bf16.gmra.mxu0 %v3834
      %v3940 = vpop.f32.mrf.mxu0
      %v3941 = vadd.f32 0.0, %v3940
      %v3942 = vpop.f32.mrf.mxu0
      %v3943 = vpop.f32.mrf.mxu0
      %v3944 = vadd.f32 0.0, %v3943
      %v3945 = vpop.f32.mrf.mxu0
      %3946 = vmatprep.mubr.bf16.mxu0 0
      %3947 = vmatmul.mubr.bf16.gmra.mxu0 %v3835
      %v3948 = vpop.f32.mrf.mxu0
      %v3949 = vadd.f32 0.0, %v3948
      %v3950 = vpop.f32.mrf.mxu0
      %v3951 = vpop.f32.mrf.mxu0
      %v3952 = vadd.f32 0.0, %v3951
      %v3953 = vpop.f32.mrf.mxu0
      %3954 = vmatprep.mubr.bf16.mxu0 0
      %3955 = vmatmul.mubr.bf16.gmra.mxu0 %v3836
      %v3956 = vpop.f32.mrf.mxu0
      %v3957 = vadd.f32 0.0, %v3956
      %v3958 = vpop.f32.mrf.mxu0
      %v3959 = vpop.f32.mrf.mxu0
      %v3960 = vadd.f32 0.0, %v3959
      %v3961 = vpop.f32.mrf.mxu0
      %3962 = vmatprep.mubr.bf16.mxu0 0
      %3963 = vmatmul.mubr.bf16.gmra.mxu0 %v3837
      %v3964 = vpop.f32.mrf.mxu0
      %v3965 = vadd.f32 0.0, %v3964
      %v3966 = vpop.f32.mrf.mxu0
      %v3967 = vpop.f32.mrf.mxu0
      %v3968 = vadd.f32 0.0, %v3967
      %v3969 = vpop.f32.mrf.mxu0
      %3970 = vmatprep.mubr.bf16.mxu0 0
      %3971 = vmatmul.mubr.bf16.gmra.mxu0 %v3838
      %v3972 = vpop.f32.mrf.mxu0
      %v3973 = vadd.f32 0.0, %v3972
      %v3974 = vpop.f32.mrf.mxu0
      %v3975 = vpop.f32.mrf.mxu0
      %v3976 = vadd.f32 0.0, %v3975
      %v3977 = vpop.f32.mrf.mxu0
      %3978 = vmatprep.mubr.bf16.mxu0 0
      %3979 = vmatmul.mubr.bf16.gmra.mxu0 %v3839
      %v3980 = vpop.f32.mrf.mxu0
      %v3981 = vadd.f32 0.0, %v3980
      %v3982 = vpop.f32.mrf.mxu0
      %v3983 = vpop.f32.mrf.mxu0
      %v3984 = vadd.f32 0.0, %v3983
      %v3985 = vpop.f32.mrf.mxu0
      %3986 = vmatprep.mubr.bf16.mxu0 0
      %3987 = vmatmul.mubr.bf16.gmra.mxu0 %v3840
      %v3988 = vpop.f32.mrf.mxu0
      %v3989 = vadd.f32 0.0, %v3988
      %v3990 = vpop.f32.mrf.mxu0
      %v3991 = vpop.f32.mrf.mxu0
      %v3992 = vadd.f32 0.0, %v3991
      %v3993 = vpop.f32.mrf.mxu0
      %3994 = vmatprep.mubr.bf16.mxu0 0
      %3995 = vmatmul.mubr.bf16.gmra.mxu0 %v3841
      %v3996 = vpop.f32.mrf.mxu0
      %v3997 = vadd.f32 0.0, %v3996
      %v3998 = vpop.f32.mrf.mxu0
      %v3999 = vpop.f32.mrf.mxu0
      %v4000 = vadd.f32 0.0, %v3999
      %v4001 = vpop.f32.mrf.mxu0
      %4002 = vdwg.mxu0
      %v4003 = vadd.f32 %v3561, %v3941
      %v4004 = vadd.f32 %v3561, %v3944
      %v4005 = vadd.f32 %v3561, %v3949
      %v4006 = vadd.f32 %v3561, %v3952
      %v4007 = vadd.f32 %v3561, %v3957
      %v4008 = vadd.f32 %v3561, %v3960
      %v4009 = vadd.f32 %v3561, %v3965
      %v4010 = vadd.f32 %v3561, %v3968
      %v4011 = vadd.f32 %v3561, %v3973
      %v4012 = vadd.f32 %v3561, %v3976
      %v4013 = vadd.f32 %v3561, %v3981
      %v4014 = vadd.f32 %v3561, %v3984
      %v4015 = vadd.f32 %v3561, %v3989
      %v4016 = vadd.f32 %v3561, %v3992
      %v4017 = vadd.f32 %v3561, %v3997
      %v4018 = vadd.f32 %v3561, %v4000
      %v4019 = vadd.f32 %v3276, %v4003
      %v4020 = vadd.f32 %v3277, %v4004
      %v4021 = vadd.f32 %v3278, %v4005
      %v4022 = vadd.f32 %v3279, %v4006
      %v4023 = vadd.f32 %v3280, %v4007
      %v4024 = vadd.f32 %v3281, %v4008
      %v4025 = vadd.f32 %v3282, %v4009
      %v4026 = vadd.f32 %v3283, %v4010
      %v4027 = vadd.f32 %v3284, %v4011
      %v4028 = vadd.f32 %v3285, %v4012
      %v4029 = vadd.f32 %v3286, %v4013
      %v4030 = vadd.f32 %v3287, %v4014
      %v4031 = vadd.f32 %v3288, %v4015
      %v4032 = vadd.f32 %v3289, %v4016
      %v4033 = vadd.f32 %v3290, %v4017
      %v4034 = vadd.f32 %v3291, %v4018
      %4035 = vst.msk [vmem:[%s440] sm:$0xff] %vm460, %v4019
      %4036 = vst.msk [vmem:[%s440 + $0x8] sm:$0xff] %vm460, %v4020
      %4037 = vst.msk [vmem:[%s440 + $0x10] sm:$0xff] %vm460, %v4021
      %4038 = vst.msk [vmem:[%s440 + $0x18] sm:$0xff] %vm460, %v4022
      %4039 = vst.msk [vmem:[%s440 + $0x20] sm:$0xff] %vm460, %v4023
      %4040 = vst.msk [vmem:[%s440 + $0x28] sm:$0xff] %vm460, %v4024
      %4041 = vst.msk [vmem:[%s440 + $0x30] sm:$0xff] %vm460, %v4025
      %4042 = vst.msk [vmem:[%s440 + $0x38] sm:$0xff] %vm460, %v4026
      %4043 = vst.msk [vmem:[%s440 + $0x40] sm:$0xff] %vm460, %v4027
      %4044 = vst.msk [vmem:[%s440 + $0x48] sm:$0xff] %vm460, %v4028
      %4045 = vst.msk [vmem:[%s440 + $0x50] sm:$0xff] %vm460, %v4029
      %4046 = vst.msk [vmem:[%s440 + $0x58] sm:$0xff] %vm460, %v4030
      %4047 = vst.msk [vmem:[%s440 + $0x60] sm:$0xff] %vm460, %v4031
      %4048 = vst.msk [vmem:[%s440 + $0x68] sm:$0xff] %vm460, %v4032
      %4049 = vst.msk [vmem:[%s440 + $0x70] sm:$0xff] %vm460, %v4033
      %4050 = vst.msk [vmem:[%s440 + $0x78] sm:$0xff] %vm460, %v4034
      %p4051 = scmp.lt.s32.totalorder %s24, 1
      %s4052 = scalar_select %p4051, %s24, 1
      %s4053 = smul.addr %s4052, 16
      %s4054 = smul.addr %s4053, 8
      %s4055 = scalar_lea.vmem %s13, %s4054
      // Predicated region
      $region73: #{tpu_custom_call.1} parent=71 // pred_check
        %p4056 = pneg %p320
      $region74: #{tpu_custom_call.1} parent=71 // pred_check_branch
        %4058 = sbr.rel (%p4056) target = $region76
      $region75: #{tpu_custom_call.1} parent=71 // pred_region
        _
      $region76: #{tpu_custom_call.1} parent=71 // pred_fallthru
        _
    $region72: #{tpu_custom_call.1} parent=5 // pred_fallthru
      _
    %p4059 = scmp.le.s32.totalorder 2, %s19
    // Predicated region
    $region77: #{tpu_custom_call.1} parent=5 // pred_check
      %p4060 = pneg %p4059
    $region78: #{tpu_custom_call.1} parent=5 // pred_check_branch
      %4062 = sbr.rel (%p4060) target = $region80
    $region79: #{tpu_custom_call.1} parent=5 // pred_region
      %s4063 = ssub.s32 %s19, 2
      // Predicated region
      $region81: #{tpu_custom_call.1} parent=79 // pred_check
        %p4064 = pneg %p326
      $region82: #{tpu_custom_call.1} parent=79 // pred_check_branch
        %4066 = sbr.rel (%p4064) target = $region84
      $region83: #{tpu_custom_call.1} parent=79 // pred_region
        %p4067 = scmp.lt.s32.totalorder %s25, 1
        %s4068 = scalar_select %p4067, %s25, 1
        %s4069 = smul.addr %s4068, 16
        %s4070 = smul.addr %s4069, 8
        %s4071 = scalar_lea.vmem %s13, %s4070
      $region84: #{tpu_custom_call.1} parent=79 // pred_fallthru
        _
    $region80: #{tpu_custom_call.1} parent=5 // pred_fallthru
      _
  $region6: #{tpu_custom_call.1} parent=0 // loop_footer
    %s23 = sadd.s32 1, %s19
  $region7: #{tpu_custom_call.1} parent=0 // loop_footer_branch
    %18 = sbr.rel target = $region3
  $region8: #{tpu_custom_call.1} parent=0 // loop_exit
    _

</llo_original>
